<compile_context>
chip_gen: v7x
topology: tpu7x:2x2x1
jax: 0.10.0
libtpu: 0.0.40
codegen_flags: <defaults>
</compile_context>

<pallas_src>
import functools

import jax
import jax.numpy as jnp
from jax import lax
from jax.experimental import pallas as pl
from jax.experimental.pallas import tpu as pltpu

_EPS = 1e-5
_LANE = 128


def _round_up(x, m):
    return ((x + m - 1) // m) * m


def _pick_row_tile(m, cap):
    """Largest multiple-of-8 divisor of m that is <= cap; else the full m."""
    best = None
    for t in range(8, min(cap, m) + 1, 8):
        if m % t == 0:
            best = t
    return best if best is not None else m


def _vmem_limit_bytes():
    """Generation-aware VMEM budget (review: don't hardcode 32 MiB)."""
    cap = 64 * 1024 * 1024
    try:
        cap = int(getattr(pltpu.get_tpu_info(), "vmem_capacity_bytes", cap))
    except Exception:
        pass
    return int(min(cap * 3 // 4, 100 * 1024 * 1024))


def _bn_scale_shift(s1_t, s2_t, gamma, beta, count):
    """Reduce per-tile partials and fold training-mode BN into scale/shift."""
    s1 = jnp.sum(s1_t, axis=(0, 1))
    s2 = jnp.sum(s2_t, axis=(0, 1))
    mean = s1 / count
    var = jnp.maximum(s2 / count - mean * mean, 0.0)
    scale = gamma * lax.rsqrt(var + _EPS)
    shift = beta - mean * scale
    return scale[None, :], shift[None, :]


# --------------------------- row-tiled 1x1 conv(s) ---------------------------
def _rows_conv_kernel(*refs, n_mm, pre_affine, mm_dtype):
    pos = 1 + (2 if pre_affine else 0)
    x_ref = refs[0]
    w_refs = refs[pos:pos + n_mm]
    out_refs = refs[pos + n_mm:]

    x = x_ref[...]
    if pre_affine:                       # fused BN(prev stage) + ReLU
        scale_ref, shift_ref = refs[1], refs[2]
        x = jnp.maximum(x * scale_ref[...] + shift_ref[...], 0.0)
    xm = x.astype(mm_dtype)
    for j in range(n_mm):
        y = jnp.dot(xm, w_refs[j][...], preferred_element_type=jnp.float32)
        out_refs[3 * j][...] = y
        out_refs[3 * j + 1][0] = jnp.sum(y, axis=0, keepdims=True)
        out_refs[3 * j + 2][0] = jnp.sum(y * y, axis=0, keepdims=True)


def _rows_conv(x2d, weights, scale_shift, *, row_tile, mm_dtype, vmem_limit):
    m, kin = x2d.shape
    tm = _pick_row_tile(m, row_tile)
    nt = m // tm

    in_specs = [pl.BlockSpec((tm, kin), lambda i: (i, 0))]
    args = [x2d]
    if scale_shift is not None:
        cs = scale_shift[0].shape[1]
        in_specs += [pl.BlockSpec((1, cs), lambda i: (0, 0)),
                     pl.BlockSpec((1, cs), lambda i: (0, 0))]
        args += list(scale_shift)
    for w in weights:
        in_specs.append(pl.BlockSpec(w.shape, lambda i: (0, 0)))
        args.append(w)

    out_specs, out_shape = [], []
    for w in weights:
        cout = w.shape[1]
        out_specs += [pl.BlockSpec((tm, cout), lambda i: (i, 0)),
                      pl.BlockSpec((1, 1, cout), lambda i: (i, 0, 0)),
                      pl.BlockSpec((1, 1, cout), lambda i: (i, 0, 0))]
        out_shape += [jax.ShapeDtypeStruct((m, cout), jnp.float32),
                      jax.ShapeDtypeStruct((nt, 1, cout), jnp.float32),
                      jax.ShapeDtypeStruct((nt, 1, cout), jnp.float32)]

    kern = functools.partial(_rows_conv_kernel, n_mm=len(weights),
                             pre_affine=scale_shift is not None,
                             mm_dtype=mm_dtype)
    outs = pl.pallas_call(
        kern,
        grid=(nt,),
        in_specs=in_specs,
        out_specs=out_specs,
        out_shape=out_shape,
        compiler_params=pltpu.CompilerParams(
            dimension_semantics=("parallel",),
            vmem_limit_bytes=vmem_limit),
    )(*args)
    return [tuple(outs[3 * j:3 * j + 3]) for j in range(len(weights))]


# --------------------- bn1 + relu + 3x3 conv (stride, pad=1) ------------------
def _conv3x3_kernel(z1_ref, scale_ref, shift_ref, w2r_ref,
                    z2_ref, s1_ref, s2_ref,
                    a1_ref, imcol_ref, acc_ref,
                    *, H, W, Hp, Wp, Ho, Wo, stride, C):
    # Stage-1 folded BN + ReLU, staged into a zero-halo VMEM slab.  Only the
    # thin halo slices are zeroed (no full-size iota mask / jnp.where).
    f32 = jnp.float32
    a1_ref[0:1, :, :] = jnp.zeros((1, Wp, C), f32)
    a1_ref[H + 1:Hp, :, :] = jnp.zeros((Hp - H - 1, Wp, C), f32)
    a1_ref[:, 0:1, :] = jnp.zeros((Hp, 1, C), f32)
    a1_ref[:, W + 1:Wp, :] = jnp.zeros((Hp, Wp - W - 1, C), f32)

    z1 = z1_ref[0].reshape(H, W, C)
    a1_ref[1:H + 1, 1:W + 1, :] = jnp.maximum(
        z1 * scale_ref[...] + shift_ref[...], 0.0)

    a1 = a1_ref[...]
    hspan = stride * (Ho - 1) + 1
    wspan = stride * (Wo - 1) + 1
    for dy in range(3):
        # Per-dy im2col: one K = 3*C MXU contraction instead of three K = C.
        for dx in range(3):
            tap = a1[dy:dy + hspan:stride, dx:dx + wspan:stride, :]
            imcol_ref[:, :, dx * C:(dx + 1) * C] = tap.astype(imcol_ref.dtype)
        contrib = jnp.dot(imcol_ref[...].reshape(Ho * Wo, 3 * C),
                          w2r_ref[dy],
                          preferred_element_type=jnp.float32)
        if dy == 0:                      # accumulate in a VMEM scratch ref
            acc_ref[...] = contrib
        else:
            acc_ref[...] += contrib

    y = acc_ref[...]
    z2_ref[0] = y
    s1_ref[0] = jnp.sum(y, axis=0, keepdims=True)
    s2_ref[0] = jnp.sum(y * y, axis=0, keepdims=True)


def _conv3x3_bn_relu(z1, scale1, shift1, w2r, *, N, H, W, Ho, Wo, stride,
                     mm_dtype, vmem_limit):
    C = w2r.shape[2]
    Hp = H + 2
    Wp = _round_up(W + 2, 8)
    z1_img = z1.reshape(N, H * W, C)

    kern = functools.partial(_conv3x3_kernel, H=H, W=W, Hp=Hp, Wp=Wp,
                             Ho=Ho, Wo=Wo, stride=stride, C=C)
    z2, s1, s2 = pl.pallas_call(
        kern,
        grid=(N,),
        in_specs=[pl.BlockSpec((1, H * W, C), lambda n: (n, 0, 0)),
                  pl.BlockSpec((1, C), lambda n: (0, 0)),
                  pl.BlockSpec((1, C), lambda n: (0, 0)),
                  pl.BlockSpec((3, 3 * C, C), lambda n: (0, 0, 0))],
        out_specs=[pl.BlockSpec((1, Ho * Wo, C), lambda n: (n, 0, 0)),
                   pl.BlockSpec((1, 1, C), lambda n: (n, 0, 0)),
                   pl.BlockSpec((1, 1, C), lambda n: (n, 0, 0))],
        out_shape=[jax.ShapeDtypeStruct((N, Ho * Wo, C), jnp.float32),
                   jax.ShapeDtypeStruct((N, 1, C), jnp.float32),
                   jax.ShapeDtypeStruct((N, 1, C), jnp.float32)],
        scratch_shapes=[pltpu.VMEM((Hp, Wp, C), jnp.float32),
                        pltpu.VMEM((Ho, Wo, 3 * C), mm_dtype),
                        pltpu.VMEM((Ho * Wo, C), jnp.float32)],
        compiler_params=pltpu.CompilerParams(
            dimension_semantics=("parallel",),
            vmem_limit_bytes=vmem_limit),
    )(z1_img, scale1, shift1, w2r)
    return z2.reshape(N * Ho * Wo, C), s1, s2


# ----------------------- bn3 + residual + relu epilogue -----------------------
def _epilogue_kernel(*refs, has_ds):
    if has_ds:
        z3_ref, s3_ref, b3_ref, zd_ref, sd_ref, bd_ref, o_ref = refs
        res = zd_ref[...] * sd_ref[...] + bd_ref[...]
    else:
        z3_ref, s3_ref, b3_ref, xr_ref, o_ref = refs
        res = xr_ref[...]
    y = z3_ref[...] * s3_ref[...] + b3_ref[...] + res
    o_ref[...] = jnp.maximum(y, 0.0).astype(o_ref.dtype)


def _epilogue(z3, scale3, shift3, res, res_ss, *, row_tile, vmem_limit):
    m, cout = z3.shape
    tm = _pick_row_tile(m, row_tile)
    nt = m // tm
    row = pl.BlockSpec((tm, cout), lambda i: (i, 0))
    vec = pl.BlockSpec((1, cout), lambda i: (0, 0))
    has_ds = res_ss is not None
    in_specs = [row, vec, vec, row] + ([vec, vec] if has_ds else [])
    args = [z3, scale3, shift3, res] + (list(res_ss) if has_ds else [])
    return pl.pallas_call(
        functools.partial(_epilogue_kernel, has_ds=has_ds),
        grid=(nt,),
        in_specs=in_specs,
        out_specs=pl.BlockSpec((tm, cout), lambda i: (i, 0)),
        out_shape=jax.ShapeDtypeStruct((m, cout), jnp.float32),
        compiler_params=pltpu.CompilerParams(
            dimension_semantics=("parallel",),
            vmem_limit_bytes=vmem_limit),
    )(*args)


# --------------------------------- forward -----------------------------------
@functools.partial(jax.jit, static_argnames=("stride", "matmul_dtype", "row_tile"))
def bottleneck_forward(x_nchw, params, stride=1, matmul_dtype=jnp.bfloat16,
                       row_tile=256):
    x = jnp.transpose(x_nchw, (0, 2, 3, 1)).astype(jnp.float32)   # NCHW -> NHWC
    N, H, W, Cin = x.shape
    Cmid = params['w1'].shape[1]
    Cout = params['w3'].shape[1]
    Ho = (H - 1) // stride + 1
    Wo = (W - 1) // stride + 1
    M0, M1 = N * H * W, N * Ho * Wo
    has_ds = 'wd' in params
    if not has_ds:
        assert stride == 1 and Cin == Cout, (
            "identity residual needs stride == 1 and n_in == n_out * expansion")

    cin_p = _round_up(Cin, _LANE)
    cmid_p = _round_up(Cmid, _LANE)
    cout_p = _round_up(Cout, _LANE)
    mm = matmul_dtype
    vmem_limit = _vmem_limit_bytes()

    def padw(w, r, c):                   # 2D weight -> lane-dense + MXU dtype
        return jnp.pad(w, ((0, r - w.shape[0]), (0, c - w.shape[1]))).astype(mm)

    def padv(v, c):                      # 1D affine param -> lane-dense f32
        return jnp.pad(v, (0, c - v.shape[0])).astype(jnp.float32)

    w1 = padw(params['w1'], cin_p, cmid_p)
    w3 = padw(params['w3'], cmid_p, cout_p)
    w2 = jnp.pad(params['w2'],
                 ((0, 0), (0, 0), (0, cmid_p - Cmid), (0, cmid_p - Cmid)))
    w2r = w2.reshape(3, 3 * cmid_p, cmid_p).astype(mm)   # per-dy im2col weights
    g1, b1 = padv(params['g1'], cmid_p), padv(params['b1'], cmid_p)
    g2, b2 = padv(params['g2'], cmid_p), padv(params['b2'], cmid_p)
    g3, b3 = padv(params['g3'], cout_p), padv(params['b3'], cout_p)

    xc = jnp.pad(x, ((0, 0), (0, 0), (0, 0), (0, cin_p - Cin)))  # channel pad only
    x2d = xc.reshape(M0, cin_p)

    # pass A: conv1 (1x1); downsample conv fused in when it reads the same rows.
    weights_a = [w1]
    if has_ds and stride == 1:
        weights_a.append(padw(params['wd'], cin_p, cout_p))
    outs_a = _rows_conv(x2d, weights_a, None, row_tile=row_tile,
                        mm_dtype=mm, vmem_limit=vmem_limit)
    z1, s1_1, s2_1 = outs_a[0]
    scale1, shift1 = _bn_scale_shift(s1_1, s2_1, g1, b1, M0)

    # pass B: bn1 + relu + 3x3 conv (stride, pad=1).
    z2, s1_2, s2_2 = _conv3x3_bn_relu(z1, scale1, shift1, w2r, N=N, H=H, W=W,
                                      Ho=Ho, Wo=Wo, stride=stride,
                                      mm_dtype=mm, vmem_limit=vmem_limit)
    scale2, shift2 = _bn_scale_shift(s1_2, s2_2, g2, b2, M1)

    # pass C: bn2 + relu + conv3 (1x1).
    z3, s1_3, s2_3 = _rows_conv(z2, [w3], (scale2, shift2), row_tile=row_tile,
                                mm_dtype=mm, vmem_limit=vmem_limit)[0]
    scale3, shift3 = _bn_scale_shift(s1_3, s2_3, g3, b3, M1)

    # residual path.
    if has_ds:
        gd, bd = padv(params['gd'], cout_p), padv(params['bd'], cout_p)
        if stride == 1:
            zd, s1_d, s2_d = outs_a[1]
        else:
            wd = padw(params['wd'], cin_p, cout_p)
            xd2d = xc[:, ::stride, ::stride, :].reshape(M1, cin_p)
            zd, s1_d, s2_d = _rows_conv(xd2d, [wd], None, row_tile=row_tile,
                                        mm_dtype=mm, vmem_limit=vmem_limit)[0]
        scaled, shiftd = _bn_scale_shift(s1_d, s2_d, gd, bd, M1)
        res, res_ss = zd, (scaled, shiftd)
    else:
        res, res_ss = x2d, None          # identity: cin_p == cout_p

    # pass D: bn3 + residual add + relu (megacore-parallel, lane-dense store).
    out2d = _epilogue(z3, scale3, shift3, res, res_ss,
                      row_tile=row_tile, vmem_limit=vmem_limit)

    out = out2d[:, :Cout].reshape(N, Ho, Wo, Cout)
    return jnp.transpose(out, (0, 3, 1, 2))                      # NHWC -> NCHW


# ------------------------------ params / reference ----------------------------
def init_params(key, n_in, n_out, stride=1, expansion=4):
    c_out = n_out * expansion
    keys = jax.random.split(key, 4)

    def he(k, shape, fan_in):
        return jax.random.normal(k, shape, jnp.float32) * (1.0 / jnp.sqrt(fan_in))

    def affine(c, seed):
        i = jnp.arange(c, dtype=jnp.float32)
        return 1.0 + 0.1 * jnp.cos(i + seed), 0.05 * jnp.sin(i + seed)

    p = {'w1': he(keys[0], (n_in, n_out), n_in),
         'w2': he(keys[1], (3, 3, n_out, n_out), 9 * n_out),
         'w3': he(keys[2], (n_out, c_out), n_out)}
    p['g1'], p['b1'] = affine(n_out, 0.0)
    p['g2'], p['b2'] = affine(n_out, 1.0)
    p['g3'], p['b3'] = affine(c_out, 2.0)
    if stride != 1 or n_in != c_out:
        p['wd'] = he(keys[3], (n_in, c_out), n_in)
        p['gd'], p['bd'] = affine(c_out, 3.0)
    return p


def reference_forward(x_nchw, params, stride=1):
    """Pure-JAX reference (lax.conv) with identical training-mode BN semantics."""
    x = jnp.transpose(x_nchw, (0, 2, 3, 1)).astype(jnp.float32)

    def bn(y, g, b):
        mean = jnp.mean(y, axis=(0, 1, 2), keepdims=True)
        var = jnp.mean((y - mean) ** 2, axis=(0, 1, 2), keepdims=True)
        return (y - mean) * lax.rsqrt(var + _EPS) * g + b

    def conv(inp, w, s=1, pad='VALID'):
        return lax.conv_general_dilated(
            inp, w, (s, s), pad, dimension_numbers=('NHWC', 'HWIO', 'NHWC'),
            precision=lax.Precision.HIGHEST)

    y = jax.nn.relu(bn(conv(x, params['w1'][None, None]), params['g1'], params['b1']))
    y = jax.nn.relu(bn(conv(y, params['w2'], stride, [(1, 1), (1, 1)]),
                       params['g2'], params['b2']))
    y = bn(conv(y, params['w3'][None, None]), params['g3'], params['b3'])
    if 'wd' in params:
        r = bn(conv(x, params['wd'][None, None], stride), params['gd'], params['bd'])
    else:
        r = x
    return jnp.transpose(jax.nn.relu(y + r), (0, 3, 1, 2))


if __name__ == "__main__":
    N, n_in, H, W = 2, 8, 16, 16
    n_out, stride, expansion = 4, 1, 4     # downsample branch active (8 != 16)

    key = jax.random.PRNGKey(0)
    kp, kx = jax.random.split(key)
    params = init_params(kp, n_in, n_out, stride, expansion)
    x = jax.random.normal(kx, (N, n_in, H, W), jnp.float32)

    ref = jax.block_until_ready(reference_forward(x, params, stride))
    Ho = (H - 1) // stride + 1
    Wo = (W - 1) // stride + 1

    # f32 MXU path: tight tolerance against the two-pass-BN reference.
    out_f32 = jax.block_until_ready(
        bottleneck_forward(x, params, stride=stride,
                           matmul_dtype=jnp.float32, row_tile=256))
    assert out_f32.shape == (N, n_out * expansion, Ho, Wo), out_f32.shape
    err_f32 = float(jnp.max(jnp.abs(out_f32 - ref)))
    assert jnp.allclose(out_f32, ref, atol=2e-3, rtol=2e-3), err_f32

    # default bf16 MXU path (f32 accumulation): looser tolerance.
    out_bf16 = jax.block_until_ready(
        bottleneck_forward(x, params, stride=stride,
                           matmul_dtype=jnp.bfloat16, row_tile=256))
    err_bf16 = float(jnp.max(jnp.abs(out_bf16 - ref)))
    assert jnp.allclose(out_bf16, ref, atol=1e-1, rtol=5e-2), err_bf16

    print("KERNEL_OK")
</pallas_src>

<mosaic_0001>
module attributes {stable_mosaic.version = 11 : i64} {
  func.func @_rows_conv_kernel(%arg0: i32, %arg1: memref<256x128xf32, #tpu.memory_space<vmem>>, %arg2: memref<128x128xf32, #tpu.memory_space<vmem>>, %arg3: memref<128x128xf32, #tpu.memory_space<vmem>>, %arg4: memref<256x128xf32, #tpu.memory_space<vmem>>, %arg5: memref<1x1x128xf32, #tpu.memory_space<vmem>>, %arg6: memref<1x1x128xf32, #tpu.memory_space<vmem>>, %arg7: memref<256x128xf32, #tpu.memory_space<vmem>>, %arg8: memref<1x1x128xf32, #tpu.memory_space<vmem>>, %arg9: memref<1x1x128xf32, #tpu.memory_space<vmem>>) attributes {dimension_semantics = [#tpu.dimension_semantics<parallel>], iteration_bounds = array<i64: 2>, scalar_prefetch = 0 : i64, scratch_operands = 0 : i64, tpu.core_type = #tpu.core_type<tc>, window_params = [{transform_indices = @transform_0, window_bounds = array<i64: 256, 128>}, {pipeline_mode = #tpu.pipeline_mode<synchronous>, transform_indices = @transform_1, window_bounds = array<i64: 128, 128>}, {pipeline_mode = #tpu.pipeline_mode<synchronous>, transform_indices = @transform_2, window_bounds = array<i64: 128, 128>}, {transform_indices = @transform_3, window_bounds = array<i64: 256, 128>}, {transform_indices = @transform_4, window_bounds = array<i64: 1, 1, 128>}, {transform_indices = @transform_5, window_bounds = array<i64: 1, 1, 128>}, {transform_indices = @transform_6, window_bounds = array<i64: 256, 128>}, {transform_indices = @transform_7, window_bounds = array<i64: 1, 1, 128>}, {transform_indices = @transform_8, window_bounds = array<i64: 1, 1, 128>}]} {
    %c0 = arith.constant 0 : index
    %c0_0 = arith.constant 0 : index
    %0 = vector.load %arg1[%c0, %c0_0] : memref<256x128xf32, #tpu.memory_space<vmem>>, vector<256x128xf32>
    %c0_1 = arith.constant 0 : index
    %c0_2 = arith.constant 0 : index
    %1 = vector.load %arg2[%c0_1, %c0_2] : memref<128x128xf32, #tpu.memory_space<vmem>>, vector<128x128xf32>
    %cst = arith.constant dense<0.000000e+00> : vector<256x128xf32>
    %2 = tpu.matmul %0, %1, %cst {dimension_numbers = #tpu.dot_dimension_numbers<[1], [0], [0], [1], [0, 0, 1, 1], [], []>} : vector<256x128xf32>, vector<128x128xf32>, vector<256x128xf32> -> vector<256x128xf32>
    %c0_3 = arith.constant 0 : index
    %c0_4 = arith.constant 0 : index
    %3 = vector.load %arg4[%c0_3, %c0_4] : memref<256x128xf32, #tpu.memory_space<vmem>>, vector<256x128xf32>
    tpu.vector_store %arg4[%c0_3, %c0_4], %2 {strides = array<i32>} : memref<256x128xf32, #tpu.memory_space<vmem>>, vector<256x128xf32>,
    %cst_5 = arith.constant dense<0.000000e+00> : vector<128xf32>
    %4 = vector.multi_reduction <add>, %2, %cst_5 [0] : vector<256x128xf32> to vector<128xf32>
    %5 = vector.shape_cast %4 : vector<128xf32> to vector<1x128xf32>
    %c0_6 = arith.constant 0 : index
    %c0_7 = arith.constant 0 : index
    %c0_8 = arith.constant 0 : index
    %6 = vector.load %arg5[%c0_6, %c0_7, %c0_8] : memref<1x1x128xf32, #tpu.memory_space<vmem>>, vector<1x1x128xf32>
    %7 = vector.shape_cast %6 : vector<1x1x128xf32> to vector<1x128xf32>
    %8 = vector.shape_cast %5 : vector<1x128xf32> to vector<1x1x128xf32>
    tpu.vector_store %arg5[%c0_6, %c0_7, %c0_8], %8 {strides = array<i32>} : memref<1x1x128xf32, #tpu.memory_space<vmem>>, vector<1x1x128xf32>,
    %9 = arith.mulf %2, %2 : vector<256x128xf32>
    %cst_9 = arith.constant dense<0.000000e+00> : vector<128xf32>
    %10 = vector.multi_reduction <add>, %9, %cst_9 [0] : vector<256x128xf32> to vector<128xf32>
    %11 = vector.shape_cast %10 : vector<128xf32> to vector<1x128xf32>
    %c0_10 = arith.constant 0 : index
    %c0_11 = arith.constant 0 : index
    %c0_12 = arith.constant 0 : index
    %12 = vector.load %arg6[%c0_10, %c0_11, %c0_12] : memref<1x1x128xf32, #tpu.memory_space<vmem>>, vector<1x1x128xf32>
    %13 = vector.shape_cast %12 : vector<1x1x128xf32> to vector<1x128xf32>
    %14 = vector.shape_cast %11 : vector<1x128xf32> to vector<1x1x128xf32>
    tpu.vector_store %arg6[%c0_10, %c0_11, %c0_12], %14 {strides = array<i32>} : memref<1x1x128xf32, #tpu.memory_space<vmem>>, vector<1x1x128xf32>,
    %c0_13 = arith.constant 0 : index
    %c0_14 = arith.constant 0 : index
    %15 = vector.load %arg3[%c0_13, %c0_14] : memref<128x128xf32, #tpu.memory_space<vmem>>, vector<128x128xf32>
    %cst_15 = arith.constant dense<0.000000e+00> : vector<256x128xf32>
    %16 = tpu.matmul %0, %15, %cst_15 {dimension_numbers = #tpu.dot_dimension_numbers<[1], [0], [0], [1], [0, 0, 1, 1], [], []>} : vector<256x128xf32>, vector<128x128xf32>, vector<256x128xf32> -> vector<256x128xf32>
    %c0_16 = arith.constant 0 : index
    %c0_17 = arith.constant 0 : index
    %17 = vector.load %arg7[%c0_16, %c0_17] : memref<256x128xf32, #tpu.memory_space<vmem>>, vector<256x128xf32>
    tpu.vector_store %arg7[%c0_16, %c0_17], %16 {strides = array<i32>} : memref<256x128xf32, #tpu.memory_space<vmem>>, vector<256x128xf32>,
    %cst_18 = arith.constant dense<0.000000e+00> : vector<128xf32>
    %18 = vector.multi_reduction <add>, %16, %cst_18 [0] : vector<256x128xf32> to vector<128xf32>
    %19 = vector.shape_cast %18 : vector<128xf32> to vector<1x128xf32>
    %c0_19 = arith.constant 0 : index
    %c0_20 = arith.constant 0 : index
    %c0_21 = arith.constant 0 : index
    %20 = vector.load %arg8[%c0_19, %c0_20, %c0_21] : memref<1x1x128xf32, #tpu.memory_space<vmem>>, vector<1x1x128xf32>
    %21 = vector.shape_cast %20 : vector<1x1x128xf32> to vector<1x128xf32>
    %22 = vector.shape_cast %19 : vector<1x128xf32> to vector<1x1x128xf32>
    tpu.vector_store %arg8[%c0_19, %c0_20, %c0_21], %22 {strides = array<i32>} : memref<1x1x128xf32, #tpu.memory_space<vmem>>, vector<1x1x128xf32>,
    %23 = arith.mulf %16, %16 : vector<256x128xf32>
    %cst_22 = arith.constant dense<0.000000e+00> : vector<128xf32>
    %24 = vector.multi_reduction <add>, %23, %cst_22 [0] : vector<256x128xf32> to vector<128xf32>
    %25 = vector.shape_cast %24 : vector<128xf32> to vector<1x128xf32>
    %c0_23 = arith.constant 0 : index
    %c0_24 = arith.constant 0 : index
    %c0_25 = arith.constant 0 : index
    %26 = vector.load %arg9[%c0_23, %c0_24, %c0_25] : memref<1x1x128xf32, #tpu.memory_space<vmem>>, vector<1x1x128xf32>
    %27 = vector.shape_cast %26 : vector<1x1x128xf32> to vector<1x128xf32>
    %28 = vector.shape_cast %25 : vector<1x128xf32> to vector<1x1x128xf32>
    tpu.vector_store %arg9[%c0_23, %c0_24, %c0_25], %28 {strides = array<i32>} : memref<1x1x128xf32, #tpu.memory_space<vmem>>, vector<1x1x128xf32>,
    return
  }
  func.func @transform_0(%arg0: i32) -> (i32, i32) {
    %c0_i32 = arith.constant 0 : i32
    %c0_i32_0 = arith.constant 0 : i32
    return %arg0, %c0_i32 : i32, i32
  }
  func.func @transform_1(%arg0: i32) -> (i32, i32) {
    %c0_i32 = arith.constant 0 : i32
    %c0_i32_0 = arith.constant 0 : i32
    %c0_i32_1 = arith.constant 0 : i32
    return %c0_i32, %c0_i32_0 : i32, i32
  }
  func.func @transform_2(%arg0: i32) -> (i32, i32) {
    %c0_i32 = arith.constant 0 : i32
    %c0_i32_0 = arith.constant 0 : i32
    %c0_i32_1 = arith.constant 0 : i32
    return %c0_i32, %c0_i32_0 : i32, i32
  }
  func.func @transform_3(%arg0: i32) -> (i32, i32) {
    %c0_i32 = arith.constant 0 : i32
    %c0_i32_0 = arith.constant 0 : i32
    return %arg0, %c0_i32 : i32, i32
  }
  func.func @transform_4(%arg0: i32) -> (i32, i32, i32) {
    %c0_i32 = arith.constant 0 : i32
    %c0_i32_0 = arith.constant 0 : i32
    %c0_i32_1 = arith.constant 0 : i32
    return %arg0, %c0_i32, %c0_i32_0 : i32, i32, i32
  }
  func.func @transform_5(%arg0: i32) -> (i32, i32, i32) {
    %c0_i32 = arith.constant 0 : i32
    %c0_i32_0 = arith.constant 0 : i32
    %c0_i32_1 = arith.constant 0 : i32
    return %arg0, %c0_i32, %c0_i32_0 : i32, i32, i32
  }
  func.func @transform_6(%arg0: i32) -> (i32, i32) {
    %c0_i32 = arith.constant 0 : i32
    %c0_i32_0 = arith.constant 0 : i32
    return %arg0, %c0_i32 : i32, i32
  }
  func.func @transform_7(%arg0: i32) -> (i32, i32, i32) {
    %c0_i32 = arith.constant 0 : i32
    %c0_i32_0 = arith.constant 0 : i32
    %c0_i32_1 = arith.constant 0 : i32
    return %arg0, %c0_i32, %c0_i32_0 : i32, i32, i32
  }
  func.func @transform_8(%arg0: i32) -> (i32, i32, i32) {
    %c0_i32 = arith.constant 0 : i32
    %c0_i32_0 = arith.constant 0 : i32
    %c0_i32_1 = arith.constant 0 : i32
    return %arg0, %c0_i32, %c0_i32_0 : i32, i32, i32
  }
}

module attributes {stable_mosaic.version = 11 : i64} {
  func.func @_rows_conv_kernel(%arg0: i32, %arg1: memref<256x128xf32, #tpu.memory_space<vmem>>, %arg2: memref<1x128xf32, #tpu.memory_space<vmem>>, %arg3: memref<1x128xf32, #tpu.memory_space<vmem>>, %arg4: memref<128x128xf32, #tpu.memory_space<vmem>>, %arg5: memref<256x128xf32, #tpu.memory_space<vmem>>, %arg6: memref<1x1x128xf32, #tpu.memory_space<vmem>>, %arg7: memref<1x1x128xf32, #tpu.memory_space<vmem>>) attributes {dimension_semantics = [#tpu.dimension_semantics<parallel>], iteration_bounds = array<i64: 2>, scalar_prefetch = 0 : i64, scratch_operands = 0 : i64, tpu.core_type = #tpu.core_type<tc>, window_params = [{transform_indices = @transform_0, window_bounds = array<i64: 256, 128>}, {pipeline_mode = #tpu.pipeline_mode<synchronous>, transform_indices = @transform_1, window_bounds = array<i64: 1, 128>}, {pipeline_mode = #tpu.pipeline_mode<synchronous>, transform_indices = @transform_2, window_bounds = array<i64: 1, 128>}, {pipeline_mode = #tpu.pipeline_mode<synchronous>, transform_indices = @transform_3, window_bounds = array<i64: 128, 128>}, {transform_indices = @transform_4, window_bounds = array<i64: 256, 128>}, {transform_indices = @transform_5, window_bounds = array<i64: 1, 1, 128>}, {transform_indices = @transform_6, window_bounds = array<i64: 1, 1, 128>}]} {
    %c0 = arith.constant 0 : index
    %c0_0 = arith.constant 0 : index
    %0 = vector.load %arg1[%c0, %c0_0] : memref<256x128xf32, #tpu.memory_space<vmem>>, vector<256x128xf32>
    %c0_1 = arith.constant 0 : index
    %c0_2 = arith.constant 0 : index
    %1 = vector.load %arg2[%c0_1, %c0_2] : memref<1x128xf32, #tpu.memory_space<vmem>>, vector<1x128xf32>
    %2 = vector.broadcast %1 : vector<1x128xf32> to vector<256x128xf32>
    %3 = arith.mulf %0, %2 : vector<256x128xf32>
    %c0_3 = arith.constant 0 : index
    %c0_4 = arith.constant 0 : index
    %4 = vector.load %arg3[%c0_3, %c0_4] : memref<1x128xf32, #tpu.memory_space<vmem>>, vector<1x128xf32>
    %5 = vector.broadcast %4 : vector<1x128xf32> to vector<256x128xf32>
    %6 = arith.addf %3, %5 : vector<256x128xf32>
    %cst = arith.constant 0.000000e+00 : f32
    %7 = vector.broadcast %cst : f32 to vector<256x128xf32>
    %8 = arith.maximumf %6, %7 : vector<256x128xf32>
    %c0_5 = arith.constant 0 : index
    %c0_6 = arith.constant 0 : index
    %9 = vector.load %arg4[%c0_5, %c0_6] : memref<128x128xf32, #tpu.memory_space<vmem>>, vector<128x128xf32>
    %cst_7 = arith.constant dense<0.000000e+00> : vector<256x128xf32>
    %10 = tpu.matmul %8, %9, %cst_7 {dimension_numbers = #tpu.dot_dimension_numbers<[1], [0], [0], [1], [0, 0, 1, 1], [], []>} : vector<256x128xf32>, vector<128x128xf32>, vector<256x128xf32> -> vector<256x128xf32>
    %c0_8 = arith.constant 0 : index
    %c0_9 = arith.constant 0 : index
    %11 = vector.load %arg5[%c0_8, %c0_9] : memref<256x128xf32, #tpu.memory_space<vmem>>, vector<256x128xf32>
    tpu.vector_store %arg5[%c0_8, %c0_9], %10 {strides = array<i32>} : memref<256x128xf32, #tpu.memory_space<vmem>>, vector<256x128xf32>,
    %cst_10 = arith.constant dense<0.000000e+00> : vector<128xf32>
    %12 = vector.multi_reduction <add>, %10, %cst_10 [0] : vector<256x128xf32> to vector<128xf32>
    %13 = vector.shape_cast %12 : vector<128xf32> to vector<1x128xf32>
    %c0_11 = arith.constant 0 : index
    %c0_12 = arith.constant 0 : index
    %c0_13 = arith.constant 0 : index
    %14 = vector.load %arg6[%c0_11, %c0_12, %c0_13] : memref<1x1x128xf32, #tpu.memory_space<vmem>>, vector<1x1x128xf32>
    %15 = vector.shape_cast %14 : vector<1x1x128xf32> to vector<1x128xf32>
    %16 = vector.shape_cast %13 : vector<1x128xf32> to vector<1x1x128xf32>
    tpu.vector_store %arg6[%c0_11, %c0_12, %c0_13], %16 {strides = array<i32>} : memref<1x1x128xf32, #tpu.memory_space<vmem>>, vector<1x1x128xf32>,
    %17 = arith.mulf %10, %10 : vector<256x128xf32>
    %cst_14 = arith.constant dense<0.000000e+00> : vector<128xf32>
    %18 = vector.multi_reduction <add>, %17, %cst_14 [0] : vector<256x128xf32> to vector<128xf32>
    %19 = vector.shape_cast %18 : vector<128xf32> to vector<1x128xf32>
    %c0_15 = arith.constant 0 : index
    %c0_16 = arith.constant 0 : index
    %c0_17 = arith.constant 0 : index
    %20 = vector.load %arg7[%c0_15, %c0_16, %c0_17] : memref<1x1x128xf32, #tpu.memory_space<vmem>>, vector<1x1x128xf32>
    %21 = vector.shape_cast %20 : vector<1x1x128xf32> to vector<1x128xf32>
    %22 = vector.shape_cast %19 : vector<1x128xf32> to vector<1x1x128xf32>
    tpu.vector_store %arg7[%c0_15, %c0_16, %c0_17], %22 {strides = array<i32>} : memref<1x1x128xf32, #tpu.memory_space<vmem>>, vector<1x1x128xf32>,
    return
  }
  func.func @transform_0(%arg0: i32) -> (i32, i32) {
    %c0_i32 = arith.constant 0 : i32
    %c0_i32_0 = arith.constant 0 : i32
    return %arg0, %c0_i32 : i32, i32
  }
  func.func @transform_1(%arg0: i32) -> (i32, i32) {
    %c0_i32 = arith.constant 0 : i32
    %c0_i32_0 = arith.constant 0 : i32
    %c0_i32_1 = arith.constant 0 : i32
    return %c0_i32, %c0_i32_0 : i32, i32
  }
  func.func @transform_2(%arg0: i32) -> (i32, i32) {
    %c0_i32 = arith.constant 0 : i32
    %c0_i32_0 = arith.constant 0 : i32
    %c0_i32_1 = arith.constant 0 : i32
    return %c0_i32, %c0_i32_0 : i32, i32
  }
  func.func @transform_3(%arg0: i32) -> (i32, i32) {
    %c0_i32 = arith.constant 0 : i32
    %c0_i32_0 = arith.constant 0 : i32
    %c0_i32_1 = arith.constant 0 : i32
    return %c0_i32, %c0_i32_0 : i32, i32
  }
  func.func @transform_4(%arg0: i32) -> (i32, i32) {
    %c0_i32 = arith.constant 0 : i32
    %c0_i32_0 = arith.constant 0 : i32
    return %arg0, %c0_i32 : i32, i32
  }
  func.func @transform_5(%arg0: i32) -> (i32, i32, i32) {
    %c0_i32 = arith.constant 0 : i32
    %c0_i32_0 = arith.constant 0 : i32
    %c0_i32_1 = arith.constant 0 : i32
    return %arg0, %c0_i32, %c0_i32_0 : i32, i32, i32
  }
  func.func @transform_6(%arg0: i32) -> (i32, i32, i32) {
    %c0_i32 = arith.constant 0 : i32
    %c0_i32_0 = arith.constant 0 : i32
    %c0_i32_1 = arith.constant 0 : i32
    return %arg0, %c0_i32, %c0_i32_0 : i32, i32, i32
  }
}

module attributes {stable_mosaic.version = 11 : i64} {
  func.func @_conv3x3_kernel(%arg0: i32, %arg1: memref<1x256x128xf32, #tpu.memory_space<vmem>>, %arg2: memref<1x128xf32, #tpu.memory_space<vmem>>, %arg3: memref<1x128xf32, #tpu.memory_space<vmem>>, %arg4: memref<3x384x128xf32, #tpu.memory_space<vmem>>, %arg5: memref<1x256x128xf32, #tpu.memory_space<vmem>>, %arg6: memref<1x1x128xf32, #tpu.memory_space<vmem>>, %arg7: memref<1x1x128xf32, #tpu.memory_space<vmem>>, %arg8: memref<18x24x128xf32, #tpu.memory_space<vmem>>, %arg9: memref<16x16x384xf32, #tpu.memory_space<vmem>>, %arg10: memref<256x128xf32, #tpu.memory_space<vmem>>) attributes {dimension_semantics = [#tpu.dimension_semantics<parallel>], iteration_bounds = array<i64: 2>, scalar_prefetch = 0 : i64, scratch_operands = 3 : i64, tpu.core_type = #tpu.core_type<tc>, window_params = [{transform_indices = @transform_0, window_bounds = array<i64: 1, 256, 128>}, {pipeline_mode = #tpu.pipeline_mode<synchronous>, transform_indices = @transform_1, window_bounds = array<i64: 1, 128>}, {pipeline_mode = #tpu.pipeline_mode<synchronous>, transform_indices = @transform_2, window_bounds = array<i64: 1, 128>}, {pipeline_mode = #tpu.pipeline_mode<synchronous>, transform_indices = @transform_3, window_bounds = array<i64: 3, 384, 128>}, {transform_indices = @transform_4, window_bounds = array<i64: 1, 256, 128>}, {transform_indices = @transform_5, window_bounds = array<i64: 1, 1, 128>}, {transform_indices = @transform_6, window_bounds = array<i64: 1, 1, 128>}]} {
    %cst = arith.constant 0.000000e+00 : f32
    %0 = vector.broadcast %cst : f32 to vector<1x24x128xf32>
    %c0 = arith.constant 0 : index
    %c0_0 = arith.constant 0 : index
    %c0_1 = arith.constant 0 : index
    %1 = vector.load %arg8[%c0, %c0_0, %c0_1] : memref<18x24x128xf32, #tpu.memory_space<vmem>>, vector<1x24x128xf32>
    tpu.vector_store %arg8[%c0, %c0_0, %c0_1], %0 {strides = array<i32>} : memref<18x24x128xf32, #tpu.memory_space<vmem>>, vector<1x24x128xf32>,
    %cst_2 = arith.constant 0.000000e+00 : f32
    %2 = vector.broadcast %cst_2 : f32 to vector<1x24x128xf32>
    %c17 = arith.constant 17 : index
    %c0_3 = arith.constant 0 : index
    %c0_4 = arith.constant 0 : index
    %3 = vector.load %arg8[%c17, %c0_3, %c0_4] : memref<18x24x128xf32, #tpu.memory_space<vmem>>, vector<1x24x128xf32>
    tpu.vector_store %arg8[%c17, %c0_3, %c0_4], %2 {strides = array<i32>} : memref<18x24x128xf32, #tpu.memory_space<vmem>>, vector<1x24x128xf32>,
    %cst_5 = arith.constant 0.000000e+00 : f32
    %4 = vector.broadcast %cst_5 : f32 to vector<18x1x128xf32>
    %c0_6 = arith.constant 0 : index
    %c0_7 = arith.constant 0 : index
    %c0_8 = arith.constant 0 : index
    %5 = vector.load %arg8[%c0_6, %c0_7, %c0_8] : memref<18x24x128xf32, #tpu.memory_space<vmem>>, vector<18x1x128xf32>
    tpu.vector_store %arg8[%c0_6, %c0_7, %c0_8], %4 {strides = array<i32>} : memref<18x24x128xf32, #tpu.memory_space<vmem>>, vector<18x1x128xf32>,
    %cst_9 = arith.constant 0.000000e+00 : f32
    %6 = vector.broadcast %cst_9 : f32 to vector<18x7x128xf32>
    %c0_10 = arith.constant 0 : index
    %c17_11 = arith.constant 17 : index
    %c0_12 = arith.constant 0 : index
    %7 = vector.load %arg8[%c0_10, %c17_11, %c0_12] : memref<18x24x128xf32, #tpu.memory_space<vmem>>, vector<18x7x128xf32>
    tpu.vector_store %arg8[%c0_10, %c17_11, %c0_12], %6 {strides = array<i32>} : memref<18x24x128xf32, #tpu.memory_space<vmem>>, vector<18x7x128xf32>,
    %c0_13 = arith.constant 0 : index
    %c0_14 = arith.constant 0 : index
    %c0_15 = arith.constant 0 : index
    %8 = vector.load %arg1[%c0_13, %c0_14, %c0_15] : memref<1x256x128xf32, #tpu.memory_space<vmem>>, vector<1x256x128xf32>
    %9 = vector.shape_cast %8 : vector<1x256x128xf32> to vector<256x128xf32>
    %10 = vector.shape_cast %9 : vector<256x128xf32> to vector<16x16x128xf32>
    %c0_16 = arith.constant 0 : index
    %c0_17 = arith.constant 0 : index
    %11 = vector.load %arg2[%c0_16, %c0_17] : memref<1x128xf32, #tpu.memory_space<vmem>>, vector<1x128xf32>
    %12 = vector.shape_cast %11 : vector<1x128xf32> to vector<1x1x128xf32>
    %13 = vector.broadcast %12 : vector<1x1x128xf32> to vector<16x16x128xf32>
    %14 = arith.mulf %10, %13 : vector<16x16x128xf32>
    %c0_18 = arith.constant 0 : index
    %c0_19 = arith.constant 0 : index
    %15 = vector.load %arg3[%c0_18, %c0_19] : memref<1x128xf32, #tpu.memory_space<vmem>>, vector<1x128xf32>
    %16 = vector.shape_cast %15 : vector<1x128xf32> to vector<1x1x128xf32>
    %17 = vector.broadcast %16 : vector<1x1x128xf32> to vector<16x16x128xf32>
    %18 = arith.addf %14, %17 : vector<16x16x128xf32>
    %cst_20 = arith.constant 0.000000e+00 : f32
    %19 = vector.broadcast %cst_20 : f32 to vector<16x16x128xf32>
    %20 = arith.maximumf %18, %19 : vector<16x16x128xf32>
    %c1 = arith.constant 1 : index
    %c1_21 = arith.constant 1 : index
    %c0_22 = arith.constant 0 : index
    %21 = vector.load %arg8[%c1, %c1_21, %c0_22] : memref<18x24x128xf32, #tpu.memory_space<vmem>>, vector<16x16x128xf32>
    tpu.vector_store %arg8[%c1, %c1_21, %c0_22], %20 {strides = array<i32>} : memref<18x24x128xf32, #tpu.memory_space<vmem>>, vector<16x16x128xf32>,
    %c0_23 = arith.constant 0 : index
    %c0_24 = arith.constant 0 : index
    %c0_25 = arith.constant 0 : index
    %22 = vector.load %arg8[%c0_23, %c0_24, %c0_25] : memref<18x24x128xf32, #tpu.memory_space<vmem>>, vector<18x24x128xf32>
    %23 = vector.extract_strided_slice %22 {offsets = [0, 0, 0], sizes = [16, 16, 128], strides = [1, 1, 1]} : vector<18x24x128xf32> to vector<16x16x128xf32>
    %c0_26 = arith.constant 0 : index
    %c0_27 = arith.constant 0 : index
    %c0_28 = arith.constant 0 : index
    %24 = vector.load %arg9[%c0_26, %c0_27, %c0_28] : memref<16x16x384xf32, #tpu.memory_space<vmem>>, vector<16x16x128xf32>
    tpu.vector_store %arg9[%c0_26, %c0_27, %c0_28], %23 {strides = array<i32>} : memref<16x16x384xf32, #tpu.memory_space<vmem>>, vector<16x16x128xf32>,
    %25 = vector.extract_strided_slice %22 {offsets = [0, 1, 0], sizes = [16, 16, 128], strides = [1, 1, 1]} : vector<18x24x128xf32> to vector<16x16x128xf32>
    %c0_29 = arith.constant 0 : index
    %c0_30 = arith.constant 0 : index
    %c128 = arith.constant 128 : index
    %26 = vector.load %arg9[%c0_29, %c0_30, %c128] : memref<16x16x384xf32, #tpu.memory_space<vmem>>, vector<16x16x128xf32>
    tpu.vector_store %arg9[%c0_29, %c0_30, %c128], %25 {strides = array<i32>} : memref<16x16x384xf32, #tpu.memory_space<vmem>>, vector<16x16x128xf32>,
    %27 = vector.extract_strided_slice %22 {offsets = [0, 2, 0], sizes = [16, 16, 128], strides = [1, 1, 1]} : vector<18x24x128xf32> to vector<16x16x128xf32>
    %c0_31 = arith.constant 0 : index
    %c0_32 = arith.constant 0 : index
    %c256 = arith.constant 256 : index
    %28 = vector.load %arg9[%c0_31, %c0_32, %c256] : memref<16x16x384xf32, #tpu.memory_space<vmem>>, vector<16x16x128xf32>
    tpu.vector_store %arg9[%c0_31, %c0_32, %c256], %27 {strides = array<i32>} : memref<16x16x384xf32, #tpu.memory_space<vmem>>, vector<16x16x128xf32>,
    %c0_33 = arith.constant 0 : index
    %c0_34 = arith.constant 0 : index
    %c0_35 = arith.constant 0 : index
    %29 = vector.load %arg9[%c0_33, %c0_34, %c0_35] : memref<16x16x384xf32, #tpu.memory_space<vmem>>, vector<16x16x384xf32>
    %30 = vector.shape_cast %29 : vector<16x16x384xf32> to vector<256x384xf32>
    %c0_36 = arith.constant 0 : index
    %c0_37 = arith.constant 0 : index
    %c0_38 = arith.constant 0 : index
    %31 = vector.load %arg4[%c0_36, %c0_37, %c0_38] : memref<3x384x128xf32, #tpu.memory_space<vmem>>, vector<1x384x128xf32>
    %32 = vector.shape_cast %31 : vector<1x384x128xf32> to vector<384x128xf32>
    %cst_39 = arith.constant dense<0.000000e+00> : vector<256x128xf32>
    %33 = tpu.matmul %30, %32, %cst_39 {dimension_numbers = #tpu.dot_dimension_numbers<[1], [0], [0], [1], [0, 0, 1, 1], [], []>} : vector<256x384xf32>, vector<384x128xf32>, vector<256x128xf32> -> vector<256x128xf32>
    %c0_40 = arith.constant 0 : index
    %c0_41 = arith.constant 0 : index
    %34 = vector.load %arg10[%c0_40, %c0_41] : memref<256x128xf32, #tpu.memory_space<vmem>>, vector<256x128xf32>
    tpu.vector_store %arg10[%c0_40, %c0_41], %33 {strides = array<i32>} : memref<256x128xf32, #tpu.memory_space<vmem>>, vector<256x128xf32>,
    %35 = vector.extract_strided_slice %22 {offsets = [1, 0, 0], sizes = [16, 16, 128], strides = [1, 1, 1]} : vector<18x24x128xf32> to vector<16x16x128xf32>
    %c0_42 = arith.constant 0 : index
    %c0_43 = arith.constant 0 : index
    %c0_44 = arith.constant 0 : index
    %36 = vector.load %arg9[%c0_42, %c0_43, %c0_44] : memref<16x16x384xf32, #tpu.memory_space<vmem>>, vector<16x16x128xf32>
    tpu.vector_store %arg9[%c0_42, %c0_43, %c0_44], %35 {strides = array<i32>} : memref<16x16x384xf32, #tpu.memory_space<vmem>>, vector<16x16x128xf32>,
    %37 = vector.extract_strided_slice %22 {offsets = [1, 1, 0], sizes = [16, 16, 128], strides = [1, 1, 1]} : vector<18x24x128xf32> to vector<16x16x128xf32>
    %c0_45 = arith.constant 0 : index
    %c0_46 = arith.constant 0 : index
    %c128_47 = arith.constant 128 : index
    %38 = vector.load %arg9[%c0_45, %c0_46, %c128_47] : memref<16x16x384xf32, #tpu.memory_space<vmem>>, vector<16x16x128xf32>
    tpu.vector_store %arg9[%c0_45, %c0_46, %c128_47], %37 {strides = array<i32>} : memref<16x16x384xf32, #tpu.memory_space<vmem>>, vector<16x16x128xf32>,
    %39 = vector.extract_strided_slice %22 {offsets = [1, 2, 0], sizes = [16, 16, 128], strides = [1, 1, 1]} : vector<18x24x128xf32> to vector<16x16x128xf32>
    %c0_48 = arith.constant 0 : index
    %c0_49 = arith.constant 0 : index
    %c256_50 = arith.constant 256 : index
    %40 = vector.load %arg9[%c0_48, %c0_49, %c256_50] : memref<16x16x384xf32, #tpu.memory_space<vmem>>, vector<16x16x128xf32>
    tpu.vector_store %arg9[%c0_48, %c0_49, %c256_50], %39 {strides = array<i32>} : memref<16x16x384xf32, #tpu.memory_space<vmem>>, vector<16x16x128xf32>,
    %c0_51 = arith.constant 0 : index
    %c0_52 = arith.constant 0 : index
    %c0_53 = arith.constant 0 : index
    %41 = vector.load %arg9[%c0_51, %c0_52, %c0_53] : memref<16x16x384xf32, #tpu.memory_space<vmem>>, vector<16x16x384xf32>
    %42 = vector.shape_cast %41 : vector<16x16x384xf32> to vector<256x384xf32>
    %c1_54 = arith.constant 1 : index
    %c0_55 = arith.constant 0 : index
    %c0_56 = arith.constant 0 : index
    %43 = vector.load %arg4[%c1_54, %c0_55, %c0_56] : memref<3x384x128xf32, #tpu.memory_space<vmem>>, vector<1x384x128xf32>
    %44 = vector.shape_cast %43 : vector<1x384x128xf32> to vector<384x128xf32>
    %cst_57 = arith.constant dense<0.000000e+00> : vector<256x128xf32>
    %45 = tpu.matmul %42, %44, %cst_57 {dimension_numbers = #tpu.dot_dimension_numbers<[1], [0], [0], [1], [0, 0, 1, 1], [], []>} : vector<256x384xf32>, vector<384x128xf32>, vector<256x128xf32> -> vector<256x128xf32>
    %c0_58 = arith.constant 0 : index
    %c0_59 = arith.constant 0 : index
    %46 = vector.load %arg10[%c0_58, %c0_59] : memref<256x128xf32, #tpu.memory_space<vmem>>, vector<256x128xf32>
    %47 = arith.addf %46, %45 : vector<256x128xf32>
    %c0_60 = arith.constant 0 : index
    %c0_61 = arith.constant 0 : index
    %48 = vector.load %arg10[%c0_60, %c0_61] : memref<256x128xf32, #tpu.memory_space<vmem>>, vector<256x128xf32>
    tpu.vector_store %arg10[%c0_60, %c0_61], %47 {strides = array<i32>} : memref<256x128xf32, #tpu.memory_space<vmem>>, vector<256x128xf32>,
    %49 = vector.extract_strided_slice %22 {offsets = [2, 0, 0], sizes = [16, 16, 128], strides = [1, 1, 1]} : vector<18x24x128xf32> to vector<16x16x128xf32>
    %c0_62 = arith.constant 0 : index
    %c0_63 = arith.constant 0 : index
    %c0_64 = arith.constant 0 : index
    %50 = vector.load %arg9[%c0_62, %c0_63, %c0_64] : memref<16x16x384xf32, #tpu.memory_space<vmem>>, vector<16x16x128xf32>
    tpu.vector_store %arg9[%c0_62, %c0_63, %c0_64], %49 {strides = array<i32>} : memref<16x16x384xf32, #tpu.memory_space<vmem>>, vector<16x16x128xf32>,
    %51 = vector.extract_strided_slice %22 {offsets = [2, 1, 0], sizes = [16, 16, 128], strides = [1, 1, 1]} : vector<18x24x128xf32> to vector<16x16x128xf32>
    %c0_65 = arith.constant 0 : index
    %c0_66 = arith.constant 0 : index
    %c128_67 = arith.constant 128 : index
    %52 = vector.load %arg9[%c0_65, %c0_66, %c128_67] : memref<16x16x384xf32, #tpu.memory_space<vmem>>, vector<16x16x128xf32>
    tpu.vector_store %arg9[%c0_65, %c0_66, %c128_67], %51 {strides = array<i32>} : memref<16x16x384xf32, #tpu.memory_space<vmem>>, vector<16x16x128xf32>,
    %53 = vector.extract_strided_slice %22 {offsets = [2, 2, 0], sizes = [16, 16, 128], strides = [1, 1, 1]} : vector<18x24x128xf32> to vector<16x16x128xf32>
    %c0_68 = arith.constant 0 : index
    %c0_69 = arith.constant 0 : index
    %c256_70 = arith.constant 256 : index
    %54 = vector.load %arg9[%c0_68, %c0_69, %c256_70] : memref<16x16x384xf32, #tpu.memory_space<vmem>>, vector<16x16x128xf32>
    tpu.vector_store %arg9[%c0_68, %c0_69, %c256_70], %53 {strides = array<i32>} : memref<16x16x384xf32, #tpu.memory_space<vmem>>, vector<16x16x128xf32>,
    %c0_71 = arith.constant 0 : index
    %c0_72 = arith.constant 0 : index
    %c0_73 = arith.constant 0 : index
    %55 = vector.load %arg9[%c0_71, %c0_72, %c0_73] : memref<16x16x384xf32, #tpu.memory_space<vmem>>, vector<16x16x384xf32>
    %56 = vector.shape_cast %55 : vector<16x16x384xf32> to vector<256x384xf32>
    %c2 = arith.constant 2 : index
    %c0_74 = arith.constant 0 : index
    %c0_75 = arith.constant 0 : index
    %57 = vector.load %arg4[%c2, %c0_74, %c0_75] : memref<3x384x128xf32, #tpu.memory_space<vmem>>, vector<1x384x128xf32>
    %58 = vector.shape_cast %57 : vector<1x384x128xf32> to vector<384x128xf32>
    %cst_76 = arith.constant dense<0.000000e+00> : vector<256x128xf32>
    %59 = tpu.matmul %56, %58, %cst_76 {dimension_numbers = #tpu.dot_dimension_numbers<[1], [0], [0], [1], [0, 0, 1, 1], [], []>} : vector<256x384xf32>, vector<384x128xf32>, vector<256x128xf32> -> vector<256x128xf32>
    %c0_77 = arith.constant 0 : index
    %c0_78 = arith.constant 0 : index
    %60 = vector.load %arg10[%c0_77, %c0_78] : memref<256x128xf32, #tpu.memory_space<vmem>>, vector<256x128xf32>
    %61 = arith.addf %60, %59 : vector<256x128xf32>
    %c0_79 = arith.constant 0 : index
    %c0_80 = arith.constant 0 : index
    %62 = vector.load %arg10[%c0_79, %c0_80] : memref<256x128xf32, #tpu.memory_space<vmem>>, vector<256x128xf32>
    tpu.vector_store %arg10[%c0_79, %c0_80], %61 {strides = array<i32>} : memref<256x128xf32, #tpu.memory_space<vmem>>, vector<256x128xf32>,
    %c0_81 = arith.constant 0 : index
    %c0_82 = arith.constant 0 : index
    %63 = vector.load %arg10[%c0_81, %c0_82] : memref<256x128xf32, #tpu.memory_space<vmem>>, vector<256x128xf32>
    %c0_83 = arith.constant 0 : index
    %c0_84 = arith.constant 0 : index
    %c0_85 = arith.constant 0 : index
    %64 = vector.load %arg5[%c0_83, %c0_84, %c0_85] : memref<1x256x128xf32, #tpu.memory_space<vmem>>, vector<1x256x128xf32>
    %65 = vector.shape_cast %64 : vector<1x256x128xf32> to vector<256x128xf32>
    %66 = vector.shape_cast %63 : vector<256x128xf32> to vector<1x256x128xf32>
    tpu.vector_store %arg5[%c0_83, %c0_84, %c0_85], %66 {strides = array<i32>} : memref<1x256x128xf32, #tpu.memory_space<vmem>>, vector<1x256x128xf32>,
    %cst_86 = arith.constant dense<0.000000e+00> : vector<128xf32>
    %67 = vector.multi_reduction <add>, %63, %cst_86 [0] : vector<256x128xf32> to vector<128xf32>
    %68 = vector.shape_cast %67 : vector<128xf32> to vector<1x128xf32>
    %c0_87 = arith.constant 0 : index
    %c0_88 = arith.constant 0 : index
    %c0_89 = arith.constant 0 : index
    %69 = vector.load %arg6[%c0_87, %c0_88, %c0_89] : memref<1x1x128xf32, #tpu.memory_space<vmem>>, vector<1x1x128xf32>
    %70 = vector.shape_cast %69 : vector<1x1x128xf32> to vector<1x128xf32>
    %71 = vector.shape_cast %68 : vector<1x128xf32> to vector<1x1x128xf32>
    tpu.vector_store %arg6[%c0_87, %c0_88, %c0_89], %71 {strides = array<i32>} : memref<1x1x128xf32, #tpu.memory_space<vmem>>, vector<1x1x128xf32>,
    %72 = arith.mulf %63, %63 : vector<256x128xf32>
    %cst_90 = arith.constant dense<0.000000e+00> : vector<128xf32>
    %73 = vector.multi_reduction <add>, %72, %cst_90 [0] : vector<256x128xf32> to vector<128xf32>
    %74 = vector.shape_cast %73 : vector<128xf32> to vector<1x128xf32>
    %c0_91 = arith.constant 0 : index
    %c0_92 = arith.constant 0 : index
    %c0_93 = arith.constant 0 : index
    %75 = vector.load %arg7[%c0_91, %c0_92, %c0_93] : memref<1x1x128xf32, #tpu.memory_space<vmem>>, vector<1x1x128xf32>
    %76 = vector.shape_cast %75 : vector<1x1x128xf32> to vector<1x128xf32>
    %77 = vector.shape_cast %74 : vector<1x128xf32> to vector<1x1x128xf32>
    tpu.vector_store %arg7[%c0_91, %c0_92, %c0_93], %77 {strides = array<i32>} : memref<1x1x128xf32, #tpu.memory_space<vmem>>, vector<1x1x128xf32>,
    return
  }
  func.func @transform_0(%arg0: i32) -> (i32, i32, i32) {
    %c0_i32 = arith.constant 0 : i32
    %c0_i32_0 = arith.constant 0 : i32
    %c0_i32_1 = arith.constant 0 : i32
    return %arg0, %c0_i32, %c0_i32_0 : i32, i32, i32
  }
  func.func @transform_1(%arg0: i32) -> (i32, i32) {
    %c0_i32 = arith.constant 0 : i32
    %c0_i32_0 = arith.constant 0 : i32
    %c0_i32_1 = arith.constant 0 : i32
    return %c0_i32, %c0_i32_0 : i32, i32
  }
  func.func @transform_2(%arg0: i32) -> (i32, i32) {
    %c0_i32 = arith.constant 0 : i32
    %c0_i32_0 = arith.constant 0 : i32
    %c0_i32_1 = arith.constant 0 : i32
    return %c0_i32, %c0_i32_0 : i32, i32
  }
  func.func @transform_3(%arg0: i32) -> (i32, i32, i32) {
    %c0_i32 = arith.constant 0 : i32
    %c0_i32_0 = arith.constant 0 : i32
    %c0_i32_1 = arith.constant 0 : i32
    %c0_i32_2 = arith.constant 0 : i32
    return %c0_i32, %c0_i32_0, %c0_i32_1 : i32, i32, i32
  }
  func.func @transform_4(%arg0: i32) -> (i32, i32, i32) {
    %c0_i32 = arith.constant 0 : i32
    %c0_i32_0 = arith.constant 0 : i32
    %c0_i32_1 = arith.constant 0 : i32
    return %arg0, %c0_i32, %c0_i32_0 : i32, i32, i32
  }
  func.func @transform_5(%arg0: i32) -> (i32, i32, i32) {
    %c0_i32 = arith.constant 0 : i32
    %c0_i32_0 = arith.constant 0 : i32
    %c0_i32_1 = arith.constant 0 : i32
    return %arg0, %c0_i32, %c0_i32_0 : i32, i32, i32
  }
  func.func @transform_6(%arg0: i32) -> (i32, i32, i32) {
    %c0_i32 = arith.constant 0 : i32
    %c0_i32_0 = arith.constant 0 : i32
    %c0_i32_1 = arith.constant 0 : i32
    return %arg0, %c0_i32, %c0_i32_0 : i32, i32, i32
  }
}

module attributes {stable_mosaic.version = 11 : i64} {
  func.func @_epilogue_kernel(%arg0: i32, %arg1: memref<256x128xf32, #tpu.memory_space<vmem>>, %arg2: memref<1x128xf32, #tpu.memory_space<vmem>>, %arg3: memref<1x128xf32, #tpu.memory_space<vmem>>, %arg4: memref<256x128xf32, #tpu.memory_space<vmem>>, %arg5: memref<1x128xf32, #tpu.memory_space<vmem>>, %arg6: memref<1x128xf32, #tpu.memory_space<vmem>>, %arg7: memref<256x128xf32, #tpu.memory_space<vmem>>) attributes {dimension_semantics = [#tpu.dimension_semantics<parallel>], iteration_bounds = array<i64: 2>, scalar_prefetch = 0 : i64, scratch_operands = 0 : i64, tpu.core_type = #tpu.core_type<tc>, window_params = [{transform_indices = @transform_0, window_bounds = array<i64: 256, 128>}, {pipeline_mode = #tpu.pipeline_mode<synchronous>, transform_indices = @transform_1, window_bounds = array<i64: 1, 128>}, {pipeline_mode = #tpu.pipeline_mode<synchronous>, transform_indices = @transform_2, window_bounds = array<i64: 1, 128>}, {transform_indices = @transform_3, window_bounds = array<i64: 256, 128>}, {pipeline_mode = #tpu.pipeline_mode<synchronous>, transform_indices = @transform_4, window_bounds = array<i64: 1, 128>}, {pipeline_mode = #tpu.pipeline_mode<synchronous>, transform_indices = @transform_5, window_bounds = array<i64: 1, 128>}, {transform_indices = @transform_6, window_bounds = array<i64: 256, 128>}]} {
    %c0 = arith.constant 0 : index
    %c0_0 = arith.constant 0 : index
    %0 = vector.load %arg4[%c0, %c0_0] : memref<256x128xf32, #tpu.memory_space<vmem>>, vector<256x128xf32>
    %c0_1 = arith.constant 0 : index
    %c0_2 = arith.constant 0 : index
    %1 = vector.load %arg5[%c0_1, %c0_2] : memref<1x128xf32, #tpu.memory_space<vmem>>, vector<1x128xf32>
    %2 = vector.broadcast %1 : vector<1x128xf32> to vector<256x128xf32>
    %3 = arith.mulf %0, %2 : vector<256x128xf32>
    %c0_3 = arith.constant 0 : index
    %c0_4 = arith.constant 0 : index
    %4 = vector.load %arg6[%c0_3, %c0_4] : memref<1x128xf32, #tpu.memory_space<vmem>>, vector<1x128xf32>
    %5 = vector.broadcast %4 : vector<1x128xf32> to vector<256x128xf32>
    %6 = arith.addf %3, %5 : vector<256x128xf32>
    %c0_5 = arith.constant 0 : index
    %c0_6 = arith.constant 0 : index
    %7 = vector.load %arg1[%c0_5, %c0_6] : memref<256x128xf32, #tpu.memory_space<vmem>>, vector<256x128xf32>
    %c0_7 = arith.constant 0 : index
    %c0_8 = arith.constant 0 : index
    %8 = vector.load %arg2[%c0_7, %c0_8] : memref<1x128xf32, #tpu.memory_space<vmem>>, vector<1x128xf32>
    %9 = vector.broadcast %8 : vector<1x128xf32> to vector<256x128xf32>
    %10 = arith.mulf %7, %9 : vector<256x128xf32>
    %c0_9 = arith.constant 0 : index
    %c0_10 = arith.constant 0 : index
    %11 = vector.load %arg3[%c0_9, %c0_10] : memref<1x128xf32, #tpu.memory_space<vmem>>, vector<1x128xf32>
    %12 = vector.broadcast %11 : vector<1x128xf32> to vector<256x128xf32>
    %13 = arith.addf %10, %12 : vector<256x128xf32>
    %14 = arith.addf %13, %6 : vector<256x128xf32>
    %cst = arith.constant 0.000000e+00 : f32
    %15 = vector.broadcast %cst : f32 to vector<256x128xf32>
    %16 = arith.maximumf %14, %15 : vector<256x128xf32>
    %c0_11 = arith.constant 0 : index
    %c0_12 = arith.constant 0 : index
    %17 = vector.load %arg7[%c0_11, %c0_12] : memref<256x128xf32, #tpu.memory_space<vmem>>, vector<256x128xf32>
    tpu.vector_store %arg7[%c0_11, %c0_12], %16 {strides = array<i32>} : memref<256x128xf32, #tpu.memory_space<vmem>>, vector<256x128xf32>,
    return
  }
  func.func @transform_0(%arg0: i32) -> (i32, i32) {
    %c0_i32 = arith.constant 0 : i32
    %c0_i32_0 = arith.constant 0 : i32
    return %arg0, %c0_i32 : i32, i32
  }
  func.func @transform_1(%arg0: i32) -> (i32, i32) {
    %c0_i32 = arith.constant 0 : i32
    %c0_i32_0 = arith.constant 0 : i32
    %c0_i32_1 = arith.constant 0 : i32
    return %c0_i32, %c0_i32_0 : i32, i32
  }
  func.func @transform_2(%arg0: i32) -> (i32, i32) {
    %c0_i32 = arith.constant 0 : i32
    %c0_i32_0 = arith.constant 0 : i32
    %c0_i32_1 = arith.constant 0 : i32
    return %c0_i32, %c0_i32_0 : i32, i32
  }
  func.func @transform_3(%arg0: i32) -> (i32, i32) {
    %c0_i32 = arith.constant 0 : i32
    %c0_i32_0 = arith.constant 0 : i32
    return %arg0, %c0_i32 : i32, i32
  }
  func.func @transform_4(%arg0: i32) -> (i32, i32) {
    %c0_i32 = arith.constant 0 : i32
    %c0_i32_0 = arith.constant 0 : i32
    %c0_i32_1 = arith.constant 0 : i32
    return %c0_i32, %c0_i32_0 : i32, i32
  }
  func.func @transform_5(%arg0: i32) -> (i32, i32) {
    %c0_i32 = arith.constant 0 : i32
    %c0_i32_0 = arith.constant 0 : i32
    %c0_i32_1 = arith.constant 0 : i32
    return %c0_i32, %c0_i32_0 : i32, i32
  }
  func.func @transform_6(%arg0: i32) -> (i32, i32) {
    %c0_i32 = arith.constant 0 : i32
    %c0_i32_0 = arith.constant 0 : i32
    return %arg0, %c0_i32 : i32, i32
  }
}

</mosaic_0001>

<llo_original>
// kernel: bottleneck_forward.7
$region0: #{bottleneck_forward.7}
  #allocation0 [shape = 'u32[]', space=smem, size = 0x4, offset = 0x4, fixed_abs, tag = 'smem constant byte address 0x4 - core index']
  #allocation1 [shape = 'u32[144,128]{1,0:T(1,128)}', space=vmem, size = 0x12000, scoped, tag = 'internal scratch']
  %s0 = inlined_call_operand.vmem [shape: f32[512,128], index: 0, kind: input, shape index: {}]
  %s1 = inlined_call_operand.vmem [shape: f32[1,128], index: 1, kind: input, shape index: {}]
  %s2 = inlined_call_operand.vmem [shape: f32[1,128], index: 2, kind: input, shape index: {}]
  %s3 = inlined_call_operand.vmem [shape: f32[512,128], index: 3, kind: input, shape index: {}]
  %s4 = inlined_call_operand.vmem [shape: f32[1,128], index: 4, kind: input, shape index: {}]
  %s5 = inlined_call_operand.vmem [shape: f32[1,128], index: 5, kind: input, shape index: {}]
  %s6 = inlined_call_operand.vmem [shape: f32[512,128], index: 6, kind: output, shape index: {}]
  %s7 = sld [smem:[#allocation0]]
  $region57: #{bottleneck_forward.7} parent=0
    _
  %s9 = ssub.s32 1, %s7
  %s10 = scalar_select 0, %s9, %s7
  loop: start=0, step=1, limit=4
  $region2: #{bottleneck_forward.7} parent=0 // loop_pre_header
    _
  $region3: #{bottleneck_forward.7} parent=0 // loop_header
    %s12 = sphi 0, %s16
    %p13 = scmp.ge.s32.totalorder %s12, 4
    %s22 = sphi 0, %s24
    %s25 = sphi 0, %s22
    %s26 = sphi 0, %s25
    %s42 = sphi 0, %s26
    %s46 = sphi 0, %s46
    %s48 = sphi 0, %s46
    %s49 = sphi 0, %s48
    %s63 = sphi 0, %s49
    %s67 = sphi 0, %s67
    %s69 = sphi 0, %s67
    %s70 = sphi 0, %s69
    %s84 = sphi 0, %s70
    %s90 = sphi 0, %s92
    %s93 = sphi 0, %s90
    %s94 = sphi 0, %s93
    %s110 = sphi 0, %s94
    %s114 = sphi 0, %s114
    %s116 = sphi 0, %s114
    %s117 = sphi 0, %s116
    %s131 = sphi 0, %s117
    %s135 = sphi 0, %s135
    %s137 = sphi 0, %s135
    %s138 = sphi 0, %s137
    %s152 = sphi 0, %s138
    %s158 = sphi 0, %s160
    %s161 = sphi 0, %s158
    %s162 = sphi 0, %s161
    %s178 = sphi 0, %s162
  $region4: #{bottleneck_forward.7} parent=0 // loop_header_branch
    %15 = sbr.rel (%p13) target = $region8
  $region5: #{bottleneck_forward.7} parent=0 // loop_body
    %s17 = ssub.s32 %s12, 1
    %s18 = ssub.s32 %s12, 2
    %s19 = sadd.s32 %s12, 1
    %s20 = ssub.s32 %s12, %s19
    %p21 = scmp.eq.s32.totalorder %s20, 0
    %s23 = sadd.s32 %s22, 1
    %s24 = scalar_select %p21, %s22, %s23
    %p27 = pneg %p21
    %p28 = scmp.eq.s32.totalorder %s12, 1
    %p29 = por %p27, %p28
    %p30 = scmp.ne.s32.totalorder %s22, %s25
    %p31 = scmp.eq.s32.totalorder %s12, 0
    %p32 = por %p30, %p31
    %p33 = scmp.ne.s32.totalorder %s22, %s25
    %p34 = scmp.eq.s32.totalorder %s17, 1
    %p35 = por %p33, %p34
    %p36 = scmp.ne.s32.totalorder %s25, %s26
    %p37 = scmp.eq.s32.totalorder %s17, 0
    %p38 = por %p36, %p37
    %p39 = scmp.ne.s32.totalorder %s25, %s26
    %p40 = scmp.eq.s32.totalorder %s18, 1
    %p41 = por %p39, %p40
    %p43 = scmp.ne.s32.totalorder %s26, %s42
    %p44 = scmp.eq.s32.totalorder %s18, 0
    %p45 = por %p43, %p44
    %s47 = sadd.s32 %s46, 1
    %p50 = scmp.eq.s32.totalorder %s12, 1
    %p51 = scmp.ne.s32.totalorder %s46, %s48
    %p52 = scmp.eq.s32.totalorder %s12, 0
    %p53 = por %p51, %p52
    %p54 = scmp.ne.s32.totalorder %s46, %s48
    %p55 = scmp.eq.s32.totalorder %s17, 1
    %p56 = por %p54, %p55
    %p57 = scmp.ne.s32.totalorder %s48, %s49
    %p58 = scmp.eq.s32.totalorder %s17, 0
    %p59 = por %p57, %p58
    %p60 = scmp.ne.s32.totalorder %s48, %s49
    %p61 = scmp.eq.s32.totalorder %s18, 1
    %p62 = por %p60, %p61
    %p64 = scmp.ne.s32.totalorder %s49, %s63
    %p65 = scmp.eq.s32.totalorder %s18, 0
    %p66 = por %p64, %p65
    %s68 = sadd.s32 %s67, 1
    %p71 = scmp.eq.s32.totalorder %s12, 1
    %p72 = scmp.ne.s32.totalorder %s67, %s69
    %p73 = scmp.eq.s32.totalorder %s12, 0
    %p74 = por %p72, %p73
    %p75 = scmp.ne.s32.totalorder %s67, %s69
    %p76 = scmp.eq.s32.totalorder %s17, 1
    %p77 = por %p75, %p76
    %p78 = scmp.ne.s32.totalorder %s69, %s70
    %p79 = scmp.eq.s32.totalorder %s17, 0
    %p80 = por %p78, %p79
    %p81 = scmp.ne.s32.totalorder %s69, %s70
    %p82 = scmp.eq.s32.totalorder %s18, 1
    %p83 = por %p81, %p82
    %p85 = scmp.ne.s32.totalorder %s70, %s84
    %p86 = scmp.eq.s32.totalorder %s18, 0
    %p87 = por %p85, %p86
    %s88 = ssub.s32 %s12, %s19
    %p89 = scmp.eq.s32.totalorder %s88, 0
    %s91 = sadd.s32 %s90, 1
    %s92 = scalar_select %p89, %s90, %s91
    %p95 = pneg %p89
    %p96 = scmp.eq.s32.totalorder %s12, 1
    %p97 = por %p95, %p96
    %p98 = scmp.ne.s32.totalorder %s90, %s93
    %p99 = scmp.eq.s32.totalorder %s12, 0
    %p100 = por %p98, %p99
    %p101 = scmp.ne.s32.totalorder %s90, %s93
    %p102 = scmp.eq.s32.totalorder %s17, 1
    %p103 = por %p101, %p102
    %p104 = scmp.ne.s32.totalorder %s93, %s94
    %p105 = scmp.eq.s32.totalorder %s17, 0
    %p106 = por %p104, %p105
    %p107 = scmp.ne.s32.totalorder %s93, %s94
    %p108 = scmp.eq.s32.totalorder %s18, 1
    %p109 = por %p107, %p108
    %p111 = scmp.ne.s32.totalorder %s94, %s110
    %p112 = scmp.eq.s32.totalorder %s18, 0
    %p113 = por %p111, %p112
    %s115 = sadd.s32 %s114, 1
    %p118 = scmp.eq.s32.totalorder %s12, 1
    %p119 = scmp.ne.s32.totalorder %s114, %s116
    %p120 = scmp.eq.s32.totalorder %s12, 0
    %p121 = por %p119, %p120
    %p122 = scmp.ne.s32.totalorder %s114, %s116
    %p123 = scmp.eq.s32.totalorder %s17, 1
    %p124 = por %p122, %p123
    %p125 = scmp.ne.s32.totalorder %s116, %s117
    %p126 = scmp.eq.s32.totalorder %s17, 0
    %p127 = por %p125, %p126
    %p128 = scmp.ne.s32.totalorder %s116, %s117
    %p129 = scmp.eq.s32.totalorder %s18, 1
    %p130 = por %p128, %p129
    %p132 = scmp.ne.s32.totalorder %s117, %s131
    %p133 = scmp.eq.s32.totalorder %s18, 0
    %p134 = por %p132, %p133
    %s136 = sadd.s32 %s135, 1
    %p139 = scmp.eq.s32.totalorder %s12, 1
    %p140 = scmp.ne.s32.totalorder %s135, %s137
    %p141 = scmp.eq.s32.totalorder %s12, 0
    %p142 = por %p140, %p141
    %p143 = scmp.ne.s32.totalorder %s135, %s137
    %p144 = scmp.eq.s32.totalorder %s17, 1
    %p145 = por %p143, %p144
    %p146 = scmp.ne.s32.totalorder %s137, %s138
    %p147 = scmp.eq.s32.totalorder %s17, 0
    %p148 = por %p146, %p147
    %p149 = scmp.ne.s32.totalorder %s137, %s138
    %p150 = scmp.eq.s32.totalorder %s18, 1
    %p151 = por %p149, %p150
    %p153 = scmp.ne.s32.totalorder %s138, %s152
    %p154 = scmp.eq.s32.totalorder %s18, 0
    %p155 = por %p153, %p154
    %s156 = ssub.s32 %s12, %s19
    %p157 = scmp.eq.s32.totalorder %s156, 0
    %s159 = sadd.s32 %s158, 1
    %s160 = scalar_select %p157, %s158, %s159
    %p163 = pneg %p157
    %p164 = scmp.eq.s32.totalorder %s12, 1
    %p165 = por %p163, %p164
    %p166 = scmp.ne.s32.totalorder %s158, %s161
    %p167 = scmp.eq.s32.totalorder %s12, 0
    %p168 = por %p166, %p167
    %p169 = scmp.ne.s32.totalorder %s158, %s161
    %p170 = scmp.eq.s32.totalorder %s17, 1
    %p171 = por %p169, %p170
    %p172 = scmp.ne.s32.totalorder %s161, %s162
    %p173 = scmp.eq.s32.totalorder %s17, 0
    %p174 = por %p172, %p173
    %p175 = scmp.ne.s32.totalorder %s161, %s162
    %p176 = scmp.eq.s32.totalorder %s18, 1
    %p177 = por %p175, %p176
    %p179 = scmp.ne.s32.totalorder %s162, %s178
    %p180 = scmp.eq.s32.totalorder %s18, 0
    %p181 = por %p179, %p180
    %p182 = scmp.le.s32.totalorder 1, %s12
    %p183 = scmp.lt.s32.totalorder %s12, 3
    %p184 = pnand %p182, %p183
    %p185 = pneg %p184
    // Predicated region
    $region9: #{bottleneck_forward.7} parent=5 // pred_check
      _
    $region10: #{bottleneck_forward.7} parent=5 // pred_check_branch
      %187 = sbr.rel (%p184) target = $region12
    $region11: #{bottleneck_forward.7} parent=5 // pred_region
      %s188 = ssub.s32 %s12, 1
      // Predicated region
      $region13: #{bottleneck_forward.7} parent=11 // pred_check
        %p189 = pneg %p59
      $region14: #{bottleneck_forward.7} parent=11 // pred_check_branch
        %191 = sbr.rel (%p189) target = $region16
      $region15: #{bottleneck_forward.7} parent=11 // pred_region
        _
      $region16: #{bottleneck_forward.7} parent=11 // pred_fallthru
        _
      // Predicated region
      $region17: #{bottleneck_forward.7} parent=11 // pred_check
        %p192 = pneg %p80
      $region18: #{bottleneck_forward.7} parent=11 // pred_check_branch
        %194 = sbr.rel (%p192) target = $region20
      $region19: #{bottleneck_forward.7} parent=11 // pred_region
        _
      $region20: #{bottleneck_forward.7} parent=11 // pred_fallthru
        _
      // Predicated region
      $region21: #{bottleneck_forward.7} parent=11 // pred_check
        %p195 = pneg %p127
      $region22: #{bottleneck_forward.7} parent=11 // pred_check_branch
        %197 = sbr.rel (%p195) target = $region24
      $region23: #{bottleneck_forward.7} parent=11 // pred_region
        _
      $region24: #{bottleneck_forward.7} parent=11 // pred_fallthru
        _
      // Predicated region
      $region25: #{bottleneck_forward.7} parent=11 // pred_check
        %p198 = pneg %p148
      $region26: #{bottleneck_forward.7} parent=11 // pred_check_branch
        %200 = sbr.rel (%p198) target = $region28
      $region27: #{bottleneck_forward.7} parent=11 // pred_region
        _
      $region28: #{bottleneck_forward.7} parent=11 // pred_fallthru
        _
    $region12: #{bottleneck_forward.7} parent=5 // pred_fallthru
      _
    %p201 = scmp.lt.s32.totalorder %s12, 2
    // Predicated region
    $region29: #{bottleneck_forward.7} parent=5 // pred_check
      %p202 = pneg %p201
    $region30: #{bottleneck_forward.7} parent=5 // pred_check_branch
      %204 = sbr.rel (%p202) target = $region32
    $region31: #{bottleneck_forward.7} parent=5 // pred_region
      // Predicated region
      $region33: #{bottleneck_forward.7} parent=31 // pred_check
        %p205 = pneg %p32
      $region34: #{bottleneck_forward.7} parent=31 // pred_check_branch
        %207 = sbr.rel (%p205) target = $region36
      $region35: #{bottleneck_forward.7} parent=31 // pred_region
        %s208 = smul.u32 32, %s12
        %p209 = scmp.lt.s32.totalorder %s208, 63
        %s210 = scalar_select %p209, %s208, 63
        %s211 = smul.addr %s210, 8
        %s212 = scalar_lea.vmem %s0, %s211
        %s213 = smul.u32 32, %s12
      $region36: #{bottleneck_forward.7} parent=31 // pred_fallthru
        _
      // Predicated region
      $region37: #{bottleneck_forward.7} parent=31 // pred_check
        %p214 = pneg %p100
      $region38: #{bottleneck_forward.7} parent=31 // pred_check_branch
        %216 = sbr.rel (%p214) target = $region40
      $region39: #{bottleneck_forward.7} parent=31 // pred_region
        %s217 = smul.u32 32, %s12
        %p218 = scmp.lt.s32.totalorder %s217, 63
        %s219 = scalar_select %p218, %s217, 63
        %s220 = smul.addr %s219, 8
        %s221 = scalar_lea.vmem %s3, %s220
        %s222 = smul.u32 32, %s12
      $region40: #{bottleneck_forward.7} parent=31 // pred_fallthru
        _
    $region32: #{bottleneck_forward.7} parent=5 // pred_fallthru
      _
    %p223 = scmp.le.s32.totalorder 1, %s12
    %p224 = scmp.lt.s32.totalorder %s12, 3
    %p225 = pnand %p223, %p224
    %p226 = pneg %p225
    // Predicated region
    $region41: #{bottleneck_forward.7} parent=5 // pred_check
      _
    $region42: #{bottleneck_forward.7} parent=5 // pred_check_branch
      %228 = sbr.rel (%p225) target = $region44
    $region43: #{bottleneck_forward.7} parent=5 // pred_region
      %s229 = ssub.s32 %s12, 1
      %s230 = smul.u32 32, %s17
      %p231 = scmp.lt.s32.totalorder %s230, 63
      %s232 = scalar_select %p231, %s230, 63
      %s233 = smul.addr %s232, 8
      %s234 = scalar_lea.vmem %s0, %s233
      %p235 = pneg %p38
      %p236 = pneg %p35
      %p237 = pneg %p59
      %p238 = pneg %p56
      %p239 = pneg %p80
      %p240 = pneg %p77
      %s241 = smul.u32 32, %s17
      %p242 = scmp.lt.s32.totalorder %s241, 63
      %s243 = scalar_select %p242, %s241, 63
      %s244 = smul.addr %s243, 8
      %s245 = scalar_lea.vmem %s3, %s244
      %p246 = pneg %p106
      %p247 = pneg %p103
      %p248 = pneg %p127
      %p249 = pneg %p124
      %p250 = pneg %p148
      %p251 = pneg %p145
      %p252 = pneg %p174
      %p253 = pneg %p171
      %s254 = smul.u32 32, %s17
      %p255 = scmp.lt.s32.totalorder %s254, 63
      %s256 = scalar_select %p255, %s254, 63
      %s257 = smul.addr %s256, 8
      %s258 = scalar_lea.vmem %s6, %s257
      %s259 = smul.u32 32, %s17
      %p260 = scmp.lt.s32.totalorder %s259, 63
      %s261 = scalar_select %p260, %s259, 63
      %s262 = smul.addr %s261, 8
      %s263 = scalar_lea.vmem %s0, %s262
      %s264 = smul.u32 32, %s17
      %s265 = smul.u32 32, %s17
      %p266 = scmp.lt.s32.totalorder %s265, 63
      %s267 = scalar_select %p266, %s265, 63
      %s268 = smul.addr %s267, 8
      %s269 = scalar_lea.vmem %s3, %s268
      %s270 = smul.u32 32, %s17
      %s271 = smul.u32 32, %s17
      %p272 = scmp.lt.s32.totalorder %s271, 63
      %s273 = scalar_select %p272, %s271, 63
      %s274 = smul.addr %s273, 8
      %s275 = scalar_lea.vmem %s6, %s274
      %s276 = smul.u32 32, %s17
      %v277 = vld [vmem:[%s269] sm:$0xff]
      %v278 = vld [vmem:[%s269 + $0x8] sm:$0xff]
      %v279 = vld [vmem:[%s269 + $0x10] sm:$0xff]
      %v280 = vld [vmem:[%s269 + $0x18] sm:$0xff]
      %v281 = vld [vmem:[%s269 + $0x20] sm:$0xff]
      %v282 = vld [vmem:[%s269 + $0x28] sm:$0xff]
      %v283 = vld [vmem:[%s269 + $0x30] sm:$0xff]
      %v284 = vld [vmem:[%s269 + $0x38] sm:$0xff]
      %v285 = vld [vmem:[%s269 + $0x40] sm:$0xff]
      %v286 = vld [vmem:[%s269 + $0x48] sm:$0xff]
      %v287 = vld [vmem:[%s269 + $0x50] sm:$0xff]
      %v288 = vld [vmem:[%s269 + $0x58] sm:$0xff]
      %v289 = vld [vmem:[%s269 + $0x60] sm:$0xff]
      %v290 = vld [vmem:[%s269 + $0x68] sm:$0xff]
      %v291 = vld [vmem:[%s269 + $0x70] sm:$0xff]
      %v292 = vld [vmem:[%s269 + $0x78] sm:$0xff]
      %v293 = vld [vmem:[%s269 + $0x80] sm:$0xff]
      %v294 = vld [vmem:[%s269 + $0x88] sm:$0xff]
      %v295 = vld [vmem:[%s269 + $0x90] sm:$0xff]
      %v296 = vld [vmem:[%s269 + $0x98] sm:$0xff]
      %v297 = vld [vmem:[%s269 + $0xa0] sm:$0xff]
      %v298 = vld [vmem:[%s269 + $0xa8] sm:$0xff]
      %v299 = vld [vmem:[%s269 + $0xb0] sm:$0xff]
      %v300 = vld [vmem:[%s269 + $0xb8] sm:$0xff]
      %v301 = vld [vmem:[%s269 + $0xc0] sm:$0xff]
      %v302 = vld [vmem:[%s269 + $0xc8] sm:$0xff]
      %v303 = vld [vmem:[%s269 + $0xd0] sm:$0xff]
      %v304 = vld [vmem:[%s269 + $0xd8] sm:$0xff]
      %v305 = vld [vmem:[%s269 + $0xe0] sm:$0xff]
      %v306 = vld [vmem:[%s269 + $0xe8] sm:$0xff]
      %v307 = vld [vmem:[%s269 + $0xf0] sm:$0xff]
      %v308 = vld [vmem:[%s269 + $0xf8] sm:$0xff]
      %v309 = vld [vmem:[%s4] sm:$0x1]
      %v311 = vlaneseq
      %v312 = vshrl.u32 %v311, 7
      %v313 = vsub.s32 0, %v312
      %v314 = vrot.slane %v309, %v313
      %v316 = vmul.f32 %v277, %v314
      %v317 = vmul.f32 %v278, %v314
      %v318 = vmul.f32 %v279, %v314
      %v319 = vmul.f32 %v280, %v314
      %v320 = vmul.f32 %v281, %v314
      %v321 = vmul.f32 %v282, %v314
      %v322 = vmul.f32 %v283, %v314
      %v323 = vmul.f32 %v284, %v314
      %v324 = vmul.f32 %v285, %v314
      %v325 = vmul.f32 %v286, %v314
      %v326 = vmul.f32 %v287, %v314
      %v327 = vmul.f32 %v288, %v314
      %v328 = vmul.f32 %v289, %v314
      %v329 = vmul.f32 %v290, %v314
      %v330 = vmul.f32 %v291, %v314
      %v331 = vmul.f32 %v292, %v314
      %v332 = vmul.f32 %v293, %v314
      %v333 = vmul.f32 %v294, %v314
      %v334 = vmul.f32 %v295, %v314
      %v335 = vmul.f32 %v296, %v314
      %v336 = vmul.f32 %v297, %v314
      %v337 = vmul.f32 %v298, %v314
      %v338 = vmul.f32 %v299, %v314
      %v339 = vmul.f32 %v300, %v314
      %v340 = vmul.f32 %v301, %v314
      %v341 = vmul.f32 %v302, %v314
      %v342 = vmul.f32 %v303, %v314
      %v343 = vmul.f32 %v304, %v314
      %v344 = vmul.f32 %v305, %v314
      %v345 = vmul.f32 %v306, %v314
      %v346 = vmul.f32 %v307, %v314
      %v347 = vmul.f32 %v308, %v314
      %v348 = vld [vmem:[%s5] sm:$0x1]
      %v350 = vlaneseq
      %v351 = vshrl.u32 %v350, 7
      %v352 = vsub.s32 0, %v351
      %v353 = vrot.slane %v348, %v352
      %v355 = vadd.f32 %v316, %v353
      %v356 = vadd.f32 %v317, %v353
      %v357 = vadd.f32 %v318, %v353
      %v358 = vadd.f32 %v319, %v353
      %v359 = vadd.f32 %v320, %v353
      %v360 = vadd.f32 %v321, %v353
      %v361 = vadd.f32 %v322, %v353
      %v362 = vadd.f32 %v323, %v353
      %v363 = vadd.f32 %v324, %v353
      %v364 = vadd.f32 %v325, %v353
      %v365 = vadd.f32 %v326, %v353
      %v366 = vadd.f32 %v327, %v353
      %v367 = vadd.f32 %v328, %v353
      %v368 = vadd.f32 %v329, %v353
      %v369 = vadd.f32 %v330, %v353
      %v370 = vadd.f32 %v331, %v353
      %v371 = vadd.f32 %v332, %v353
      %v372 = vadd.f32 %v333, %v353
      %v373 = vadd.f32 %v334, %v353
      %v374 = vadd.f32 %v335, %v353
      %v375 = vadd.f32 %v336, %v353
      %v376 = vadd.f32 %v337, %v353
      %v377 = vadd.f32 %v338, %v353
      %v378 = vadd.f32 %v339, %v353
      %v379 = vadd.f32 %v340, %v353
      %v380 = vadd.f32 %v341, %v353
      %v381 = vadd.f32 %v342, %v353
      %v382 = vadd.f32 %v343, %v353
      %v383 = vadd.f32 %v344, %v353
      %v384 = vadd.f32 %v345, %v353
      %v385 = vadd.f32 %v346, %v353
      %v386 = vadd.f32 %v347, %v353
      %v387 = vld [vmem:[%s263] sm:$0xff]
      %v388 = vld [vmem:[%s263 + $0x8] sm:$0xff]
      %v389 = vld [vmem:[%s263 + $0x10] sm:$0xff]
      %v390 = vld [vmem:[%s263 + $0x18] sm:$0xff]
      %v391 = vld [vmem:[%s263 + $0x20] sm:$0xff]
      %v392 = vld [vmem:[%s263 + $0x28] sm:$0xff]
      %v393 = vld [vmem:[%s263 + $0x30] sm:$0xff]
      %v394 = vld [vmem:[%s263 + $0x38] sm:$0xff]
      %v395 = vld [vmem:[%s263 + $0x40] sm:$0xff]
      %v396 = vld [vmem:[%s263 + $0x48] sm:$0xff]
      %v397 = vld [vmem:[%s263 + $0x50] sm:$0xff]
      %v398 = vld [vmem:[%s263 + $0x58] sm:$0xff]
      %v399 = vld [vmem:[%s263 + $0x60] sm:$0xff]
      %v400 = vld [vmem:[%s263 + $0x68] sm:$0xff]
      %v401 = vld [vmem:[%s263 + $0x70] sm:$0xff]
      %v402 = vld [vmem:[%s263 + $0x78] sm:$0xff]
      %v403 = vld [vmem:[%s263 + $0x80] sm:$0xff]
      %v404 = vld [vmem:[%s263 + $0x88] sm:$0xff]
      %v405 = vld [vmem:[%s263 + $0x90] sm:$0xff]
      %v406 = vld [vmem:[%s263 + $0x98] sm:$0xff]
      %v407 = vld [vmem:[%s263 + $0xa0] sm:$0xff]
      %v408 = vld [vmem:[%s263 + $0xa8] sm:$0xff]
      %v409 = vld [vmem:[%s263 + $0xb0] sm:$0xff]
      %v410 = vld [vmem:[%s263 + $0xb8] sm:$0xff]
      %v411 = vld [vmem:[%s263 + $0xc0] sm:$0xff]
      %v412 = vld [vmem:[%s263 + $0xc8] sm:$0xff]
      %v413 = vld [vmem:[%s263 + $0xd0] sm:$0xff]
      %v414 = vld [vmem:[%s263 + $0xd8] sm:$0xff]
      %v415 = vld [vmem:[%s263 + $0xe0] sm:$0xff]
      %v416 = vld [vmem:[%s263 + $0xe8] sm:$0xff]
      %v417 = vld [vmem:[%s263 + $0xf0] sm:$0xff]
      %v418 = vld [vmem:[%s263 + $0xf8] sm:$0xff]
      %v419 = vld [vmem:[%s1] sm:$0x1]
      %v421 = vlaneseq
      %v422 = vshrl.u32 %v421, 7
      %v423 = vsub.s32 0, %v422
      %v424 = vrot.slane %v419, %v423
      %v426 = vmul.f32 %v387, %v424
      %v427 = vmul.f32 %v388, %v424
      %v428 = vmul.f32 %v389, %v424
      %v429 = vmul.f32 %v390, %v424
      %v430 = vmul.f32 %v391, %v424
      %v431 = vmul.f32 %v392, %v424
      %v432 = vmul.f32 %v393, %v424
      %v433 = vmul.f32 %v394, %v424
      %v434 = vmul.f32 %v395, %v424
      %v435 = vmul.f32 %v396, %v424
      %v436 = vmul.f32 %v397, %v424
      %v437 = vmul.f32 %v398, %v424
      %v438 = vmul.f32 %v399, %v424
      %v439 = vmul.f32 %v400, %v424
      %v440 = vmul.f32 %v401, %v424
      %v441 = vmul.f32 %v402, %v424
      %v442 = vmul.f32 %v403, %v424
      %v443 = vmul.f32 %v404, %v424
      %v444 = vmul.f32 %v405, %v424
      %v445 = vmul.f32 %v406, %v424
      %v446 = vmul.f32 %v407, %v424
      %v447 = vmul.f32 %v408, %v424
      %v448 = vmul.f32 %v409, %v424
      %v449 = vmul.f32 %v410, %v424
      %v450 = vmul.f32 %v411, %v424
      %v451 = vmul.f32 %v412, %v424
      %v452 = vmul.f32 %v413, %v424
      %v453 = vmul.f32 %v414, %v424
      %v454 = vmul.f32 %v415, %v424
      %v455 = vmul.f32 %v416, %v424
      %v456 = vmul.f32 %v417, %v424
      %v457 = vmul.f32 %v418, %v424
      %v458 = vld [vmem:[%s2] sm:$0x1]
      %v460 = vlaneseq
      %v461 = vshrl.u32 %v460, 7
      %v462 = vsub.s32 0, %v461
      %v463 = vrot.slane %v458, %v462
      %v465 = vadd.f32 %v426, %v463
      %v466 = vadd.f32 %v427, %v463
      %v467 = vadd.f32 %v428, %v463
      %v468 = vadd.f32 %v429, %v463
      %v469 = vadd.f32 %v430, %v463
      %v470 = vadd.f32 %v431, %v463
      %v471 = vadd.f32 %v432, %v463
      %v472 = vadd.f32 %v433, %v463
      %v473 = vadd.f32 %v434, %v463
      %v474 = vadd.f32 %v435, %v463
      %v475 = vadd.f32 %v436, %v463
      %v476 = vadd.f32 %v437, %v463
      %v477 = vadd.f32 %v438, %v463
      %v478 = vadd.f32 %v439, %v463
      %v479 = vadd.f32 %v440, %v463
      %v480 = vadd.f32 %v441, %v463
      %v481 = vadd.f32 %v442, %v463
      %v482 = vadd.f32 %v443, %v463
      %v483 = vadd.f32 %v444, %v463
      %v484 = vadd.f32 %v445, %v463
      %v485 = vadd.f32 %v446, %v463
      %v486 = vadd.f32 %v447, %v463
      %v487 = vadd.f32 %v448, %v463
      %v488 = vadd.f32 %v449, %v463
      %v489 = vadd.f32 %v450, %v463
      %v490 = vadd.f32 %v451, %v463
      %v491 = vadd.f32 %v452, %v463
      %v492 = vadd.f32 %v453, %v463
      %v493 = vadd.f32 %v454, %v463
      %v494 = vadd.f32 %v455, %v463
      %v495 = vadd.f32 %v456, %v463
      %v496 = vadd.f32 %v457, %v463
      %v497 = vadd.f32 %v465, %v355
      %v498 = vadd.f32 %v466, %v356
      %v499 = vadd.f32 %v467, %v357
      %v500 = vadd.f32 %v468, %v358
      %v501 = vadd.f32 %v469, %v359
      %v502 = vadd.f32 %v470, %v360
      %v503 = vadd.f32 %v471, %v361
      %v504 = vadd.f32 %v472, %v362
      %v505 = vadd.f32 %v473, %v363
      %v506 = vadd.f32 %v474, %v364
      %v507 = vadd.f32 %v475, %v365
      %v508 = vadd.f32 %v476, %v366
      %v509 = vadd.f32 %v477, %v367
      %v510 = vadd.f32 %v478, %v368
      %v511 = vadd.f32 %v479, %v369
      %v512 = vadd.f32 %v480, %v370
      %v513 = vadd.f32 %v481, %v371
      %v514 = vadd.f32 %v482, %v372
      %v515 = vadd.f32 %v483, %v373
      %v516 = vadd.f32 %v484, %v374
      %v517 = vadd.f32 %v485, %v375
      %v518 = vadd.f32 %v486, %v376
      %v519 = vadd.f32 %v487, %v377
      %v520 = vadd.f32 %v488, %v378
      %v521 = vadd.f32 %v489, %v379
      %v522 = vadd.f32 %v490, %v380
      %v523 = vadd.f32 %v491, %v381
      %v524 = vadd.f32 %v492, %v382
      %v525 = vadd.f32 %v493, %v383
      %v526 = vadd.f32 %v494, %v384
      %v527 = vadd.f32 %v495, %v385
      %v528 = vadd.f32 %v496, %v386
      %v529 = vmax.f32 %v497, 0.0
      %v530 = vmax.f32 %v498, 0.0
      %v531 = vmax.f32 %v499, 0.0
      %v532 = vmax.f32 %v500, 0.0
      %v533 = vmax.f32 %v501, 0.0
      %v534 = vmax.f32 %v502, 0.0
      %v535 = vmax.f32 %v503, 0.0
      %v536 = vmax.f32 %v504, 0.0
      %v537 = vmax.f32 %v505, 0.0
      %v538 = vmax.f32 %v506, 0.0
      %v539 = vmax.f32 %v507, 0.0
      %v540 = vmax.f32 %v508, 0.0
      %v541 = vmax.f32 %v509, 0.0
      %v542 = vmax.f32 %v510, 0.0
      %v543 = vmax.f32 %v511, 0.0
      %v544 = vmax.f32 %v512, 0.0
      %v545 = vmax.f32 %v513, 0.0
      %v546 = vmax.f32 %v514, 0.0
      %v547 = vmax.f32 %v515, 0.0
      %v548 = vmax.f32 %v516, 0.0
      %v549 = vmax.f32 %v517, 0.0
      %v550 = vmax.f32 %v518, 0.0
      %v551 = vmax.f32 %v519, 0.0
      %v552 = vmax.f32 %v520, 0.0
      %v553 = vmax.f32 %v521, 0.0
      %v554 = vmax.f32 %v522, 0.0
      %v555 = vmax.f32 %v523, 0.0
      %v556 = vmax.f32 %v524, 0.0
      %v557 = vmax.f32 %v525, 0.0
      %v558 = vmax.f32 %v526, 0.0
      %v559 = vmax.f32 %v527, 0.0
      %v560 = vmax.f32 %v528, 0.0
      %561 = vst [vmem:[%s275] sm:$0xff] %v529
      %562 = vst [vmem:[%s275 + $0x8] sm:$0xff] %v530
      %563 = vst [vmem:[%s275 + $0x10] sm:$0xff] %v531
      %564 = vst [vmem:[%s275 + $0x18] sm:$0xff] %v532
      %565 = vst [vmem:[%s275 + $0x20] sm:$0xff] %v533
      %566 = vst [vmem:[%s275 + $0x28] sm:$0xff] %v534
      %567 = vst [vmem:[%s275 + $0x30] sm:$0xff] %v535
      %568 = vst [vmem:[%s275 + $0x38] sm:$0xff] %v536
      %569 = vst [vmem:[%s275 + $0x40] sm:$0xff] %v537
      %570 = vst [vmem:[%s275 + $0x48] sm:$0xff] %v538
      %571 = vst [vmem:[%s275 + $0x50] sm:$0xff] %v539
      %572 = vst [vmem:[%s275 + $0x58] sm:$0xff] %v540
      %573 = vst [vmem:[%s275 + $0x60] sm:$0xff] %v541
      %574 = vst [vmem:[%s275 + $0x68] sm:$0xff] %v542
      %575 = vst [vmem:[%s275 + $0x70] sm:$0xff] %v543
      %576 = vst [vmem:[%s275 + $0x78] sm:$0xff] %v544
      %577 = vst [vmem:[%s275 + $0x80] sm:$0xff] %v545
      %578 = vst [vmem:[%s275 + $0x88] sm:$0xff] %v546
      %579 = vst [vmem:[%s275 + $0x90] sm:$0xff] %v547
      %580 = vst [vmem:[%s275 + $0x98] sm:$0xff] %v548
      %581 = vst [vmem:[%s275 + $0xa0] sm:$0xff] %v549
      %582 = vst [vmem:[%s275 + $0xa8] sm:$0xff] %v550
      %583 = vst [vmem:[%s275 + $0xb0] sm:$0xff] %v551
      %584 = vst [vmem:[%s275 + $0xb8] sm:$0xff] %v552
      %585 = vst [vmem:[%s275 + $0xc0] sm:$0xff] %v553
      %586 = vst [vmem:[%s275 + $0xc8] sm:$0xff] %v554
      %587 = vst [vmem:[%s275 + $0xd0] sm:$0xff] %v555
      %588 = vst [vmem:[%s275 + $0xd8] sm:$0xff] %v556
      %589 = vst [vmem:[%s275 + $0xe0] sm:$0xff] %v557
      %590 = vst [vmem:[%s275 + $0xe8] sm:$0xff] %v558
      %591 = vst [vmem:[%s275 + $0xf0] sm:$0xff] %v559
      %592 = vst [vmem:[%s275 + $0xf8] sm:$0xff] %v560
      %s593 = smul.u32 32, %s17
      %p594 = scmp.lt.s32.totalorder %s593, 63
      %s595 = scalar_select %p594, %s593, 63
      %s596 = smul.addr %s595, 8
      %s597 = scalar_lea.vmem %s6, %s596
      // Predicated region
      $region45: #{bottleneck_forward.7} parent=43 // pred_check
        %p598 = pneg %p171
      $region46: #{bottleneck_forward.7} parent=43 // pred_check_branch
        %600 = sbr.rel (%p598) target = $region48
      $region47: #{bottleneck_forward.7} parent=43 // pred_region
        %s601 = smul.u32 32, %s17
      $region48: #{bottleneck_forward.7} parent=43 // pred_fallthru
        _
    $region44: #{bottleneck_forward.7} parent=5 // pred_fallthru
      _
    %p602 = scmp.le.s32.totalorder 2, %s12
    // Predicated region
    $region49: #{bottleneck_forward.7} parent=5 // pred_check
      %p603 = pneg %p602
    $region50: #{bottleneck_forward.7} parent=5 // pred_check_branch
      %605 = sbr.rel (%p603) target = $region52
    $region51: #{bottleneck_forward.7} parent=5 // pred_region
      %s606 = ssub.s32 %s12, 2
      // Predicated region
      $region53: #{bottleneck_forward.7} parent=51 // pred_check
        %p607 = pneg %p177
      $region54: #{bottleneck_forward.7} parent=51 // pred_check_branch
        %609 = sbr.rel (%p607) target = $region56
      $region55: #{bottleneck_forward.7} parent=51 // pred_region
        %s610 = smul.u32 32, %s18
        %p611 = scmp.lt.s32.totalorder %s610, 63
        %s612 = scalar_select %p611, %s610, 63
        %s613 = smul.addr %s612, 8
        %s614 = scalar_lea.vmem %s6, %s613
      $region56: #{bottleneck_forward.7} parent=51 // pred_fallthru
        _
    $region52: #{bottleneck_forward.7} parent=5 // pred_fallthru
      _
  $region6: #{bottleneck_forward.7} parent=0 // loop_footer
    %s16 = sadd.s32 1, %s12
  $region7: #{bottleneck_forward.7} parent=0 // loop_footer_branch
    %11 = sbr.rel target = $region3
  $region8: #{bottleneck_forward.7} parent=0 // loop_exit
    _

// kernel: bottleneck_forward.6
$region0: #{bottleneck_forward.6}
  #allocation0 [shape = 'u32[]', space=smem, size = 0x4, offset = 0x4, fixed_abs, tag = 'smem constant byte address 0x4 - core index']
  #allocation1 [shape = 'u32[144,128]{1,0:T(1,128)}', space=vmem, size = 0x12000, scoped, tag = 'internal scratch']
  %s0 = inlined_call_operand.vmem [shape: f32[512,128], index: 0, kind: input, shape index: {}]
  %s1 = inlined_call_operand.vmem [shape: f32[1,128], index: 1, kind: input, shape index: {}]
  %s2 = inlined_call_operand.vmem [shape: f32[1,128], index: 2, kind: input, shape index: {}]
  %s3 = inlined_call_operand.vmem [shape: f32[128,128], index: 3, kind: input, shape index: {}]
  %s4 = inlined_call_operand.vmem [shape: f32[512,128], index: 4, kind: output, shape index: {0}]
  %s5 = inlined_call_operand.vmem [shape: f32[2,1,128], index: 5, kind: output, shape index: {1}]
  %s6 = inlined_call_operand.vmem [shape: f32[2,1,128], index: 6, kind: output, shape index: {2}]
  %7 = xla_tuple %s4, %s5, %s6
  %s8 = sld [smem:[#allocation0]]
  $region65: #{bottleneck_forward.6} parent=0
    _
  %s10 = ssub.s32 1, %s8
  %s11 = scalar_select 0, %s10, %s8
  loop: start=0, step=1, limit=4
  $region2: #{bottleneck_forward.6} parent=0 // loop_pre_header
    _
  $region3: #{bottleneck_forward.6} parent=0 // loop_header
    %s13 = sphi 0, %s17
    %p14 = scmp.ge.s32.totalorder %s13, 4
    %s23 = sphi 0, %s25
    %s26 = sphi 0, %s23
    %s27 = sphi 0, %s26
    %s43 = sphi 0, %s27
    %s47 = sphi 0, %s47
    %s49 = sphi 0, %s47
    %s50 = sphi 0, %s49
    %s64 = sphi 0, %s50
    %s68 = sphi 0, %s68
    %s70 = sphi 0, %s68
    %s71 = sphi 0, %s70
    %s85 = sphi 0, %s71
    %s89 = sphi 0, %s89
    %s91 = sphi 0, %s89
    %s92 = sphi 0, %s91
    %s106 = sphi 0, %s92
    %s112 = sphi 0, %s114
    %s115 = sphi 0, %s112
    %s116 = sphi 0, %s115
    %s132 = sphi 0, %s116
    %s138 = sphi 0, %s140
    %s141 = sphi 0, %s138
    %s142 = sphi 0, %s141
    %s158 = sphi 0, %s142
    %s164 = sphi 0, %s166
    %s167 = sphi 0, %s164
    %s168 = sphi 0, %s167
    %s184 = sphi 0, %s168
  $region4: #{bottleneck_forward.6} parent=0 // loop_header_branch
    %16 = sbr.rel (%p14) target = $region8
  $region5: #{bottleneck_forward.6} parent=0 // loop_body
    %s18 = ssub.s32 %s13, 1
    %s19 = ssub.s32 %s13, 2
    %s20 = sadd.s32 %s13, 1
    %s21 = ssub.s32 %s13, %s20
    %p22 = scmp.eq.s32.totalorder %s21, 0
    %s24 = sadd.s32 %s23, 1
    %s25 = scalar_select %p22, %s23, %s24
    %p28 = pneg %p22
    %p29 = scmp.eq.s32.totalorder %s13, 1
    %p30 = por %p28, %p29
    %p31 = scmp.ne.s32.totalorder %s23, %s26
    %p32 = scmp.eq.s32.totalorder %s13, 0
    %p33 = por %p31, %p32
    %p34 = scmp.ne.s32.totalorder %s23, %s26
    %p35 = scmp.eq.s32.totalorder %s18, 1
    %p36 = por %p34, %p35
    %p37 = scmp.ne.s32.totalorder %s26, %s27
    %p38 = scmp.eq.s32.totalorder %s18, 0
    %p39 = por %p37, %p38
    %p40 = scmp.ne.s32.totalorder %s26, %s27
    %p41 = scmp.eq.s32.totalorder %s19, 1
    %p42 = por %p40, %p41
    %p44 = scmp.ne.s32.totalorder %s27, %s43
    %p45 = scmp.eq.s32.totalorder %s19, 0
    %p46 = por %p44, %p45
    %s48 = sadd.s32 %s47, 1
    %p51 = scmp.eq.s32.totalorder %s13, 1
    %p52 = scmp.ne.s32.totalorder %s47, %s49
    %p53 = scmp.eq.s32.totalorder %s13, 0
    %p54 = por %p52, %p53
    %p55 = scmp.ne.s32.totalorder %s47, %s49
    %p56 = scmp.eq.s32.totalorder %s18, 1
    %p57 = por %p55, %p56
    %p58 = scmp.ne.s32.totalorder %s49, %s50
    %p59 = scmp.eq.s32.totalorder %s18, 0
    %p60 = por %p58, %p59
    %p61 = scmp.ne.s32.totalorder %s49, %s50
    %p62 = scmp.eq.s32.totalorder %s19, 1
    %p63 = por %p61, %p62
    %p65 = scmp.ne.s32.totalorder %s50, %s64
    %p66 = scmp.eq.s32.totalorder %s19, 0
    %p67 = por %p65, %p66
    %s69 = sadd.s32 %s68, 1
    %p72 = scmp.eq.s32.totalorder %s13, 1
    %p73 = scmp.ne.s32.totalorder %s68, %s70
    %p74 = scmp.eq.s32.totalorder %s13, 0
    %p75 = por %p73, %p74
    %p76 = scmp.ne.s32.totalorder %s68, %s70
    %p77 = scmp.eq.s32.totalorder %s18, 1
    %p78 = por %p76, %p77
    %p79 = scmp.ne.s32.totalorder %s70, %s71
    %p80 = scmp.eq.s32.totalorder %s18, 0
    %p81 = por %p79, %p80
    %p82 = scmp.ne.s32.totalorder %s70, %s71
    %p83 = scmp.eq.s32.totalorder %s19, 1
    %p84 = por %p82, %p83
    %p86 = scmp.ne.s32.totalorder %s71, %s85
    %p87 = scmp.eq.s32.totalorder %s19, 0
    %p88 = por %p86, %p87
    %s90 = sadd.s32 %s89, 1
    %p93 = scmp.eq.s32.totalorder %s13, 1
    %p94 = scmp.ne.s32.totalorder %s89, %s91
    %p95 = scmp.eq.s32.totalorder %s13, 0
    %p96 = por %p94, %p95
    %p97 = scmp.ne.s32.totalorder %s89, %s91
    %p98 = scmp.eq.s32.totalorder %s18, 1
    %p99 = por %p97, %p98
    %p100 = scmp.ne.s32.totalorder %s91, %s92
    %p101 = scmp.eq.s32.totalorder %s18, 0
    %p102 = por %p100, %p101
    %p103 = scmp.ne.s32.totalorder %s91, %s92
    %p104 = scmp.eq.s32.totalorder %s19, 1
    %p105 = por %p103, %p104
    %p107 = scmp.ne.s32.totalorder %s92, %s106
    %p108 = scmp.eq.s32.totalorder %s19, 0
    %p109 = por %p107, %p108
    %s110 = ssub.s32 %s13, %s20
    %p111 = scmp.eq.s32.totalorder %s110, 0
    %s113 = sadd.s32 %s112, 1
    %s114 = scalar_select %p111, %s112, %s113
    %p117 = pneg %p111
    %p118 = scmp.eq.s32.totalorder %s13, 1
    %p119 = por %p117, %p118
    %p120 = scmp.ne.s32.totalorder %s112, %s115
    %p121 = scmp.eq.s32.totalorder %s13, 0
    %p122 = por %p120, %p121
    %p123 = scmp.ne.s32.totalorder %s112, %s115
    %p124 = scmp.eq.s32.totalorder %s18, 1
    %p125 = por %p123, %p124
    %p126 = scmp.ne.s32.totalorder %s115, %s116
    %p127 = scmp.eq.s32.totalorder %s18, 0
    %p128 = por %p126, %p127
    %p129 = scmp.ne.s32.totalorder %s115, %s116
    %p130 = scmp.eq.s32.totalorder %s19, 1
    %p131 = por %p129, %p130
    %p133 = scmp.ne.s32.totalorder %s116, %s132
    %p134 = scmp.eq.s32.totalorder %s19, 0
    %p135 = por %p133, %p134
    %s136 = ssub.s32 %s13, %s20
    %p137 = scmp.eq.s32.totalorder %s136, 0
    %s139 = sadd.s32 %s138, 1
    %s140 = scalar_select %p137, %s138, %s139
    %p143 = pneg %p137
    %p144 = scmp.eq.s32.totalorder %s13, 1
    %p145 = por %p143, %p144
    %p146 = scmp.ne.s32.totalorder %s138, %s141
    %p147 = scmp.eq.s32.totalorder %s13, 0
    %p148 = por %p146, %p147
    %p149 = scmp.ne.s32.totalorder %s138, %s141
    %p150 = scmp.eq.s32.totalorder %s18, 1
    %p151 = por %p149, %p150
    %p152 = scmp.ne.s32.totalorder %s141, %s142
    %p153 = scmp.eq.s32.totalorder %s18, 0
    %p154 = por %p152, %p153
    %p155 = scmp.ne.s32.totalorder %s141, %s142
    %p156 = scmp.eq.s32.totalorder %s19, 1
    %p157 = por %p155, %p156
    %p159 = scmp.ne.s32.totalorder %s142, %s158
    %p160 = scmp.eq.s32.totalorder %s19, 0
    %p161 = por %p159, %p160
    %s162 = ssub.s32 %s13, %s20
    %p163 = scmp.eq.s32.totalorder %s162, 0
    %s165 = sadd.s32 %s164, 1
    %s166 = scalar_select %p163, %s164, %s165
    %p169 = pneg %p163
    %p170 = scmp.eq.s32.totalorder %s13, 1
    %p171 = por %p169, %p170
    %p172 = scmp.ne.s32.totalorder %s164, %s167
    %p173 = scmp.eq.s32.totalorder %s13, 0
    %p174 = por %p172, %p173
    %p175 = scmp.ne.s32.totalorder %s164, %s167
    %p176 = scmp.eq.s32.totalorder %s18, 1
    %p177 = por %p175, %p176
    %p178 = scmp.ne.s32.totalorder %s167, %s168
    %p179 = scmp.eq.s32.totalorder %s18, 0
    %p180 = por %p178, %p179
    %p181 = scmp.ne.s32.totalorder %s167, %s168
    %p182 = scmp.eq.s32.totalorder %s19, 1
    %p183 = por %p181, %p182
    %p185 = scmp.ne.s32.totalorder %s168, %s184
    %p186 = scmp.eq.s32.totalorder %s19, 0
    %p187 = por %p185, %p186
    %p188 = scmp.le.s32.totalorder 1, %s13
    %p189 = scmp.lt.s32.totalorder %s13, 3
    %p190 = pnand %p188, %p189
    %p191 = pneg %p190
    // Predicated region
    $region9: #{bottleneck_forward.6} parent=5 // pred_check
      _
    $region10: #{bottleneck_forward.6} parent=5 // pred_check_branch
      %193 = sbr.rel (%p190) target = $region12
    $region11: #{bottleneck_forward.6} parent=5 // pred_region
      %s194 = ssub.s32 %s13, 1
      // Predicated region
      $region13: #{bottleneck_forward.6} parent=11 // pred_check
        %p195 = pneg %p60
      $region14: #{bottleneck_forward.6} parent=11 // pred_check_branch
        %197 = sbr.rel (%p195) target = $region16
      $region15: #{bottleneck_forward.6} parent=11 // pred_region
        _
      $region16: #{bottleneck_forward.6} parent=11 // pred_fallthru
        _
      // Predicated region
      $region17: #{bottleneck_forward.6} parent=11 // pred_check
        %p198 = pneg %p81
      $region18: #{bottleneck_forward.6} parent=11 // pred_check_branch
        %200 = sbr.rel (%p198) target = $region20
      $region19: #{bottleneck_forward.6} parent=11 // pred_region
        _
      $region20: #{bottleneck_forward.6} parent=11 // pred_fallthru
        _
      // Predicated region
      $region21: #{bottleneck_forward.6} parent=11 // pred_check
        %p201 = pneg %p102
      $region22: #{bottleneck_forward.6} parent=11 // pred_check_branch
        %203 = sbr.rel (%p201) target = $region24
      $region23: #{bottleneck_forward.6} parent=11 // pred_region
        _
      $region24: #{bottleneck_forward.6} parent=11 // pred_fallthru
        _
    $region12: #{bottleneck_forward.6} parent=5 // pred_fallthru
      _
    %p204 = scmp.lt.s32.totalorder %s13, 2
    // Predicated region
    $region25: #{bottleneck_forward.6} parent=5 // pred_check
      %p205 = pneg %p204
    $region26: #{bottleneck_forward.6} parent=5 // pred_check_branch
      %207 = sbr.rel (%p205) target = $region28
    $region27: #{bottleneck_forward.6} parent=5 // pred_region
      // Predicated region
      $region29: #{bottleneck_forward.6} parent=27 // pred_check
        %p208 = pneg %p33
      $region30: #{bottleneck_forward.6} parent=27 // pred_check_branch
        %210 = sbr.rel (%p208) target = $region32
      $region31: #{bottleneck_forward.6} parent=27 // pred_region
        %s211 = smul.u32 32, %s13
        %p212 = scmp.lt.s32.totalorder %s211, 63
        %s213 = scalar_select %p212, %s211, 63
        %s214 = smul.addr %s213, 8
        %s215 = scalar_lea.vmem %s0, %s214
        %s216 = smul.u32 32, %s13
      $region32: #{bottleneck_forward.6} parent=27 // pred_fallthru
        _
    $region28: #{bottleneck_forward.6} parent=5 // pred_fallthru
      _
    %p217 = scmp.le.s32.totalorder 1, %s13
    %p218 = scmp.lt.s32.totalorder %s13, 3
    %p219 = pnand %p217, %p218
    %p220 = pneg %p219
    // Predicated region
    $region33: #{bottleneck_forward.6} parent=5 // pred_check
      _
    $region34: #{bottleneck_forward.6} parent=5 // pred_check_branch
      %222 = sbr.rel (%p219) target = $region36
    $region35: #{bottleneck_forward.6} parent=5 // pred_region
      %s223 = ssub.s32 %s13, 1
      %s224 = smul.u32 32, %s18
      %p225 = scmp.lt.s32.totalorder %s224, 63
      %s226 = scalar_select %p225, %s224, 63
      %s227 = smul.addr %s226, 8
      %s228 = scalar_lea.vmem %s0, %s227
      %p229 = pneg %p39
      %p230 = pneg %p36
      %p231 = pneg %p60
      %p232 = pneg %p57
      %p233 = pneg %p81
      %p234 = pneg %p78
      %p235 = pneg %p102
      %p236 = pneg %p99
      %p237 = pneg %p128
      %p238 = pneg %p125
      %s239 = smul.u32 32, %s18
      %p240 = scmp.lt.s32.totalorder %s239, 63
      %s241 = scalar_select %p240, %s239, 63
      %s242 = smul.addr %s241, 8
      %s243 = scalar_lea.vmem %s4, %s242
      %p244 = pneg %p154
      %p245 = pneg %p151
      %p246 = scmp.lt.s32.totalorder %s18, 1
      %s247 = scalar_select %p246, %s18, 1
      %s248 = scalar_lea.vmem %s5, %s247
      %p249 = pneg %p180
      %p250 = pneg %p177
      %p251 = scmp.lt.s32.totalorder %s18, 1
      %s252 = scalar_select %p251, %s18, 1
      %s253 = scalar_lea.vmem %s6, %s252
      %s254 = smul.u32 32, %s18
      %p255 = scmp.lt.s32.totalorder %s254, 63
      %s256 = scalar_select %p255, %s254, 63
      %s257 = smul.addr %s256, 8
      %s258 = scalar_lea.vmem %s0, %s257
      %s259 = smul.u32 32, %s18
      %s260 = smul.u32 32, %s18
      %p261 = scmp.lt.s32.totalorder %s260, 63
      %s262 = scalar_select %p261, %s260, 63
      %s263 = smul.addr %s262, 8
      %s264 = scalar_lea.vmem %s4, %s263
      %s265 = smul.u32 32, %s18
      %p266 = scmp.lt.s32.totalorder %s18, 1
      %s267 = scalar_select %p266, %s18, 1
      %s268 = scalar_lea.vmem %s5, %s267
      %p269 = scmp.lt.s32.totalorder %s18, 1
      %s270 = scalar_select %p269, %s18, 1
      %s271 = scalar_lea.vmem %s6, %s270
      %v272 = vld [vmem:[%s258] sm:$0xff]
      %v273 = vld [vmem:[%s258 + $0x8] sm:$0xff]
      %v274 = vld [vmem:[%s258 + $0x10] sm:$0xff]
      %v275 = vld [vmem:[%s258 + $0x18] sm:$0xff]
      %v276 = vld [vmem:[%s258 + $0x20] sm:$0xff]
      %v277 = vld [vmem:[%s258 + $0x28] sm:$0xff]
      %v278 = vld [vmem:[%s258 + $0x30] sm:$0xff]
      %v279 = vld [vmem:[%s258 + $0x38] sm:$0xff]
      %v280 = vld [vmem:[%s258 + $0x40] sm:$0xff]
      %v281 = vld [vmem:[%s258 + $0x48] sm:$0xff]
      %v282 = vld [vmem:[%s258 + $0x50] sm:$0xff]
      %v283 = vld [vmem:[%s258 + $0x58] sm:$0xff]
      %v284 = vld [vmem:[%s258 + $0x60] sm:$0xff]
      %v285 = vld [vmem:[%s258 + $0x68] sm:$0xff]
      %v286 = vld [vmem:[%s258 + $0x70] sm:$0xff]
      %v287 = vld [vmem:[%s258 + $0x78] sm:$0xff]
      %v288 = vld [vmem:[%s258 + $0x80] sm:$0xff]
      %v289 = vld [vmem:[%s258 + $0x88] sm:$0xff]
      %v290 = vld [vmem:[%s258 + $0x90] sm:$0xff]
      %v291 = vld [vmem:[%s258 + $0x98] sm:$0xff]
      %v292 = vld [vmem:[%s258 + $0xa0] sm:$0xff]
      %v293 = vld [vmem:[%s258 + $0xa8] sm:$0xff]
      %v294 = vld [vmem:[%s258 + $0xb0] sm:$0xff]
      %v295 = vld [vmem:[%s258 + $0xb8] sm:$0xff]
      %v296 = vld [vmem:[%s258 + $0xc0] sm:$0xff]
      %v297 = vld [vmem:[%s258 + $0xc8] sm:$0xff]
      %v298 = vld [vmem:[%s258 + $0xd0] sm:$0xff]
      %v299 = vld [vmem:[%s258 + $0xd8] sm:$0xff]
      %v300 = vld [vmem:[%s258 + $0xe0] sm:$0xff]
      %v301 = vld [vmem:[%s258 + $0xe8] sm:$0xff]
      %v302 = vld [vmem:[%s258 + $0xf0] sm:$0xff]
      %v303 = vld [vmem:[%s258 + $0xf8] sm:$0xff]
      %v304 = vld [vmem:[%s1] sm:$0x1]
      %v306 = vlaneseq
      %v307 = vshrl.u32 %v306, 7
      %v308 = vsub.s32 0, %v307
      %v309 = vrot.slane %v304, %v308
      %v311 = vmul.f32 %v272, %v309
      %v312 = vmul.f32 %v273, %v309
      %v313 = vmul.f32 %v274, %v309
      %v314 = vmul.f32 %v275, %v309
      %v315 = vmul.f32 %v276, %v309
      %v316 = vmul.f32 %v277, %v309
      %v317 = vmul.f32 %v278, %v309
      %v318 = vmul.f32 %v279, %v309
      %v319 = vmul.f32 %v280, %v309
      %v320 = vmul.f32 %v281, %v309
      %v321 = vmul.f32 %v282, %v309
      %v322 = vmul.f32 %v283, %v309
      %v323 = vmul.f32 %v284, %v309
      %v324 = vmul.f32 %v285, %v309
      %v325 = vmul.f32 %v286, %v309
      %v326 = vmul.f32 %v287, %v309
      %v327 = vmul.f32 %v288, %v309
      %v328 = vmul.f32 %v289, %v309
      %v329 = vmul.f32 %v290, %v309
      %v330 = vmul.f32 %v291, %v309
      %v331 = vmul.f32 %v292, %v309
      %v332 = vmul.f32 %v293, %v309
      %v333 = vmul.f32 %v294, %v309
      %v334 = vmul.f32 %v295, %v309
      %v335 = vmul.f32 %v296, %v309
      %v336 = vmul.f32 %v297, %v309
      %v337 = vmul.f32 %v298, %v309
      %v338 = vmul.f32 %v299, %v309
      %v339 = vmul.f32 %v300, %v309
      %v340 = vmul.f32 %v301, %v309
      %v341 = vmul.f32 %v302, %v309
      %v342 = vmul.f32 %v303, %v309
      %v343 = vld [vmem:[%s2] sm:$0x1]
      %v345 = vlaneseq
      %v346 = vshrl.u32 %v345, 7
      %v347 = vsub.s32 0, %v346
      %v348 = vrot.slane %v343, %v347
      %v350 = vadd.f32 %v311, %v348
      %v351 = vadd.f32 %v312, %v348
      %v352 = vadd.f32 %v313, %v348
      %v353 = vadd.f32 %v314, %v348
      %v354 = vadd.f32 %v315, %v348
      %v355 = vadd.f32 %v316, %v348
      %v356 = vadd.f32 %v317, %v348
      %v357 = vadd.f32 %v318, %v348
      %v358 = vadd.f32 %v319, %v348
      %v359 = vadd.f32 %v320, %v348
      %v360 = vadd.f32 %v321, %v348
      %v361 = vadd.f32 %v322, %v348
      %v362 = vadd.f32 %v323, %v348
      %v363 = vadd.f32 %v324, %v348
      %v364 = vadd.f32 %v325, %v348
      %v365 = vadd.f32 %v326, %v348
      %v366 = vadd.f32 %v327, %v348
      %v367 = vadd.f32 %v328, %v348
      %v368 = vadd.f32 %v329, %v348
      %v369 = vadd.f32 %v330, %v348
      %v370 = vadd.f32 %v331, %v348
      %v371 = vadd.f32 %v332, %v348
      %v372 = vadd.f32 %v333, %v348
      %v373 = vadd.f32 %v334, %v348
      %v374 = vadd.f32 %v335, %v348
      %v375 = vadd.f32 %v336, %v348
      %v376 = vadd.f32 %v337, %v348
      %v377 = vadd.f32 %v338, %v348
      %v378 = vadd.f32 %v339, %v348
      %v379 = vadd.f32 %v340, %v348
      %v380 = vadd.f32 %v341, %v348
      %v381 = vadd.f32 %v342, %v348
      %v382 = vmax.f32 %v350, 0.0
      %v383 = vmax.f32 %v351, 0.0
      %v384 = vmax.f32 %v352, 0.0
      %v385 = vmax.f32 %v353, 0.0
      %v386 = vmax.f32 %v354, 0.0
      %v387 = vmax.f32 %v355, 0.0
      %v388 = vmax.f32 %v356, 0.0
      %v389 = vmax.f32 %v357, 0.0
      %v390 = vmax.f32 %v358, 0.0
      %v391 = vmax.f32 %v359, 0.0
      %v392 = vmax.f32 %v360, 0.0
      %v393 = vmax.f32 %v361, 0.0
      %v394 = vmax.f32 %v362, 0.0
      %v395 = vmax.f32 %v363, 0.0
      %v396 = vmax.f32 %v364, 0.0
      %v397 = vmax.f32 %v365, 0.0
      %v398 = vmax.f32 %v366, 0.0
      %v399 = vmax.f32 %v367, 0.0
      %v400 = vmax.f32 %v368, 0.0
      %v401 = vmax.f32 %v369, 0.0
      %v402 = vmax.f32 %v370, 0.0
      %v403 = vmax.f32 %v371, 0.0
      %v404 = vmax.f32 %v372, 0.0
      %v405 = vmax.f32 %v373, 0.0
      %v406 = vmax.f32 %v374, 0.0
      %v407 = vmax.f32 %v375, 0.0
      %v408 = vmax.f32 %v376, 0.0
      %v409 = vmax.f32 %v377, 0.0
      %v410 = vmax.f32 %v378, 0.0
      %v411 = vmax.f32 %v379, 0.0
      %v412 = vmax.f32 %v380, 0.0
      %v413 = vmax.f32 %v381, 0.0
      %v414 = vld [vmem:[%s3] sm:$0xff]
      %v415 = vld [vmem:[%s3 + $0x8] sm:$0xff]
      %v416 = vld [vmem:[%s3 + $0x10] sm:$0xff]
      %v417 = vld [vmem:[%s3 + $0x18] sm:$0xff]
      %v418 = vld [vmem:[%s3 + $0x20] sm:$0xff]
      %v419 = vld [vmem:[%s3 + $0x28] sm:$0xff]
      %v420 = vld [vmem:[%s3 + $0x30] sm:$0xff]
      %v421 = vld [vmem:[%s3 + $0x38] sm:$0xff]
      %v422 = vld [vmem:[%s3 + $0x40] sm:$0xff]
      %v423 = vld [vmem:[%s3 + $0x48] sm:$0xff]
      %v424 = vld [vmem:[%s3 + $0x50] sm:$0xff]
      %v425 = vld [vmem:[%s3 + $0x58] sm:$0xff]
      %v426 = vld [vmem:[%s3 + $0x60] sm:$0xff]
      %v427 = vld [vmem:[%s3 + $0x68] sm:$0xff]
      %v428 = vld [vmem:[%s3 + $0x70] sm:$0xff]
      %v429 = vld [vmem:[%s3 + $0x78] sm:$0xff]
      %430 = vmatprep.subr.mxu0 0.0
      %431 = vmatpush1.msra.mxu0 %v414
      %432 = vmatprep.subr.mxu0 0.0
      %433 = vmatpush1.msra.mxu0 %v415
      %434 = vmatprep.subr.mxu0 0.0
      %435 = vmatpush1.msra.mxu0 %v416
      %436 = vmatprep.subr.mxu0 0.0
      %437 = vmatpush1.msra.mxu0 %v417
      %438 = vmatprep.subr.mxu0 0.0
      %439 = vmatpush1.msra.mxu0 %v418
      %440 = vmatprep.subr.mxu0 0.0
      %441 = vmatpush1.msra.mxu0 %v419
      %442 = vmatprep.subr.mxu0 0.0
      %443 = vmatpush1.msra.mxu0 %v420
      %444 = vmatprep.subr.mxu0 0.0
      %445 = vmatpush1.msra.mxu0 %v421
      %446 = vmatprep.subr.mxu0 0.0
      %447 = vmatpush1.msra.mxu0 %v422
      %448 = vmatprep.subr.mxu0 0.0
      %449 = vmatpush1.msra.mxu0 %v423
      %450 = vmatprep.subr.mxu0 0.0
      %451 = vmatpush1.msra.mxu0 %v424
      %452 = vmatprep.subr.mxu0 0.0
      %453 = vmatpush1.msra.mxu0 %v425
      %454 = vmatprep.subr.mxu0 0.0
      %455 = vmatpush1.msra.mxu0 %v426
      %456 = vmatprep.subr.mxu0 0.0
      %457 = vmatpush1.msra.mxu0 %v427
      %458 = vmatprep.subr.mxu0 0.0
      %459 = vmatpush1.msra.mxu0 %v428
      %460 = vmatprep.subr.mxu0 0.0
      %461 = vmatpush1.msra.mxu0 %v429
      %462 = vmatprep.subr.mxu0 0.0
      %463 = vmatpush1.msra.mxu0 0.0
      %464 = vmatprep.subr.mxu0 0.0
      %465 = vmatpush1.msra.mxu0 0.0
      %466 = vmatprep.subr.mxu0 0.0
      %467 = vmatpush1.msra.mxu0 0.0
      %468 = vmatprep.subr.mxu0 0.0
      %469 = vmatpush1.msra.mxu0 0.0
      %470 = vmatprep.subr.mxu0 0.0
      %471 = vmatpush1.msra.mxu0 0.0
      %472 = vmatprep.subr.mxu0 0.0
      %473 = vmatpush1.msra.mxu0 0.0
      %474 = vmatprep.subr.mxu0 0.0
      %475 = vmatpush1.msra.mxu0 0.0
      %476 = vmatprep.subr.mxu0 0.0
      %477 = vmatpush1.msra.mxu0 0.0
      %478 = vmatprep.subr.mxu0 0.0
      %479 = vmatpush1.msra.mxu0 0.0
      %480 = vmatprep.subr.mxu0 0.0
      %481 = vmatpush1.msra.mxu0 0.0
      %482 = vmatprep.subr.mxu0 0.0
      %483 = vmatpush1.msra.mxu0 0.0
      %484 = vmatprep.subr.mxu0 0.0
      %485 = vmatpush1.msra.mxu0 0.0
      %486 = vmatprep.subr.mxu0 0.0
      %487 = vmatpush1.msra.mxu0 0.0
      %488 = vmatprep.subr.mxu0 0.0
      %489 = vmatpush1.msra.mxu0 0.0
      %490 = vmatprep.subr.mxu0 0.0
      %491 = vmatpush1.msra.mxu0 0.0
      %492 = vmatprep.subr.mxu0 0.0
      %493 = vmatpush1.msra.mxu0 0.0
      %494 = vmatprep.mubr.f32.mxu0 0.0
      %495 = vmatmul.mubr.f32.gmra.mrb[0].mxu0 %v382
      %v496 = vpop.f32.mrb[0].mxu0
      %v497 = vadd.f32 0.0, %v496
      %v498 = vpop.f32.mrb[0].mxu0
      %499 = vmatprep.mubr.f32.mxu0 0.0
      %500 = vmatmul.mubr.f32.gmra.mrb[0].mxu0 %v383
      %v501 = vpop.f32.mrb[0].mxu0
      %v502 = vadd.f32 0.0, %v501
      %v503 = vpop.f32.mrb[0].mxu0
      %504 = vmatprep.mubr.f32.mxu0 0.0
      %505 = vmatmul.mubr.f32.gmra.mrb[0].mxu0 %v384
      %v506 = vpop.f32.mrb[0].mxu0
      %v507 = vadd.f32 0.0, %v506
      %v508 = vpop.f32.mrb[0].mxu0
      %509 = vmatprep.mubr.f32.mxu0 0.0
      %510 = vmatmul.mubr.f32.gmra.mrb[0].mxu0 %v385
      %v511 = vpop.f32.mrb[0].mxu0
      %v512 = vadd.f32 0.0, %v511
      %v513 = vpop.f32.mrb[0].mxu0
      %514 = vmatprep.mubr.f32.mxu0 0.0
      %515 = vmatmul.mubr.f32.gmra.mrb[0].mxu0 %v386
      %v516 = vpop.f32.mrb[0].mxu0
      %v517 = vadd.f32 0.0, %v516
      %v518 = vpop.f32.mrb[0].mxu0
      %519 = vmatprep.mubr.f32.mxu0 0.0
      %520 = vmatmul.mubr.f32.gmra.mrb[0].mxu0 %v387
      %v521 = vpop.f32.mrb[0].mxu0
      %v522 = vadd.f32 0.0, %v521
      %v523 = vpop.f32.mrb[0].mxu0
      %524 = vmatprep.mubr.f32.mxu0 0.0
      %525 = vmatmul.mubr.f32.gmra.mrb[0].mxu0 %v388
      %v526 = vpop.f32.mrb[0].mxu0
      %v527 = vadd.f32 0.0, %v526
      %v528 = vpop.f32.mrb[0].mxu0
      %529 = vmatprep.mubr.f32.mxu0 0.0
      %530 = vmatmul.mubr.f32.gmra.mrb[0].mxu0 %v389
      %v531 = vpop.f32.mrb[0].mxu0
      %v532 = vadd.f32 0.0, %v531
      %v533 = vpop.f32.mrb[0].mxu0
      %534 = vmatprep.mubr.f32.mxu0 0.0
      %535 = vmatmul.mubr.f32.gmra.mrb[0].mxu0 %v390
      %v536 = vpop.f32.mrb[0].mxu0
      %v537 = vadd.f32 0.0, %v536
      %v538 = vpop.f32.mrb[0].mxu0
      %539 = vmatprep.mubr.f32.mxu0 0.0
      %540 = vmatmul.mubr.f32.gmra.mrb[0].mxu0 %v391
      %v541 = vpop.f32.mrb[0].mxu0
      %v542 = vadd.f32 0.0, %v541
      %v543 = vpop.f32.mrb[0].mxu0
      %544 = vmatprep.mubr.f32.mxu0 0.0
      %545 = vmatmul.mubr.f32.gmra.mrb[0].mxu0 %v392
      %v546 = vpop.f32.mrb[0].mxu0
      %v547 = vadd.f32 0.0, %v546
      %v548 = vpop.f32.mrb[0].mxu0
      %549 = vmatprep.mubr.f32.mxu0 0.0
      %550 = vmatmul.mubr.f32.gmra.mrb[0].mxu0 %v393
      %v551 = vpop.f32.mrb[0].mxu0
      %v552 = vadd.f32 0.0, %v551
      %v553 = vpop.f32.mrb[0].mxu0
      %554 = vmatprep.mubr.f32.mxu0 0.0
      %555 = vmatmul.mubr.f32.gmra.mrb[0].mxu0 %v394
      %v556 = vpop.f32.mrb[0].mxu0
      %v557 = vadd.f32 0.0, %v556
      %v558 = vpop.f32.mrb[0].mxu0
      %559 = vmatprep.mubr.f32.mxu0 0.0
      %560 = vmatmul.mubr.f32.gmra.mrb[0].mxu0 %v395
      %v561 = vpop.f32.mrb[0].mxu0
      %v562 = vadd.f32 0.0, %v561
      %v563 = vpop.f32.mrb[0].mxu0
      %564 = vmatprep.mubr.f32.mxu0 0.0
      %565 = vmatmul.mubr.f32.gmra.mrb[0].mxu0 %v396
      %v566 = vpop.f32.mrb[0].mxu0
      %v567 = vadd.f32 0.0, %v566
      %v568 = vpop.f32.mrb[0].mxu0
      %569 = vmatprep.mubr.f32.mxu0 0.0
      %570 = vmatmul.mubr.f32.gmra.mrb[0].mxu0 %v397
      %v571 = vpop.f32.mrb[0].mxu0
      %v572 = vadd.f32 0.0, %v571
      %v573 = vpop.f32.mrb[0].mxu0
      %574 = vmatprep.mubr.f32.mxu0 0.0
      %575 = vmatmul.mubr.f32.gmra.mrb[0].mxu0 %v398
      %v576 = vpop.f32.mrb[0].mxu0
      %v577 = vadd.f32 0.0, %v576
      %v578 = vpop.f32.mrb[0].mxu0
      %579 = vmatprep.mubr.f32.mxu0 0.0
      %580 = vmatmul.mubr.f32.gmra.mrb[0].mxu0 %v399
      %v581 = vpop.f32.mrb[0].mxu0
      %v582 = vadd.f32 0.0, %v581
      %v583 = vpop.f32.mrb[0].mxu0
      %584 = vmatprep.mubr.f32.mxu0 0.0
      %585 = vmatmul.mubr.f32.gmra.mrb[0].mxu0 %v400
      %v586 = vpop.f32.mrb[0].mxu0
      %v587 = vadd.f32 0.0, %v586
      %v588 = vpop.f32.mrb[0].mxu0
      %589 = vmatprep.mubr.f32.mxu0 0.0
      %590 = vmatmul.mubr.f32.gmra.mrb[0].mxu0 %v401
      %v591 = vpop.f32.mrb[0].mxu0
      %v592 = vadd.f32 0.0, %v591
      %v593 = vpop.f32.mrb[0].mxu0
      %594 = vmatprep.mubr.f32.mxu0 0.0
      %595 = vmatmul.mubr.f32.gmra.mrb[0].mxu0 %v402
      %v596 = vpop.f32.mrb[0].mxu0
      %v597 = vadd.f32 0.0, %v596
      %v598 = vpop.f32.mrb[0].mxu0
      %599 = vmatprep.mubr.f32.mxu0 0.0
      %600 = vmatmul.mubr.f32.gmra.mrb[0].mxu0 %v403
      %v601 = vpop.f32.mrb[0].mxu0
      %v602 = vadd.f32 0.0, %v601
      %v603 = vpop.f32.mrb[0].mxu0
      %604 = vmatprep.mubr.f32.mxu0 0.0
      %605 = vmatmul.mubr.f32.gmra.mrb[0].mxu0 %v404
      %v606 = vpop.f32.mrb[0].mxu0
      %v607 = vadd.f32 0.0, %v606
      %v608 = vpop.f32.mrb[0].mxu0
      %609 = vmatprep.mubr.f32.mxu0 0.0
      %610 = vmatmul.mubr.f32.gmra.mrb[0].mxu0 %v405
      %v611 = vpop.f32.mrb[0].mxu0
      %v612 = vadd.f32 0.0, %v611
      %v613 = vpop.f32.mrb[0].mxu0
      %614 = vmatprep.mubr.f32.mxu0 0.0
      %615 = vmatmul.mubr.f32.gmra.mrb[0].mxu0 %v406
      %v616 = vpop.f32.mrb[0].mxu0
      %v617 = vadd.f32 0.0, %v616
      %v618 = vpop.f32.mrb[0].mxu0
      %619 = vmatprep.mubr.f32.mxu0 0.0
      %620 = vmatmul.mubr.f32.gmra.mrb[0].mxu0 %v407
      %v621 = vpop.f32.mrb[0].mxu0
      %v622 = vadd.f32 0.0, %v621
      %v623 = vpop.f32.mrb[0].mxu0
      %624 = vmatprep.mubr.f32.mxu0 0.0
      %625 = vmatmul.mubr.f32.gmra.mrb[0].mxu0 %v408
      %v626 = vpop.f32.mrb[0].mxu0
      %v627 = vadd.f32 0.0, %v626
      %v628 = vpop.f32.mrb[0].mxu0
      %629 = vmatprep.mubr.f32.mxu0 0.0
      %630 = vmatmul.mubr.f32.gmra.mrb[0].mxu0 %v409
      %v631 = vpop.f32.mrb[0].mxu0
      %v632 = vadd.f32 0.0, %v631
      %v633 = vpop.f32.mrb[0].mxu0
      %634 = vmatprep.mubr.f32.mxu0 0.0
      %635 = vmatmul.mubr.f32.gmra.mrb[0].mxu0 %v410
      %v636 = vpop.f32.mrb[0].mxu0
      %v637 = vadd.f32 0.0, %v636
      %v638 = vpop.f32.mrb[0].mxu0
      %639 = vmatprep.mubr.f32.mxu0 0.0
      %640 = vmatmul.mubr.f32.gmra.mrb[0].mxu0 %v411
      %v641 = vpop.f32.mrb[0].mxu0
      %v642 = vadd.f32 0.0, %v641
      %v643 = vpop.f32.mrb[0].mxu0
      %644 = vmatprep.mubr.f32.mxu0 0.0
      %645 = vmatmul.mubr.f32.gmra.mrb[0].mxu0 %v412
      %v646 = vpop.f32.mrb[0].mxu0
      %v647 = vadd.f32 0.0, %v646
      %v648 = vpop.f32.mrb[0].mxu0
      %649 = vmatprep.mubr.f32.mxu0 0.0
      %650 = vmatmul.mubr.f32.gmra.mrb[0].mxu0 %v413
      %v651 = vpop.f32.mrb[0].mxu0
      %v652 = vadd.f32 0.0, %v651
      %v653 = vpop.f32.mrb[0].mxu0
      %654 = vdwg.mxu0
      %655 = vst [vmem:[%s264] sm:$0xff] %v497
      %656 = vst [vmem:[%s264 + $0x8] sm:$0xff] %v502
      %657 = vst [vmem:[%s264 + $0x10] sm:$0xff] %v507
      %658 = vst [vmem:[%s264 + $0x18] sm:$0xff] %v512
      %659 = vst [vmem:[%s264 + $0x20] sm:$0xff] %v517
      %660 = vst [vmem:[%s264 + $0x28] sm:$0xff] %v522
      %661 = vst [vmem:[%s264 + $0x30] sm:$0xff] %v527
      %662 = vst [vmem:[%s264 + $0x38] sm:$0xff] %v532
      %663 = vst [vmem:[%s264 + $0x40] sm:$0xff] %v537
      %664 = vst [vmem:[%s264 + $0x48] sm:$0xff] %v542
      %665 = vst [vmem:[%s264 + $0x50] sm:$0xff] %v547
      %666 = vst [vmem:[%s264 + $0x58] sm:$0xff] %v552
      %667 = vst [vmem:[%s264 + $0x60] sm:$0xff] %v557
      %668 = vst [vmem:[%s264 + $0x68] sm:$0xff] %v562
      %669 = vst [vmem:[%s264 + $0x70] sm:$0xff] %v567
      %670 = vst [vmem:[%s264 + $0x78] sm:$0xff] %v572
      %671 = vst [vmem:[%s264 + $0x80] sm:$0xff] %v577
      %672 = vst [vmem:[%s264 + $0x88] sm:$0xff] %v582
      %673 = vst [vmem:[%s264 + $0x90] sm:$0xff] %v587
      %674 = vst [vmem:[%s264 + $0x98] sm:$0xff] %v592
      %675 = vst [vmem:[%s264 + $0xa0] sm:$0xff] %v597
      %676 = vst [vmem:[%s264 + $0xa8] sm:$0xff] %v602
      %677 = vst [vmem:[%s264 + $0xb0] sm:$0xff] %v607
      %678 = vst [vmem:[%s264 + $0xb8] sm:$0xff] %v612
      %679 = vst [vmem:[%s264 + $0xc0] sm:$0xff] %v617
      %680 = vst [vmem:[%s264 + $0xc8] sm:$0xff] %v622
      %681 = vst [vmem:[%s264 + $0xd0] sm:$0xff] %v627
      %682 = vst [vmem:[%s264 + $0xd8] sm:$0xff] %v632
      %683 = vst [vmem:[%s264 + $0xe0] sm:$0xff] %v637
      %684 = vst [vmem:[%s264 + $0xe8] sm:$0xff] %v642
      %685 = vst [vmem:[%s264 + $0xf0] sm:$0xff] %v647
      %686 = vst [vmem:[%s264 + $0xf8] sm:$0xff] %v652
      %v687 = vadd.f32 %v497, %v502
      %v688 = vadd.f32 %v687, %v507
      %v689 = vadd.f32 %v688, %v512
      %v690 = vadd.f32 %v689, %v517
      %v691 = vadd.f32 %v690, %v522
      %v692 = vadd.f32 %v691, %v527
      %v693 = vadd.f32 %v692, %v532
      %v694 = vadd.f32 %v693, %v537
      %v695 = vadd.f32 %v694, %v542
      %v696 = vadd.f32 %v695, %v547
      %v697 = vadd.f32 %v696, %v552
      %v698 = vadd.f32 %v697, %v557
      %v699 = vadd.f32 %v698, %v562
      %v700 = vadd.f32 %v699, %v567
      %v701 = vadd.f32 %v700, %v572
      %v702 = vadd.f32 %v701, %v577
      %v703 = vadd.f32 %v702, %v582
      %v704 = vadd.f32 %v703, %v587
      %v705 = vadd.f32 %v704, %v592
      %v706 = vadd.f32 %v705, %v597
      %v707 = vadd.f32 %v706, %v602
      %v708 = vadd.f32 %v707, %v607
      %v709 = vadd.f32 %v708, %v612
      %v710 = vadd.f32 %v709, %v617
      %v711 = vadd.f32 %v710, %v622
      %v712 = vadd.f32 %v711, %v627
      %v713 = vadd.f32 %v712, %v632
      %v714 = vadd.f32 %v713, %v637
      %v715 = vadd.f32 %v714, %v642
      %v716 = vadd.f32 %v715, %v647
      %v717 = vadd.f32 %v716, %v652
      %v718 = vrot.slane %v717, 4
      %v719 = vadd.f32 %v717, %v718
      %v720 = vrot.slane %v719, 2
      %v721 = vadd.f32 %v719, %v720
      %v722 = vrot.slane %v721, 1
      %v723 = vadd.f32 %v721, %v722
      %724 = vst [vmem:[%s268] sm:$0x1] %v723
      %v725 = vmul.f32 %v497, %v497
      %v726 = vmul.f32 %v502, %v502
      %v727 = vmul.f32 %v507, %v507
      %v728 = vmul.f32 %v512, %v512
      %v729 = vmul.f32 %v517, %v517
      %v730 = vmul.f32 %v522, %v522
      %v731 = vmul.f32 %v527, %v527
      %v732 = vmul.f32 %v532, %v532
      %v733 = vmul.f32 %v537, %v537
      %v734 = vmul.f32 %v542, %v542
      %v735 = vmul.f32 %v547, %v547
      %v736 = vmul.f32 %v552, %v552
      %v737 = vmul.f32 %v557, %v557
      %v738 = vmul.f32 %v562, %v562
      %v739 = vmul.f32 %v567, %v567
      %v740 = vmul.f32 %v572, %v572
      %v741 = vmul.f32 %v577, %v577
      %v742 = vmul.f32 %v582, %v582
      %v743 = vmul.f32 %v587, %v587
      %v744 = vmul.f32 %v592, %v592
      %v745 = vmul.f32 %v597, %v597
      %v746 = vmul.f32 %v602, %v602
      %v747 = vmul.f32 %v607, %v607
      %v748 = vmul.f32 %v612, %v612
      %v749 = vmul.f32 %v617, %v617
      %v750 = vmul.f32 %v622, %v622
      %v751 = vmul.f32 %v627, %v627
      %v752 = vmul.f32 %v632, %v632
      %v753 = vmul.f32 %v637, %v637
      %v754 = vmul.f32 %v642, %v642
      %v755 = vmul.f32 %v647, %v647
      %v756 = vmul.f32 %v652, %v652
      %v757 = vadd.f32 %v725, %v726
      %v758 = vadd.f32 %v757, %v727
      %v759 = vadd.f32 %v758, %v728
      %v760 = vadd.f32 %v759, %v729
      %v761 = vadd.f32 %v760, %v730
      %v762 = vadd.f32 %v761, %v731
      %v763 = vadd.f32 %v762, %v732
      %v764 = vadd.f32 %v763, %v733
      %v765 = vadd.f32 %v764, %v734
      %v766 = vadd.f32 %v765, %v735
      %v767 = vadd.f32 %v766, %v736
      %v768 = vadd.f32 %v767, %v737
      %v769 = vadd.f32 %v768, %v738
      %v770 = vadd.f32 %v769, %v739
      %v771 = vadd.f32 %v770, %v740
      %v772 = vadd.f32 %v771, %v741
      %v773 = vadd.f32 %v772, %v742
      %v774 = vadd.f32 %v773, %v743
      %v775 = vadd.f32 %v774, %v744
      %v776 = vadd.f32 %v775, %v745
      %v777 = vadd.f32 %v776, %v746
      %v778 = vadd.f32 %v777, %v747
      %v779 = vadd.f32 %v778, %v748
      %v780 = vadd.f32 %v779, %v749
      %v781 = vadd.f32 %v780, %v750
      %v782 = vadd.f32 %v781, %v751
      %v783 = vadd.f32 %v782, %v752
      %v784 = vadd.f32 %v783, %v753
      %v785 = vadd.f32 %v784, %v754
      %v786 = vadd.f32 %v785, %v755
      %v787 = vadd.f32 %v786, %v756
      %v788 = vrot.slane %v787, 4
      %v789 = vadd.f32 %v787, %v788
      %v790 = vrot.slane %v789, 2
      %v791 = vadd.f32 %v789, %v790
      %v792 = vrot.slane %v791, 1
      %v793 = vadd.f32 %v791, %v792
      %794 = vst [vmem:[%s271] sm:$0x1] %v793
      %s795 = smul.u32 32, %s18
      %p796 = scmp.lt.s32.totalorder %s795, 63
      %s797 = scalar_select %p796, %s795, 63
      %s798 = smul.addr %s797, 8
      %s799 = scalar_lea.vmem %s4, %s798
      %p800 = scmp.lt.s32.totalorder %s18, 1
      %s801 = scalar_select %p800, %s18, 1
      %s802 = scalar_lea.vmem %s5, %s801
      %p803 = scmp.lt.s32.totalorder %s18, 1
      %s804 = scalar_select %p803, %s18, 1
      %s805 = scalar_lea.vmem %s6, %s804
      // Predicated region
      $region37: #{bottleneck_forward.6} parent=35 // pred_check
        %p806 = pneg %p125
      $region38: #{bottleneck_forward.6} parent=35 // pred_check_branch
        %808 = sbr.rel (%p806) target = $region40
      $region39: #{bottleneck_forward.6} parent=35 // pred_region
        %s809 = smul.u32 32, %s18
      $region40: #{bottleneck_forward.6} parent=35 // pred_fallthru
        _
      // Predicated region
      $region41: #{bottleneck_forward.6} parent=35 // pred_check
        %p810 = pneg %p151
      $region42: #{bottleneck_forward.6} parent=35 // pred_check_branch
        %812 = sbr.rel (%p810) target = $region44
      $region43: #{bottleneck_forward.6} parent=35 // pred_region
        _
      $region44: #{bottleneck_forward.6} parent=35 // pred_fallthru
        _
      // Predicated region
      $region45: #{bottleneck_forward.6} parent=35 // pred_check
        %p813 = pneg %p177
      $region46: #{bottleneck_forward.6} parent=35 // pred_check_branch
        %815 = sbr.rel (%p813) target = $region48
      $region47: #{bottleneck_forward.6} parent=35 // pred_region
        _
      $region48: #{bottleneck_forward.6} parent=35 // pred_fallthru
        _
    $region36: #{bottleneck_forward.6} parent=5 // pred_fallthru
      _
    %p816 = scmp.le.s32.totalorder 2, %s13
    // Predicated region
    $region49: #{bottleneck_forward.6} parent=5 // pred_check
      %p817 = pneg %p816
    $region50: #{bottleneck_forward.6} parent=5 // pred_check_branch
      %819 = sbr.rel (%p817) target = $region52
    $region51: #{bottleneck_forward.6} parent=5 // pred_region
      %s820 = ssub.s32 %s13, 2
      // Predicated region
      $region53: #{bottleneck_forward.6} parent=51 // pred_check
        %p821 = pneg %p131
      $region54: #{bottleneck_forward.6} parent=51 // pred_check_branch
        %823 = sbr.rel (%p821) target = $region56
      $region55: #{bottleneck_forward.6} parent=51 // pred_region
        %s824 = smul.u32 32, %s19
        %p825 = scmp.lt.s32.totalorder %s824, 63
        %s826 = scalar_select %p825, %s824, 63
        %s827 = smul.addr %s826, 8
        %s828 = scalar_lea.vmem %s4, %s827
      $region56: #{bottleneck_forward.6} parent=51 // pred_fallthru
        _
      // Predicated region
      $region57: #{bottleneck_forward.6} parent=51 // pred_check
        %p829 = pneg %p157
      $region58: #{bottleneck_forward.6} parent=51 // pred_check_branch
        %831 = sbr.rel (%p829) target = $region60
      $region59: #{bottleneck_forward.6} parent=51 // pred_region
        %p832 = scmp.lt.s32.totalorder %s19, 1
        %s833 = scalar_select %p832, %s19, 1
        %s834 = scalar_lea.vmem %s5, %s833
      $region60: #{bottleneck_forward.6} parent=51 // pred_fallthru
        _
      // Predicated region
      $region61: #{bottleneck_forward.6} parent=51 // pred_check
        %p835 = pneg %p183
      $region62: #{bottleneck_forward.6} parent=51 // pred_check_branch
        %837 = sbr.rel (%p835) target = $region64
      $region63: #{bottleneck_forward.6} parent=51 // pred_region
        %p838 = scmp.lt.s32.totalorder %s19, 1
        %s839 = scalar_select %p838, %s19, 1
        %s840 = scalar_lea.vmem %s6, %s839
      $region64: #{bottleneck_forward.6} parent=51 // pred_fallthru
        _
    $region52: #{bottleneck_forward.6} parent=5 // pred_fallthru
      _
  $region6: #{bottleneck_forward.6} parent=0 // loop_footer
    %s17 = sadd.s32 1, %s13
  $region7: #{bottleneck_forward.6} parent=0 // loop_footer_branch
    %12 = sbr.rel target = $region3
  $region8: #{bottleneck_forward.6} parent=0 // loop_exit
    _

// kernel: bottleneck_forward.4
$region0: #{bottleneck_forward.4}
  #allocation0 [shape = 'u32[]', space=smem, size = 0x4, offset = 0x4, fixed_abs, tag = 'smem constant byte address 0x4 - core index']
  #allocation1 [shape = 'u32[144,128]{1,0:T(1,128)}', space=vmem, size = 0x12000, scoped, tag = 'internal scratch']
  %s0 = inlined_call_operand.vmem [shape: f32[512,128], index: 0, kind: input, shape index: {}]
  %s1 = inlined_call_operand.vmem [shape: f32[128,128], index: 1, kind: input, shape index: {}]
  %s2 = inlined_call_operand.vmem [shape: f32[128,128], index: 2, kind: input, shape index: {}]
  %s3 = inlined_call_operand.vmem [shape: f32[512,128], index: 3, kind: output, shape index: {0}]
  %s4 = inlined_call_operand.vmem [shape: f32[2,1,128], index: 4, kind: output, shape index: {1}]
  %s5 = inlined_call_operand.vmem [shape: f32[2,1,128], index: 5, kind: output, shape index: {2}]
  %s6 = inlined_call_operand.vmem [shape: f32[512,128], index: 6, kind: output, shape index: {3}]
  %s7 = inlined_call_operand.vmem [shape: f32[2,1,128], index: 7, kind: output, shape index: {4}]
  %s8 = inlined_call_operand.vmem [shape: f32[2,1,128], index: 8, kind: output, shape index: {5}]
  %9 = xla_tuple %s3, %s4, %s5, %s6, %s7, %s8
  %s10 = sld [smem:[#allocation0]]
  $region85: #{bottleneck_forward.4} parent=0
    _
  %s12 = ssub.s32 1, %s10
  %s13 = scalar_select 0, %s12, %s10
  loop: start=0, step=1, limit=4
  $region2: #{bottleneck_forward.4} parent=0 // loop_pre_header
    _
  $region3: #{bottleneck_forward.4} parent=0 // loop_header
    %s15 = sphi 0, %s19
    %p16 = scmp.ge.s32.totalorder %s15, 4
    %s25 = sphi 0, %s27
    %s28 = sphi 0, %s25
    %s29 = sphi 0, %s28
    %s45 = sphi 0, %s29
    %s49 = sphi 0, %s49
    %s51 = sphi 0, %s49
    %s52 = sphi 0, %s51
    %s66 = sphi 0, %s52
    %s70 = sphi 0, %s70
    %s72 = sphi 0, %s70
    %s73 = sphi 0, %s72
    %s87 = sphi 0, %s73
    %s93 = sphi 0, %s95
    %s96 = sphi 0, %s93
    %s97 = sphi 0, %s96
    %s113 = sphi 0, %s97
    %s119 = sphi 0, %s121
    %s122 = sphi 0, %s119
    %s123 = sphi 0, %s122
    %s139 = sphi 0, %s123
    %s145 = sphi 0, %s147
    %s148 = sphi 0, %s145
    %s149 = sphi 0, %s148
    %s165 = sphi 0, %s149
    %s171 = sphi 0, %s173
    %s174 = sphi 0, %s171
    %s175 = sphi 0, %s174
    %s191 = sphi 0, %s175
    %s197 = sphi 0, %s199
    %s200 = sphi 0, %s197
    %s201 = sphi 0, %s200
    %s217 = sphi 0, %s201
    %s223 = sphi 0, %s225
    %s226 = sphi 0, %s223
    %s227 = sphi 0, %s226
    %s243 = sphi 0, %s227
  $region4: #{bottleneck_forward.4} parent=0 // loop_header_branch
    %18 = sbr.rel (%p16) target = $region8
  $region5: #{bottleneck_forward.4} parent=0 // loop_body
    %s20 = ssub.s32 %s15, 1
    %s21 = ssub.s32 %s15, 2
    %s22 = sadd.s32 %s15, 1
    %s23 = ssub.s32 %s15, %s22
    %p24 = scmp.eq.s32.totalorder %s23, 0
    %s26 = sadd.s32 %s25, 1
    %s27 = scalar_select %p24, %s25, %s26
    %p30 = pneg %p24
    %p31 = scmp.eq.s32.totalorder %s15, 1
    %p32 = por %p30, %p31
    %p33 = scmp.ne.s32.totalorder %s25, %s28
    %p34 = scmp.eq.s32.totalorder %s15, 0
    %p35 = por %p33, %p34
    %p36 = scmp.ne.s32.totalorder %s25, %s28
    %p37 = scmp.eq.s32.totalorder %s20, 1
    %p38 = por %p36, %p37
    %p39 = scmp.ne.s32.totalorder %s28, %s29
    %p40 = scmp.eq.s32.totalorder %s20, 0
    %p41 = por %p39, %p40
    %p42 = scmp.ne.s32.totalorder %s28, %s29
    %p43 = scmp.eq.s32.totalorder %s21, 1
    %p44 = por %p42, %p43
    %p46 = scmp.ne.s32.totalorder %s29, %s45
    %p47 = scmp.eq.s32.totalorder %s21, 0
    %p48 = por %p46, %p47
    %s50 = sadd.s32 %s49, 1
    %p53 = scmp.eq.s32.totalorder %s15, 1
    %p54 = scmp.ne.s32.totalorder %s49, %s51
    %p55 = scmp.eq.s32.totalorder %s15, 0
    %p56 = por %p54, %p55
    %p57 = scmp.ne.s32.totalorder %s49, %s51
    %p58 = scmp.eq.s32.totalorder %s20, 1
    %p59 = por %p57, %p58
    %p60 = scmp.ne.s32.totalorder %s51, %s52
    %p61 = scmp.eq.s32.totalorder %s20, 0
    %p62 = por %p60, %p61
    %p63 = scmp.ne.s32.totalorder %s51, %s52
    %p64 = scmp.eq.s32.totalorder %s21, 1
    %p65 = por %p63, %p64
    %p67 = scmp.ne.s32.totalorder %s52, %s66
    %p68 = scmp.eq.s32.totalorder %s21, 0
    %p69 = por %p67, %p68
    %s71 = sadd.s32 %s70, 1
    %p74 = scmp.eq.s32.totalorder %s15, 1
    %p75 = scmp.ne.s32.totalorder %s70, %s72
    %p76 = scmp.eq.s32.totalorder %s15, 0
    %p77 = por %p75, %p76
    %p78 = scmp.ne.s32.totalorder %s70, %s72
    %p79 = scmp.eq.s32.totalorder %s20, 1
    %p80 = por %p78, %p79
    %p81 = scmp.ne.s32.totalorder %s72, %s73
    %p82 = scmp.eq.s32.totalorder %s20, 0
    %p83 = por %p81, %p82
    %p84 = scmp.ne.s32.totalorder %s72, %s73
    %p85 = scmp.eq.s32.totalorder %s21, 1
    %p86 = por %p84, %p85
    %p88 = scmp.ne.s32.totalorder %s73, %s87
    %p89 = scmp.eq.s32.totalorder %s21, 0
    %p90 = por %p88, %p89
    %s91 = ssub.s32 %s15, %s22
    %p92 = scmp.eq.s32.totalorder %s91, 0
    %s94 = sadd.s32 %s93, 1
    %s95 = scalar_select %p92, %s93, %s94
    %p98 = pneg %p92
    %p99 = scmp.eq.s32.totalorder %s15, 1
    %p100 = por %p98, %p99
    %p101 = scmp.ne.s32.totalorder %s93, %s96
    %p102 = scmp.eq.s32.totalorder %s15, 0
    %p103 = por %p101, %p102
    %p104 = scmp.ne.s32.totalorder %s93, %s96
    %p105 = scmp.eq.s32.totalorder %s20, 1
    %p106 = por %p104, %p105
    %p107 = scmp.ne.s32.totalorder %s96, %s97
    %p108 = scmp.eq.s32.totalorder %s20, 0
    %p109 = por %p107, %p108
    %p110 = scmp.ne.s32.totalorder %s96, %s97
    %p111 = scmp.eq.s32.totalorder %s21, 1
    %p112 = por %p110, %p111
    %p114 = scmp.ne.s32.totalorder %s97, %s113
    %p115 = scmp.eq.s32.totalorder %s21, 0
    %p116 = por %p114, %p115
    %s117 = ssub.s32 %s15, %s22
    %p118 = scmp.eq.s32.totalorder %s117, 0
    %s120 = sadd.s32 %s119, 1
    %s121 = scalar_select %p118, %s119, %s120
    %p124 = pneg %p118
    %p125 = scmp.eq.s32.totalorder %s15, 1
    %p126 = por %p124, %p125
    %p127 = scmp.ne.s32.totalorder %s119, %s122
    %p128 = scmp.eq.s32.totalorder %s15, 0
    %p129 = por %p127, %p128
    %p130 = scmp.ne.s32.totalorder %s119, %s122
    %p131 = scmp.eq.s32.totalorder %s20, 1
    %p132 = por %p130, %p131
    %p133 = scmp.ne.s32.totalorder %s122, %s123
    %p134 = scmp.eq.s32.totalorder %s20, 0
    %p135 = por %p133, %p134
    %p136 = scmp.ne.s32.totalorder %s122, %s123
    %p137 = scmp.eq.s32.totalorder %s21, 1
    %p138 = por %p136, %p137
    %p140 = scmp.ne.s32.totalorder %s123, %s139
    %p141 = scmp.eq.s32.totalorder %s21, 0
    %p142 = por %p140, %p141
    %s143 = ssub.s32 %s15, %s22
    %p144 = scmp.eq.s32.totalorder %s143, 0
    %s146 = sadd.s32 %s145, 1
    %s147 = scalar_select %p144, %s145, %s146
    %p150 = pneg %p144
    %p151 = scmp.eq.s32.totalorder %s15, 1
    %p152 = por %p150, %p151
    %p153 = scmp.ne.s32.totalorder %s145, %s148
    %p154 = scmp.eq.s32.totalorder %s15, 0
    %p155 = por %p153, %p154
    %p156 = scmp.ne.s32.totalorder %s145, %s148
    %p157 = scmp.eq.s32.totalorder %s20, 1
    %p158 = por %p156, %p157
    %p159 = scmp.ne.s32.totalorder %s148, %s149
    %p160 = scmp.eq.s32.totalorder %s20, 0
    %p161 = por %p159, %p160
    %p162 = scmp.ne.s32.totalorder %s148, %s149
    %p163 = scmp.eq.s32.totalorder %s21, 1
    %p164 = por %p162, %p163
    %p166 = scmp.ne.s32.totalorder %s149, %s165
    %p167 = scmp.eq.s32.totalorder %s21, 0
    %p168 = por %p166, %p167
    %s169 = ssub.s32 %s15, %s22
    %p170 = scmp.eq.s32.totalorder %s169, 0
    %s172 = sadd.s32 %s171, 1
    %s173 = scalar_select %p170, %s171, %s172
    %p176 = pneg %p170
    %p177 = scmp.eq.s32.totalorder %s15, 1
    %p178 = por %p176, %p177
    %p179 = scmp.ne.s32.totalorder %s171, %s174
    %p180 = scmp.eq.s32.totalorder %s15, 0
    %p181 = por %p179, %p180
    %p182 = scmp.ne.s32.totalorder %s171, %s174
    %p183 = scmp.eq.s32.totalorder %s20, 1
    %p184 = por %p182, %p183
    %p185 = scmp.ne.s32.totalorder %s174, %s175
    %p186 = scmp.eq.s32.totalorder %s20, 0
    %p187 = por %p185, %p186
    %p188 = scmp.ne.s32.totalorder %s174, %s175
    %p189 = scmp.eq.s32.totalorder %s21, 1
    %p190 = por %p188, %p189
    %p192 = scmp.ne.s32.totalorder %s175, %s191
    %p193 = scmp.eq.s32.totalorder %s21, 0
    %p194 = por %p192, %p193
    %s195 = ssub.s32 %s15, %s22
    %p196 = scmp.eq.s32.totalorder %s195, 0
    %s198 = sadd.s32 %s197, 1
    %s199 = scalar_select %p196, %s197, %s198
    %p202 = pneg %p196
    %p203 = scmp.eq.s32.totalorder %s15, 1
    %p204 = por %p202, %p203
    %p205 = scmp.ne.s32.totalorder %s197, %s200
    %p206 = scmp.eq.s32.totalorder %s15, 0
    %p207 = por %p205, %p206
    %p208 = scmp.ne.s32.totalorder %s197, %s200
    %p209 = scmp.eq.s32.totalorder %s20, 1
    %p210 = por %p208, %p209
    %p211 = scmp.ne.s32.totalorder %s200, %s201
    %p212 = scmp.eq.s32.totalorder %s20, 0
    %p213 = por %p211, %p212
    %p214 = scmp.ne.s32.totalorder %s200, %s201
    %p215 = scmp.eq.s32.totalorder %s21, 1
    %p216 = por %p214, %p215
    %p218 = scmp.ne.s32.totalorder %s201, %s217
    %p219 = scmp.eq.s32.totalorder %s21, 0
    %p220 = por %p218, %p219
    %s221 = ssub.s32 %s15, %s22
    %p222 = scmp.eq.s32.totalorder %s221, 0
    %s224 = sadd.s32 %s223, 1
    %s225 = scalar_select %p222, %s223, %s224
    %p228 = pneg %p222
    %p229 = scmp.eq.s32.totalorder %s15, 1
    %p230 = por %p228, %p229
    %p231 = scmp.ne.s32.totalorder %s223, %s226
    %p232 = scmp.eq.s32.totalorder %s15, 0
    %p233 = por %p231, %p232
    %p234 = scmp.ne.s32.totalorder %s223, %s226
    %p235 = scmp.eq.s32.totalorder %s20, 1
    %p236 = por %p234, %p235
    %p237 = scmp.ne.s32.totalorder %s226, %s227
    %p238 = scmp.eq.s32.totalorder %s20, 0
    %p239 = por %p237, %p238
    %p240 = scmp.ne.s32.totalorder %s226, %s227
    %p241 = scmp.eq.s32.totalorder %s21, 1
    %p242 = por %p240, %p241
    %p244 = scmp.ne.s32.totalorder %s227, %s243
    %p245 = scmp.eq.s32.totalorder %s21, 0
    %p246 = por %p244, %p245
    %p247 = scmp.le.s32.totalorder 1, %s15
    %p248 = scmp.lt.s32.totalorder %s15, 3
    %p249 = pnand %p247, %p248
    %p250 = pneg %p249
    // Predicated region
    $region9: #{bottleneck_forward.4} parent=5 // pred_check
      _
    $region10: #{bottleneck_forward.4} parent=5 // pred_check_branch
      %252 = sbr.rel (%p249) target = $region12
    $region11: #{bottleneck_forward.4} parent=5 // pred_region
      %s253 = ssub.s32 %s15, 1
      // Predicated region
      $region13: #{bottleneck_forward.4} parent=11 // pred_check
        %p254 = pneg %p62
      $region14: #{bottleneck_forward.4} parent=11 // pred_check_branch
        %256 = sbr.rel (%p254) target = $region16
      $region15: #{bottleneck_forward.4} parent=11 // pred_region
        _
      $region16: #{bottleneck_forward.4} parent=11 // pred_fallthru
        _
      // Predicated region
      $region17: #{bottleneck_forward.4} parent=11 // pred_check
        %p257 = pneg %p83
      $region18: #{bottleneck_forward.4} parent=11 // pred_check_branch
        %259 = sbr.rel (%p257) target = $region20
      $region19: #{bottleneck_forward.4} parent=11 // pred_region
        _
      $region20: #{bottleneck_forward.4} parent=11 // pred_fallthru
        _
    $region12: #{bottleneck_forward.4} parent=5 // pred_fallthru
      _
    %p260 = scmp.lt.s32.totalorder %s15, 2
    // Predicated region
    $region21: #{bottleneck_forward.4} parent=5 // pred_check
      %p261 = pneg %p260
    $region22: #{bottleneck_forward.4} parent=5 // pred_check_branch
      %263 = sbr.rel (%p261) target = $region24
    $region23: #{bottleneck_forward.4} parent=5 // pred_region
      // Predicated region
      $region25: #{bottleneck_forward.4} parent=23 // pred_check
        %p264 = pneg %p35
      $region26: #{bottleneck_forward.4} parent=23 // pred_check_branch
        %266 = sbr.rel (%p264) target = $region28
      $region27: #{bottleneck_forward.4} parent=23 // pred_region
        %s267 = smul.u32 32, %s15
        %p268 = scmp.lt.s32.totalorder %s267, 63
        %s269 = scalar_select %p268, %s267, 63
        %s270 = smul.addr %s269, 8
        %s271 = scalar_lea.vmem %s0, %s270
        %s272 = smul.u32 32, %s15
      $region28: #{bottleneck_forward.4} parent=23 // pred_fallthru
        _
    $region24: #{bottleneck_forward.4} parent=5 // pred_fallthru
      _
    %p273 = scmp.le.s32.totalorder 1, %s15
    %p274 = scmp.lt.s32.totalorder %s15, 3
    %p275 = pnand %p273, %p274
    %p276 = pneg %p275
    // Predicated region
    $region29: #{bottleneck_forward.4} parent=5 // pred_check
      _
    $region30: #{bottleneck_forward.4} parent=5 // pred_check_branch
      %278 = sbr.rel (%p275) target = $region32
    $region31: #{bottleneck_forward.4} parent=5 // pred_region
      %s279 = ssub.s32 %s15, 1
      %s280 = smul.u32 32, %s20
      %p281 = scmp.lt.s32.totalorder %s280, 63
      %s282 = scalar_select %p281, %s280, 63
      %s283 = smul.addr %s282, 8
      %s284 = scalar_lea.vmem %s0, %s283
      %p285 = pneg %p41
      %p286 = pneg %p38
      %p287 = pneg %p62
      %p288 = pneg %p59
      %p289 = pneg %p83
      %p290 = pneg %p80
      %p291 = pneg %p109
      %p292 = pneg %p106
      %s293 = smul.u32 32, %s20
      %p294 = scmp.lt.s32.totalorder %s293, 63
      %s295 = scalar_select %p294, %s293, 63
      %s296 = smul.addr %s295, 8
      %s297 = scalar_lea.vmem %s3, %s296
      %p298 = pneg %p135
      %p299 = pneg %p132
      %p300 = scmp.lt.s32.totalorder %s20, 1
      %s301 = scalar_select %p300, %s20, 1
      %s302 = scalar_lea.vmem %s4, %s301
      %p303 = pneg %p161
      %p304 = pneg %p158
      %p305 = scmp.lt.s32.totalorder %s20, 1
      %s306 = scalar_select %p305, %s20, 1
      %s307 = scalar_lea.vmem %s5, %s306
      %p308 = pneg %p187
      %p309 = pneg %p184
      %s310 = smul.u32 32, %s20
      %p311 = scmp.lt.s32.totalorder %s310, 63
      %s312 = scalar_select %p311, %s310, 63
      %s313 = smul.addr %s312, 8
      %s314 = scalar_lea.vmem %s6, %s313
      %p315 = pneg %p213
      %p316 = pneg %p210
      %p317 = scmp.lt.s32.totalorder %s20, 1
      %s318 = scalar_select %p317, %s20, 1
      %s319 = scalar_lea.vmem %s7, %s318
      %p320 = pneg %p239
      %p321 = pneg %p236
      %p322 = scmp.lt.s32.totalorder %s20, 1
      %s323 = scalar_select %p322, %s20, 1
      %s324 = scalar_lea.vmem %s8, %s323
      %s325 = smul.u32 32, %s20
      %p326 = scmp.lt.s32.totalorder %s325, 63
      %s327 = scalar_select %p326, %s325, 63
      %s328 = smul.addr %s327, 8
      %s329 = scalar_lea.vmem %s0, %s328
      %s330 = smul.u32 32, %s20
      %s331 = smul.u32 32, %s20
      %p332 = scmp.lt.s32.totalorder %s331, 63
      %s333 = scalar_select %p332, %s331, 63
      %s334 = smul.addr %s333, 8
      %s335 = scalar_lea.vmem %s3, %s334
      %s336 = smul.u32 32, %s20
      %p337 = scmp.lt.s32.totalorder %s20, 1
      %s338 = scalar_select %p337, %s20, 1
      %s339 = scalar_lea.vmem %s4, %s338
      %p340 = scmp.lt.s32.totalorder %s20, 1
      %s341 = scalar_select %p340, %s20, 1
      %s342 = scalar_lea.vmem %s5, %s341
      %s343 = smul.u32 32, %s20
      %p344 = scmp.lt.s32.totalorder %s343, 63
      %s345 = scalar_select %p344, %s343, 63
      %s346 = smul.addr %s345, 8
      %s347 = scalar_lea.vmem %s6, %s346
      %s348 = smul.u32 32, %s20
      %p349 = scmp.lt.s32.totalorder %s20, 1
      %s350 = scalar_select %p349, %s20, 1
      %s351 = scalar_lea.vmem %s7, %s350
      %p352 = scmp.lt.s32.totalorder %s20, 1
      %s353 = scalar_select %p352, %s20, 1
      %s354 = scalar_lea.vmem %s8, %s353
      %v355 = vld [vmem:[%s329] sm:$0xff]
      %v356 = vld [vmem:[%s329 + $0x8] sm:$0xff]
      %v357 = vld [vmem:[%s329 + $0x10] sm:$0xff]
      %v358 = vld [vmem:[%s329 + $0x18] sm:$0xff]
      %v359 = vld [vmem:[%s329 + $0x20] sm:$0xff]
      %v360 = vld [vmem:[%s329 + $0x28] sm:$0xff]
      %v361 = vld [vmem:[%s329 + $0x30] sm:$0xff]
      %v362 = vld [vmem:[%s329 + $0x38] sm:$0xff]
      %v363 = vld [vmem:[%s329 + $0x40] sm:$0xff]
      %v364 = vld [vmem:[%s329 + $0x48] sm:$0xff]
      %v365 = vld [vmem:[%s329 + $0x50] sm:$0xff]
      %v366 = vld [vmem:[%s329 + $0x58] sm:$0xff]
      %v367 = vld [vmem:[%s329 + $0x60] sm:$0xff]
      %v368 = vld [vmem:[%s329 + $0x68] sm:$0xff]
      %v369 = vld [vmem:[%s329 + $0x70] sm:$0xff]
      %v370 = vld [vmem:[%s329 + $0x78] sm:$0xff]
      %v371 = vld [vmem:[%s329 + $0x80] sm:$0xff]
      %v372 = vld [vmem:[%s329 + $0x88] sm:$0xff]
      %v373 = vld [vmem:[%s329 + $0x90] sm:$0xff]
      %v374 = vld [vmem:[%s329 + $0x98] sm:$0xff]
      %v375 = vld [vmem:[%s329 + $0xa0] sm:$0xff]
      %v376 = vld [vmem:[%s329 + $0xa8] sm:$0xff]
      %v377 = vld [vmem:[%s329 + $0xb0] sm:$0xff]
      %v378 = vld [vmem:[%s329 + $0xb8] sm:$0xff]
      %v379 = vld [vmem:[%s329 + $0xc0] sm:$0xff]
      %v380 = vld [vmem:[%s329 + $0xc8] sm:$0xff]
      %v381 = vld [vmem:[%s329 + $0xd0] sm:$0xff]
      %v382 = vld [vmem:[%s329 + $0xd8] sm:$0xff]
      %v383 = vld [vmem:[%s329 + $0xe0] sm:$0xff]
      %v384 = vld [vmem:[%s329 + $0xe8] sm:$0xff]
      %v385 = vld [vmem:[%s329 + $0xf0] sm:$0xff]
      %v386 = vld [vmem:[%s329 + $0xf8] sm:$0xff]
      %v387 = vld [vmem:[%s1] sm:$0xff]
      %v388 = vld [vmem:[%s1 + $0x8] sm:$0xff]
      %v389 = vld [vmem:[%s1 + $0x10] sm:$0xff]
      %v390 = vld [vmem:[%s1 + $0x18] sm:$0xff]
      %v391 = vld [vmem:[%s1 + $0x20] sm:$0xff]
      %v392 = vld [vmem:[%s1 + $0x28] sm:$0xff]
      %v393 = vld [vmem:[%s1 + $0x30] sm:$0xff]
      %v394 = vld [vmem:[%s1 + $0x38] sm:$0xff]
      %v395 = vld [vmem:[%s1 + $0x40] sm:$0xff]
      %v396 = vld [vmem:[%s1 + $0x48] sm:$0xff]
      %v397 = vld [vmem:[%s1 + $0x50] sm:$0xff]
      %v398 = vld [vmem:[%s1 + $0x58] sm:$0xff]
      %v399 = vld [vmem:[%s1 + $0x60] sm:$0xff]
      %v400 = vld [vmem:[%s1 + $0x68] sm:$0xff]
      %v401 = vld [vmem:[%s1 + $0x70] sm:$0xff]
      %v402 = vld [vmem:[%s1 + $0x78] sm:$0xff]
      %403 = vmatprep.subr.mxu0 0.0
      %404 = vmatpush1.msra.mxu0 %v387
      %405 = vmatprep.subr.mxu0 0.0
      %406 = vmatpush1.msra.mxu0 %v388
      %407 = vmatprep.subr.mxu0 0.0
      %408 = vmatpush1.msra.mxu0 %v389
      %409 = vmatprep.subr.mxu0 0.0
      %410 = vmatpush1.msra.mxu0 %v390
      %411 = vmatprep.subr.mxu0 0.0
      %412 = vmatpush1.msra.mxu0 %v391
      %413 = vmatprep.subr.mxu0 0.0
      %414 = vmatpush1.msra.mxu0 %v392
      %415 = vmatprep.subr.mxu0 0.0
      %416 = vmatpush1.msra.mxu0 %v393
      %417 = vmatprep.subr.mxu0 0.0
      %418 = vmatpush1.msra.mxu0 %v394
      %419 = vmatprep.subr.mxu0 0.0
      %420 = vmatpush1.msra.mxu0 %v395
      %421 = vmatprep.subr.mxu0 0.0
      %422 = vmatpush1.msra.mxu0 %v396
      %423 = vmatprep.subr.mxu0 0.0
      %424 = vmatpush1.msra.mxu0 %v397
      %425 = vmatprep.subr.mxu0 0.0
      %426 = vmatpush1.msra.mxu0 %v398
      %427 = vmatprep.subr.mxu0 0.0
      %428 = vmatpush1.msra.mxu0 %v399
      %429 = vmatprep.subr.mxu0 0.0
      %430 = vmatpush1.msra.mxu0 %v400
      %431 = vmatprep.subr.mxu0 0.0
      %432 = vmatpush1.msra.mxu0 %v401
      %433 = vmatprep.subr.mxu0 0.0
      %434 = vmatpush1.msra.mxu0 %v402
      %435 = vmatprep.subr.mxu0 0.0
      %436 = vmatpush1.msra.mxu0 0.0
      %437 = vmatprep.subr.mxu0 0.0
      %438 = vmatpush1.msra.mxu0 0.0
      %439 = vmatprep.subr.mxu0 0.0
      %440 = vmatpush1.msra.mxu0 0.0
      %441 = vmatprep.subr.mxu0 0.0
      %442 = vmatpush1.msra.mxu0 0.0
      %443 = vmatprep.subr.mxu0 0.0
      %444 = vmatpush1.msra.mxu0 0.0
      %445 = vmatprep.subr.mxu0 0.0
      %446 = vmatpush1.msra.mxu0 0.0
      %447 = vmatprep.subr.mxu0 0.0
      %448 = vmatpush1.msra.mxu0 0.0
      %449 = vmatprep.subr.mxu0 0.0
      %450 = vmatpush1.msra.mxu0 0.0
      %451 = vmatprep.subr.mxu0 0.0
      %452 = vmatpush1.msra.mxu0 0.0
      %453 = vmatprep.subr.mxu0 0.0
      %454 = vmatpush1.msra.mxu0 0.0
      %455 = vmatprep.subr.mxu0 0.0
      %456 = vmatpush1.msra.mxu0 0.0
      %457 = vmatprep.subr.mxu0 0.0
      %458 = vmatpush1.msra.mxu0 0.0
      %459 = vmatprep.subr.mxu0 0.0
      %460 = vmatpush1.msra.mxu0 0.0
      %461 = vmatprep.subr.mxu0 0.0
      %462 = vmatpush1.msra.mxu0 0.0
      %463 = vmatprep.subr.mxu0 0.0
      %464 = vmatpush1.msra.mxu0 0.0
      %465 = vmatprep.subr.mxu0 0.0
      %466 = vmatpush1.msra.mxu0 0.0
      %467 = vmatprep.mubr.f32.mxu0 0.0
      %468 = vmatmul.mubr.f32.gmra.mrb[0].mxu0 %v355
      %v469 = vpop.f32.mrb[0].mxu0
      %v470 = vadd.f32 0.0, %v469
      %v471 = vpop.f32.mrb[0].mxu0
      %472 = vmatprep.mubr.f32.mxu0 0.0
      %473 = vmatmul.mubr.f32.gmra.mrb[0].mxu0 %v356
      %v474 = vpop.f32.mrb[0].mxu0
      %v475 = vadd.f32 0.0, %v474
      %v476 = vpop.f32.mrb[0].mxu0
      %477 = vmatprep.mubr.f32.mxu0 0.0
      %478 = vmatmul.mubr.f32.gmra.mrb[0].mxu0 %v357
      %v479 = vpop.f32.mrb[0].mxu0
      %v480 = vadd.f32 0.0, %v479
      %v481 = vpop.f32.mrb[0].mxu0
      %482 = vmatprep.mubr.f32.mxu0 0.0
      %483 = vmatmul.mubr.f32.gmra.mrb[0].mxu0 %v358
      %v484 = vpop.f32.mrb[0].mxu0
      %v485 = vadd.f32 0.0, %v484
      %v486 = vpop.f32.mrb[0].mxu0
      %487 = vmatprep.mubr.f32.mxu0 0.0
      %488 = vmatmul.mubr.f32.gmra.mrb[0].mxu0 %v359
      %v489 = vpop.f32.mrb[0].mxu0
      %v490 = vadd.f32 0.0, %v489
      %v491 = vpop.f32.mrb[0].mxu0
      %492 = vmatprep.mubr.f32.mxu0 0.0
      %493 = vmatmul.mubr.f32.gmra.mrb[0].mxu0 %v360
      %v494 = vpop.f32.mrb[0].mxu0
      %v495 = vadd.f32 0.0, %v494
      %v496 = vpop.f32.mrb[0].mxu0
      %497 = vmatprep.mubr.f32.mxu0 0.0
      %498 = vmatmul.mubr.f32.gmra.mrb[0].mxu0 %v361
      %v499 = vpop.f32.mrb[0].mxu0
      %v500 = vadd.f32 0.0, %v499
      %v501 = vpop.f32.mrb[0].mxu0
      %502 = vmatprep.mubr.f32.mxu0 0.0
      %503 = vmatmul.mubr.f32.gmra.mrb[0].mxu0 %v362
      %v504 = vpop.f32.mrb[0].mxu0
      %v505 = vadd.f32 0.0, %v504
      %v506 = vpop.f32.mrb[0].mxu0
      %507 = vmatprep.mubr.f32.mxu0 0.0
      %508 = vmatmul.mubr.f32.gmra.mrb[0].mxu0 %v363
      %v509 = vpop.f32.mrb[0].mxu0
      %v510 = vadd.f32 0.0, %v509
      %v511 = vpop.f32.mrb[0].mxu0
      %512 = vmatprep.mubr.f32.mxu0 0.0
      %513 = vmatmul.mubr.f32.gmra.mrb[0].mxu0 %v364
      %v514 = vpop.f32.mrb[0].mxu0
      %v515 = vadd.f32 0.0, %v514
      %v516 = vpop.f32.mrb[0].mxu0
      %517 = vmatprep.mubr.f32.mxu0 0.0
      %518 = vmatmul.mubr.f32.gmra.mrb[0].mxu0 %v365
      %v519 = vpop.f32.mrb[0].mxu0
      %v520 = vadd.f32 0.0, %v519
      %v521 = vpop.f32.mrb[0].mxu0
      %522 = vmatprep.mubr.f32.mxu0 0.0
      %523 = vmatmul.mubr.f32.gmra.mrb[0].mxu0 %v366
      %v524 = vpop.f32.mrb[0].mxu0
      %v525 = vadd.f32 0.0, %v524
      %v526 = vpop.f32.mrb[0].mxu0
      %527 = vmatprep.mubr.f32.mxu0 0.0
      %528 = vmatmul.mubr.f32.gmra.mrb[0].mxu0 %v367
      %v529 = vpop.f32.mrb[0].mxu0
      %v530 = vadd.f32 0.0, %v529
      %v531 = vpop.f32.mrb[0].mxu0
      %532 = vmatprep.mubr.f32.mxu0 0.0
      %533 = vmatmul.mubr.f32.gmra.mrb[0].mxu0 %v368
      %v534 = vpop.f32.mrb[0].mxu0
      %v535 = vadd.f32 0.0, %v534
      %v536 = vpop.f32.mrb[0].mxu0
      %537 = vmatprep.mubr.f32.mxu0 0.0
      %538 = vmatmul.mubr.f32.gmra.mrb[0].mxu0 %v369
      %v539 = vpop.f32.mrb[0].mxu0
      %v540 = vadd.f32 0.0, %v539
      %v541 = vpop.f32.mrb[0].mxu0
      %542 = vmatprep.mubr.f32.mxu0 0.0
      %543 = vmatmul.mubr.f32.gmra.mrb[0].mxu0 %v370
      %v544 = vpop.f32.mrb[0].mxu0
      %v545 = vadd.f32 0.0, %v544
      %v546 = vpop.f32.mrb[0].mxu0
      %547 = vmatprep.mubr.f32.mxu0 0.0
      %548 = vmatmul.mubr.f32.gmra.mrb[0].mxu0 %v371
      %v549 = vpop.f32.mrb[0].mxu0
      %v550 = vadd.f32 0.0, %v549
      %v551 = vpop.f32.mrb[0].mxu0
      %552 = vmatprep.mubr.f32.mxu0 0.0
      %553 = vmatmul.mubr.f32.gmra.mrb[0].mxu0 %v372
      %v554 = vpop.f32.mrb[0].mxu0
      %v555 = vadd.f32 0.0, %v554
      %v556 = vpop.f32.mrb[0].mxu0
      %557 = vmatprep.mubr.f32.mxu0 0.0
      %558 = vmatmul.mubr.f32.gmra.mrb[0].mxu0 %v373
      %v559 = vpop.f32.mrb[0].mxu0
      %v560 = vadd.f32 0.0, %v559
      %v561 = vpop.f32.mrb[0].mxu0
      %562 = vmatprep.mubr.f32.mxu0 0.0
      %563 = vmatmul.mubr.f32.gmra.mrb[0].mxu0 %v374
      %v564 = vpop.f32.mrb[0].mxu0
      %v565 = vadd.f32 0.0, %v564
      %v566 = vpop.f32.mrb[0].mxu0
      %567 = vmatprep.mubr.f32.mxu0 0.0
      %568 = vmatmul.mubr.f32.gmra.mrb[0].mxu0 %v375
      %v569 = vpop.f32.mrb[0].mxu0
      %v570 = vadd.f32 0.0, %v569
      %v571 = vpop.f32.mrb[0].mxu0
      %572 = vmatprep.mubr.f32.mxu0 0.0
      %573 = vmatmul.mubr.f32.gmra.mrb[0].mxu0 %v376
      %v574 = vpop.f32.mrb[0].mxu0
      %v575 = vadd.f32 0.0, %v574
      %v576 = vpop.f32.mrb[0].mxu0
      %577 = vmatprep.mubr.f32.mxu0 0.0
      %578 = vmatmul.mubr.f32.gmra.mrb[0].mxu0 %v377
      %v579 = vpop.f32.mrb[0].mxu0
      %v580 = vadd.f32 0.0, %v579
      %v581 = vpop.f32.mrb[0].mxu0
      %582 = vmatprep.mubr.f32.mxu0 0.0
      %583 = vmatmul.mubr.f32.gmra.mrb[0].mxu0 %v378
      %v584 = vpop.f32.mrb[0].mxu0
      %v585 = vadd.f32 0.0, %v584
      %v586 = vpop.f32.mrb[0].mxu0
      %587 = vmatprep.mubr.f32.mxu0 0.0
      %588 = vmatmul.mubr.f32.gmra.mrb[0].mxu0 %v379
      %v589 = vpop.f32.mrb[0].mxu0
      %v590 = vadd.f32 0.0, %v589
      %v591 = vpop.f32.mrb[0].mxu0
      %592 = vmatprep.mubr.f32.mxu0 0.0
      %593 = vmatmul.mubr.f32.gmra.mrb[0].mxu0 %v380
      %v594 = vpop.f32.mrb[0].mxu0
      %v595 = vadd.f32 0.0, %v594
      %v596 = vpop.f32.mrb[0].mxu0
      %597 = vmatprep.mubr.f32.mxu0 0.0
      %598 = vmatmul.mubr.f32.gmra.mrb[0].mxu0 %v381
      %v599 = vpop.f32.mrb[0].mxu0
      %v600 = vadd.f32 0.0, %v599
      %v601 = vpop.f32.mrb[0].mxu0
      %602 = vmatprep.mubr.f32.mxu0 0.0
      %603 = vmatmul.mubr.f32.gmra.mrb[0].mxu0 %v382
      %v604 = vpop.f32.mrb[0].mxu0
      %v605 = vadd.f32 0.0, %v604
      %v606 = vpop.f32.mrb[0].mxu0
      %607 = vmatprep.mubr.f32.mxu0 0.0
      %608 = vmatmul.mubr.f32.gmra.mrb[0].mxu0 %v383
      %v609 = vpop.f32.mrb[0].mxu0
      %v610 = vadd.f32 0.0, %v609
      %v611 = vpop.f32.mrb[0].mxu0
      %612 = vmatprep.mubr.f32.mxu0 0.0
      %613 = vmatmul.mubr.f32.gmra.mrb[0].mxu0 %v384
      %v614 = vpop.f32.mrb[0].mxu0
      %v615 = vadd.f32 0.0, %v614
      %v616 = vpop.f32.mrb[0].mxu0
      %617 = vmatprep.mubr.f32.mxu0 0.0
      %618 = vmatmul.mubr.f32.gmra.mrb[0].mxu0 %v385
      %v619 = vpop.f32.mrb[0].mxu0
      %v620 = vadd.f32 0.0, %v619
      %v621 = vpop.f32.mrb[0].mxu0
      %622 = vmatprep.mubr.f32.mxu0 0.0
      %623 = vmatmul.mubr.f32.gmra.mrb[0].mxu0 %v386
      %v624 = vpop.f32.mrb[0].mxu0
      %v625 = vadd.f32 0.0, %v624
      %v626 = vpop.f32.mrb[0].mxu0
      %627 = vdwg.mxu0
      %628 = vst [vmem:[%s335] sm:$0xff] %v470
      %629 = vst [vmem:[%s335 + $0x8] sm:$0xff] %v475
      %630 = vst [vmem:[%s335 + $0x10] sm:$0xff] %v480
      %631 = vst [vmem:[%s335 + $0x18] sm:$0xff] %v485
      %632 = vst [vmem:[%s335 + $0x20] sm:$0xff] %v490
      %633 = vst [vmem:[%s335 + $0x28] sm:$0xff] %v495
      %634 = vst [vmem:[%s335 + $0x30] sm:$0xff] %v500
      %635 = vst [vmem:[%s335 + $0x38] sm:$0xff] %v505
      %636 = vst [vmem:[%s335 + $0x40] sm:$0xff] %v510
      %637 = vst [vmem:[%s335 + $0x48] sm:$0xff] %v515
      %638 = vst [vmem:[%s335 + $0x50] sm:$0xff] %v520
      %639 = vst [vmem:[%s335 + $0x58] sm:$0xff] %v525
      %640 = vst [vmem:[%s335 + $0x60] sm:$0xff] %v530
      %641 = vst [vmem:[%s335 + $0x68] sm:$0xff] %v535
      %642 = vst [vmem:[%s335 + $0x70] sm:$0xff] %v540
      %643 = vst [vmem:[%s335 + $0x78] sm:$0xff] %v545
      %644 = vst [vmem:[%s335 + $0x80] sm:$0xff] %v550
      %645 = vst [vmem:[%s335 + $0x88] sm:$0xff] %v555
      %646 = vst [vmem:[%s335 + $0x90] sm:$0xff] %v560
      %647 = vst [vmem:[%s335 + $0x98] sm:$0xff] %v565
      %648 = vst [vmem:[%s335 + $0xa0] sm:$0xff] %v570
      %649 = vst [vmem:[%s335 + $0xa8] sm:$0xff] %v575
      %650 = vst [vmem:[%s335 + $0xb0] sm:$0xff] %v580
      %651 = vst [vmem:[%s335 + $0xb8] sm:$0xff] %v585
      %652 = vst [vmem:[%s335 + $0xc0] sm:$0xff] %v590
      %653 = vst [vmem:[%s335 + $0xc8] sm:$0xff] %v595
      %654 = vst [vmem:[%s335 + $0xd0] sm:$0xff] %v600
      %655 = vst [vmem:[%s335 + $0xd8] sm:$0xff] %v605
      %656 = vst [vmem:[%s335 + $0xe0] sm:$0xff] %v610
      %657 = vst [vmem:[%s335 + $0xe8] sm:$0xff] %v615
      %658 = vst [vmem:[%s335 + $0xf0] sm:$0xff] %v620
      %659 = vst [vmem:[%s335 + $0xf8] sm:$0xff] %v625
      %v660 = vadd.f32 %v470, %v475
      %v661 = vadd.f32 %v660, %v480
      %v662 = vadd.f32 %v661, %v485
      %v663 = vadd.f32 %v662, %v490
      %v664 = vadd.f32 %v663, %v495
      %v665 = vadd.f32 %v664, %v500
      %v666 = vadd.f32 %v665, %v505
      %v667 = vadd.f32 %v666, %v510
      %v668 = vadd.f32 %v667, %v515
      %v669 = vadd.f32 %v668, %v520
      %v670 = vadd.f32 %v669, %v525
      %v671 = vadd.f32 %v670, %v530
      %v672 = vadd.f32 %v671, %v535
      %v673 = vadd.f32 %v672, %v540
      %v674 = vadd.f32 %v673, %v545
      %v675 = vadd.f32 %v674, %v550
      %v676 = vadd.f32 %v675, %v555
      %v677 = vadd.f32 %v676, %v560
      %v678 = vadd.f32 %v677, %v565
      %v679 = vadd.f32 %v678, %v570
      %v680 = vadd.f32 %v679, %v575
      %v681 = vadd.f32 %v680, %v580
      %v682 = vadd.f32 %v681, %v585
      %v683 = vadd.f32 %v682, %v590
      %v684 = vadd.f32 %v683, %v595
      %v685 = vadd.f32 %v684, %v600
      %v686 = vadd.f32 %v685, %v605
      %v687 = vadd.f32 %v686, %v610
      %v688 = vadd.f32 %v687, %v615
      %v689 = vadd.f32 %v688, %v620
      %v690 = vadd.f32 %v689, %v625
      %v691 = vrot.slane %v690, 4
      %v692 = vadd.f32 %v690, %v691
      %v693 = vrot.slane %v692, 2
      %v694 = vadd.f32 %v692, %v693
      %v695 = vrot.slane %v694, 1
      %v696 = vadd.f32 %v694, %v695
      %697 = vst [vmem:[%s339] sm:$0x1] %v696
      %v698 = vmul.f32 %v470, %v470
      %v699 = vmul.f32 %v475, %v475
      %v700 = vmul.f32 %v480, %v480
      %v701 = vmul.f32 %v485, %v485
      %v702 = vmul.f32 %v490, %v490
      %v703 = vmul.f32 %v495, %v495
      %v704 = vmul.f32 %v500, %v500
      %v705 = vmul.f32 %v505, %v505
      %v706 = vmul.f32 %v510, %v510
      %v707 = vmul.f32 %v515, %v515
      %v708 = vmul.f32 %v520, %v520
      %v709 = vmul.f32 %v525, %v525
      %v710 = vmul.f32 %v530, %v530
      %v711 = vmul.f32 %v535, %v535
      %v712 = vmul.f32 %v540, %v540
      %v713 = vmul.f32 %v545, %v545
      %v714 = vmul.f32 %v550, %v550
      %v715 = vmul.f32 %v555, %v555
      %v716 = vmul.f32 %v560, %v560
      %v717 = vmul.f32 %v565, %v565
      %v718 = vmul.f32 %v570, %v570
      %v719 = vmul.f32 %v575, %v575
      %v720 = vmul.f32 %v580, %v580
      %v721 = vmul.f32 %v585, %v585
      %v722 = vmul.f32 %v590, %v590
      %v723 = vmul.f32 %v595, %v595
      %v724 = vmul.f32 %v600, %v600
      %v725 = vmul.f32 %v605, %v605
      %v726 = vmul.f32 %v610, %v610
      %v727 = vmul.f32 %v615, %v615
      %v728 = vmul.f32 %v620, %v620
      %v729 = vmul.f32 %v625, %v625
      %v730 = vadd.f32 %v698, %v699
      %v731 = vadd.f32 %v730, %v700
      %v732 = vadd.f32 %v731, %v701
      %v733 = vadd.f32 %v732, %v702
      %v734 = vadd.f32 %v733, %v703
      %v735 = vadd.f32 %v734, %v704
      %v736 = vadd.f32 %v735, %v705
      %v737 = vadd.f32 %v736, %v706
      %v738 = vadd.f32 %v737, %v707
      %v739 = vadd.f32 %v738, %v708
      %v740 = vadd.f32 %v739, %v709
      %v741 = vadd.f32 %v740, %v710
      %v742 = vadd.f32 %v741, %v711
      %v743 = vadd.f32 %v742, %v712
      %v744 = vadd.f32 %v743, %v713
      %v745 = vadd.f32 %v744, %v714
      %v746 = vadd.f32 %v745, %v715
      %v747 = vadd.f32 %v746, %v716
      %v748 = vadd.f32 %v747, %v717
      %v749 = vadd.f32 %v748, %v718
      %v750 = vadd.f32 %v749, %v719
      %v751 = vadd.f32 %v750, %v720
      %v752 = vadd.f32 %v751, %v721
      %v753 = vadd.f32 %v752, %v722
      %v754 = vadd.f32 %v753, %v723
      %v755 = vadd.f32 %v754, %v724
      %v756 = vadd.f32 %v755, %v725
      %v757 = vadd.f32 %v756, %v726
      %v758 = vadd.f32 %v757, %v727
      %v759 = vadd.f32 %v758, %v728
      %v760 = vadd.f32 %v759, %v729
      %v761 = vrot.slane %v760, 4
      %v762 = vadd.f32 %v760, %v761
      %v763 = vrot.slane %v762, 2
      %v764 = vadd.f32 %v762, %v763
      %v765 = vrot.slane %v764, 1
      %v766 = vadd.f32 %v764, %v765
      %767 = vst [vmem:[%s342] sm:$0x1] %v766
      %v768 = vld [vmem:[%s2] sm:$0xff]
      %v769 = vld [vmem:[%s2 + $0x8] sm:$0xff]
      %v770 = vld [vmem:[%s2 + $0x10] sm:$0xff]
      %v771 = vld [vmem:[%s2 + $0x18] sm:$0xff]
      %v772 = vld [vmem:[%s2 + $0x20] sm:$0xff]
      %v773 = vld [vmem:[%s2 + $0x28] sm:$0xff]
      %v774 = vld [vmem:[%s2 + $0x30] sm:$0xff]
      %v775 = vld [vmem:[%s2 + $0x38] sm:$0xff]
      %v776 = vld [vmem:[%s2 + $0x40] sm:$0xff]
      %v777 = vld [vmem:[%s2 + $0x48] sm:$0xff]
      %v778 = vld [vmem:[%s2 + $0x50] sm:$0xff]
      %v779 = vld [vmem:[%s2 + $0x58] sm:$0xff]
      %v780 = vld [vmem:[%s2 + $0x60] sm:$0xff]
      %v781 = vld [vmem:[%s2 + $0x68] sm:$0xff]
      %v782 = vld [vmem:[%s2 + $0x70] sm:$0xff]
      %v783 = vld [vmem:[%s2 + $0x78] sm:$0xff]
      %784 = vmatprep.subr.mxu0 0.0
      %785 = vmatpush1.msra.mxu0 %v768
      %786 = vmatprep.subr.mxu0 0.0
      %787 = vmatpush1.msra.mxu0 %v769
      %788 = vmatprep.subr.mxu0 0.0
      %789 = vmatpush1.msra.mxu0 %v770
      %790 = vmatprep.subr.mxu0 0.0
      %791 = vmatpush1.msra.mxu0 %v771
      %792 = vmatprep.subr.mxu0 0.0
      %793 = vmatpush1.msra.mxu0 %v772
      %794 = vmatprep.subr.mxu0 0.0
      %795 = vmatpush1.msra.mxu0 %v773
      %796 = vmatprep.subr.mxu0 0.0
      %797 = vmatpush1.msra.mxu0 %v774
      %798 = vmatprep.subr.mxu0 0.0
      %799 = vmatpush1.msra.mxu0 %v775
      %800 = vmatprep.subr.mxu0 0.0
      %801 = vmatpush1.msra.mxu0 %v776
      %802 = vmatprep.subr.mxu0 0.0
      %803 = vmatpush1.msra.mxu0 %v777
      %804 = vmatprep.subr.mxu0 0.0
      %805 = vmatpush1.msra.mxu0 %v778
      %806 = vmatprep.subr.mxu0 0.0
      %807 = vmatpush1.msra.mxu0 %v779
      %808 = vmatprep.subr.mxu0 0.0
      %809 = vmatpush1.msra.mxu0 %v780
      %810 = vmatprep.subr.mxu0 0.0
      %811 = vmatpush1.msra.mxu0 %v781
      %812 = vmatprep.subr.mxu0 0.0
      %813 = vmatpush1.msra.mxu0 %v782
      %814 = vmatprep.subr.mxu0 0.0
      %815 = vmatpush1.msra.mxu0 %v783
      %816 = vmatprep.subr.mxu0 0.0
      %817 = vmatpush1.msra.mxu0 0.0
      %818 = vmatprep.subr.mxu0 0.0
      %819 = vmatpush1.msra.mxu0 0.0
      %820 = vmatprep.subr.mxu0 0.0
      %821 = vmatpush1.msra.mxu0 0.0
      %822 = vmatprep.subr.mxu0 0.0
      %823 = vmatpush1.msra.mxu0 0.0
      %824 = vmatprep.subr.mxu0 0.0
      %825 = vmatpush1.msra.mxu0 0.0
      %826 = vmatprep.subr.mxu0 0.0
      %827 = vmatpush1.msra.mxu0 0.0
      %828 = vmatprep.subr.mxu0 0.0
      %829 = vmatpush1.msra.mxu0 0.0
      %830 = vmatprep.subr.mxu0 0.0
      %831 = vmatpush1.msra.mxu0 0.0
      %832 = vmatprep.subr.mxu0 0.0
      %833 = vmatpush1.msra.mxu0 0.0
      %834 = vmatprep.subr.mxu0 0.0
      %835 = vmatpush1.msra.mxu0 0.0
      %836 = vmatprep.subr.mxu0 0.0
      %837 = vmatpush1.msra.mxu0 0.0
      %838 = vmatprep.subr.mxu0 0.0
      %839 = vmatpush1.msra.mxu0 0.0
      %840 = vmatprep.subr.mxu0 0.0
      %841 = vmatpush1.msra.mxu0 0.0
      %842 = vmatprep.subr.mxu0 0.0
      %843 = vmatpush1.msra.mxu0 0.0
      %844 = vmatprep.subr.mxu0 0.0
      %845 = vmatpush1.msra.mxu0 0.0
      %846 = vmatprep.subr.mxu0 0.0
      %847 = vmatpush1.msra.mxu0 0.0
      %848 = vmatprep.mubr.f32.mxu0 0.0
      %849 = vmatmul.mubr.f32.gmra.mrb[0].mxu0 %v355
      %v850 = vpop.f32.mrb[0].mxu0
      %v851 = vadd.f32 0.0, %v850
      %v852 = vpop.f32.mrb[0].mxu0
      %853 = vmatprep.mubr.f32.mxu0 0.0
      %854 = vmatmul.mubr.f32.gmra.mrb[0].mxu0 %v356
      %v855 = vpop.f32.mrb[0].mxu0
      %v856 = vadd.f32 0.0, %v855
      %v857 = vpop.f32.mrb[0].mxu0
      %858 = vmatprep.mubr.f32.mxu0 0.0
      %859 = vmatmul.mubr.f32.gmra.mrb[0].mxu0 %v357
      %v860 = vpop.f32.mrb[0].mxu0
      %v861 = vadd.f32 0.0, %v860
      %v862 = vpop.f32.mrb[0].mxu0
      %863 = vmatprep.mubr.f32.mxu0 0.0
      %864 = vmatmul.mubr.f32.gmra.mrb[0].mxu0 %v358
      %v865 = vpop.f32.mrb[0].mxu0
      %v866 = vadd.f32 0.0, %v865
      %v867 = vpop.f32.mrb[0].mxu0
      %868 = vmatprep.mubr.f32.mxu0 0.0
      %869 = vmatmul.mubr.f32.gmra.mrb[0].mxu0 %v359
      %v870 = vpop.f32.mrb[0].mxu0
      %v871 = vadd.f32 0.0, %v870
      %v872 = vpop.f32.mrb[0].mxu0
      %873 = vmatprep.mubr.f32.mxu0 0.0
      %874 = vmatmul.mubr.f32.gmra.mrb[0].mxu0 %v360
      %v875 = vpop.f32.mrb[0].mxu0
      %v876 = vadd.f32 0.0, %v875
      %v877 = vpop.f32.mrb[0].mxu0
      %878 = vmatprep.mubr.f32.mxu0 0.0
      %879 = vmatmul.mubr.f32.gmra.mrb[0].mxu0 %v361
      %v880 = vpop.f32.mrb[0].mxu0
      %v881 = vadd.f32 0.0, %v880
      %v882 = vpop.f32.mrb[0].mxu0
      %883 = vmatprep.mubr.f32.mxu0 0.0
      %884 = vmatmul.mubr.f32.gmra.mrb[0].mxu0 %v362
      %v885 = vpop.f32.mrb[0].mxu0
      %v886 = vadd.f32 0.0, %v885
      %v887 = vpop.f32.mrb[0].mxu0
      %888 = vmatprep.mubr.f32.mxu0 0.0
      %889 = vmatmul.mubr.f32.gmra.mrb[0].mxu0 %v363
      %v890 = vpop.f32.mrb[0].mxu0
      %v891 = vadd.f32 0.0, %v890
      %v892 = vpop.f32.mrb[0].mxu0
      %893 = vmatprep.mubr.f32.mxu0 0.0
      %894 = vmatmul.mubr.f32.gmra.mrb[0].mxu0 %v364
      %v895 = vpop.f32.mrb[0].mxu0
      %v896 = vadd.f32 0.0, %v895
      %v897 = vpop.f32.mrb[0].mxu0
      %898 = vmatprep.mubr.f32.mxu0 0.0
      %899 = vmatmul.mubr.f32.gmra.mrb[0].mxu0 %v365
      %v900 = vpop.f32.mrb[0].mxu0
      %v901 = vadd.f32 0.0, %v900
      %v902 = vpop.f32.mrb[0].mxu0
      %903 = vmatprep.mubr.f32.mxu0 0.0
      %904 = vmatmul.mubr.f32.gmra.mrb[0].mxu0 %v366
      %v905 = vpop.f32.mrb[0].mxu0
      %v906 = vadd.f32 0.0, %v905
      %v907 = vpop.f32.mrb[0].mxu0
      %908 = vmatprep.mubr.f32.mxu0 0.0
      %909 = vmatmul.mubr.f32.gmra.mrb[0].mxu0 %v367
      %v910 = vpop.f32.mrb[0].mxu0
      %v911 = vadd.f32 0.0, %v910
      %v912 = vpop.f32.mrb[0].mxu0
      %913 = vmatprep.mubr.f32.mxu0 0.0
      %914 = vmatmul.mubr.f32.gmra.mrb[0].mxu0 %v368
      %v915 = vpop.f32.mrb[0].mxu0
      %v916 = vadd.f32 0.0, %v915
      %v917 = vpop.f32.mrb[0].mxu0
      %918 = vmatprep.mubr.f32.mxu0 0.0
      %919 = vmatmul.mubr.f32.gmra.mrb[0].mxu0 %v369
      %v920 = vpop.f32.mrb[0].mxu0
      %v921 = vadd.f32 0.0, %v920
      %v922 = vpop.f32.mrb[0].mxu0
      %923 = vmatprep.mubr.f32.mxu0 0.0
      %924 = vmatmul.mubr.f32.gmra.mrb[0].mxu0 %v370
      %v925 = vpop.f32.mrb[0].mxu0
      %v926 = vadd.f32 0.0, %v925
      %v927 = vpop.f32.mrb[0].mxu0
      %928 = vmatprep.mubr.f32.mxu0 0.0
      %929 = vmatmul.mubr.f32.gmra.mrb[0].mxu0 %v371
      %v930 = vpop.f32.mrb[0].mxu0
      %v931 = vadd.f32 0.0, %v930
      %v932 = vpop.f32.mrb[0].mxu0
      %933 = vmatprep.mubr.f32.mxu0 0.0
      %934 = vmatmul.mubr.f32.gmra.mrb[0].mxu0 %v372
      %v935 = vpop.f32.mrb[0].mxu0
      %v936 = vadd.f32 0.0, %v935
      %v937 = vpop.f32.mrb[0].mxu0
      %938 = vmatprep.mubr.f32.mxu0 0.0
      %939 = vmatmul.mubr.f32.gmra.mrb[0].mxu0 %v373
      %v940 = vpop.f32.mrb[0].mxu0
      %v941 = vadd.f32 0.0, %v940
      %v942 = vpop.f32.mrb[0].mxu0
      %943 = vmatprep.mubr.f32.mxu0 0.0
      %944 = vmatmul.mubr.f32.gmra.mrb[0].mxu0 %v374
      %v945 = vpop.f32.mrb[0].mxu0
      %v946 = vadd.f32 0.0, %v945
      %v947 = vpop.f32.mrb[0].mxu0
      %948 = vmatprep.mubr.f32.mxu0 0.0
      %949 = vmatmul.mubr.f32.gmra.mrb[0].mxu0 %v375
      %v950 = vpop.f32.mrb[0].mxu0
      %v951 = vadd.f32 0.0, %v950
      %v952 = vpop.f32.mrb[0].mxu0
      %953 = vmatprep.mubr.f32.mxu0 0.0
      %954 = vmatmul.mubr.f32.gmra.mrb[0].mxu0 %v376
      %v955 = vpop.f32.mrb[0].mxu0
      %v956 = vadd.f32 0.0, %v955
      %v957 = vpop.f32.mrb[0].mxu0
      %958 = vmatprep.mubr.f32.mxu0 0.0
      %959 = vmatmul.mubr.f32.gmra.mrb[0].mxu0 %v377
      %v960 = vpop.f32.mrb[0].mxu0
      %v961 = vadd.f32 0.0, %v960
      %v962 = vpop.f32.mrb[0].mxu0
      %963 = vmatprep.mubr.f32.mxu0 0.0
      %964 = vmatmul.mubr.f32.gmra.mrb[0].mxu0 %v378
      %v965 = vpop.f32.mrb[0].mxu0
      %v966 = vadd.f32 0.0, %v965
      %v967 = vpop.f32.mrb[0].mxu0
      %968 = vmatprep.mubr.f32.mxu0 0.0
      %969 = vmatmul.mubr.f32.gmra.mrb[0].mxu0 %v379
      %v970 = vpop.f32.mrb[0].mxu0
      %v971 = vadd.f32 0.0, %v970
      %v972 = vpop.f32.mrb[0].mxu0
      %973 = vmatprep.mubr.f32.mxu0 0.0
      %974 = vmatmul.mubr.f32.gmra.mrb[0].mxu0 %v380
      %v975 = vpop.f32.mrb[0].mxu0
      %v976 = vadd.f32 0.0, %v975
      %v977 = vpop.f32.mrb[0].mxu0
      %978 = vmatprep.mubr.f32.mxu0 0.0
      %979 = vmatmul.mubr.f32.gmra.mrb[0].mxu0 %v381
      %v980 = vpop.f32.mrb[0].mxu0
      %v981 = vadd.f32 0.0, %v980
      %v982 = vpop.f32.mrb[0].mxu0
      %983 = vmatprep.mubr.f32.mxu0 0.0
      %984 = vmatmul.mubr.f32.gmra.mrb[0].mxu0 %v382
      %v985 = vpop.f32.mrb[0].mxu0
      %v986 = vadd.f32 0.0, %v985
      %v987 = vpop.f32.mrb[0].mxu0
      %988 = vmatprep.mubr.f32.mxu0 0.0
      %989 = vmatmul.mubr.f32.gmra.mrb[0].mxu0 %v383
      %v990 = vpop.f32.mrb[0].mxu0
      %v991 = vadd.f32 0.0, %v990
      %v992 = vpop.f32.mrb[0].mxu0
      %993 = vmatprep.mubr.f32.mxu0 0.0
      %994 = vmatmul.mubr.f32.gmra.mrb[0].mxu0 %v384
      %v995 = vpop.f32.mrb[0].mxu0
      %v996 = vadd.f32 0.0, %v995
      %v997 = vpop.f32.mrb[0].mxu0
      %998 = vmatprep.mubr.f32.mxu0 0.0
      %999 = vmatmul.mubr.f32.gmra.mrb[0].mxu0 %v385
      %v1000 = vpop.f32.mrb[0].mxu0
      %v1001 = vadd.f32 0.0, %v1000
      %v1002 = vpop.f32.mrb[0].mxu0
      %1003 = vmatprep.mubr.f32.mxu0 0.0
      %1004 = vmatmul.mubr.f32.gmra.mrb[0].mxu0 %v386
      %v1005 = vpop.f32.mrb[0].mxu0
      %v1006 = vadd.f32 0.0, %v1005
      %v1007 = vpop.f32.mrb[0].mxu0
      %1008 = vdwg.mxu0
      %1009 = vst [vmem:[%s347] sm:$0xff] %v851
      %1010 = vst [vmem:[%s347 + $0x8] sm:$0xff] %v856
      %1011 = vst [vmem:[%s347 + $0x10] sm:$0xff] %v861
      %1012 = vst [vmem:[%s347 + $0x18] sm:$0xff] %v866
      %1013 = vst [vmem:[%s347 + $0x20] sm:$0xff] %v871
      %1014 = vst [vmem:[%s347 + $0x28] sm:$0xff] %v876
      %1015 = vst [vmem:[%s347 + $0x30] sm:$0xff] %v881
      %1016 = vst [vmem:[%s347 + $0x38] sm:$0xff] %v886
      %1017 = vst [vmem:[%s347 + $0x40] sm:$0xff] %v891
      %1018 = vst [vmem:[%s347 + $0x48] sm:$0xff] %v896
      %1019 = vst [vmem:[%s347 + $0x50] sm:$0xff] %v901
      %1020 = vst [vmem:[%s347 + $0x58] sm:$0xff] %v906
      %1021 = vst [vmem:[%s347 + $0x60] sm:$0xff] %v911
      %1022 = vst [vmem:[%s347 + $0x68] sm:$0xff] %v916
      %1023 = vst [vmem:[%s347 + $0x70] sm:$0xff] %v921
      %1024 = vst [vmem:[%s347 + $0x78] sm:$0xff] %v926
      %1025 = vst [vmem:[%s347 + $0x80] sm:$0xff] %v931
      %1026 = vst [vmem:[%s347 + $0x88] sm:$0xff] %v936
      %1027 = vst [vmem:[%s347 + $0x90] sm:$0xff] %v941
      %1028 = vst [vmem:[%s347 + $0x98] sm:$0xff] %v946
      %1029 = vst [vmem:[%s347 + $0xa0] sm:$0xff] %v951
      %1030 = vst [vmem:[%s347 + $0xa8] sm:$0xff] %v956
      %1031 = vst [vmem:[%s347 + $0xb0] sm:$0xff] %v961
      %1032 = vst [vmem:[%s347 + $0xb8] sm:$0xff] %v966
      %1033 = vst [vmem:[%s347 + $0xc0] sm:$0xff] %v971
      %1034 = vst [vmem:[%s347 + $0xc8] sm:$0xff] %v976
      %1035 = vst [vmem:[%s347 + $0xd0] sm:$0xff] %v981
      %1036 = vst [vmem:[%s347 + $0xd8] sm:$0xff] %v986
      %1037 = vst [vmem:[%s347 + $0xe0] sm:$0xff] %v991
      %1038 = vst [vmem:[%s347 + $0xe8] sm:$0xff] %v996
      %1039 = vst [vmem:[%s347 + $0xf0] sm:$0xff] %v1001
      %1040 = vst [vmem:[%s347 + $0xf8] sm:$0xff] %v1006
      %v1041 = vadd.f32 %v851, %v856
      %v1042 = vadd.f32 %v1041, %v861
      %v1043 = vadd.f32 %v1042, %v866
      %v1044 = vadd.f32 %v1043, %v871
      %v1045 = vadd.f32 %v1044, %v876
      %v1046 = vadd.f32 %v1045, %v881
      %v1047 = vadd.f32 %v1046, %v886
      %v1048 = vadd.f32 %v1047, %v891
      %v1049 = vadd.f32 %v1048, %v896
      %v1050 = vadd.f32 %v1049, %v901
      %v1051 = vadd.f32 %v1050, %v906
      %v1052 = vadd.f32 %v1051, %v911
      %v1053 = vadd.f32 %v1052, %v916
      %v1054 = vadd.f32 %v1053, %v921
      %v1055 = vadd.f32 %v1054, %v926
      %v1056 = vadd.f32 %v1055, %v931
      %v1057 = vadd.f32 %v1056, %v936
      %v1058 = vadd.f32 %v1057, %v941
      %v1059 = vadd.f32 %v1058, %v946
      %v1060 = vadd.f32 %v1059, %v951
      %v1061 = vadd.f32 %v1060, %v956
      %v1062 = vadd.f32 %v1061, %v961
      %v1063 = vadd.f32 %v1062, %v966
      %v1064 = vadd.f32 %v1063, %v971
      %v1065 = vadd.f32 %v1064, %v976
      %v1066 = vadd.f32 %v1065, %v981
      %v1067 = vadd.f32 %v1066, %v986
      %v1068 = vadd.f32 %v1067, %v991
      %v1069 = vadd.f32 %v1068, %v996
      %v1070 = vadd.f32 %v1069, %v1001
      %v1071 = vadd.f32 %v1070, %v1006
      %v1072 = vrot.slane %v1071, 4
      %v1073 = vadd.f32 %v1071, %v1072
      %v1074 = vrot.slane %v1073, 2
      %v1075 = vadd.f32 %v1073, %v1074
      %v1076 = vrot.slane %v1075, 1
      %v1077 = vadd.f32 %v1075, %v1076
      %1078 = vst [vmem:[%s351] sm:$0x1] %v1077
      %v1079 = vmul.f32 %v851, %v851
      %v1080 = vmul.f32 %v856, %v856
      %v1081 = vmul.f32 %v861, %v861
      %v1082 = vmul.f32 %v866, %v866
      %v1083 = vmul.f32 %v871, %v871
      %v1084 = vmul.f32 %v876, %v876
      %v1085 = vmul.f32 %v881, %v881
      %v1086 = vmul.f32 %v886, %v886
      %v1087 = vmul.f32 %v891, %v891
      %v1088 = vmul.f32 %v896, %v896
      %v1089 = vmul.f32 %v901, %v901
      %v1090 = vmul.f32 %v906, %v906
      %v1091 = vmul.f32 %v911, %v911
      %v1092 = vmul.f32 %v916, %v916
      %v1093 = vmul.f32 %v921, %v921
      %v1094 = vmul.f32 %v926, %v926
      %v1095 = vmul.f32 %v931, %v931
      %v1096 = vmul.f32 %v936, %v936
      %v1097 = vmul.f32 %v941, %v941
      %v1098 = vmul.f32 %v946, %v946
      %v1099 = vmul.f32 %v951, %v951
      %v1100 = vmul.f32 %v956, %v956
      %v1101 = vmul.f32 %v961, %v961
      %v1102 = vmul.f32 %v966, %v966
      %v1103 = vmul.f32 %v971, %v971
      %v1104 = vmul.f32 %v976, %v976
      %v1105 = vmul.f32 %v981, %v981
      %v1106 = vmul.f32 %v986, %v986
      %v1107 = vmul.f32 %v991, %v991
      %v1108 = vmul.f32 %v996, %v996
      %v1109 = vmul.f32 %v1001, %v1001
      %v1110 = vmul.f32 %v1006, %v1006
      %v1111 = vadd.f32 %v1079, %v1080
      %v1112 = vadd.f32 %v1111, %v1081
      %v1113 = vadd.f32 %v1112, %v1082
      %v1114 = vadd.f32 %v1113, %v1083
      %v1115 = vadd.f32 %v1114, %v1084
      %v1116 = vadd.f32 %v1115, %v1085
      %v1117 = vadd.f32 %v1116, %v1086
      %v1118 = vadd.f32 %v1117, %v1087
      %v1119 = vadd.f32 %v1118, %v1088
      %v1120 = vadd.f32 %v1119, %v1089
      %v1121 = vadd.f32 %v1120, %v1090
      %v1122 = vadd.f32 %v1121, %v1091
      %v1123 = vadd.f32 %v1122, %v1092
      %v1124 = vadd.f32 %v1123, %v1093
      %v1125 = vadd.f32 %v1124, %v1094
      %v1126 = vadd.f32 %v1125, %v1095
      %v1127 = vadd.f32 %v1126, %v1096
      %v1128 = vadd.f32 %v1127, %v1097
      %v1129 = vadd.f32 %v1128, %v1098
      %v1130 = vadd.f32 %v1129, %v1099
      %v1131 = vadd.f32 %v1130, %v1100
      %v1132 = vadd.f32 %v1131, %v1101
      %v1133 = vadd.f32 %v1132, %v1102
      %v1134 = vadd.f32 %v1133, %v1103
      %v1135 = vadd.f32 %v1134, %v1104
      %v1136 = vadd.f32 %v1135, %v1105
      %v1137 = vadd.f32 %v1136, %v1106
      %v1138 = vadd.f32 %v1137, %v1107
      %v1139 = vadd.f32 %v1138, %v1108
      %v1140 = vadd.f32 %v1139, %v1109
      %v1141 = vadd.f32 %v1140, %v1110
      %v1142 = vrot.slane %v1141, 4
      %v1143 = vadd.f32 %v1141, %v1142
      %v1144 = vrot.slane %v1143, 2
      %v1145 = vadd.f32 %v1143, %v1144
      %v1146 = vrot.slane %v1145, 1
      %v1147 = vadd.f32 %v1145, %v1146
      %1148 = vst [vmem:[%s354] sm:$0x1] %v1147
      %s1149 = smul.u32 32, %s20
      %p1150 = scmp.lt.s32.totalorder %s1149, 63
      %s1151 = scalar_select %p1150, %s1149, 63
      %s1152 = smul.addr %s1151, 8
      %s1153 = scalar_lea.vmem %s3, %s1152
      %p1154 = scmp.lt.s32.totalorder %s20, 1
      %s1155 = scalar_select %p1154, %s20, 1
      %s1156 = scalar_lea.vmem %s4, %s1155
      %p1157 = scmp.lt.s32.totalorder %s20, 1
      %s1158 = scalar_select %p1157, %s20, 1
      %s1159 = scalar_lea.vmem %s5, %s1158
      %s1160 = smul.u32 32, %s20
      %p1161 = scmp.lt.s32.totalorder %s1160, 63
      %s1162 = scalar_select %p1161, %s1160, 63
      %s1163 = smul.addr %s1162, 8
      %s1164 = scalar_lea.vmem %s6, %s1163
      %p1165 = scmp.lt.s32.totalorder %s20, 1
      %s1166 = scalar_select %p1165, %s20, 1
      %s1167 = scalar_lea.vmem %s7, %s1166
      %p1168 = scmp.lt.s32.totalorder %s20, 1
      %s1169 = scalar_select %p1168, %s20, 1
      %s1170 = scalar_lea.vmem %s8, %s1169
      // Predicated region
      $region33: #{bottleneck_forward.4} parent=31 // pred_check
        %p1171 = pneg %p106
      $region34: #{bottleneck_forward.4} parent=31 // pred_check_branch
        %1173 = sbr.rel (%p1171) target = $region36
      $region35: #{bottleneck_forward.4} parent=31 // pred_region
        %s1174 = smul.u32 32, %s20
      $region36: #{bottleneck_forward.4} parent=31 // pred_fallthru
        _
      // Predicated region
      $region37: #{bottleneck_forward.4} parent=31 // pred_check
        %p1175 = pneg %p132
      $region38: #{bottleneck_forward.4} parent=31 // pred_check_branch
        %1177 = sbr.rel (%p1175) target = $region40
      $region39: #{bottleneck_forward.4} parent=31 // pred_region
        _
      $region40: #{bottleneck_forward.4} parent=31 // pred_fallthru
        _
      // Predicated region
      $region41: #{bottleneck_forward.4} parent=31 // pred_check
        %p1178 = pneg %p158
      $region42: #{bottleneck_forward.4} parent=31 // pred_check_branch
        %1180 = sbr.rel (%p1178) target = $region44
      $region43: #{bottleneck_forward.4} parent=31 // pred_region
        _
      $region44: #{bottleneck_forward.4} parent=31 // pred_fallthru
        _
      // Predicated region
      $region45: #{bottleneck_forward.4} parent=31 // pred_check
        %p1181 = pneg %p184
      $region46: #{bottleneck_forward.4} parent=31 // pred_check_branch
        %1183 = sbr.rel (%p1181) target = $region48
      $region47: #{bottleneck_forward.4} parent=31 // pred_region
        %s1184 = smul.u32 32, %s20
      $region48: #{bottleneck_forward.4} parent=31 // pred_fallthru
        _
      // Predicated region
      $region49: #{bottleneck_forward.4} parent=31 // pred_check
        %p1185 = pneg %p210
      $region50: #{bottleneck_forward.4} parent=31 // pred_check_branch
        %1187 = sbr.rel (%p1185) target = $region52
      $region51: #{bottleneck_forward.4} parent=31 // pred_region
        _
      $region52: #{bottleneck_forward.4} parent=31 // pred_fallthru
        _
      // Predicated region
      $region53: #{bottleneck_forward.4} parent=31 // pred_check
        %p1188 = pneg %p236
      $region54: #{bottleneck_forward.4} parent=31 // pred_check_branch
        %1190 = sbr.rel (%p1188) target = $region56
      $region55: #{bottleneck_forward.4} parent=31 // pred_region
        _
      $region56: #{bottleneck_forward.4} parent=31 // pred_fallthru
        _
    $region32: #{bottleneck_forward.4} parent=5 // pred_fallthru
      _
    %p1191 = scmp.le.s32.totalorder 2, %s15
    // Predicated region
    $region57: #{bottleneck_forward.4} parent=5 // pred_check
      %p1192 = pneg %p1191
    $region58: #{bottleneck_forward.4} parent=5 // pred_check_branch
      %1194 = sbr.rel (%p1192) target = $region60
    $region59: #{bottleneck_forward.4} parent=5 // pred_region
      %s1195 = ssub.s32 %s15, 2
      // Predicated region
      $region61: #{bottleneck_forward.4} parent=59 // pred_check
        %p1196 = pneg %p112
      $region62: #{bottleneck_forward.4} parent=59 // pred_check_branch
        %1198 = sbr.rel (%p1196) target = $region64
      $region63: #{bottleneck_forward.4} parent=59 // pred_region
        %s1199 = smul.u32 32, %s21
        %p1200 = scmp.lt.s32.totalorder %s1199, 63
        %s1201 = scalar_select %p1200, %s1199, 63
        %s1202 = smul.addr %s1201, 8
        %s1203 = scalar_lea.vmem %s3, %s1202
      $region64: #{bottleneck_forward.4} parent=59 // pred_fallthru
        _
      // Predicated region
      $region65: #{bottleneck_forward.4} parent=59 // pred_check
        %p1204 = pneg %p138
      $region66: #{bottleneck_forward.4} parent=59 // pred_check_branch
        %1206 = sbr.rel (%p1204) target = $region68
      $region67: #{bottleneck_forward.4} parent=59 // pred_region
        %p1207 = scmp.lt.s32.totalorder %s21, 1
        %s1208 = scalar_select %p1207, %s21, 1
        %s1209 = scalar_lea.vmem %s4, %s1208
      $region68: #{bottleneck_forward.4} parent=59 // pred_fallthru
        _
      // Predicated region
      $region69: #{bottleneck_forward.4} parent=59 // pred_check
        %p1210 = pneg %p164
      $region70: #{bottleneck_forward.4} parent=59 // pred_check_branch
        %1212 = sbr.rel (%p1210) target = $region72
      $region71: #{bottleneck_forward.4} parent=59 // pred_region
        %p1213 = scmp.lt.s32.totalorder %s21, 1
        %s1214 = scalar_select %p1213, %s21, 1
        %s1215 = scalar_lea.vmem %s5, %s1214
      $region72: #{bottleneck_forward.4} parent=59 // pred_fallthru
        _
      // Predicated region
      $region73: #{bottleneck_forward.4} parent=59 // pred_check
        %p1216 = pneg %p190
      $region74: #{bottleneck_forward.4} parent=59 // pred_check_branch
        %1218 = sbr.rel (%p1216) target = $region76
      $region75: #{bottleneck_forward.4} parent=59 // pred_region
        %s1219 = smul.u32 32, %s21
        %p1220 = scmp.lt.s32.totalorder %s1219, 63
        %s1221 = scalar_select %p1220, %s1219, 63
        %s1222 = smul.addr %s1221, 8
        %s1223 = scalar_lea.vmem %s6, %s1222
      $region76: #{bottleneck_forward.4} parent=59 // pred_fallthru
        _
      // Predicated region
      $region77: #{bottleneck_forward.4} parent=59 // pred_check
        %p1224 = pneg %p216
      $region78: #{bottleneck_forward.4} parent=59 // pred_check_branch
        %1226 = sbr.rel (%p1224) target = $region80
      $region79: #{bottleneck_forward.4} parent=59 // pred_region
        %p1227 = scmp.lt.s32.totalorder %s21, 1
        %s1228 = scalar_select %p1227, %s21, 1
        %s1229 = scalar_lea.vmem %s7, %s1228
      $region80: #{bottleneck_forward.4} parent=59 // pred_fallthru
        _
      // Predicated region
      $region81: #{bottleneck_forward.4} parent=59 // pred_check
        %p1230 = pneg %p242
      $region82: #{bottleneck_forward.4} parent=59 // pred_check_branch
        %1232 = sbr.rel (%p1230) target = $region84
      $region83: #{bottleneck_forward.4} parent=59 // pred_region
        %p1233 = scmp.lt.s32.totalorder %s21, 1
        %s1234 = scalar_select %p1233, %s21, 1
        %s1235 = scalar_lea.vmem %s8, %s1234
      $region84: #{bottleneck_forward.4} parent=59 // pred_fallthru
        _
    $region60: #{bottleneck_forward.4} parent=5 // pred_fallthru
      _
  $region6: #{bottleneck_forward.4} parent=0 // loop_footer
    %s19 = sadd.s32 1, %s15
  $region7: #{bottleneck_forward.4} parent=0 // loop_footer_branch
    %14 = sbr.rel target = $region3
  $region8: #{bottleneck_forward.4} parent=0 // loop_exit
    _

// kernel: bottleneck_forward.5
$region0: #{bottleneck_forward.5}
  #allocation0 [shape = 'u32[]', space=smem, size = 0x4, offset = 0x4, fixed_abs, tag = 'smem constant byte address 0x4 - core index']
  #allocation1 [shape = 'u32[144,128]{1,0:T(1,128)}', space=vmem, size = 0x12000, scoped, tag = 'internal scratch']
  #allocation2 [shape = 'f32[18,24,128]{2,1,0:T(8,128)}', space=vmem, size = 0x36000, scoped, tag = 'scratch operand']
  #allocation3 [shape = 'f32[16,16,384]{2,1,0:T(8,128)}', space=vmem, size = 0x60000, scoped, tag = 'scratch operand']
  #allocation4 [shape = 'f32[256,128]{1,0:T(8,128)}', space=vmem, size = 0x20000, scoped, tag = 'scratch operand']
  %s0 = inlined_call_operand.vmem [shape: f32[2,256,128], index: 0, kind: input, shape index: {}]
  %s1 = inlined_call_operand.vmem [shape: f32[1,128], index: 1, kind: input, shape index: {}]
  %s2 = inlined_call_operand.vmem [shape: f32[1,128], index: 2, kind: input, shape index: {}]
  %s3 = inlined_call_operand.vmem [shape: f32[3,384,128], index: 3, kind: input, shape index: {}]
  %s4 = inlined_call_operand.vmem [shape: f32[2,256,128], index: 4, kind: output, shape index: {0}]
  %s5 = inlined_call_operand.vmem [shape: f32[2,1,128], index: 5, kind: output, shape index: {1}]
  %s6 = inlined_call_operand.vmem [shape: f32[2,1,128], index: 6, kind: output, shape index: {2}]
  %7 = xla_tuple %s4, %s5, %s6
  %s8 = sld [smem:[#allocation0]]
  $region65: #{bottleneck_forward.5} parent=0
    _
  %s10 = ssub.s32 1, %s8
  %s11 = scalar_select 0, %s10, %s8
  loop: start=0, step=1, limit=4
  $region2: #{bottleneck_forward.5} parent=0 // loop_pre_header
    _
  $region3: #{bottleneck_forward.5} parent=0 // loop_header
    %s13 = sphi 0, %s17
    %p14 = scmp.ge.s32.totalorder %s13, 4
    %s23 = sphi 0, %s25
    %s26 = sphi 0, %s23
    %s27 = sphi 0, %s26
    %s43 = sphi 0, %s27
    %s47 = sphi 0, %s47
    %s49 = sphi 0, %s47
    %s50 = sphi 0, %s49
    %s64 = sphi 0, %s50
    %s68 = sphi 0, %s68
    %s70 = sphi 0, %s68
    %s71 = sphi 0, %s70
    %s85 = sphi 0, %s71
    %s89 = sphi 0, %s89
    %s91 = sphi 0, %s89
    %s92 = sphi 0, %s91
    %s106 = sphi 0, %s92
    %s112 = sphi 0, %s114
    %s115 = sphi 0, %s112
    %s116 = sphi 0, %s115
    %s132 = sphi 0, %s116
    %s138 = sphi 0, %s140
    %s141 = sphi 0, %s138
    %s142 = sphi 0, %s141
    %s158 = sphi 0, %s142
    %s164 = sphi 0, %s166
    %s167 = sphi 0, %s164
    %s168 = sphi 0, %s167
    %s184 = sphi 0, %s168
  $region4: #{bottleneck_forward.5} parent=0 // loop_header_branch
    %16 = sbr.rel (%p14) target = $region8
  $region5: #{bottleneck_forward.5} parent=0 // loop_body
    %s18 = ssub.s32 %s13, 1
    %s19 = ssub.s32 %s13, 2
    %s20 = sadd.s32 %s13, 1
    %s21 = ssub.s32 %s13, %s20
    %p22 = scmp.eq.s32.totalorder %s21, 0
    %s24 = sadd.s32 %s23, 1
    %s25 = scalar_select %p22, %s23, %s24
    %p28 = pneg %p22
    %p29 = scmp.eq.s32.totalorder %s13, 1
    %p30 = por %p28, %p29
    %p31 = scmp.ne.s32.totalorder %s23, %s26
    %p32 = scmp.eq.s32.totalorder %s13, 0
    %p33 = por %p31, %p32
    %p34 = scmp.ne.s32.totalorder %s23, %s26
    %p35 = scmp.eq.s32.totalorder %s18, 1
    %p36 = por %p34, %p35
    %p37 = scmp.ne.s32.totalorder %s26, %s27
    %p38 = scmp.eq.s32.totalorder %s18, 0
    %p39 = por %p37, %p38
    %p40 = scmp.ne.s32.totalorder %s26, %s27
    %p41 = scmp.eq.s32.totalorder %s19, 1
    %p42 = por %p40, %p41
    %p44 = scmp.ne.s32.totalorder %s27, %s43
    %p45 = scmp.eq.s32.totalorder %s19, 0
    %p46 = por %p44, %p45
    %s48 = sadd.s32 %s47, 1
    %p51 = scmp.eq.s32.totalorder %s13, 1
    %p52 = scmp.ne.s32.totalorder %s47, %s49
    %p53 = scmp.eq.s32.totalorder %s13, 0
    %p54 = por %p52, %p53
    %p55 = scmp.ne.s32.totalorder %s47, %s49
    %p56 = scmp.eq.s32.totalorder %s18, 1
    %p57 = por %p55, %p56
    %p58 = scmp.ne.s32.totalorder %s49, %s50
    %p59 = scmp.eq.s32.totalorder %s18, 0
    %p60 = por %p58, %p59
    %p61 = scmp.ne.s32.totalorder %s49, %s50
    %p62 = scmp.eq.s32.totalorder %s19, 1
    %p63 = por %p61, %p62
    %p65 = scmp.ne.s32.totalorder %s50, %s64
    %p66 = scmp.eq.s32.totalorder %s19, 0
    %p67 = por %p65, %p66
    %s69 = sadd.s32 %s68, 1
    %p72 = scmp.eq.s32.totalorder %s13, 1
    %p73 = scmp.ne.s32.totalorder %s68, %s70
    %p74 = scmp.eq.s32.totalorder %s13, 0
    %p75 = por %p73, %p74
    %p76 = scmp.ne.s32.totalorder %s68, %s70
    %p77 = scmp.eq.s32.totalorder %s18, 1
    %p78 = por %p76, %p77
    %p79 = scmp.ne.s32.totalorder %s70, %s71
    %p80 = scmp.eq.s32.totalorder %s18, 0
    %p81 = por %p79, %p80
    %p82 = scmp.ne.s32.totalorder %s70, %s71
    %p83 = scmp.eq.s32.totalorder %s19, 1
    %p84 = por %p82, %p83
    %p86 = scmp.ne.s32.totalorder %s71, %s85
    %p87 = scmp.eq.s32.totalorder %s19, 0
    %p88 = por %p86, %p87
    %s90 = sadd.s32 %s89, 1
    %p93 = scmp.eq.s32.totalorder %s13, 1
    %p94 = scmp.ne.s32.totalorder %s89, %s91
    %p95 = scmp.eq.s32.totalorder %s13, 0
    %p96 = por %p94, %p95
    %p97 = scmp.ne.s32.totalorder %s89, %s91
    %p98 = scmp.eq.s32.totalorder %s18, 1
    %p99 = por %p97, %p98
    %p100 = scmp.ne.s32.totalorder %s91, %s92
    %p101 = scmp.eq.s32.totalorder %s18, 0
    %p102 = por %p100, %p101
    %p103 = scmp.ne.s32.totalorder %s91, %s92
    %p104 = scmp.eq.s32.totalorder %s19, 1
    %p105 = por %p103, %p104
    %p107 = scmp.ne.s32.totalorder %s92, %s106
    %p108 = scmp.eq.s32.totalorder %s19, 0
    %p109 = por %p107, %p108
    %s110 = ssub.s32 %s13, %s20
    %p111 = scmp.eq.s32.totalorder %s110, 0
    %s113 = sadd.s32 %s112, 1
    %s114 = scalar_select %p111, %s112, %s113
    %p117 = pneg %p111
    %p118 = scmp.eq.s32.totalorder %s13, 1
    %p119 = por %p117, %p118
    %p120 = scmp.ne.s32.totalorder %s112, %s115
    %p121 = scmp.eq.s32.totalorder %s13, 0
    %p122 = por %p120, %p121
    %p123 = scmp.ne.s32.totalorder %s112, %s115
    %p124 = scmp.eq.s32.totalorder %s18, 1
    %p125 = por %p123, %p124
    %p126 = scmp.ne.s32.totalorder %s115, %s116
    %p127 = scmp.eq.s32.totalorder %s18, 0
    %p128 = por %p126, %p127
    %p129 = scmp.ne.s32.totalorder %s115, %s116
    %p130 = scmp.eq.s32.totalorder %s19, 1
    %p131 = por %p129, %p130
    %p133 = scmp.ne.s32.totalorder %s116, %s132
    %p134 = scmp.eq.s32.totalorder %s19, 0
    %p135 = por %p133, %p134
    %s136 = ssub.s32 %s13, %s20
    %p137 = scmp.eq.s32.totalorder %s136, 0
    %s139 = sadd.s32 %s138, 1
    %s140 = scalar_select %p137, %s138, %s139
    %p143 = pneg %p137
    %p144 = scmp.eq.s32.totalorder %s13, 1
    %p145 = por %p143, %p144
    %p146 = scmp.ne.s32.totalorder %s138, %s141
    %p147 = scmp.eq.s32.totalorder %s13, 0
    %p148 = por %p146, %p147
    %p149 = scmp.ne.s32.totalorder %s138, %s141
    %p150 = scmp.eq.s32.totalorder %s18, 1
    %p151 = por %p149, %p150
    %p152 = scmp.ne.s32.totalorder %s141, %s142
    %p153 = scmp.eq.s32.totalorder %s18, 0
    %p154 = por %p152, %p153
    %p155 = scmp.ne.s32.totalorder %s141, %s142
    %p156 = scmp.eq.s32.totalorder %s19, 1
    %p157 = por %p155, %p156
    %p159 = scmp.ne.s32.totalorder %s142, %s158
    %p160 = scmp.eq.s32.totalorder %s19, 0
    %p161 = por %p159, %p160
    %s162 = ssub.s32 %s13, %s20
    %p163 = scmp.eq.s32.totalorder %s162, 0
    %s165 = sadd.s32 %s164, 1
    %s166 = scalar_select %p163, %s164, %s165
    %p169 = pneg %p163
    %p170 = scmp.eq.s32.totalorder %s13, 1
    %p171 = por %p169, %p170
    %p172 = scmp.ne.s32.totalorder %s164, %s167
    %p173 = scmp.eq.s32.totalorder %s13, 0
    %p174 = por %p172, %p173
    %p175 = scmp.ne.s32.totalorder %s164, %s167
    %p176 = scmp.eq.s32.totalorder %s18, 1
    %p177 = por %p175, %p176
    %p178 = scmp.ne.s32.totalorder %s167, %s168
    %p179 = scmp.eq.s32.totalorder %s18, 0
    %p180 = por %p178, %p179
    %p181 = scmp.ne.s32.totalorder %s167, %s168
    %p182 = scmp.eq.s32.totalorder %s19, 1
    %p183 = por %p181, %p182
    %p185 = scmp.ne.s32.totalorder %s168, %s184
    %p186 = scmp.eq.s32.totalorder %s19, 0
    %p187 = por %p185, %p186
    %p188 = scmp.le.s32.totalorder 1, %s13
    %p189 = scmp.lt.s32.totalorder %s13, 3
    %p190 = pnand %p188, %p189
    %p191 = pneg %p190
    // Predicated region
    $region9: #{bottleneck_forward.5} parent=5 // pred_check
      _
    $region10: #{bottleneck_forward.5} parent=5 // pred_check_branch
      %193 = sbr.rel (%p190) target = $region12
    $region11: #{bottleneck_forward.5} parent=5 // pred_region
      %s194 = ssub.s32 %s13, 1
      // Predicated region
      $region13: #{bottleneck_forward.5} parent=11 // pred_check
        %p195 = pneg %p60
      $region14: #{bottleneck_forward.5} parent=11 // pred_check_branch
        %197 = sbr.rel (%p195) target = $region16
      $region15: #{bottleneck_forward.5} parent=11 // pred_region
        _
      $region16: #{bottleneck_forward.5} parent=11 // pred_fallthru
        _
      // Predicated region
      $region17: #{bottleneck_forward.5} parent=11 // pred_check
        %p198 = pneg %p81
      $region18: #{bottleneck_forward.5} parent=11 // pred_check_branch
        %200 = sbr.rel (%p198) target = $region20
      $region19: #{bottleneck_forward.5} parent=11 // pred_region
        _
      $region20: #{bottleneck_forward.5} parent=11 // pred_fallthru
        _
      // Predicated region
      $region21: #{bottleneck_forward.5} parent=11 // pred_check
        %p201 = pneg %p102
      $region22: #{bottleneck_forward.5} parent=11 // pred_check_branch
        %203 = sbr.rel (%p201) target = $region24
      $region23: #{bottleneck_forward.5} parent=11 // pred_region
        _
      $region24: #{bottleneck_forward.5} parent=11 // pred_fallthru
        _
    $region12: #{bottleneck_forward.5} parent=5 // pred_fallthru
      _
    %p204 = scmp.lt.s32.totalorder %s13, 2
    // Predicated region
    $region25: #{bottleneck_forward.5} parent=5 // pred_check
      %p205 = pneg %p204
    $region26: #{bottleneck_forward.5} parent=5 // pred_check_branch
      %207 = sbr.rel (%p205) target = $region28
    $region27: #{bottleneck_forward.5} parent=5 // pred_region
      // Predicated region
      $region29: #{bottleneck_forward.5} parent=27 // pred_check
        %p208 = pneg %p33
      $region30: #{bottleneck_forward.5} parent=27 // pred_check_branch
        %210 = sbr.rel (%p208) target = $region32
      $region31: #{bottleneck_forward.5} parent=27 // pred_region
        %p211 = scmp.lt.s32.totalorder %s13, 1
        %s212 = scalar_select %p211, %s13, 1
        %s213 = smul.addr %s212, 32
        %s214 = smul.addr %s213, 8
        %s215 = scalar_lea.vmem %s0, %s214
      $region32: #{bottleneck_forward.5} parent=27 // pred_fallthru
        _
    $region28: #{bottleneck_forward.5} parent=5 // pred_fallthru
      _
    %p216 = scmp.le.s32.totalorder 1, %s13
    %p217 = scmp.lt.s32.totalorder %s13, 3
    %p218 = pnand %p216, %p217
    %p219 = pneg %p218
    // Predicated region
    $region33: #{bottleneck_forward.5} parent=5 // pred_check
      _
    $region34: #{bottleneck_forward.5} parent=5 // pred_check_branch
      %221 = sbr.rel (%p218) target = $region36
    $region35: #{bottleneck_forward.5} parent=5 // pred_region
      %s222 = ssub.s32 %s13, 1
      %p223 = scmp.lt.s32.totalorder %s18, 1
      %s224 = scalar_select %p223, %s18, 1
      %s225 = smul.addr %s224, 32
      %s226 = smul.addr %s225, 8
      %s227 = scalar_lea.vmem %s0, %s226
      %p228 = pneg %p39
      %p229 = pneg %p36
      %p230 = pneg %p60
      %p231 = pneg %p57
      %p232 = pneg %p81
      %p233 = pneg %p78
      %p234 = pneg %p102
      %p235 = pneg %p99
      %p236 = pneg %p128
      %p237 = pneg %p125
      %p238 = scmp.lt.s32.totalorder %s18, 1
      %s239 = scalar_select %p238, %s18, 1
      %s240 = smul.addr %s239, 32
      %s241 = smul.addr %s240, 8
      %s242 = scalar_lea.vmem %s4, %s241
      %p243 = pneg %p154
      %p244 = pneg %p151
      %p245 = scmp.lt.s32.totalorder %s18, 1
      %s246 = scalar_select %p245, %s18, 1
      %s247 = scalar_lea.vmem %s5, %s246
      %p248 = pneg %p180
      %p249 = pneg %p177
      %p250 = scmp.lt.s32.totalorder %s18, 1
      %s251 = scalar_select %p250, %s18, 1
      %s252 = scalar_lea.vmem %s6, %s251
      %p253 = scmp.lt.s32.totalorder %s18, 1
      %s254 = scalar_select %p253, %s18, 1
      %s255 = smul.addr %s254, 32
      %s256 = smul.addr %s255, 8
      %s257 = scalar_lea.vmem %s0, %s256
      %p258 = scmp.lt.s32.totalorder %s18, 1
      %s259 = scalar_select %p258, %s18, 1
      %s260 = smul.addr %s259, 32
      %s261 = smul.addr %s260, 8
      %s262 = scalar_lea.vmem %s4, %s261
      %p263 = scmp.lt.s32.totalorder %s18, 1
      %s264 = scalar_select %p263, %s18, 1
      %s265 = scalar_lea.vmem %s5, %s264
      %p266 = scmp.lt.s32.totalorder %s18, 1
      %s267 = scalar_select %p266, %s18, 1
      %s268 = scalar_lea.vmem %s6, %s267
      %269 = vst [vmem:[#allocation2] sm:$0xff] 0.0
      %270 = vst [vmem:[#allocation2 + $0x8] sm:$0xff] 0.0
      %271 = vst [vmem:[#allocation2 + $0x10] sm:$0xff] 0.0
      %s272 = scalar_lea.vmem [#allocation2], 408
      %273 = vst [vmem:[%s272] sm:$0xff] 0.0
      %274 = vst [vmem:[%s272 + $0x8] sm:$0xff] 0.0
      %275 = vst [vmem:[%s272 + $0x10] sm:$0xff] 0.0
      %276 = vst [vmem:[#allocation2] sm:$0x1] 0.0
      %277 = vst [vmem:[#allocation2 + $0x18] sm:$0x1] 0.0
      %278 = vst [vmem:[#allocation2 + $0x30] sm:$0x1] 0.0
      %279 = vst [vmem:[#allocation2 + $0x48] sm:$0x1] 0.0
      %280 = vst [vmem:[#allocation2 + $0x60] sm:$0x1] 0.0
      %281 = vst [vmem:[#allocation2 + $0x78] sm:$0x1] 0.0
      %282 = vst [vmem:[#allocation2 + $0x90] sm:$0x1] 0.0
      %283 = vst [vmem:[#allocation2 + $0xa8] sm:$0x1] 0.0
      %284 = vst [vmem:[#allocation2 + $0xc0] sm:$0x1] 0.0
      %285 = vst [vmem:[#allocation2 + $0xd8] sm:$0x1] 0.0
      %286 = vst [vmem:[#allocation2 + $0xf0] sm:$0x1] 0.0
      %287 = vst [vmem:[#allocation2 + $0x108] sm:$0x1] 0.0
      %288 = vst [vmem:[#allocation2 + $0x120] sm:$0x1] 0.0
      %289 = vst [vmem:[#allocation2 + $0x138] sm:$0x1] 0.0
      %290 = vst [vmem:[#allocation2 + $0x150] sm:$0x1] 0.0
      %291 = vst [vmem:[#allocation2 + $0x168] sm:$0x1] 0.0
      %292 = vst [vmem:[#allocation2 + $0x180] sm:$0x1] 0.0
      %293 = vst [vmem:[#allocation2 + $0x198] sm:$0x1] 0.0
      %294 = vst [vmem:[#allocation2 + $0x11] sm:$0x7f] 0.0
      %295 = vst [vmem:[#allocation2 + $0x29] sm:$0x7f] 0.0
      %296 = vst [vmem:[#allocation2 + $0x41] sm:$0x7f] 0.0
      %297 = vst [vmem:[#allocation2 + $0x59] sm:$0x7f] 0.0
      %298 = vst [vmem:[#allocation2 + $0x71] sm:$0x7f] 0.0
      %299 = vst [vmem:[#allocation2 + $0x89] sm:$0x7f] 0.0
      %300 = vst [vmem:[#allocation2 + $0xa1] sm:$0x7f] 0.0
      %301 = vst [vmem:[#allocation2 + $0xb9] sm:$0x7f] 0.0
      %302 = vst [vmem:[#allocation2 + $0xd1] sm:$0x7f] 0.0
      %303 = vst [vmem:[#allocation2 + $0xe9] sm:$0x7f] 0.0
      %304 = vst [vmem:[#allocation2 + $0x101] sm:$0x7f] 0.0
      %305 = vst [vmem:[#allocation2 + $0x119] sm:$0x7f] 0.0
      %306 = vst [vmem:[#allocation2 + $0x131] sm:$0x7f] 0.0
      %307 = vst [vmem:[#allocation2 + $0x149] sm:$0x7f] 0.0
      %308 = vst [vmem:[#allocation2 + $0x161] sm:$0x7f] 0.0
      %309 = vst [vmem:[#allocation2 + $0x179] sm:$0x7f] 0.0
      %310 = vst [vmem:[#allocation2 + $0x191] sm:$0x7f] 0.0
      %311 = vst [vmem:[#allocation2 + $0x1a9] sm:$0x7f] 0.0
      %v312 = vld [vmem:[%s257] sm:$0xff]
      %v313 = vld [vmem:[%s257 + $0x8] sm:$0xff]
      %v314 = vld [vmem:[%s257 + $0x10] sm:$0xff]
      %v315 = vld [vmem:[%s257 + $0x18] sm:$0xff]
      %v316 = vld [vmem:[%s257 + $0x20] sm:$0xff]
      %v317 = vld [vmem:[%s257 + $0x28] sm:$0xff]
      %v318 = vld [vmem:[%s257 + $0x30] sm:$0xff]
      %v319 = vld [vmem:[%s257 + $0x38] sm:$0xff]
      %v320 = vld [vmem:[%s257 + $0x40] sm:$0xff]
      %v321 = vld [vmem:[%s257 + $0x48] sm:$0xff]
      %v322 = vld [vmem:[%s257 + $0x50] sm:$0xff]
      %v323 = vld [vmem:[%s257 + $0x58] sm:$0xff]
      %v324 = vld [vmem:[%s257 + $0x60] sm:$0xff]
      %v325 = vld [vmem:[%s257 + $0x68] sm:$0xff]
      %v326 = vld [vmem:[%s257 + $0x70] sm:$0xff]
      %v327 = vld [vmem:[%s257 + $0x78] sm:$0xff]
      %v328 = vld [vmem:[%s257 + $0x80] sm:$0xff]
      %v329 = vld [vmem:[%s257 + $0x88] sm:$0xff]
      %v330 = vld [vmem:[%s257 + $0x90] sm:$0xff]
      %v331 = vld [vmem:[%s257 + $0x98] sm:$0xff]
      %v332 = vld [vmem:[%s257 + $0xa0] sm:$0xff]
      %v333 = vld [vmem:[%s257 + $0xa8] sm:$0xff]
      %v334 = vld [vmem:[%s257 + $0xb0] sm:$0xff]
      %v335 = vld [vmem:[%s257 + $0xb8] sm:$0xff]
      %v336 = vld [vmem:[%s257 + $0xc0] sm:$0xff]
      %v337 = vld [vmem:[%s257 + $0xc8] sm:$0xff]
      %v338 = vld [vmem:[%s257 + $0xd0] sm:$0xff]
      %v339 = vld [vmem:[%s257 + $0xd8] sm:$0xff]
      %v340 = vld [vmem:[%s257 + $0xe0] sm:$0xff]
      %v341 = vld [vmem:[%s257 + $0xe8] sm:$0xff]
      %v342 = vld [vmem:[%s257 + $0xf0] sm:$0xff]
      %v343 = vld [vmem:[%s257 + $0xf8] sm:$0xff]
      %v344 = vld [vmem:[%s1] sm:$0x1]
      %v346 = vlaneseq
      %v347 = vshrl.u32 %v346, 7
      %v348 = vsub.s32 0, %v347
      %v349 = vrot.slane %v344, %v348
      %v351 = vmul.f32 %v312, %v349
      %v352 = vmul.f32 %v313, %v349
      %v353 = vmul.f32 %v314, %v349
      %v354 = vmul.f32 %v315, %v349
      %v355 = vmul.f32 %v316, %v349
      %v356 = vmul.f32 %v317, %v349
      %v357 = vmul.f32 %v318, %v349
      %v358 = vmul.f32 %v319, %v349
      %v359 = vmul.f32 %v320, %v349
      %v360 = vmul.f32 %v321, %v349
      %v361 = vmul.f32 %v322, %v349
      %v362 = vmul.f32 %v323, %v349
      %v363 = vmul.f32 %v324, %v349
      %v364 = vmul.f32 %v325, %v349
      %v365 = vmul.f32 %v326, %v349
      %v366 = vmul.f32 %v327, %v349
      %v367 = vmul.f32 %v328, %v349
      %v368 = vmul.f32 %v329, %v349
      %v369 = vmul.f32 %v330, %v349
      %v370 = vmul.f32 %v331, %v349
      %v371 = vmul.f32 %v332, %v349
      %v372 = vmul.f32 %v333, %v349
      %v373 = vmul.f32 %v334, %v349
      %v374 = vmul.f32 %v335, %v349
      %v375 = vmul.f32 %v336, %v349
      %v376 = vmul.f32 %v337, %v349
      %v377 = vmul.f32 %v338, %v349
      %v378 = vmul.f32 %v339, %v349
      %v379 = vmul.f32 %v340, %v349
      %v380 = vmul.f32 %v341, %v349
      %v381 = vmul.f32 %v342, %v349
      %v382 = vmul.f32 %v343, %v349
      %v383 = vld [vmem:[%s2] sm:$0x1]
      %v385 = vlaneseq
      %v386 = vshrl.u32 %v385, 7
      %v387 = vsub.s32 0, %v386
      %v388 = vrot.slane %v383, %v387
      %v390 = vadd.f32 %v351, %v388
      %v391 = vadd.f32 %v352, %v388
      %v392 = vadd.f32 %v353, %v388
      %v393 = vadd.f32 %v354, %v388
      %v394 = vadd.f32 %v355, %v388
      %v395 = vadd.f32 %v356, %v388
      %v396 = vadd.f32 %v357, %v388
      %v397 = vadd.f32 %v358, %v388
      %v398 = vadd.f32 %v359, %v388
      %v399 = vadd.f32 %v360, %v388
      %v400 = vadd.f32 %v361, %v388
      %v401 = vadd.f32 %v362, %v388
      %v402 = vadd.f32 %v363, %v388
      %v403 = vadd.f32 %v364, %v388
      %v404 = vadd.f32 %v365, %v388
      %v405 = vadd.f32 %v366, %v388
      %v406 = vadd.f32 %v367, %v388
      %v407 = vadd.f32 %v368, %v388
      %v408 = vadd.f32 %v369, %v388
      %v409 = vadd.f32 %v370, %v388
      %v410 = vadd.f32 %v371, %v388
      %v411 = vadd.f32 %v372, %v388
      %v412 = vadd.f32 %v373, %v388
      %v413 = vadd.f32 %v374, %v388
      %v414 = vadd.f32 %v375, %v388
      %v415 = vadd.f32 %v376, %v388
      %v416 = vadd.f32 %v377, %v388
      %v417 = vadd.f32 %v378, %v388
      %v418 = vadd.f32 %v379, %v388
      %v419 = vadd.f32 %v380, %v388
      %v420 = vadd.f32 %v381, %v388
      %v421 = vadd.f32 %v382, %v388
      %v422 = vmax.f32 %v390, 0.0
      %v423 = vmax.f32 %v391, 0.0
      %v424 = vmax.f32 %v392, 0.0
      %v425 = vmax.f32 %v393, 0.0
      %v426 = vmax.f32 %v394, 0.0
      %v427 = vmax.f32 %v395, 0.0
      %v428 = vmax.f32 %v396, 0.0
      %v429 = vmax.f32 %v397, 0.0
      %v430 = vmax.f32 %v398, 0.0
      %v431 = vmax.f32 %v399, 0.0
      %v432 = vmax.f32 %v400, 0.0
      %v433 = vmax.f32 %v401, 0.0
      %v434 = vmax.f32 %v402, 0.0
      %v435 = vmax.f32 %v403, 0.0
      %v436 = vmax.f32 %v404, 0.0
      %v437 = vmax.f32 %v405, 0.0
      %v438 = vmax.f32 %v406, 0.0
      %v439 = vmax.f32 %v407, 0.0
      %v440 = vmax.f32 %v408, 0.0
      %v441 = vmax.f32 %v409, 0.0
      %v442 = vmax.f32 %v410, 0.0
      %v443 = vmax.f32 %v411, 0.0
      %v444 = vmax.f32 %v412, 0.0
      %v445 = vmax.f32 %v413, 0.0
      %v446 = vmax.f32 %v414, 0.0
      %v447 = vmax.f32 %v415, 0.0
      %v448 = vmax.f32 %v416, 0.0
      %v449 = vmax.f32 %v417, 0.0
      %v450 = vmax.f32 %v418, 0.0
      %v451 = vmax.f32 %v419, 0.0
      %v452 = vmax.f32 %v420, 0.0
      %v453 = vmax.f32 %v421, 0.0
      %s454 = scalar_lea.vmem [#allocation2], 24
      %455 = vst [vmem:[%s454 + $0x1] sm:$0xff] %v422
      %456 = vst [vmem:[%s454 + $0x9] sm:$0xff] %v423
      %457 = vst [vmem:[%s454 + $0x19] sm:$0xff] %v424
      %458 = vst [vmem:[%s454 + $0x21] sm:$0xff] %v425
      %459 = vst [vmem:[%s454 + $0x31] sm:$0xff] %v426
      %460 = vst [vmem:[%s454 + $0x39] sm:$0xff] %v427
      %461 = vst [vmem:[%s454 + $0x49] sm:$0xff] %v428
      %462 = vst [vmem:[%s454 + $0x51] sm:$0xff] %v429
      %463 = vst [vmem:[%s454 + $0x61] sm:$0xff] %v430
      %464 = vst [vmem:[%s454 + $0x69] sm:$0xff] %v431
      %465 = vst [vmem:[%s454 + $0x79] sm:$0xff] %v432
      %466 = vst [vmem:[%s454 + $0x81] sm:$0xff] %v433
      %467 = vst [vmem:[%s454 + $0x91] sm:$0xff] %v434
      %468 = vst [vmem:[%s454 + $0x99] sm:$0xff] %v435
      %469 = vst [vmem:[%s454 + $0xa9] sm:$0xff] %v436
      %470 = vst [vmem:[%s454 + $0xb1] sm:$0xff] %v437
      %471 = vst [vmem:[%s454 + $0xc1] sm:$0xff] %v438
      %472 = vst [vmem:[%s454 + $0xc9] sm:$0xff] %v439
      %473 = vst [vmem:[%s454 + $0xd9] sm:$0xff] %v440
      %474 = vst [vmem:[%s454 + $0xe1] sm:$0xff] %v441
      %475 = vst [vmem:[%s454 + $0xf1] sm:$0xff] %v442
      %476 = vst [vmem:[%s454 + $0xf9] sm:$0xff] %v443
      %477 = vst [vmem:[%s454 + $0x109] sm:$0xff] %v444
      %478 = vst [vmem:[%s454 + $0x111] sm:$0xff] %v445
      %479 = vst [vmem:[%s454 + $0x121] sm:$0xff] %v446
      %480 = vst [vmem:[%s454 + $0x129] sm:$0xff] %v447
      %481 = vst [vmem:[%s454 + $0x139] sm:$0xff] %v448
      %482 = vst [vmem:[%s454 + $0x141] sm:$0xff] %v449
      %483 = vst [vmem:[%s454 + $0x151] sm:$0xff] %v450
      %484 = vst [vmem:[%s454 + $0x159] sm:$0xff] %v451
      %485 = vst [vmem:[%s454 + $0x169] sm:$0xff] %v452
      %486 = vst [vmem:[%s454 + $0x171] sm:$0xff] %v453
      %v487 = vld [vmem:[#allocation2] sm:$0xff]
      %v488 = vld [vmem:[#allocation2 + $0x8] sm:$0xff]
      %v489 = vld [vmem:[#allocation2 + $0x10] sm:$0xff]
      %v490 = vld [vmem:[#allocation2 + $0x18] sm:$0xff]
      %v491 = vld [vmem:[#allocation2 + $0x20] sm:$0xff]
      %v492 = vld [vmem:[#allocation2 + $0x28] sm:$0xff]
      %v493 = vld [vmem:[#allocation2 + $0x30] sm:$0xff]
      %v494 = vld [vmem:[#allocation2 + $0x38] sm:$0xff]
      %v495 = vld [vmem:[#allocation2 + $0x40] sm:$0xff]
      %v496 = vld [vmem:[#allocation2 + $0x48] sm:$0xff]
      %v497 = vld [vmem:[#allocation2 + $0x50] sm:$0xff]
      %v498 = vld [vmem:[#allocation2 + $0x58] sm:$0xff]
      %v499 = vld [vmem:[#allocation2 + $0x60] sm:$0xff]
      %v500 = vld [vmem:[#allocation2 + $0x68] sm:$0xff]
      %v501 = vld [vmem:[#allocation2 + $0x70] sm:$0xff]
      %v502 = vld [vmem:[#allocation2 + $0x78] sm:$0xff]
      %v503 = vld [vmem:[#allocation2 + $0x80] sm:$0xff]
      %v504 = vld [vmem:[#allocation2 + $0x88] sm:$0xff]
      %v505 = vld [vmem:[#allocation2 + $0x90] sm:$0xff]
      %v506 = vld [vmem:[#allocation2 + $0x98] sm:$0xff]
      %v507 = vld [vmem:[#allocation2 + $0xa0] sm:$0xff]
      %v508 = vld [vmem:[#allocation2 + $0xa8] sm:$0xff]
      %v509 = vld [vmem:[#allocation2 + $0xb0] sm:$0xff]
      %v510 = vld [vmem:[#allocation2 + $0xb8] sm:$0xff]
      %v511 = vld [vmem:[#allocation2 + $0xc0] sm:$0xff]
      %v512 = vld [vmem:[#allocation2 + $0xc8] sm:$0xff]
      %v513 = vld [vmem:[#allocation2 + $0xd0] sm:$0xff]
      %v514 = vld [vmem:[#allocation2 + $0xd8] sm:$0xff]
      %v515 = vld [vmem:[#allocation2 + $0xe0] sm:$0xff]
      %v516 = vld [vmem:[#allocation2 + $0xe8] sm:$0xff]
      %v517 = vld [vmem:[#allocation2 + $0xf0] sm:$0xff]
      %v518 = vld [vmem:[#allocation2 + $0xf8] sm:$0xff]
      %v519 = vld [vmem:[#allocation2 + $0x100] sm:$0xff]
      %v520 = vld [vmem:[#allocation2 + $0x108] sm:$0xff]
      %v521 = vld [vmem:[#allocation2 + $0x110] sm:$0xff]
      %v522 = vld [vmem:[#allocation2 + $0x118] sm:$0xff]
      %v523 = vld [vmem:[#allocation2 + $0x120] sm:$0xff]
      %v524 = vld [vmem:[#allocation2 + $0x128] sm:$0xff]
      %v525 = vld [vmem:[#allocation2 + $0x130] sm:$0xff]
      %v526 = vld [vmem:[#allocation2 + $0x138] sm:$0xff]
      %v527 = vld [vmem:[#allocation2 + $0x140] sm:$0xff]
      %v528 = vld [vmem:[#allocation2 + $0x148] sm:$0xff]
      %v529 = vld [vmem:[#allocation2 + $0x150] sm:$0xff]
      %v530 = vld [vmem:[#allocation2 + $0x158] sm:$0xff]
      %v531 = vld [vmem:[#allocation2 + $0x160] sm:$0xff]
      %v532 = vld [vmem:[#allocation2 + $0x168] sm:$0xff]
      %v533 = vld [vmem:[#allocation2 + $0x170] sm:$0xff]
      %v534 = vld [vmem:[#allocation2 + $0x178] sm:$0xff]
      %v535 = vld [vmem:[#allocation2 + $0x180] sm:$0xff]
      %v536 = vld [vmem:[#allocation2 + $0x188] sm:$0xff]
      %v537 = vld [vmem:[#allocation2 + $0x190] sm:$0xff]
      %v538 = vld [vmem:[#allocation2 + $0x198] sm:$0xff]
      %v539 = vld [vmem:[#allocation2 + $0x1a0] sm:$0xff]
      %v540 = vld [vmem:[#allocation2 + $0x1a8] sm:$0xff]
      %541 = vst [vmem:[#allocation3] sm:$0xff] %v487
      %542 = vst [vmem:[#allocation3 + $0x18] sm:$0xff] %v488
      %543 = vst [vmem:[#allocation3 + $0x30] sm:$0xff] %v490
      %544 = vst [vmem:[#allocation3 + $0x48] sm:$0xff] %v491
      %545 = vst [vmem:[#allocation3 + $0x60] sm:$0xff] %v493
      %546 = vst [vmem:[#allocation3 + $0x78] sm:$0xff] %v494
      %547 = vst [vmem:[#allocation3 + $0x90] sm:$0xff] %v496
      %548 = vst [vmem:[#allocation3 + $0xa8] sm:$0xff] %v497
      %549 = vst [vmem:[#allocation3 + $0xc0] sm:$0xff] %v499
      %550 = vst [vmem:[#allocation3 + $0xd8] sm:$0xff] %v500
      %551 = vst [vmem:[#allocation3 + $0xf0] sm:$0xff] %v502
      %552 = vst [vmem:[#allocation3 + $0x108] sm:$0xff] %v503
      %553 = vst [vmem:[#allocation3 + $0x120] sm:$0xff] %v505
      %554 = vst [vmem:[#allocation3 + $0x138] sm:$0xff] %v506
      %555 = vst [vmem:[#allocation3 + $0x150] sm:$0xff] %v508
      %556 = vst [vmem:[#allocation3 + $0x168] sm:$0xff] %v509
      %557 = vst [vmem:[#allocation3 + $0x180] sm:$0xff] %v511
      %558 = vst [vmem:[#allocation3 + $0x198] sm:$0xff] %v512
      %559 = vst [vmem:[#allocation3 + $0x1b0] sm:$0xff] %v514
      %560 = vst [vmem:[#allocation3 + $0x1c8] sm:$0xff] %v515
      %561 = vst [vmem:[#allocation3 + $0x1e0] sm:$0xff] %v517
      %562 = vst [vmem:[#allocation3 + $0x1f8] sm:$0xff] %v518
      %563 = vst [vmem:[#allocation3 + $0x210] sm:$0xff] %v520
      %564 = vst [vmem:[#allocation3 + $0x228] sm:$0xff] %v521
      %565 = vst [vmem:[#allocation3 + $0x240] sm:$0xff] %v523
      %566 = vst [vmem:[#allocation3 + $0x258] sm:$0xff] %v524
      %567 = vst [vmem:[#allocation3 + $0x270] sm:$0xff] %v526
      %568 = vst [vmem:[#allocation3 + $0x288] sm:$0xff] %v527
      %569 = vst [vmem:[#allocation3 + $0x2a0] sm:$0xff] %v529
      %570 = vst [vmem:[#allocation3 + $0x2b8] sm:$0xff] %v530
      %571 = vst [vmem:[#allocation3 + $0x2d0] sm:$0xff] %v532
      %572 = vst [vmem:[#allocation3 + $0x2e8] sm:$0xff] %v533
      %vm621 = vcmask 1046528
      %v622 = vrot.slane %v487, 1
      %v623 = vrot.slane %v488, 1
      %v624 = vsel %vm621, %v622, %v623
      %v625 = vrot.slane %v489, 1
      %v626 = vsel %vm621, %v623, %v625
      %v627 = vrot.slane %v490, 1
      %v628 = vrot.slane %v491, 1
      %v629 = vsel %vm621, %v627, %v628
      %v630 = vrot.slane %v492, 1
      %v631 = vsel %vm621, %v628, %v630
      %v632 = vrot.slane %v493, 1
      %v633 = vrot.slane %v494, 1
      %v634 = vsel %vm621, %v632, %v633
      %v635 = vrot.slane %v495, 1
      %v636 = vsel %vm621, %v633, %v635
      %v637 = vrot.slane %v496, 1
      %v638 = vrot.slane %v497, 1
      %v639 = vsel %vm621, %v637, %v638
      %v640 = vrot.slane %v498, 1
      %v641 = vsel %vm621, %v638, %v640
      %v642 = vrot.slane %v499, 1
      %v643 = vrot.slane %v500, 1
      %v644 = vsel %vm621, %v642, %v643
      %v645 = vrot.slane %v501, 1
      %v646 = vsel %vm621, %v643, %v645
      %v647 = vrot.slane %v502, 1
      %v648 = vrot.slane %v503, 1
      %v649 = vsel %vm621, %v647, %v648
      %v650 = vrot.slane %v504, 1
      %v651 = vsel %vm621, %v648, %v650
      %v652 = vrot.slane %v505, 1
      %v653 = vrot.slane %v506, 1
      %v654 = vsel %vm621, %v652, %v653
      %v655 = vrot.slane %v507, 1
      %v656 = vsel %vm621, %v653, %v655
      %v657 = vrot.slane %v508, 1
      %v658 = vrot.slane %v509, 1
      %v659 = vsel %vm621, %v657, %v658
      %v660 = vrot.slane %v510, 1
      %v661 = vsel %vm621, %v658, %v660
      %v662 = vrot.slane %v511, 1
      %v663 = vrot.slane %v512, 1
      %v664 = vsel %vm621, %v662, %v663
      %v665 = vrot.slane %v513, 1
      %v666 = vsel %vm621, %v663, %v665
      %v667 = vrot.slane %v514, 1
      %v668 = vrot.slane %v515, 1
      %v669 = vsel %vm621, %v667, %v668
      %v670 = vrot.slane %v516, 1
      %v671 = vsel %vm621, %v668, %v670
      %v672 = vrot.slane %v517, 1
      %v673 = vrot.slane %v518, 1
      %v674 = vsel %vm621, %v672, %v673
      %v675 = vrot.slane %v519, 1
      %v676 = vsel %vm621, %v673, %v675
      %v677 = vrot.slane %v520, 1
      %v678 = vrot.slane %v521, 1
      %v679 = vsel %vm621, %v677, %v678
      %v680 = vrot.slane %v522, 1
      %v681 = vsel %vm621, %v678, %v680
      %v682 = vrot.slane %v523, 1
      %v683 = vrot.slane %v524, 1
      %v684 = vsel %vm621, %v682, %v683
      %v685 = vrot.slane %v525, 1
      %v686 = vsel %vm621, %v683, %v685
      %v687 = vrot.slane %v526, 1
      %v688 = vrot.slane %v527, 1
      %v689 = vsel %vm621, %v687, %v688
      %v690 = vrot.slane %v528, 1
      %v691 = vsel %vm621, %v688, %v690
      %v692 = vrot.slane %v529, 1
      %v693 = vrot.slane %v530, 1
      %v694 = vsel %vm621, %v692, %v693
      %v695 = vrot.slane %v531, 1
      %v696 = vsel %vm621, %v693, %v695
      %v697 = vrot.slane %v532, 1
      %v698 = vrot.slane %v533, 1
      %v699 = vsel %vm621, %v697, %v698
      %v700 = vrot.slane %v534, 1
      %v701 = vsel %vm621, %v698, %v700
      %734 = vst [vmem:[#allocation3 + $0x8] sm:$0xff] %v624
      %735 = vst [vmem:[#allocation3 + $0x20] sm:$0xff] %v626
      %736 = vst [vmem:[#allocation3 + $0x38] sm:$0xff] %v629
      %737 = vst [vmem:[#allocation3 + $0x50] sm:$0xff] %v631
      %738 = vst [vmem:[#allocation3 + $0x68] sm:$0xff] %v634
      %739 = vst [vmem:[#allocation3 + $0x80] sm:$0xff] %v636
      %740 = vst [vmem:[#allocation3 + $0x98] sm:$0xff] %v639
      %741 = vst [vmem:[#allocation3 + $0xb0] sm:$0xff] %v641
      %742 = vst [vmem:[#allocation3 + $0xc8] sm:$0xff] %v644
      %743 = vst [vmem:[#allocation3 + $0xe0] sm:$0xff] %v646
      %744 = vst [vmem:[#allocation3 + $0xf8] sm:$0xff] %v649
      %745 = vst [vmem:[#allocation3 + $0x110] sm:$0xff] %v651
      %746 = vst [vmem:[#allocation3 + $0x128] sm:$0xff] %v654
      %747 = vst [vmem:[#allocation3 + $0x140] sm:$0xff] %v656
      %748 = vst [vmem:[#allocation3 + $0x158] sm:$0xff] %v659
      %749 = vst [vmem:[#allocation3 + $0x170] sm:$0xff] %v661
      %750 = vst [vmem:[#allocation3 + $0x188] sm:$0xff] %v664
      %751 = vst [vmem:[#allocation3 + $0x1a0] sm:$0xff] %v666
      %752 = vst [vmem:[#allocation3 + $0x1b8] sm:$0xff] %v669
      %753 = vst [vmem:[#allocation3 + $0x1d0] sm:$0xff] %v671
      %754 = vst [vmem:[#allocation3 + $0x1e8] sm:$0xff] %v674
      %755 = vst [vmem:[#allocation3 + $0x200] sm:$0xff] %v676
      %756 = vst [vmem:[#allocation3 + $0x218] sm:$0xff] %v679
      %757 = vst [vmem:[#allocation3 + $0x230] sm:$0xff] %v681
      %758 = vst [vmem:[#allocation3 + $0x248] sm:$0xff] %v684
      %759 = vst [vmem:[#allocation3 + $0x260] sm:$0xff] %v686
      %760 = vst [vmem:[#allocation3 + $0x278] sm:$0xff] %v689
      %761 = vst [vmem:[#allocation3 + $0x290] sm:$0xff] %v691
      %762 = vst [vmem:[#allocation3 + $0x2a8] sm:$0xff] %v694
      %763 = vst [vmem:[#allocation3 + $0x2c0] sm:$0xff] %v696
      %764 = vst [vmem:[#allocation3 + $0x2d8] sm:$0xff] %v699
      %765 = vst [vmem:[#allocation3 + $0x2f0] sm:$0xff] %v701
      %vm766 = vcmask 1045504
      %v767 = vrot.slane %v487, 2
      %v768 = vrot.slane %v488, 2
      %v769 = vsel %vm766, %v767, %v768
      %v770 = vrot.slane %v489, 2
      %v771 = vsel %vm766, %v768, %v770
      %v772 = vrot.slane %v490, 2
      %v773 = vrot.slane %v491, 2
      %v774 = vsel %vm766, %v772, %v773
      %v775 = vrot.slane %v492, 2
      %v776 = vsel %vm766, %v773, %v775
      %v777 = vrot.slane %v493, 2
      %v778 = vrot.slane %v494, 2
      %v779 = vsel %vm766, %v777, %v778
      %v780 = vrot.slane %v495, 2
      %v781 = vsel %vm766, %v778, %v780
      %v782 = vrot.slane %v496, 2
      %v783 = vrot.slane %v497, 2
      %v784 = vsel %vm766, %v782, %v783
      %v785 = vrot.slane %v498, 2
      %v786 = vsel %vm766, %v783, %v785
      %v787 = vrot.slane %v499, 2
      %v788 = vrot.slane %v500, 2
      %v789 = vsel %vm766, %v787, %v788
      %v790 = vrot.slane %v501, 2
      %v791 = vsel %vm766, %v788, %v790
      %v792 = vrot.slane %v502, 2
      %v793 = vrot.slane %v503, 2
      %v794 = vsel %vm766, %v792, %v793
      %v795 = vrot.slane %v504, 2
      %v796 = vsel %vm766, %v793, %v795
      %v797 = vrot.slane %v505, 2
      %v798 = vrot.slane %v506, 2
      %v799 = vsel %vm766, %v797, %v798
      %v800 = vrot.slane %v507, 2
      %v801 = vsel %vm766, %v798, %v800
      %v802 = vrot.slane %v508, 2
      %v803 = vrot.slane %v509, 2
      %v804 = vsel %vm766, %v802, %v803
      %v805 = vrot.slane %v510, 2
      %v806 = vsel %vm766, %v803, %v805
      %v807 = vrot.slane %v511, 2
      %v808 = vrot.slane %v512, 2
      %v809 = vsel %vm766, %v807, %v808
      %v810 = vrot.slane %v513, 2
      %v811 = vsel %vm766, %v808, %v810
      %v812 = vrot.slane %v514, 2
      %v813 = vrot.slane %v515, 2
      %v814 = vsel %vm766, %v812, %v813
      %v815 = vrot.slane %v516, 2
      %v816 = vsel %vm766, %v813, %v815
      %v817 = vrot.slane %v517, 2
      %v818 = vrot.slane %v518, 2
      %v819 = vsel %vm766, %v817, %v818
      %v820 = vrot.slane %v519, 2
      %v821 = vsel %vm766, %v818, %v820
      %v822 = vrot.slane %v520, 2
      %v823 = vrot.slane %v521, 2
      %v824 = vsel %vm766, %v822, %v823
      %v825 = vrot.slane %v522, 2
      %v826 = vsel %vm766, %v823, %v825
      %v827 = vrot.slane %v523, 2
      %v828 = vrot.slane %v524, 2
      %v829 = vsel %vm766, %v827, %v828
      %v830 = vrot.slane %v525, 2
      %v831 = vsel %vm766, %v828, %v830
      %v832 = vrot.slane %v526, 2
      %v833 = vrot.slane %v527, 2
      %v834 = vsel %vm766, %v832, %v833
      %v835 = vrot.slane %v528, 2
      %v836 = vsel %vm766, %v833, %v835
      %v837 = vrot.slane %v529, 2
      %v838 = vrot.slane %v530, 2
      %v839 = vsel %vm766, %v837, %v838
      %v840 = vrot.slane %v531, 2
      %v841 = vsel %vm766, %v838, %v840
      %v842 = vrot.slane %v532, 2
      %v843 = vrot.slane %v533, 2
      %v844 = vsel %vm766, %v842, %v843
      %v845 = vrot.slane %v534, 2
      %v846 = vsel %vm766, %v843, %v845
      %879 = vst [vmem:[#allocation3 + $0x10] sm:$0xff] %v769
      %880 = vst [vmem:[#allocation3 + $0x28] sm:$0xff] %v771
      %881 = vst [vmem:[#allocation3 + $0x40] sm:$0xff] %v774
      %882 = vst [vmem:[#allocation3 + $0x58] sm:$0xff] %v776
      %883 = vst [vmem:[#allocation3 + $0x70] sm:$0xff] %v779
      %884 = vst [vmem:[#allocation3 + $0x88] sm:$0xff] %v781
      %885 = vst [vmem:[#allocation3 + $0xa0] sm:$0xff] %v784
      %886 = vst [vmem:[#allocation3 + $0xb8] sm:$0xff] %v786
      %887 = vst [vmem:[#allocation3 + $0xd0] sm:$0xff] %v789
      %888 = vst [vmem:[#allocation3 + $0xe8] sm:$0xff] %v791
      %889 = vst [vmem:[#allocation3 + $0x100] sm:$0xff] %v794
      %890 = vst [vmem:[#allocation3 + $0x118] sm:$0xff] %v796
      %891 = vst [vmem:[#allocation3 + $0x130] sm:$0xff] %v799
      %892 = vst [vmem:[#allocation3 + $0x148] sm:$0xff] %v801
      %893 = vst [vmem:[#allocation3 + $0x160] sm:$0xff] %v804
      %894 = vst [vmem:[#allocation3 + $0x178] sm:$0xff] %v806
      %895 = vst [vmem:[#allocation3 + $0x190] sm:$0xff] %v809
      %896 = vst [vmem:[#allocation3 + $0x1a8] sm:$0xff] %v811
      %897 = vst [vmem:[#allocation3 + $0x1c0] sm:$0xff] %v814
      %898 = vst [vmem:[#allocation3 + $0x1d8] sm:$0xff] %v816
      %899 = vst [vmem:[#allocation3 + $0x1f0] sm:$0xff] %v819
      %900 = vst [vmem:[#allocation3 + $0x208] sm:$0xff] %v821
      %901 = vst [vmem:[#allocation3 + $0x220] sm:$0xff] %v824
      %902 = vst [vmem:[#allocation3 + $0x238] sm:$0xff] %v826
      %903 = vst [vmem:[#allocation3 + $0x250] sm:$0xff] %v829
      %904 = vst [vmem:[#allocation3 + $0x268] sm:$0xff] %v831
      %905 = vst [vmem:[#allocation3 + $0x280] sm:$0xff] %v834
      %906 = vst [vmem:[#allocation3 + $0x298] sm:$0xff] %v836
      %907 = vst [vmem:[#allocation3 + $0x2b0] sm:$0xff] %v839
      %908 = vst [vmem:[#allocation3 + $0x2c8] sm:$0xff] %v841
      %909 = vst [vmem:[#allocation3 + $0x2e0] sm:$0xff] %v844
      %910 = vst [vmem:[#allocation3 + $0x2f8] sm:$0xff] %v846
      %v911 = vld [vmem:[#allocation3] sm:$0xff]
      %v912 = vld [vmem:[#allocation3 + $0x8] sm:$0xff]
      %v913 = vld [vmem:[#allocation3 + $0x10] sm:$0xff]
      %v914 = vld [vmem:[#allocation3 + $0x18] sm:$0xff]
      %v915 = vld [vmem:[#allocation3 + $0x20] sm:$0xff]
      %v916 = vld [vmem:[#allocation3 + $0x28] sm:$0xff]
      %v917 = vld [vmem:[#allocation3 + $0x30] sm:$0xff]
      %v918 = vld [vmem:[#allocation3 + $0x38] sm:$0xff]
      %v919 = vld [vmem:[#allocation3 + $0x40] sm:$0xff]
      %v920 = vld [vmem:[#allocation3 + $0x48] sm:$0xff]
      %v921 = vld [vmem:[#allocation3 + $0x50] sm:$0xff]
      %v922 = vld [vmem:[#allocation3 + $0x58] sm:$0xff]
      %v923 = vld [vmem:[#allocation3 + $0x60] sm:$0xff]
      %v924 = vld [vmem:[#allocation3 + $0x68] sm:$0xff]
      %v925 = vld [vmem:[#allocation3 + $0x70] sm:$0xff]
      %v926 = vld [vmem:[#allocation3 + $0x78] sm:$0xff]
      %v927 = vld [vmem:[#allocation3 + $0x80] sm:$0xff]
      %v928 = vld [vmem:[#allocation3 + $0x88] sm:$0xff]
      %v929 = vld [vmem:[#allocation3 + $0x90] sm:$0xff]
      %v930 = vld [vmem:[#allocation3 + $0x98] sm:$0xff]
      %v931 = vld [vmem:[#allocation3 + $0xa0] sm:$0xff]
      %v932 = vld [vmem:[#allocation3 + $0xa8] sm:$0xff]
      %v933 = vld [vmem:[#allocation3 + $0xb0] sm:$0xff]
      %v934 = vld [vmem:[#allocation3 + $0xb8] sm:$0xff]
      %v935 = vld [vmem:[#allocation3 + $0xc0] sm:$0xff]
      %v936 = vld [vmem:[#allocation3 + $0xc8] sm:$0xff]
      %v937 = vld [vmem:[#allocation3 + $0xd0] sm:$0xff]
      %v938 = vld [vmem:[#allocation3 + $0xd8] sm:$0xff]
      %v939 = vld [vmem:[#allocation3 + $0xe0] sm:$0xff]
      %v940 = vld [vmem:[#allocation3 + $0xe8] sm:$0xff]
      %v941 = vld [vmem:[#allocation3 + $0xf0] sm:$0xff]
      %v942 = vld [vmem:[#allocation3 + $0xf8] sm:$0xff]
      %v943 = vld [vmem:[#allocation3 + $0x100] sm:$0xff]
      %v944 = vld [vmem:[#allocation3 + $0x108] sm:$0xff]
      %v945 = vld [vmem:[#allocation3 + $0x110] sm:$0xff]
      %v946 = vld [vmem:[#allocation3 + $0x118] sm:$0xff]
      %v947 = vld [vmem:[#allocation3 + $0x120] sm:$0xff]
      %v948 = vld [vmem:[#allocation3 + $0x128] sm:$0xff]
      %v949 = vld [vmem:[#allocation3 + $0x130] sm:$0xff]
      %v950 = vld [vmem:[#allocation3 + $0x138] sm:$0xff]
      %v951 = vld [vmem:[#allocation3 + $0x140] sm:$0xff]
      %v952 = vld [vmem:[#allocation3 + $0x148] sm:$0xff]
      %v953 = vld [vmem:[#allocation3 + $0x150] sm:$0xff]
      %v954 = vld [vmem:[#allocation3 + $0x158] sm:$0xff]
      %v955 = vld [vmem:[#allocation3 + $0x160] sm:$0xff]
      %v956 = vld [vmem:[#allocation3 + $0x168] sm:$0xff]
      %v957 = vld [vmem:[#allocation3 + $0x170] sm:$0xff]
      %v958 = vld [vmem:[#allocation3 + $0x178] sm:$0xff]
      %v959 = vld [vmem:[#allocation3 + $0x180] sm:$0xff]
      %v960 = vld [vmem:[#allocation3 + $0x188] sm:$0xff]
      %v961 = vld [vmem:[#allocation3 + $0x190] sm:$0xff]
      %v962 = vld [vmem:[#allocation3 + $0x198] sm:$0xff]
      %v963 = vld [vmem:[#allocation3 + $0x1a0] sm:$0xff]
      %v964 = vld [vmem:[#allocation3 + $0x1a8] sm:$0xff]
      %v965 = vld [vmem:[#allocation3 + $0x1b0] sm:$0xff]
      %v966 = vld [vmem:[#allocation3 + $0x1b8] sm:$0xff]
      %v967 = vld [vmem:[#allocation3 + $0x1c0] sm:$0xff]
      %v968 = vld [vmem:[#allocation3 + $0x1c8] sm:$0xff]
      %v969 = vld [vmem:[#allocation3 + $0x1d0] sm:$0xff]
      %v970 = vld [vmem:[#allocation3 + $0x1d8] sm:$0xff]
      %v971 = vld [vmem:[#allocation3 + $0x1e0] sm:$0xff]
      %v972 = vld [vmem:[#allocation3 + $0x1e8] sm:$0xff]
      %v973 = vld [vmem:[#allocation3 + $0x1f0] sm:$0xff]
      %v974 = vld [vmem:[#allocation3 + $0x1f8] sm:$0xff]
      %v975 = vld [vmem:[#allocation3 + $0x200] sm:$0xff]
      %v976 = vld [vmem:[#allocation3 + $0x208] sm:$0xff]
      %v977 = vld [vmem:[#allocation3 + $0x210] sm:$0xff]
      %v978 = vld [vmem:[#allocation3 + $0x218] sm:$0xff]
      %v979 = vld [vmem:[#allocation3 + $0x220] sm:$0xff]
      %v980 = vld [vmem:[#allocation3 + $0x228] sm:$0xff]
      %v981 = vld [vmem:[#allocation3 + $0x230] sm:$0xff]
      %v982 = vld [vmem:[#allocation3 + $0x238] sm:$0xff]
      %v983 = vld [vmem:[#allocation3 + $0x240] sm:$0xff]
      %v984 = vld [vmem:[#allocation3 + $0x248] sm:$0xff]
      %v985 = vld [vmem:[#allocation3 + $0x250] sm:$0xff]
      %v986 = vld [vmem:[#allocation3 + $0x258] sm:$0xff]
      %v987 = vld [vmem:[#allocation3 + $0x260] sm:$0xff]
      %v988 = vld [vmem:[#allocation3 + $0x268] sm:$0xff]
      %v989 = vld [vmem:[#allocation3 + $0x270] sm:$0xff]
      %v990 = vld [vmem:[#allocation3 + $0x278] sm:$0xff]
      %v991 = vld [vmem:[#allocation3 + $0x280] sm:$0xff]
      %v992 = vld [vmem:[#allocation3 + $0x288] sm:$0xff]
      %v993 = vld [vmem:[#allocation3 + $0x290] sm:$0xff]
      %v994 = vld [vmem:[#allocation3 + $0x298] sm:$0xff]
      %v995 = vld [vmem:[#allocation3 + $0x2a0] sm:$0xff]
      %v996 = vld [vmem:[#allocation3 + $0x2a8] sm:$0xff]
      %v997 = vld [vmem:[#allocation3 + $0x2b0] sm:$0xff]
      %v998 = vld [vmem:[#allocation3 + $0x2b8] sm:$0xff]
      %v999 = vld [vmem:[#allocation3 + $0x2c0] sm:$0xff]
      %v1000 = vld [vmem:[#allocation3 + $0x2c8] sm:$0xff]
      %v1001 = vld [vmem:[#allocation3 + $0x2d0] sm:$0xff]
      %v1002 = vld [vmem:[#allocation3 + $0x2d8] sm:$0xff]
      %v1003 = vld [vmem:[#allocation3 + $0x2e0] sm:$0xff]
      %v1004 = vld [vmem:[#allocation3 + $0x2e8] sm:$0xff]
      %v1005 = vld [vmem:[#allocation3 + $0x2f0] sm:$0xff]
      %v1006 = vld [vmem:[#allocation3 + $0x2f8] sm:$0xff]
      %v1007 = vld [vmem:[%s3] sm:$0xff]
      %v1008 = vld [vmem:[%s3 + $0x8] sm:$0xff]
      %v1009 = vld [vmem:[%s3 + $0x10] sm:$0xff]
      %v1010 = vld [vmem:[%s3 + $0x18] sm:$0xff]
      %v1011 = vld [vmem:[%s3 + $0x20] sm:$0xff]
      %v1012 = vld [vmem:[%s3 + $0x28] sm:$0xff]
      %v1013 = vld [vmem:[%s3 + $0x30] sm:$0xff]
      %v1014 = vld [vmem:[%s3 + $0x38] sm:$0xff]
      %v1015 = vld [vmem:[%s3 + $0x40] sm:$0xff]
      %v1016 = vld [vmem:[%s3 + $0x48] sm:$0xff]
      %v1017 = vld [vmem:[%s3 + $0x50] sm:$0xff]
      %v1018 = vld [vmem:[%s3 + $0x58] sm:$0xff]
      %v1019 = vld [vmem:[%s3 + $0x60] sm:$0xff]
      %v1020 = vld [vmem:[%s3 + $0x68] sm:$0xff]
      %v1021 = vld [vmem:[%s3 + $0x70] sm:$0xff]
      %v1022 = vld [vmem:[%s3 + $0x78] sm:$0xff]
      %v1023 = vld [vmem:[%s3 + $0x80] sm:$0xff]
      %v1024 = vld [vmem:[%s3 + $0x88] sm:$0xff]
      %v1025 = vld [vmem:[%s3 + $0x90] sm:$0xff]
      %v1026 = vld [vmem:[%s3 + $0x98] sm:$0xff]
      %v1027 = vld [vmem:[%s3 + $0xa0] sm:$0xff]
      %v1028 = vld [vmem:[%s3 + $0xa8] sm:$0xff]
      %v1029 = vld [vmem:[%s3 + $0xb0] sm:$0xff]
      %v1030 = vld [vmem:[%s3 + $0xb8] sm:$0xff]
      %v1031 = vld [vmem:[%s3 + $0xc0] sm:$0xff]
      %v1032 = vld [vmem:[%s3 + $0xc8] sm:$0xff]
      %v1033 = vld [vmem:[%s3 + $0xd0] sm:$0xff]
      %v1034 = vld [vmem:[%s3 + $0xd8] sm:$0xff]
      %v1035 = vld [vmem:[%s3 + $0xe0] sm:$0xff]
      %v1036 = vld [vmem:[%s3 + $0xe8] sm:$0xff]
      %v1037 = vld [vmem:[%s3 + $0xf0] sm:$0xff]
      %v1038 = vld [vmem:[%s3 + $0xf8] sm:$0xff]
      %v1039 = vld [vmem:[%s3 + $0x100] sm:$0xff]
      %v1040 = vld [vmem:[%s3 + $0x108] sm:$0xff]
      %v1041 = vld [vmem:[%s3 + $0x110] sm:$0xff]
      %v1042 = vld [vmem:[%s3 + $0x118] sm:$0xff]
      %v1043 = vld [vmem:[%s3 + $0x120] sm:$0xff]
      %v1044 = vld [vmem:[%s3 + $0x128] sm:$0xff]
      %v1045 = vld [vmem:[%s3 + $0x130] sm:$0xff]
      %v1046 = vld [vmem:[%s3 + $0x138] sm:$0xff]
      %v1047 = vld [vmem:[%s3 + $0x140] sm:$0xff]
      %v1048 = vld [vmem:[%s3 + $0x148] sm:$0xff]
      %v1049 = vld [vmem:[%s3 + $0x150] sm:$0xff]
      %v1050 = vld [vmem:[%s3 + $0x158] sm:$0xff]
      %v1051 = vld [vmem:[%s3 + $0x160] sm:$0xff]
      %v1052 = vld [vmem:[%s3 + $0x168] sm:$0xff]
      %v1053 = vld [vmem:[%s3 + $0x170] sm:$0xff]
      %v1054 = vld [vmem:[%s3 + $0x178] sm:$0xff]
      %1055 = vmatprep.subr.mxu0 0.0
      %1056 = vmatpush1.msra.mxu0 %v1007
      %1057 = vmatprep.subr.mxu0 0.0
      %1058 = vmatpush1.msra.mxu0 %v1008
      %1059 = vmatprep.subr.mxu0 0.0
      %1060 = vmatpush1.msra.mxu0 %v1009
      %1061 = vmatprep.subr.mxu0 0.0
      %1062 = vmatpush1.msra.mxu0 %v1010
      %1063 = vmatprep.subr.mxu0 0.0
      %1064 = vmatpush1.msra.mxu0 %v1011
      %1065 = vmatprep.subr.mxu0 0.0
      %1066 = vmatpush1.msra.mxu0 %v1012
      %1067 = vmatprep.subr.mxu0 0.0
      %1068 = vmatpush1.msra.mxu0 %v1013
      %1069 = vmatprep.subr.mxu0 0.0
      %1070 = vmatpush1.msra.mxu0 %v1014
      %1071 = vmatprep.subr.mxu0 0.0
      %1072 = vmatpush1.msra.mxu0 %v1015
      %1073 = vmatprep.subr.mxu0 0.0
      %1074 = vmatpush1.msra.mxu0 %v1016
      %1075 = vmatprep.subr.mxu0 0.0
      %1076 = vmatpush1.msra.mxu0 %v1017
      %1077 = vmatprep.subr.mxu0 0.0
      %1078 = vmatpush1.msra.mxu0 %v1018
      %1079 = vmatprep.subr.mxu0 0.0
      %1080 = vmatpush1.msra.mxu0 %v1019
      %1081 = vmatprep.subr.mxu0 0.0
      %1082 = vmatpush1.msra.mxu0 %v1020
      %1083 = vmatprep.subr.mxu0 0.0
      %1084 = vmatpush1.msra.mxu0 %v1021
      %1085 = vmatprep.subr.mxu0 0.0
      %1086 = vmatpush1.msra.mxu0 %v1022
      %1087 = vmatprep.subr.mxu0 0.0
      %1088 = vmatpush1.msra.mxu0 %v1023
      %1089 = vmatprep.subr.mxu0 0.0
      %1090 = vmatpush1.msra.mxu0 %v1024
      %1091 = vmatprep.subr.mxu0 0.0
      %1092 = vmatpush1.msra.mxu0 %v1025
      %1093 = vmatprep.subr.mxu0 0.0
      %1094 = vmatpush1.msra.mxu0 %v1026
      %1095 = vmatprep.subr.mxu0 0.0
      %1096 = vmatpush1.msra.mxu0 %v1027
      %1097 = vmatprep.subr.mxu0 0.0
      %1098 = vmatpush1.msra.mxu0 %v1028
      %1099 = vmatprep.subr.mxu0 0.0
      %1100 = vmatpush1.msra.mxu0 %v1029
      %1101 = vmatprep.subr.mxu0 0.0
      %1102 = vmatpush1.msra.mxu0 %v1030
      %1103 = vmatprep.subr.mxu0 0.0
      %1104 = vmatpush1.msra.mxu0 %v1031
      %1105 = vmatprep.subr.mxu0 0.0
      %1106 = vmatpush1.msra.mxu0 %v1032
      %1107 = vmatprep.subr.mxu0 0.0
      %1108 = vmatpush1.msra.mxu0 %v1033
      %1109 = vmatprep.subr.mxu0 0.0
      %1110 = vmatpush1.msra.mxu0 %v1034
      %1111 = vmatprep.subr.mxu0 0.0
      %1112 = vmatpush1.msra.mxu0 %v1035
      %1113 = vmatprep.subr.mxu0 0.0
      %1114 = vmatpush1.msra.mxu0 %v1036
      %1115 = vmatprep.subr.mxu0 0.0
      %1116 = vmatpush1.msra.mxu0 %v1037
      %1117 = vmatprep.subr.mxu0 0.0
      %1118 = vmatpush1.msra.mxu0 %v1038
      %1119 = vmatprep.mubr.f32.mxu0 %v912
      %1120 = vmatmul.mubr.f32.gmra.mrb[0].mxu0 %v911
      %v1121 = vpop.f32.mrb[0].mxu0
      %v1122 = vadd.f32 0.0, %v1121
      %v1123 = vpop.f32.mrb[0].mxu0
      %1124 = vmatprep.mubr.f32.mxu0 %v915
      %1125 = vmatmul.mubr.f32.gmra.mrb[0].mxu0 %v914
      %v1126 = vpop.f32.mrb[0].mxu0
      %v1127 = vadd.f32 0.0, %v1126
      %v1128 = vpop.f32.mrb[0].mxu0
      %1129 = vmatprep.mubr.f32.mxu0 %v918
      %1130 = vmatmul.mubr.f32.gmra.mrb[0].mxu0 %v917
      %v1131 = vpop.f32.mrb[0].mxu0
      %v1132 = vadd.f32 0.0, %v1131
      %v1133 = vpop.f32.mrb[0].mxu0
      %1134 = vmatprep.mubr.f32.mxu0 %v921
      %1135 = vmatmul.mubr.f32.gmra.mrb[0].mxu0 %v920
      %v1136 = vpop.f32.mrb[0].mxu0
      %v1137 = vadd.f32 0.0, %v1136
      %v1138 = vpop.f32.mrb[0].mxu0
      %1139 = vmatprep.mubr.f32.mxu0 %v924
      %1140 = vmatmul.mubr.f32.gmra.mrb[0].mxu0 %v923
      %v1141 = vpop.f32.mrb[0].mxu0
      %v1142 = vadd.f32 0.0, %v1141
      %v1143 = vpop.f32.mrb[0].mxu0
      %1144 = vmatprep.mubr.f32.mxu0 %v927
      %1145 = vmatmul.mubr.f32.gmra.mrb[0].mxu0 %v926
      %v1146 = vpop.f32.mrb[0].mxu0
      %v1147 = vadd.f32 0.0, %v1146
      %v1148 = vpop.f32.mrb[0].mxu0
      %1149 = vmatprep.mubr.f32.mxu0 %v930
      %1150 = vmatmul.mubr.f32.gmra.mrb[0].mxu0 %v929
      %v1151 = vpop.f32.mrb[0].mxu0
      %v1152 = vadd.f32 0.0, %v1151
      %v1153 = vpop.f32.mrb[0].mxu0
      %1154 = vmatprep.mubr.f32.mxu0 %v933
      %1155 = vmatmul.mubr.f32.gmra.mrb[0].mxu0 %v932
      %v1156 = vpop.f32.mrb[0].mxu0
      %v1157 = vadd.f32 0.0, %v1156
      %v1158 = vpop.f32.mrb[0].mxu0
      %1159 = vmatprep.mubr.f32.mxu0 %v936
      %1160 = vmatmul.mubr.f32.gmra.mrb[0].mxu0 %v935
      %v1161 = vpop.f32.mrb[0].mxu0
      %v1162 = vadd.f32 0.0, %v1161
      %v1163 = vpop.f32.mrb[0].mxu0
      %1164 = vmatprep.mubr.f32.mxu0 %v939
      %1165 = vmatmul.mubr.f32.gmra.mrb[0].mxu0 %v938
      %v1166 = vpop.f32.mrb[0].mxu0
      %v1167 = vadd.f32 0.0, %v1166
      %v1168 = vpop.f32.mrb[0].mxu0
      %1169 = vmatprep.mubr.f32.mxu0 %v942
      %1170 = vmatmul.mubr.f32.gmra.mrb[0].mxu0 %v941
      %v1171 = vpop.f32.mrb[0].mxu0
      %v1172 = vadd.f32 0.0, %v1171
      %v1173 = vpop.f32.mrb[0].mxu0
      %1174 = vmatprep.mubr.f32.mxu0 %v945
      %1175 = vmatmul.mubr.f32.gmra.mrb[0].mxu0 %v944
      %v1176 = vpop.f32.mrb[0].mxu0
      %v1177 = vadd.f32 0.0, %v1176
      %v1178 = vpop.f32.mrb[0].mxu0
      %1179 = vmatprep.mubr.f32.mxu0 %v948
      %1180 = vmatmul.mubr.f32.gmra.mrb[0].mxu0 %v947
      %v1181 = vpop.f32.mrb[0].mxu0
      %v1182 = vadd.f32 0.0, %v1181
      %v1183 = vpop.f32.mrb[0].mxu0
      %1184 = vmatprep.mubr.f32.mxu0 %v951
      %1185 = vmatmul.mubr.f32.gmra.mrb[0].mxu0 %v950
      %v1186 = vpop.f32.mrb[0].mxu0
      %v1187 = vadd.f32 0.0, %v1186
      %v1188 = vpop.f32.mrb[0].mxu0
      %1189 = vmatprep.mubr.f32.mxu0 %v954
      %1190 = vmatmul.mubr.f32.gmra.mrb[0].mxu0 %v953
      %v1191 = vpop.f32.mrb[0].mxu0
      %v1192 = vadd.f32 0.0, %v1191
      %v1193 = vpop.f32.mrb[0].mxu0
      %1194 = vmatprep.mubr.f32.mxu0 %v957
      %1195 = vmatmul.mubr.f32.gmra.mrb[0].mxu0 %v956
      %v1196 = vpop.f32.mrb[0].mxu0
      %v1197 = vadd.f32 0.0, %v1196
      %v1198 = vpop.f32.mrb[0].mxu0
      %1199 = vmatprep.mubr.f32.mxu0 %v960
      %1200 = vmatmul.mubr.f32.gmra.mrb[0].mxu0 %v959
      %v1201 = vpop.f32.mrb[0].mxu0
      %v1202 = vadd.f32 0.0, %v1201
      %v1203 = vpop.f32.mrb[0].mxu0
      %1204 = vmatprep.mubr.f32.mxu0 %v963
      %1205 = vmatmul.mubr.f32.gmra.mrb[0].mxu0 %v962
      %v1206 = vpop.f32.mrb[0].mxu0
      %v1207 = vadd.f32 0.0, %v1206
      %v1208 = vpop.f32.mrb[0].mxu0
      %1209 = vmatprep.mubr.f32.mxu0 %v966
      %1210 = vmatmul.mubr.f32.gmra.mrb[0].mxu0 %v965
      %v1211 = vpop.f32.mrb[0].mxu0
      %v1212 = vadd.f32 0.0, %v1211
      %v1213 = vpop.f32.mrb[0].mxu0
      %1214 = vmatprep.mubr.f32.mxu0 %v969
      %1215 = vmatmul.mubr.f32.gmra.mrb[0].mxu0 %v968
      %v1216 = vpop.f32.mrb[0].mxu0
      %v1217 = vadd.f32 0.0, %v1216
      %v1218 = vpop.f32.mrb[0].mxu0
      %1219 = vmatprep.mubr.f32.mxu0 %v972
      %1220 = vmatmul.mubr.f32.gmra.mrb[0].mxu0 %v971
      %v1221 = vpop.f32.mrb[0].mxu0
      %v1222 = vadd.f32 0.0, %v1221
      %v1223 = vpop.f32.mrb[0].mxu0
      %1224 = vmatprep.mubr.f32.mxu0 %v975
      %1225 = vmatmul.mubr.f32.gmra.mrb[0].mxu0 %v974
      %v1226 = vpop.f32.mrb[0].mxu0
      %v1227 = vadd.f32 0.0, %v1226
      %v1228 = vpop.f32.mrb[0].mxu0
      %1229 = vmatprep.mubr.f32.mxu0 %v978
      %1230 = vmatmul.mubr.f32.gmra.mrb[0].mxu0 %v977
      %v1231 = vpop.f32.mrb[0].mxu0
      %v1232 = vadd.f32 0.0, %v1231
      %v1233 = vpop.f32.mrb[0].mxu0
      %1234 = vmatprep.mubr.f32.mxu0 %v981
      %1235 = vmatmul.mubr.f32.gmra.mrb[0].mxu0 %v980
      %v1236 = vpop.f32.mrb[0].mxu0
      %v1237 = vadd.f32 0.0, %v1236
      %v1238 = vpop.f32.mrb[0].mxu0
      %1239 = vmatprep.mubr.f32.mxu0 %v984
      %1240 = vmatmul.mubr.f32.gmra.mrb[0].mxu0 %v983
      %v1241 = vpop.f32.mrb[0].mxu0
      %v1242 = vadd.f32 0.0, %v1241
      %v1243 = vpop.f32.mrb[0].mxu0
      %1244 = vmatprep.mubr.f32.mxu0 %v987
      %1245 = vmatmul.mubr.f32.gmra.mrb[0].mxu0 %v986
      %v1246 = vpop.f32.mrb[0].mxu0
      %v1247 = vadd.f32 0.0, %v1246
      %v1248 = vpop.f32.mrb[0].mxu0
      %1249 = vmatprep.mubr.f32.mxu0 %v990
      %1250 = vmatmul.mubr.f32.gmra.mrb[0].mxu0 %v989
      %v1251 = vpop.f32.mrb[0].mxu0
      %v1252 = vadd.f32 0.0, %v1251
      %v1253 = vpop.f32.mrb[0].mxu0
      %1254 = vmatprep.mubr.f32.mxu0 %v993
      %1255 = vmatmul.mubr.f32.gmra.mrb[0].mxu0 %v992
      %v1256 = vpop.f32.mrb[0].mxu0
      %v1257 = vadd.f32 0.0, %v1256
      %v1258 = vpop.f32.mrb[0].mxu0
      %1259 = vmatprep.mubr.f32.mxu0 %v996
      %1260 = vmatmul.mubr.f32.gmra.mrb[0].mxu0 %v995
      %v1261 = vpop.f32.mrb[0].mxu0
      %v1262 = vadd.f32 0.0, %v1261
      %v1263 = vpop.f32.mrb[0].mxu0
      %1264 = vmatprep.mubr.f32.mxu0 %v999
      %1265 = vmatmul.mubr.f32.gmra.mrb[0].mxu0 %v998
      %v1266 = vpop.f32.mrb[0].mxu0
      %v1267 = vadd.f32 0.0, %v1266
      %v1268 = vpop.f32.mrb[0].mxu0
      %1269 = vmatprep.mubr.f32.mxu0 %v1002
      %1270 = vmatmul.mubr.f32.gmra.mrb[0].mxu0 %v1001
      %v1271 = vpop.f32.mrb[0].mxu0
      %v1272 = vadd.f32 0.0, %v1271
      %v1273 = vpop.f32.mrb[0].mxu0
      %1274 = vmatprep.mubr.f32.mxu0 %v1005
      %1275 = vmatmul.mubr.f32.gmra.mrb[0].mxu0 %v1004
      %v1276 = vpop.f32.mrb[0].mxu0
      %v1277 = vadd.f32 0.0, %v1276
      %v1278 = vpop.f32.mrb[0].mxu0
      %1279 = vdwg.mxu0
      %1280 = vmatprep.subr.mxu0 0.0
      %1281 = vmatpush1.msra.mxu0 %v1039
      %1282 = vmatprep.subr.mxu0 0.0
      %1283 = vmatpush1.msra.mxu0 %v1040
      %1284 = vmatprep.subr.mxu0 0.0
      %1285 = vmatpush1.msra.mxu0 %v1041
      %1286 = vmatprep.subr.mxu0 0.0
      %1287 = vmatpush1.msra.mxu0 %v1042
      %1288 = vmatprep.subr.mxu0 0.0
      %1289 = vmatpush1.msra.mxu0 %v1043
      %1290 = vmatprep.subr.mxu0 0.0
      %1291 = vmatpush1.msra.mxu0 %v1044
      %1292 = vmatprep.subr.mxu0 0.0
      %1293 = vmatpush1.msra.mxu0 %v1045
      %1294 = vmatprep.subr.mxu0 0.0
      %1295 = vmatpush1.msra.mxu0 %v1046
      %1296 = vmatprep.subr.mxu0 0.0
      %1297 = vmatpush1.msra.mxu0 %v1047
      %1298 = vmatprep.subr.mxu0 0.0
      %1299 = vmatpush1.msra.mxu0 %v1048
      %1300 = vmatprep.subr.mxu0 0.0
      %1301 = vmatpush1.msra.mxu0 %v1049
      %1302 = vmatprep.subr.mxu0 0.0
      %1303 = vmatpush1.msra.mxu0 %v1050
      %1304 = vmatprep.subr.mxu0 0.0
      %1305 = vmatpush1.msra.mxu0 %v1051
      %1306 = vmatprep.subr.mxu0 0.0
      %1307 = vmatpush1.msra.mxu0 %v1052
      %1308 = vmatprep.subr.mxu0 0.0
      %1309 = vmatpush1.msra.mxu0 %v1053
      %1310 = vmatprep.subr.mxu0 0.0
      %1311 = vmatpush1.msra.mxu0 %v1054
      %1312 = vmatprep.subr.mxu0 0.0
      %1313 = vmatpush1.msra.mxu0 0.0
      %1314 = vmatprep.subr.mxu0 0.0
      %1315 = vmatpush1.msra.mxu0 0.0
      %1316 = vmatprep.subr.mxu0 0.0
      %1317 = vmatpush1.msra.mxu0 0.0
      %1318 = vmatprep.subr.mxu0 0.0
      %1319 = vmatpush1.msra.mxu0 0.0
      %1320 = vmatprep.subr.mxu0 0.0
      %1321 = vmatpush1.msra.mxu0 0.0
      %1322 = vmatprep.subr.mxu0 0.0
      %1323 = vmatpush1.msra.mxu0 0.0
      %1324 = vmatprep.subr.mxu0 0.0
      %1325 = vmatpush1.msra.mxu0 0.0
      %1326 = vmatprep.subr.mxu0 0.0
      %1327 = vmatpush1.msra.mxu0 0.0
      %1328 = vmatprep.subr.mxu0 0.0
      %1329 = vmatpush1.msra.mxu0 0.0
      %1330 = vmatprep.subr.mxu0 0.0
      %1331 = vmatpush1.msra.mxu0 0.0
      %1332 = vmatprep.subr.mxu0 0.0
      %1333 = vmatpush1.msra.mxu0 0.0
      %1334 = vmatprep.subr.mxu0 0.0
      %1335 = vmatpush1.msra.mxu0 0.0
      %1336 = vmatprep.subr.mxu0 0.0
      %1337 = vmatpush1.msra.mxu0 0.0
      %1338 = vmatprep.subr.mxu0 0.0
      %1339 = vmatpush1.msra.mxu0 0.0
      %1340 = vmatprep.subr.mxu0 0.0
      %1341 = vmatpush1.msra.mxu0 0.0
      %1342 = vmatprep.subr.mxu0 0.0
      %1343 = vmatpush1.msra.mxu0 0.0
      %1344 = vmatprep.mubr.f32.mxu0 0.0
      %1345 = vmatmul.mubr.f32.gmra.mrb[0].mxu0 %v913
      %v1346 = vpop.f32.mrb[0].mxu0
      %v1347 = vadd.f32 %v1122, %v1346
      %v1348 = vpop.f32.mrb[0].mxu0
      %1349 = vmatprep.mubr.f32.mxu0 0.0
      %1350 = vmatmul.mubr.f32.gmra.mrb[0].mxu0 %v916
      %v1351 = vpop.f32.mrb[0].mxu0
      %v1352 = vadd.f32 %v1127, %v1351
      %v1353 = vpop.f32.mrb[0].mxu0
      %1354 = vmatprep.mubr.f32.mxu0 0.0
      %1355 = vmatmul.mubr.f32.gmra.mrb[0].mxu0 %v919
      %v1356 = vpop.f32.mrb[0].mxu0
      %v1357 = vadd.f32 %v1132, %v1356
      %v1358 = vpop.f32.mrb[0].mxu0
      %1359 = vmatprep.mubr.f32.mxu0 0.0
      %1360 = vmatmul.mubr.f32.gmra.mrb[0].mxu0 %v922
      %v1361 = vpop.f32.mrb[0].mxu0
      %v1362 = vadd.f32 %v1137, %v1361
      %v1363 = vpop.f32.mrb[0].mxu0
      %1364 = vmatprep.mubr.f32.mxu0 0.0
      %1365 = vmatmul.mubr.f32.gmra.mrb[0].mxu0 %v925
      %v1366 = vpop.f32.mrb[0].mxu0
      %v1367 = vadd.f32 %v1142, %v1366
      %v1368 = vpop.f32.mrb[0].mxu0
      %1369 = vmatprep.mubr.f32.mxu0 0.0
      %1370 = vmatmul.mubr.f32.gmra.mrb[0].mxu0 %v928
      %v1371 = vpop.f32.mrb[0].mxu0
      %v1372 = vadd.f32 %v1147, %v1371
      %v1373 = vpop.f32.mrb[0].mxu0
      %1374 = vmatprep.mubr.f32.mxu0 0.0
      %1375 = vmatmul.mubr.f32.gmra.mrb[0].mxu0 %v931
      %v1376 = vpop.f32.mrb[0].mxu0
      %v1377 = vadd.f32 %v1152, %v1376
      %v1378 = vpop.f32.mrb[0].mxu0
      %1379 = vmatprep.mubr.f32.mxu0 0.0
      %1380 = vmatmul.mubr.f32.gmra.mrb[0].mxu0 %v934
      %v1381 = vpop.f32.mrb[0].mxu0
      %v1382 = vadd.f32 %v1157, %v1381
      %v1383 = vpop.f32.mrb[0].mxu0
      %1384 = vmatprep.mubr.f32.mxu0 0.0
      %1385 = vmatmul.mubr.f32.gmra.mrb[0].mxu0 %v937
      %v1386 = vpop.f32.mrb[0].mxu0
      %v1387 = vadd.f32 %v1162, %v1386
      %v1388 = vpop.f32.mrb[0].mxu0
      %1389 = vmatprep.mubr.f32.mxu0 0.0
      %1390 = vmatmul.mubr.f32.gmra.mrb[0].mxu0 %v940
      %v1391 = vpop.f32.mrb[0].mxu0
      %v1392 = vadd.f32 %v1167, %v1391
      %v1393 = vpop.f32.mrb[0].mxu0
      %1394 = vmatprep.mubr.f32.mxu0 0.0
      %1395 = vmatmul.mubr.f32.gmra.mrb[0].mxu0 %v943
      %v1396 = vpop.f32.mrb[0].mxu0
      %v1397 = vadd.f32 %v1172, %v1396
      %v1398 = vpop.f32.mrb[0].mxu0
      %1399 = vmatprep.mubr.f32.mxu0 0.0
      %1400 = vmatmul.mubr.f32.gmra.mrb[0].mxu0 %v946
      %v1401 = vpop.f32.mrb[0].mxu0
      %v1402 = vadd.f32 %v1177, %v1401
      %v1403 = vpop.f32.mrb[0].mxu0
      %1404 = vmatprep.mubr.f32.mxu0 0.0
      %1405 = vmatmul.mubr.f32.gmra.mrb[0].mxu0 %v949
      %v1406 = vpop.f32.mrb[0].mxu0
      %v1407 = vadd.f32 %v1182, %v1406
      %v1408 = vpop.f32.mrb[0].mxu0
      %1409 = vmatprep.mubr.f32.mxu0 0.0
      %1410 = vmatmul.mubr.f32.gmra.mrb[0].mxu0 %v952
      %v1411 = vpop.f32.mrb[0].mxu0
      %v1412 = vadd.f32 %v1187, %v1411
      %v1413 = vpop.f32.mrb[0].mxu0
      %1414 = vmatprep.mubr.f32.mxu0 0.0
      %1415 = vmatmul.mubr.f32.gmra.mrb[0].mxu0 %v955
      %v1416 = vpop.f32.mrb[0].mxu0
      %v1417 = vadd.f32 %v1192, %v1416
      %v1418 = vpop.f32.mrb[0].mxu0
      %1419 = vmatprep.mubr.f32.mxu0 0.0
      %1420 = vmatmul.mubr.f32.gmra.mrb[0].mxu0 %v958
      %v1421 = vpop.f32.mrb[0].mxu0
      %v1422 = vadd.f32 %v1197, %v1421
      %v1423 = vpop.f32.mrb[0].mxu0
      %1424 = vmatprep.mubr.f32.mxu0 0.0
      %1425 = vmatmul.mubr.f32.gmra.mrb[0].mxu0 %v961
      %v1426 = vpop.f32.mrb[0].mxu0
      %v1427 = vadd.f32 %v1202, %v1426
      %v1428 = vpop.f32.mrb[0].mxu0
      %1429 = vmatprep.mubr.f32.mxu0 0.0
      %1430 = vmatmul.mubr.f32.gmra.mrb[0].mxu0 %v964
      %v1431 = vpop.f32.mrb[0].mxu0
      %v1432 = vadd.f32 %v1207, %v1431
      %v1433 = vpop.f32.mrb[0].mxu0
      %1434 = vmatprep.mubr.f32.mxu0 0.0
      %1435 = vmatmul.mubr.f32.gmra.mrb[0].mxu0 %v967
      %v1436 = vpop.f32.mrb[0].mxu0
      %v1437 = vadd.f32 %v1212, %v1436
      %v1438 = vpop.f32.mrb[0].mxu0
      %1439 = vmatprep.mubr.f32.mxu0 0.0
      %1440 = vmatmul.mubr.f32.gmra.mrb[0].mxu0 %v970
      %v1441 = vpop.f32.mrb[0].mxu0
      %v1442 = vadd.f32 %v1217, %v1441
      %v1443 = vpop.f32.mrb[0].mxu0
      %1444 = vmatprep.mubr.f32.mxu0 0.0
      %1445 = vmatmul.mubr.f32.gmra.mrb[0].mxu0 %v973
      %v1446 = vpop.f32.mrb[0].mxu0
      %v1447 = vadd.f32 %v1222, %v1446
      %v1448 = vpop.f32.mrb[0].mxu0
      %1449 = vmatprep.mubr.f32.mxu0 0.0
      %1450 = vmatmul.mubr.f32.gmra.mrb[0].mxu0 %v976
      %v1451 = vpop.f32.mrb[0].mxu0
      %v1452 = vadd.f32 %v1227, %v1451
      %v1453 = vpop.f32.mrb[0].mxu0
      %1454 = vmatprep.mubr.f32.mxu0 0.0
      %1455 = vmatmul.mubr.f32.gmra.mrb[0].mxu0 %v979
      %v1456 = vpop.f32.mrb[0].mxu0
      %v1457 = vadd.f32 %v1232, %v1456
      %v1458 = vpop.f32.mrb[0].mxu0
      %1459 = vmatprep.mubr.f32.mxu0 0.0
      %1460 = vmatmul.mubr.f32.gmra.mrb[0].mxu0 %v982
      %v1461 = vpop.f32.mrb[0].mxu0
      %v1462 = vadd.f32 %v1237, %v1461
      %v1463 = vpop.f32.mrb[0].mxu0
      %1464 = vmatprep.mubr.f32.mxu0 0.0
      %1465 = vmatmul.mubr.f32.gmra.mrb[0].mxu0 %v985
      %v1466 = vpop.f32.mrb[0].mxu0
      %v1467 = vadd.f32 %v1242, %v1466
      %v1468 = vpop.f32.mrb[0].mxu0
      %1469 = vmatprep.mubr.f32.mxu0 0.0
      %1470 = vmatmul.mubr.f32.gmra.mrb[0].mxu0 %v988
      %v1471 = vpop.f32.mrb[0].mxu0
      %v1472 = vadd.f32 %v1247, %v1471
      %v1473 = vpop.f32.mrb[0].mxu0
      %1474 = vmatprep.mubr.f32.mxu0 0.0
      %1475 = vmatmul.mubr.f32.gmra.mrb[0].mxu0 %v991
      %v1476 = vpop.f32.mrb[0].mxu0
      %v1477 = vadd.f32 %v1252, %v1476
      %v1478 = vpop.f32.mrb[0].mxu0
      %1479 = vmatprep.mubr.f32.mxu0 0.0
      %1480 = vmatmul.mubr.f32.gmra.mrb[0].mxu0 %v994
      %v1481 = vpop.f32.mrb[0].mxu0
      %v1482 = vadd.f32 %v1257, %v1481
      %v1483 = vpop.f32.mrb[0].mxu0
      %1484 = vmatprep.mubr.f32.mxu0 0.0
      %1485 = vmatmul.mubr.f32.gmra.mrb[0].mxu0 %v997
      %v1486 = vpop.f32.mrb[0].mxu0
      %v1487 = vadd.f32 %v1262, %v1486
      %v1488 = vpop.f32.mrb[0].mxu0
      %1489 = vmatprep.mubr.f32.mxu0 0.0
      %1490 = vmatmul.mubr.f32.gmra.mrb[0].mxu0 %v1000
      %v1491 = vpop.f32.mrb[0].mxu0
      %v1492 = vadd.f32 %v1267, %v1491
      %v1493 = vpop.f32.mrb[0].mxu0
      %1494 = vmatprep.mubr.f32.mxu0 0.0
      %1495 = vmatmul.mubr.f32.gmra.mrb[0].mxu0 %v1003
      %v1496 = vpop.f32.mrb[0].mxu0
      %v1497 = vadd.f32 %v1272, %v1496
      %v1498 = vpop.f32.mrb[0].mxu0
      %1499 = vmatprep.mubr.f32.mxu0 0.0
      %1500 = vmatmul.mubr.f32.gmra.mrb[0].mxu0 %v1006
      %v1501 = vpop.f32.mrb[0].mxu0
      %v1502 = vadd.f32 %v1277, %v1501
      %v1503 = vpop.f32.mrb[0].mxu0
      %1504 = vdwg.mxu0
      %1505 = vst [vmem:[#allocation4] sm:$0xff] %v1347
      %1506 = vst [vmem:[#allocation4 + $0x8] sm:$0xff] %v1352
      %1507 = vst [vmem:[#allocation4 + $0x10] sm:$0xff] %v1357
      %1508 = vst [vmem:[#allocation4 + $0x18] sm:$0xff] %v1362
      %1509 = vst [vmem:[#allocation4 + $0x20] sm:$0xff] %v1367
      %1510 = vst [vmem:[#allocation4 + $0x28] sm:$0xff] %v1372
      %1511 = vst [vmem:[#allocation4 + $0x30] sm:$0xff] %v1377
      %1512 = vst [vmem:[#allocation4 + $0x38] sm:$0xff] %v1382
      %1513 = vst [vmem:[#allocation4 + $0x40] sm:$0xff] %v1387
      %1514 = vst [vmem:[#allocation4 + $0x48] sm:$0xff] %v1392
      %1515 = vst [vmem:[#allocation4 + $0x50] sm:$0xff] %v1397
      %1516 = vst [vmem:[#allocation4 + $0x58] sm:$0xff] %v1402
      %1517 = vst [vmem:[#allocation4 + $0x60] sm:$0xff] %v1407
      %1518 = vst [vmem:[#allocation4 + $0x68] sm:$0xff] %v1412
      %1519 = vst [vmem:[#allocation4 + $0x70] sm:$0xff] %v1417
      %1520 = vst [vmem:[#allocation4 + $0x78] sm:$0xff] %v1422
      %1521 = vst [vmem:[#allocation4 + $0x80] sm:$0xff] %v1427
      %1522 = vst [vmem:[#allocation4 + $0x88] sm:$0xff] %v1432
      %1523 = vst [vmem:[#allocation4 + $0x90] sm:$0xff] %v1437
      %1524 = vst [vmem:[#allocation4 + $0x98] sm:$0xff] %v1442
      %1525 = vst [vmem:[#allocation4 + $0xa0] sm:$0xff] %v1447
      %1526 = vst [vmem:[#allocation4 + $0xa8] sm:$0xff] %v1452
      %1527 = vst [vmem:[#allocation4 + $0xb0] sm:$0xff] %v1457
      %1528 = vst [vmem:[#allocation4 + $0xb8] sm:$0xff] %v1462
      %1529 = vst [vmem:[#allocation4 + $0xc0] sm:$0xff] %v1467
      %1530 = vst [vmem:[#allocation4 + $0xc8] sm:$0xff] %v1472
      %1531 = vst [vmem:[#allocation4 + $0xd0] sm:$0xff] %v1477
      %1532 = vst [vmem:[#allocation4 + $0xd8] sm:$0xff] %v1482
      %1533 = vst [vmem:[#allocation4 + $0xe0] sm:$0xff] %v1487
      %1534 = vst [vmem:[#allocation4 + $0xe8] sm:$0xff] %v1492
      %1535 = vst [vmem:[#allocation4 + $0xf0] sm:$0xff] %v1497
      %1536 = vst [vmem:[#allocation4 + $0xf8] sm:$0xff] %v1502
      %1537 = vst [vmem:[#allocation3] sm:$0xff] %v490
      %1538 = vst [vmem:[#allocation3 + $0x18] sm:$0xff] %v491
      %1539 = vst [vmem:[#allocation3 + $0x30] sm:$0xff] %v493
      %1540 = vst [vmem:[#allocation3 + $0x48] sm:$0xff] %v494
      %1541 = vst [vmem:[#allocation3 + $0x60] sm:$0xff] %v496
      %1542 = vst [vmem:[#allocation3 + $0x78] sm:$0xff] %v497
      %1543 = vst [vmem:[#allocation3 + $0x90] sm:$0xff] %v499
      %1544 = vst [vmem:[#allocation3 + $0xa8] sm:$0xff] %v500
      %1545 = vst [vmem:[#allocation3 + $0xc0] sm:$0xff] %v502
      %1546 = vst [vmem:[#allocation3 + $0xd8] sm:$0xff] %v503
      %1547 = vst [vmem:[#allocation3 + $0xf0] sm:$0xff] %v505
      %1548 = vst [vmem:[#allocation3 + $0x108] sm:$0xff] %v506
      %1549 = vst [vmem:[#allocation3 + $0x120] sm:$0xff] %v508
      %1550 = vst [vmem:[#allocation3 + $0x138] sm:$0xff] %v509
      %1551 = vst [vmem:[#allocation3 + $0x150] sm:$0xff] %v511
      %1552 = vst [vmem:[#allocation3 + $0x168] sm:$0xff] %v512
      %1553 = vst [vmem:[#allocation3 + $0x180] sm:$0xff] %v514
      %1554 = vst [vmem:[#allocation3 + $0x198] sm:$0xff] %v515
      %1555 = vst [vmem:[#allocation3 + $0x1b0] sm:$0xff] %v517
      %1556 = vst [vmem:[#allocation3 + $0x1c8] sm:$0xff] %v518
      %1557 = vst [vmem:[#allocation3 + $0x1e0] sm:$0xff] %v520
      %1558 = vst [vmem:[#allocation3 + $0x1f8] sm:$0xff] %v521
      %1559 = vst [vmem:[#allocation3 + $0x210] sm:$0xff] %v523
      %1560 = vst [vmem:[#allocation3 + $0x228] sm:$0xff] %v524
      %1561 = vst [vmem:[#allocation3 + $0x240] sm:$0xff] %v526
      %1562 = vst [vmem:[#allocation3 + $0x258] sm:$0xff] %v527
      %1563 = vst [vmem:[#allocation3 + $0x270] sm:$0xff] %v529
      %1564 = vst [vmem:[#allocation3 + $0x288] sm:$0xff] %v530
      %1565 = vst [vmem:[#allocation3 + $0x2a0] sm:$0xff] %v532
      %1566 = vst [vmem:[#allocation3 + $0x2b8] sm:$0xff] %v533
      %1567 = vst [vmem:[#allocation3 + $0x2d0] sm:$0xff] %v535
      %1568 = vst [vmem:[#allocation3 + $0x2e8] sm:$0xff] %v536
      %v1572 = vrot.slane %v535, 1
      %v1573 = vrot.slane %v536, 1
      %v1574 = vsel %vm621, %v1572, %v1573
      %v1575 = vrot.slane %v537, 1
      %v1576 = vsel %vm621, %v1573, %v1575
      %1579 = vst [vmem:[#allocation3 + $0x8] sm:$0xff] %v629
      %1580 = vst [vmem:[#allocation3 + $0x20] sm:$0xff] %v631
      %1581 = vst [vmem:[#allocation3 + $0x38] sm:$0xff] %v634
      %1582 = vst [vmem:[#allocation3 + $0x50] sm:$0xff] %v636
      %1583 = vst [vmem:[#allocation3 + $0x68] sm:$0xff] %v639
      %1584 = vst [vmem:[#allocation3 + $0x80] sm:$0xff] %v641
      %1585 = vst [vmem:[#allocation3 + $0x98] sm:$0xff] %v644
      %1586 = vst [vmem:[#allocation3 + $0xb0] sm:$0xff] %v646
      %1587 = vst [vmem:[#allocation3 + $0xc8] sm:$0xff] %v649
      %1588 = vst [vmem:[#allocation3 + $0xe0] sm:$0xff] %v651
      %1589 = vst [vmem:[#allocation3 + $0xf8] sm:$0xff] %v654
      %1590 = vst [vmem:[#allocation3 + $0x110] sm:$0xff] %v656
      %1591 = vst [vmem:[#allocation3 + $0x128] sm:$0xff] %v659
      %1592 = vst [vmem:[#allocation3 + $0x140] sm:$0xff] %v661
      %1593 = vst [vmem:[#allocation3 + $0x158] sm:$0xff] %v664
      %1594 = vst [vmem:[#allocation3 + $0x170] sm:$0xff] %v666
      %1595 = vst [vmem:[#allocation3 + $0x188] sm:$0xff] %v669
      %1596 = vst [vmem:[#allocation3 + $0x1a0] sm:$0xff] %v671
      %1597 = vst [vmem:[#allocation3 + $0x1b8] sm:$0xff] %v674
      %1598 = vst [vmem:[#allocation3 + $0x1d0] sm:$0xff] %v676
      %1599 = vst [vmem:[#allocation3 + $0x1e8] sm:$0xff] %v679
      %1600 = vst [vmem:[#allocation3 + $0x200] sm:$0xff] %v681
      %1601 = vst [vmem:[#allocation3 + $0x218] sm:$0xff] %v684
      %1602 = vst [vmem:[#allocation3 + $0x230] sm:$0xff] %v686
      %1603 = vst [vmem:[#allocation3 + $0x248] sm:$0xff] %v689
      %1604 = vst [vmem:[#allocation3 + $0x260] sm:$0xff] %v691
      %1605 = vst [vmem:[#allocation3 + $0x278] sm:$0xff] %v694
      %1606 = vst [vmem:[#allocation3 + $0x290] sm:$0xff] %v696
      %1607 = vst [vmem:[#allocation3 + $0x2a8] sm:$0xff] %v699
      %1608 = vst [vmem:[#allocation3 + $0x2c0] sm:$0xff] %v701
      %1609 = vst [vmem:[#allocation3 + $0x2d8] sm:$0xff] %v1574
      %1610 = vst [vmem:[#allocation3 + $0x2f0] sm:$0xff] %v1576
      %v1611 = vrot.slane %v535, 2
      %v1612 = vrot.slane %v536, 2
      %v1613 = vsel %vm766, %v1611, %v1612
      %v1614 = vrot.slane %v537, 2
      %v1615 = vsel %vm766, %v1612, %v1614
      %1618 = vst [vmem:[#allocation3 + $0x10] sm:$0xff] %v774
      %1619 = vst [vmem:[#allocation3 + $0x28] sm:$0xff] %v776
      %1620 = vst [vmem:[#allocation3 + $0x40] sm:$0xff] %v779
      %1621 = vst [vmem:[#allocation3 + $0x58] sm:$0xff] %v781
      %1622 = vst [vmem:[#allocation3 + $0x70] sm:$0xff] %v784
      %1623 = vst [vmem:[#allocation3 + $0x88] sm:$0xff] %v786
      %1624 = vst [vmem:[#allocation3 + $0xa0] sm:$0xff] %v789
      %1625 = vst [vmem:[#allocation3 + $0xb8] sm:$0xff] %v791
      %1626 = vst [vmem:[#allocation3 + $0xd0] sm:$0xff] %v794
      %1627 = vst [vmem:[#allocation3 + $0xe8] sm:$0xff] %v796
      %1628 = vst [vmem:[#allocation3 + $0x100] sm:$0xff] %v799
      %1629 = vst [vmem:[#allocation3 + $0x118] sm:$0xff] %v801
      %1630 = vst [vmem:[#allocation3 + $0x130] sm:$0xff] %v804
      %1631 = vst [vmem:[#allocation3 + $0x148] sm:$0xff] %v806
      %1632 = vst [vmem:[#allocation3 + $0x160] sm:$0xff] %v809
      %1633 = vst [vmem:[#allocation3 + $0x178] sm:$0xff] %v811
      %1634 = vst [vmem:[#allocation3 + $0x190] sm:$0xff] %v814
      %1635 = vst [vmem:[#allocation3 + $0x1a8] sm:$0xff] %v816
      %1636 = vst [vmem:[#allocation3 + $0x1c0] sm:$0xff] %v819
      %1637 = vst [vmem:[#allocation3 + $0x1d8] sm:$0xff] %v821
      %1638 = vst [vmem:[#allocation3 + $0x1f0] sm:$0xff] %v824
      %1639 = vst [vmem:[#allocation3 + $0x208] sm:$0xff] %v826
      %1640 = vst [vmem:[#allocation3 + $0x220] sm:$0xff] %v829
      %1641 = vst [vmem:[#allocation3 + $0x238] sm:$0xff] %v831
      %1642 = vst [vmem:[#allocation3 + $0x250] sm:$0xff] %v834
      %1643 = vst [vmem:[#allocation3 + $0x268] sm:$0xff] %v836
      %1644 = vst [vmem:[#allocation3 + $0x280] sm:$0xff] %v839
      %1645 = vst [vmem:[#allocation3 + $0x298] sm:$0xff] %v841
      %1646 = vst [vmem:[#allocation3 + $0x2b0] sm:$0xff] %v844
      %1647 = vst [vmem:[#allocation3 + $0x2c8] sm:$0xff] %v846
      %1648 = vst [vmem:[#allocation3 + $0x2e0] sm:$0xff] %v1613
      %1649 = vst [vmem:[#allocation3 + $0x2f8] sm:$0xff] %v1615
      %v1650 = vld [vmem:[#allocation3] sm:$0xff]
      %v1651 = vld [vmem:[#allocation3 + $0x8] sm:$0xff]
      %v1652 = vld [vmem:[#allocation3 + $0x10] sm:$0xff]
      %v1653 = vld [vmem:[#allocation3 + $0x18] sm:$0xff]
      %v1654 = vld [vmem:[#allocation3 + $0x20] sm:$0xff]
      %v1655 = vld [vmem:[#allocation3 + $0x28] sm:$0xff]
      %v1656 = vld [vmem:[#allocation3 + $0x30] sm:$0xff]
      %v1657 = vld [vmem:[#allocation3 + $0x38] sm:$0xff]
      %v1658 = vld [vmem:[#allocation3 + $0x40] sm:$0xff]
      %v1659 = vld [vmem:[#allocation3 + $0x48] sm:$0xff]
      %v1660 = vld [vmem:[#allocation3 + $0x50] sm:$0xff]
      %v1661 = vld [vmem:[#allocation3 + $0x58] sm:$0xff]
      %v1662 = vld [vmem:[#allocation3 + $0x60] sm:$0xff]
      %v1663 = vld [vmem:[#allocation3 + $0x68] sm:$0xff]
      %v1664 = vld [vmem:[#allocation3 + $0x70] sm:$0xff]
      %v1665 = vld [vmem:[#allocation3 + $0x78] sm:$0xff]
      %v1666 = vld [vmem:[#allocation3 + $0x80] sm:$0xff]
      %v1667 = vld [vmem:[#allocation3 + $0x88] sm:$0xff]
      %v1668 = vld [vmem:[#allocation3 + $0x90] sm:$0xff]
      %v1669 = vld [vmem:[#allocation3 + $0x98] sm:$0xff]
      %v1670 = vld [vmem:[#allocation3 + $0xa0] sm:$0xff]
      %v1671 = vld [vmem:[#allocation3 + $0xa8] sm:$0xff]
      %v1672 = vld [vmem:[#allocation3 + $0xb0] sm:$0xff]
      %v1673 = vld [vmem:[#allocation3 + $0xb8] sm:$0xff]
      %v1674 = vld [vmem:[#allocation3 + $0xc0] sm:$0xff]
      %v1675 = vld [vmem:[#allocation3 + $0xc8] sm:$0xff]
      %v1676 = vld [vmem:[#allocation3 + $0xd0] sm:$0xff]
      %v1677 = vld [vmem:[#allocation3 + $0xd8] sm:$0xff]
      %v1678 = vld [vmem:[#allocation3 + $0xe0] sm:$0xff]
      %v1679 = vld [vmem:[#allocation3 + $0xe8] sm:$0xff]
      %v1680 = vld [vmem:[#allocation3 + $0xf0] sm:$0xff]
      %v1681 = vld [vmem:[#allocation3 + $0xf8] sm:$0xff]
      %v1682 = vld [vmem:[#allocation3 + $0x100] sm:$0xff]
      %v1683 = vld [vmem:[#allocation3 + $0x108] sm:$0xff]
      %v1684 = vld [vmem:[#allocation3 + $0x110] sm:$0xff]
      %v1685 = vld [vmem:[#allocation3 + $0x118] sm:$0xff]
      %v1686 = vld [vmem:[#allocation3 + $0x120] sm:$0xff]
      %v1687 = vld [vmem:[#allocation3 + $0x128] sm:$0xff]
      %v1688 = vld [vmem:[#allocation3 + $0x130] sm:$0xff]
      %v1689 = vld [vmem:[#allocation3 + $0x138] sm:$0xff]
      %v1690 = vld [vmem:[#allocation3 + $0x140] sm:$0xff]
      %v1691 = vld [vmem:[#allocation3 + $0x148] sm:$0xff]
      %v1692 = vld [vmem:[#allocation3 + $0x150] sm:$0xff]
      %v1693 = vld [vmem:[#allocation3 + $0x158] sm:$0xff]
      %v1694 = vld [vmem:[#allocation3 + $0x160] sm:$0xff]
      %v1695 = vld [vmem:[#allocation3 + $0x168] sm:$0xff]
      %v1696 = vld [vmem:[#allocation3 + $0x170] sm:$0xff]
      %v1697 = vld [vmem:[#allocation3 + $0x178] sm:$0xff]
      %v1698 = vld [vmem:[#allocation3 + $0x180] sm:$0xff]
      %v1699 = vld [vmem:[#allocation3 + $0x188] sm:$0xff]
      %v1700 = vld [vmem:[#allocation3 + $0x190] sm:$0xff]
      %v1701 = vld [vmem:[#allocation3 + $0x198] sm:$0xff]
      %v1702 = vld [vmem:[#allocation3 + $0x1a0] sm:$0xff]
      %v1703 = vld [vmem:[#allocation3 + $0x1a8] sm:$0xff]
      %v1704 = vld [vmem:[#allocation3 + $0x1b0] sm:$0xff]
      %v1705 = vld [vmem:[#allocation3 + $0x1b8] sm:$0xff]
      %v1706 = vld [vmem:[#allocation3 + $0x1c0] sm:$0xff]
      %v1707 = vld [vmem:[#allocation3 + $0x1c8] sm:$0xff]
      %v1708 = vld [vmem:[#allocation3 + $0x1d0] sm:$0xff]
      %v1709 = vld [vmem:[#allocation3 + $0x1d8] sm:$0xff]
      %v1710 = vld [vmem:[#allocation3 + $0x1e0] sm:$0xff]
      %v1711 = vld [vmem:[#allocation3 + $0x1e8] sm:$0xff]
      %v1712 = vld [vmem:[#allocation3 + $0x1f0] sm:$0xff]
      %v1713 = vld [vmem:[#allocation3 + $0x1f8] sm:$0xff]
      %v1714 = vld [vmem:[#allocation3 + $0x200] sm:$0xff]
      %v1715 = vld [vmem:[#allocation3 + $0x208] sm:$0xff]
      %v1716 = vld [vmem:[#allocation3 + $0x210] sm:$0xff]
      %v1717 = vld [vmem:[#allocation3 + $0x218] sm:$0xff]
      %v1718 = vld [vmem:[#allocation3 + $0x220] sm:$0xff]
      %v1719 = vld [vmem:[#allocation3 + $0x228] sm:$0xff]
      %v1720 = vld [vmem:[#allocation3 + $0x230] sm:$0xff]
      %v1721 = vld [vmem:[#allocation3 + $0x238] sm:$0xff]
      %v1722 = vld [vmem:[#allocation3 + $0x240] sm:$0xff]
      %v1723 = vld [vmem:[#allocation3 + $0x248] sm:$0xff]
      %v1724 = vld [vmem:[#allocation3 + $0x250] sm:$0xff]
      %v1725 = vld [vmem:[#allocation3 + $0x258] sm:$0xff]
      %v1726 = vld [vmem:[#allocation3 + $0x260] sm:$0xff]
      %v1727 = vld [vmem:[#allocation3 + $0x268] sm:$0xff]
      %v1728 = vld [vmem:[#allocation3 + $0x270] sm:$0xff]
      %v1729 = vld [vmem:[#allocation3 + $0x278] sm:$0xff]
      %v1730 = vld [vmem:[#allocation3 + $0x280] sm:$0xff]
      %v1731 = vld [vmem:[#allocation3 + $0x288] sm:$0xff]
      %v1732 = vld [vmem:[#allocation3 + $0x290] sm:$0xff]
      %v1733 = vld [vmem:[#allocation3 + $0x298] sm:$0xff]
      %v1734 = vld [vmem:[#allocation3 + $0x2a0] sm:$0xff]
      %v1735 = vld [vmem:[#allocation3 + $0x2a8] sm:$0xff]
      %v1736 = vld [vmem:[#allocation3 + $0x2b0] sm:$0xff]
      %v1737 = vld [vmem:[#allocation3 + $0x2b8] sm:$0xff]
      %v1738 = vld [vmem:[#allocation3 + $0x2c0] sm:$0xff]
      %v1739 = vld [vmem:[#allocation3 + $0x2c8] sm:$0xff]
      %v1740 = vld [vmem:[#allocation3 + $0x2d0] sm:$0xff]
      %v1741 = vld [vmem:[#allocation3 + $0x2d8] sm:$0xff]
      %v1742 = vld [vmem:[#allocation3 + $0x2e0] sm:$0xff]
      %v1743 = vld [vmem:[#allocation3 + $0x2e8] sm:$0xff]
      %v1744 = vld [vmem:[#allocation3 + $0x2f0] sm:$0xff]
      %v1745 = vld [vmem:[#allocation3 + $0x2f8] sm:$0xff]
      %s1746 = scalar_lea.vmem %s3, 384
      %v1747 = vld [vmem:[%s1746] sm:$0xff]
      %v1748 = vld [vmem:[%s1746 + $0x8] sm:$0xff]
      %v1749 = vld [vmem:[%s1746 + $0x10] sm:$0xff]
      %v1750 = vld [vmem:[%s1746 + $0x18] sm:$0xff]
      %v1751 = vld [vmem:[%s1746 + $0x20] sm:$0xff]
      %v1752 = vld [vmem:[%s1746 + $0x28] sm:$0xff]
      %v1753 = vld [vmem:[%s1746 + $0x30] sm:$0xff]
      %v1754 = vld [vmem:[%s1746 + $0x38] sm:$0xff]
      %v1755 = vld [vmem:[%s1746 + $0x40] sm:$0xff]
      %v1756 = vld [vmem:[%s1746 + $0x48] sm:$0xff]
      %v1757 = vld [vmem:[%s1746 + $0x50] sm:$0xff]
      %v1758 = vld [vmem:[%s1746 + $0x58] sm:$0xff]
      %v1759 = vld [vmem:[%s1746 + $0x60] sm:$0xff]
      %v1760 = vld [vmem:[%s1746 + $0x68] sm:$0xff]
      %v1761 = vld [vmem:[%s1746 + $0x70] sm:$0xff]
      %v1762 = vld [vmem:[%s1746 + $0x78] sm:$0xff]
      %v1763 = vld [vmem:[%s1746 + $0x80] sm:$0xff]
      %v1764 = vld [vmem:[%s1746 + $0x88] sm:$0xff]
      %v1765 = vld [vmem:[%s1746 + $0x90] sm:$0xff]
      %v1766 = vld [vmem:[%s1746 + $0x98] sm:$0xff]
      %v1767 = vld [vmem:[%s1746 + $0xa0] sm:$0xff]
      %v1768 = vld [vmem:[%s1746 + $0xa8] sm:$0xff]
      %v1769 = vld [vmem:[%s1746 + $0xb0] sm:$0xff]
      %v1770 = vld [vmem:[%s1746 + $0xb8] sm:$0xff]
      %v1771 = vld [vmem:[%s1746 + $0xc0] sm:$0xff]
      %v1772 = vld [vmem:[%s1746 + $0xc8] sm:$0xff]
      %v1773 = vld [vmem:[%s1746 + $0xd0] sm:$0xff]
      %v1774 = vld [vmem:[%s1746 + $0xd8] sm:$0xff]
      %v1775 = vld [vmem:[%s1746 + $0xe0] sm:$0xff]
      %v1776 = vld [vmem:[%s1746 + $0xe8] sm:$0xff]
      %v1777 = vld [vmem:[%s1746 + $0xf0] sm:$0xff]
      %v1778 = vld [vmem:[%s1746 + $0xf8] sm:$0xff]
      %v1779 = vld [vmem:[%s1746 + $0x100] sm:$0xff]
      %v1780 = vld [vmem:[%s1746 + $0x108] sm:$0xff]
      %v1781 = vld [vmem:[%s1746 + $0x110] sm:$0xff]
      %v1782 = vld [vmem:[%s1746 + $0x118] sm:$0xff]
      %v1783 = vld [vmem:[%s1746 + $0x120] sm:$0xff]
      %v1784 = vld [vmem:[%s1746 + $0x128] sm:$0xff]
      %v1785 = vld [vmem:[%s1746 + $0x130] sm:$0xff]
      %v1786 = vld [vmem:[%s1746 + $0x138] sm:$0xff]
      %v1787 = vld [vmem:[%s1746 + $0x140] sm:$0xff]
      %v1788 = vld [vmem:[%s1746 + $0x148] sm:$0xff]
      %v1789 = vld [vmem:[%s1746 + $0x150] sm:$0xff]
      %v1790 = vld [vmem:[%s1746 + $0x158] sm:$0xff]
      %v1791 = vld [vmem:[%s1746 + $0x160] sm:$0xff]
      %v1792 = vld [vmem:[%s1746 + $0x168] sm:$0xff]
      %v1793 = vld [vmem:[%s1746 + $0x170] sm:$0xff]
      %v1794 = vld [vmem:[%s1746 + $0x178] sm:$0xff]
      %1795 = vmatprep.subr.mxu0 0.0
      %1796 = vmatpush1.msra.mxu0 %v1747
      %1797 = vmatprep.subr.mxu0 0.0
      %1798 = vmatpush1.msra.mxu0 %v1748
      %1799 = vmatprep.subr.mxu0 0.0
      %1800 = vmatpush1.msra.mxu0 %v1749
      %1801 = vmatprep.subr.mxu0 0.0
      %1802 = vmatpush1.msra.mxu0 %v1750
      %1803 = vmatprep.subr.mxu0 0.0
      %1804 = vmatpush1.msra.mxu0 %v1751
      %1805 = vmatprep.subr.mxu0 0.0
      %1806 = vmatpush1.msra.mxu0 %v1752
      %1807 = vmatprep.subr.mxu0 0.0
      %1808 = vmatpush1.msra.mxu0 %v1753
      %1809 = vmatprep.subr.mxu0 0.0
      %1810 = vmatpush1.msra.mxu0 %v1754
      %1811 = vmatprep.subr.mxu0 0.0
      %1812 = vmatpush1.msra.mxu0 %v1755
      %1813 = vmatprep.subr.mxu0 0.0
      %1814 = vmatpush1.msra.mxu0 %v1756
      %1815 = vmatprep.subr.mxu0 0.0
      %1816 = vmatpush1.msra.mxu0 %v1757
      %1817 = vmatprep.subr.mxu0 0.0
      %1818 = vmatpush1.msra.mxu0 %v1758
      %1819 = vmatprep.subr.mxu0 0.0
      %1820 = vmatpush1.msra.mxu0 %v1759
      %1821 = vmatprep.subr.mxu0 0.0
      %1822 = vmatpush1.msra.mxu0 %v1760
      %1823 = vmatprep.subr.mxu0 0.0
      %1824 = vmatpush1.msra.mxu0 %v1761
      %1825 = vmatprep.subr.mxu0 0.0
      %1826 = vmatpush1.msra.mxu0 %v1762
      %1827 = vmatprep.subr.mxu0 0.0
      %1828 = vmatpush1.msra.mxu0 %v1763
      %1829 = vmatprep.subr.mxu0 0.0
      %1830 = vmatpush1.msra.mxu0 %v1764
      %1831 = vmatprep.subr.mxu0 0.0
      %1832 = vmatpush1.msra.mxu0 %v1765
      %1833 = vmatprep.subr.mxu0 0.0
      %1834 = vmatpush1.msra.mxu0 %v1766
      %1835 = vmatprep.subr.mxu0 0.0
      %1836 = vmatpush1.msra.mxu0 %v1767
      %1837 = vmatprep.subr.mxu0 0.0
      %1838 = vmatpush1.msra.mxu0 %v1768
      %1839 = vmatprep.subr.mxu0 0.0
      %1840 = vmatpush1.msra.mxu0 %v1769
      %1841 = vmatprep.subr.mxu0 0.0
      %1842 = vmatpush1.msra.mxu0 %v1770
      %1843 = vmatprep.subr.mxu0 0.0
      %1844 = vmatpush1.msra.mxu0 %v1771
      %1845 = vmatprep.subr.mxu0 0.0
      %1846 = vmatpush1.msra.mxu0 %v1772
      %1847 = vmatprep.subr.mxu0 0.0
      %1848 = vmatpush1.msra.mxu0 %v1773
      %1849 = vmatprep.subr.mxu0 0.0
      %1850 = vmatpush1.msra.mxu0 %v1774
      %1851 = vmatprep.subr.mxu0 0.0
      %1852 = vmatpush1.msra.mxu0 %v1775
      %1853 = vmatprep.subr.mxu0 0.0
      %1854 = vmatpush1.msra.mxu0 %v1776
      %1855 = vmatprep.subr.mxu0 0.0
      %1856 = vmatpush1.msra.mxu0 %v1777
      %1857 = vmatprep.subr.mxu0 0.0
      %1858 = vmatpush1.msra.mxu0 %v1778
      %1859 = vmatprep.mubr.f32.mxu0 %v1651
      %1860 = vmatmul.mubr.f32.gmra.mrb[0].mxu0 %v1650
      %v1861 = vpop.f32.mrb[0].mxu0
      %v1862 = vadd.f32 0.0, %v1861
      %v1863 = vpop.f32.mrb[0].mxu0
      %1864 = vmatprep.mubr.f32.mxu0 %v1654
      %1865 = vmatmul.mubr.f32.gmra.mrb[0].mxu0 %v1653
      %v1866 = vpop.f32.mrb[0].mxu0
      %v1867 = vadd.f32 0.0, %v1866
      %v1868 = vpop.f32.mrb[0].mxu0
      %1869 = vmatprep.mubr.f32.mxu0 %v1657
      %1870 = vmatmul.mubr.f32.gmra.mrb[0].mxu0 %v1656
      %v1871 = vpop.f32.mrb[0].mxu0
      %v1872 = vadd.f32 0.0, %v1871
      %v1873 = vpop.f32.mrb[0].mxu0
      %1874 = vmatprep.mubr.f32.mxu0 %v1660
      %1875 = vmatmul.mubr.f32.gmra.mrb[0].mxu0 %v1659
      %v1876 = vpop.f32.mrb[0].mxu0
      %v1877 = vadd.f32 0.0, %v1876
      %v1878 = vpop.f32.mrb[0].mxu0
      %1879 = vmatprep.mubr.f32.mxu0 %v1663
      %1880 = vmatmul.mubr.f32.gmra.mrb[0].mxu0 %v1662
      %v1881 = vpop.f32.mrb[0].mxu0
      %v1882 = vadd.f32 0.0, %v1881
      %v1883 = vpop.f32.mrb[0].mxu0
      %1884 = vmatprep.mubr.f32.mxu0 %v1666
      %1885 = vmatmul.mubr.f32.gmra.mrb[0].mxu0 %v1665
      %v1886 = vpop.f32.mrb[0].mxu0
      %v1887 = vadd.f32 0.0, %v1886
      %v1888 = vpop.f32.mrb[0].mxu0
      %1889 = vmatprep.mubr.f32.mxu0 %v1669
      %1890 = vmatmul.mubr.f32.gmra.mrb[0].mxu0 %v1668
      %v1891 = vpop.f32.mrb[0].mxu0
      %v1892 = vadd.f32 0.0, %v1891
      %v1893 = vpop.f32.mrb[0].mxu0
      %1894 = vmatprep.mubr.f32.mxu0 %v1672
      %1895 = vmatmul.mubr.f32.gmra.mrb[0].mxu0 %v1671
      %v1896 = vpop.f32.mrb[0].mxu0
      %v1897 = vadd.f32 0.0, %v1896
      %v1898 = vpop.f32.mrb[0].mxu0
      %1899 = vmatprep.mubr.f32.mxu0 %v1675
      %1900 = vmatmul.mubr.f32.gmra.mrb[0].mxu0 %v1674
      %v1901 = vpop.f32.mrb[0].mxu0
      %v1902 = vadd.f32 0.0, %v1901
      %v1903 = vpop.f32.mrb[0].mxu0
      %1904 = vmatprep.mubr.f32.mxu0 %v1678
      %1905 = vmatmul.mubr.f32.gmra.mrb[0].mxu0 %v1677
      %v1906 = vpop.f32.mrb[0].mxu0
      %v1907 = vadd.f32 0.0, %v1906
      %v1908 = vpop.f32.mrb[0].mxu0
      %1909 = vmatprep.mubr.f32.mxu0 %v1681
      %1910 = vmatmul.mubr.f32.gmra.mrb[0].mxu0 %v1680
      %v1911 = vpop.f32.mrb[0].mxu0
      %v1912 = vadd.f32 0.0, %v1911
      %v1913 = vpop.f32.mrb[0].mxu0
      %1914 = vmatprep.mubr.f32.mxu0 %v1684
      %1915 = vmatmul.mubr.f32.gmra.mrb[0].mxu0 %v1683
      %v1916 = vpop.f32.mrb[0].mxu0
      %v1917 = vadd.f32 0.0, %v1916
      %v1918 = vpop.f32.mrb[0].mxu0
      %1919 = vmatprep.mubr.f32.mxu0 %v1687
      %1920 = vmatmul.mubr.f32.gmra.mrb[0].mxu0 %v1686
      %v1921 = vpop.f32.mrb[0].mxu0
      %v1922 = vadd.f32 0.0, %v1921
      %v1923 = vpop.f32.mrb[0].mxu0
      %1924 = vmatprep.mubr.f32.mxu0 %v1690
      %1925 = vmatmul.mubr.f32.gmra.mrb[0].mxu0 %v1689
      %v1926 = vpop.f32.mrb[0].mxu0
      %v1927 = vadd.f32 0.0, %v1926
      %v1928 = vpop.f32.mrb[0].mxu0
      %1929 = vmatprep.mubr.f32.mxu0 %v1693
      %1930 = vmatmul.mubr.f32.gmra.mrb[0].mxu0 %v1692
      %v1931 = vpop.f32.mrb[0].mxu0
      %v1932 = vadd.f32 0.0, %v1931
      %v1933 = vpop.f32.mrb[0].mxu0
      %1934 = vmatprep.mubr.f32.mxu0 %v1696
      %1935 = vmatmul.mubr.f32.gmra.mrb[0].mxu0 %v1695
      %v1936 = vpop.f32.mrb[0].mxu0
      %v1937 = vadd.f32 0.0, %v1936
      %v1938 = vpop.f32.mrb[0].mxu0
      %1939 = vmatprep.mubr.f32.mxu0 %v1699
      %1940 = vmatmul.mubr.f32.gmra.mrb[0].mxu0 %v1698
      %v1941 = vpop.f32.mrb[0].mxu0
      %v1942 = vadd.f32 0.0, %v1941
      %v1943 = vpop.f32.mrb[0].mxu0
      %1944 = vmatprep.mubr.f32.mxu0 %v1702
      %1945 = vmatmul.mubr.f32.gmra.mrb[0].mxu0 %v1701
      %v1946 = vpop.f32.mrb[0].mxu0
      %v1947 = vadd.f32 0.0, %v1946
      %v1948 = vpop.f32.mrb[0].mxu0
      %1949 = vmatprep.mubr.f32.mxu0 %v1705
      %1950 = vmatmul.mubr.f32.gmra.mrb[0].mxu0 %v1704
      %v1951 = vpop.f32.mrb[0].mxu0
      %v1952 = vadd.f32 0.0, %v1951
      %v1953 = vpop.f32.mrb[0].mxu0
      %1954 = vmatprep.mubr.f32.mxu0 %v1708
      %1955 = vmatmul.mubr.f32.gmra.mrb[0].mxu0 %v1707
      %v1956 = vpop.f32.mrb[0].mxu0
      %v1957 = vadd.f32 0.0, %v1956
      %v1958 = vpop.f32.mrb[0].mxu0
      %1959 = vmatprep.mubr.f32.mxu0 %v1711
      %1960 = vmatmul.mubr.f32.gmra.mrb[0].mxu0 %v1710
      %v1961 = vpop.f32.mrb[0].mxu0
      %v1962 = vadd.f32 0.0, %v1961
      %v1963 = vpop.f32.mrb[0].mxu0
      %1964 = vmatprep.mubr.f32.mxu0 %v1714
      %1965 = vmatmul.mubr.f32.gmra.mrb[0].mxu0 %v1713
      %v1966 = vpop.f32.mrb[0].mxu0
      %v1967 = vadd.f32 0.0, %v1966
      %v1968 = vpop.f32.mrb[0].mxu0
      %1969 = vmatprep.mubr.f32.mxu0 %v1717
      %1970 = vmatmul.mubr.f32.gmra.mrb[0].mxu0 %v1716
      %v1971 = vpop.f32.mrb[0].mxu0
      %v1972 = vadd.f32 0.0, %v1971
      %v1973 = vpop.f32.mrb[0].mxu0
      %1974 = vmatprep.mubr.f32.mxu0 %v1720
      %1975 = vmatmul.mubr.f32.gmra.mrb[0].mxu0 %v1719
      %v1976 = vpop.f32.mrb[0].mxu0
      %v1977 = vadd.f32 0.0, %v1976
      %v1978 = vpop.f32.mrb[0].mxu0
      %1979 = vmatprep.mubr.f32.mxu0 %v1723
      %1980 = vmatmul.mubr.f32.gmra.mrb[0].mxu0 %v1722
      %v1981 = vpop.f32.mrb[0].mxu0
      %v1982 = vadd.f32 0.0, %v1981
      %v1983 = vpop.f32.mrb[0].mxu0
      %1984 = vmatprep.mubr.f32.mxu0 %v1726
      %1985 = vmatmul.mubr.f32.gmra.mrb[0].mxu0 %v1725
      %v1986 = vpop.f32.mrb[0].mxu0
      %v1987 = vadd.f32 0.0, %v1986
      %v1988 = vpop.f32.mrb[0].mxu0
      %1989 = vmatprep.mubr.f32.mxu0 %v1729
      %1990 = vmatmul.mubr.f32.gmra.mrb[0].mxu0 %v1728
      %v1991 = vpop.f32.mrb[0].mxu0
      %v1992 = vadd.f32 0.0, %v1991
      %v1993 = vpop.f32.mrb[0].mxu0
      %1994 = vmatprep.mubr.f32.mxu0 %v1732
      %1995 = vmatmul.mubr.f32.gmra.mrb[0].mxu0 %v1731
      %v1996 = vpop.f32.mrb[0].mxu0
      %v1997 = vadd.f32 0.0, %v1996
      %v1998 = vpop.f32.mrb[0].mxu0
      %1999 = vmatprep.mubr.f32.mxu0 %v1735
      %2000 = vmatmul.mubr.f32.gmra.mrb[0].mxu0 %v1734
      %v2001 = vpop.f32.mrb[0].mxu0
      %v2002 = vadd.f32 0.0, %v2001
      %v2003 = vpop.f32.mrb[0].mxu0
      %2004 = vmatprep.mubr.f32.mxu0 %v1738
      %2005 = vmatmul.mubr.f32.gmra.mrb[0].mxu0 %v1737
      %v2006 = vpop.f32.mrb[0].mxu0
      %v2007 = vadd.f32 0.0, %v2006
      %v2008 = vpop.f32.mrb[0].mxu0
      %2009 = vmatprep.mubr.f32.mxu0 %v1741
      %2010 = vmatmul.mubr.f32.gmra.mrb[0].mxu0 %v1740
      %v2011 = vpop.f32.mrb[0].mxu0
      %v2012 = vadd.f32 0.0, %v2011
      %v2013 = vpop.f32.mrb[0].mxu0
      %2014 = vmatprep.mubr.f32.mxu0 %v1744
      %2015 = vmatmul.mubr.f32.gmra.mrb[0].mxu0 %v1743
      %v2016 = vpop.f32.mrb[0].mxu0
      %v2017 = vadd.f32 0.0, %v2016
      %v2018 = vpop.f32.mrb[0].mxu0
      %2019 = vdwg.mxu0
      %2020 = vmatprep.subr.mxu0 0.0
      %2021 = vmatpush1.msra.mxu0 %v1779
      %2022 = vmatprep.subr.mxu0 0.0
      %2023 = vmatpush1.msra.mxu0 %v1780
      %2024 = vmatprep.subr.mxu0 0.0
      %2025 = vmatpush1.msra.mxu0 %v1781
      %2026 = vmatprep.subr.mxu0 0.0
      %2027 = vmatpush1.msra.mxu0 %v1782
      %2028 = vmatprep.subr.mxu0 0.0
      %2029 = vmatpush1.msra.mxu0 %v1783
      %2030 = vmatprep.subr.mxu0 0.0
      %2031 = vmatpush1.msra.mxu0 %v1784
      %2032 = vmatprep.subr.mxu0 0.0
      %2033 = vmatpush1.msra.mxu0 %v1785
      %2034 = vmatprep.subr.mxu0 0.0
      %2035 = vmatpush1.msra.mxu0 %v1786
      %2036 = vmatprep.subr.mxu0 0.0
      %2037 = vmatpush1.msra.mxu0 %v1787
      %2038 = vmatprep.subr.mxu0 0.0
      %2039 = vmatpush1.msra.mxu0 %v1788
      %2040 = vmatprep.subr.mxu0 0.0
      %2041 = vmatpush1.msra.mxu0 %v1789
      %2042 = vmatprep.subr.mxu0 0.0
      %2043 = vmatpush1.msra.mxu0 %v1790
      %2044 = vmatprep.subr.mxu0 0.0
      %2045 = vmatpush1.msra.mxu0 %v1791
      %2046 = vmatprep.subr.mxu0 0.0
      %2047 = vmatpush1.msra.mxu0 %v1792
      %2048 = vmatprep.subr.mxu0 0.0
      %2049 = vmatpush1.msra.mxu0 %v1793
      %2050 = vmatprep.subr.mxu0 0.0
      %2051 = vmatpush1.msra.mxu0 %v1794
      %2052 = vmatprep.subr.mxu0 0.0
      %2053 = vmatpush1.msra.mxu0 0.0
      %2054 = vmatprep.subr.mxu0 0.0
      %2055 = vmatpush1.msra.mxu0 0.0
      %2056 = vmatprep.subr.mxu0 0.0
      %2057 = vmatpush1.msra.mxu0 0.0
      %2058 = vmatprep.subr.mxu0 0.0
      %2059 = vmatpush1.msra.mxu0 0.0
      %2060 = vmatprep.subr.mxu0 0.0
      %2061 = vmatpush1.msra.mxu0 0.0
      %2062 = vmatprep.subr.mxu0 0.0
      %2063 = vmatpush1.msra.mxu0 0.0
      %2064 = vmatprep.subr.mxu0 0.0
      %2065 = vmatpush1.msra.mxu0 0.0
      %2066 = vmatprep.subr.mxu0 0.0
      %2067 = vmatpush1.msra.mxu0 0.0
      %2068 = vmatprep.subr.mxu0 0.0
      %2069 = vmatpush1.msra.mxu0 0.0
      %2070 = vmatprep.subr.mxu0 0.0
      %2071 = vmatpush1.msra.mxu0 0.0
      %2072 = vmatprep.subr.mxu0 0.0
      %2073 = vmatpush1.msra.mxu0 0.0
      %2074 = vmatprep.subr.mxu0 0.0
      %2075 = vmatpush1.msra.mxu0 0.0
      %2076 = vmatprep.subr.mxu0 0.0
      %2077 = vmatpush1.msra.mxu0 0.0
      %2078 = vmatprep.subr.mxu0 0.0
      %2079 = vmatpush1.msra.mxu0 0.0
      %2080 = vmatprep.subr.mxu0 0.0
      %2081 = vmatpush1.msra.mxu0 0.0
      %2082 = vmatprep.subr.mxu0 0.0
      %2083 = vmatpush1.msra.mxu0 0.0
      %2084 = vmatprep.mubr.f32.mxu0 0.0
      %2085 = vmatmul.mubr.f32.gmra.mrb[0].mxu0 %v1652
      %v2086 = vpop.f32.mrb[0].mxu0
      %v2087 = vadd.f32 %v1862, %v2086
      %v2088 = vpop.f32.mrb[0].mxu0
      %2089 = vmatprep.mubr.f32.mxu0 0.0
      %2090 = vmatmul.mubr.f32.gmra.mrb[0].mxu0 %v1655
      %v2091 = vpop.f32.mrb[0].mxu0
      %v2092 = vadd.f32 %v1867, %v2091
      %v2093 = vpop.f32.mrb[0].mxu0
      %2094 = vmatprep.mubr.f32.mxu0 0.0
      %2095 = vmatmul.mubr.f32.gmra.mrb[0].mxu0 %v1658
      %v2096 = vpop.f32.mrb[0].mxu0
      %v2097 = vadd.f32 %v1872, %v2096
      %v2098 = vpop.f32.mrb[0].mxu0
      %2099 = vmatprep.mubr.f32.mxu0 0.0
      %2100 = vmatmul.mubr.f32.gmra.mrb[0].mxu0 %v1661
      %v2101 = vpop.f32.mrb[0].mxu0
      %v2102 = vadd.f32 %v1877, %v2101
      %v2103 = vpop.f32.mrb[0].mxu0
      %2104 = vmatprep.mubr.f32.mxu0 0.0
      %2105 = vmatmul.mubr.f32.gmra.mrb[0].mxu0 %v1664
      %v2106 = vpop.f32.mrb[0].mxu0
      %v2107 = vadd.f32 %v1882, %v2106
      %v2108 = vpop.f32.mrb[0].mxu0
      %2109 = vmatprep.mubr.f32.mxu0 0.0
      %2110 = vmatmul.mubr.f32.gmra.mrb[0].mxu0 %v1667
      %v2111 = vpop.f32.mrb[0].mxu0
      %v2112 = vadd.f32 %v1887, %v2111
      %v2113 = vpop.f32.mrb[0].mxu0
      %2114 = vmatprep.mubr.f32.mxu0 0.0
      %2115 = vmatmul.mubr.f32.gmra.mrb[0].mxu0 %v1670
      %v2116 = vpop.f32.mrb[0].mxu0
      %v2117 = vadd.f32 %v1892, %v2116
      %v2118 = vpop.f32.mrb[0].mxu0
      %2119 = vmatprep.mubr.f32.mxu0 0.0
      %2120 = vmatmul.mubr.f32.gmra.mrb[0].mxu0 %v1673
      %v2121 = vpop.f32.mrb[0].mxu0
      %v2122 = vadd.f32 %v1897, %v2121
      %v2123 = vpop.f32.mrb[0].mxu0
      %2124 = vmatprep.mubr.f32.mxu0 0.0
      %2125 = vmatmul.mubr.f32.gmra.mrb[0].mxu0 %v1676
      %v2126 = vpop.f32.mrb[0].mxu0
      %v2127 = vadd.f32 %v1902, %v2126
      %v2128 = vpop.f32.mrb[0].mxu0
      %2129 = vmatprep.mubr.f32.mxu0 0.0
      %2130 = vmatmul.mubr.f32.gmra.mrb[0].mxu0 %v1679
      %v2131 = vpop.f32.mrb[0].mxu0
      %v2132 = vadd.f32 %v1907, %v2131
      %v2133 = vpop.f32.mrb[0].mxu0
      %2134 = vmatprep.mubr.f32.mxu0 0.0
      %2135 = vmatmul.mubr.f32.gmra.mrb[0].mxu0 %v1682
      %v2136 = vpop.f32.mrb[0].mxu0
      %v2137 = vadd.f32 %v1912, %v2136
      %v2138 = vpop.f32.mrb[0].mxu0
      %2139 = vmatprep.mubr.f32.mxu0 0.0
      %2140 = vmatmul.mubr.f32.gmra.mrb[0].mxu0 %v1685
      %v2141 = vpop.f32.mrb[0].mxu0
      %v2142 = vadd.f32 %v1917, %v2141
      %v2143 = vpop.f32.mrb[0].mxu0
      %2144 = vmatprep.mubr.f32.mxu0 0.0
      %2145 = vmatmul.mubr.f32.gmra.mrb[0].mxu0 %v1688
      %v2146 = vpop.f32.mrb[0].mxu0
      %v2147 = vadd.f32 %v1922, %v2146
      %v2148 = vpop.f32.mrb[0].mxu0
      %2149 = vmatprep.mubr.f32.mxu0 0.0
      %2150 = vmatmul.mubr.f32.gmra.mrb[0].mxu0 %v1691
      %v2151 = vpop.f32.mrb[0].mxu0
      %v2152 = vadd.f32 %v1927, %v2151
      %v2153 = vpop.f32.mrb[0].mxu0
      %2154 = vmatprep.mubr.f32.mxu0 0.0
      %2155 = vmatmul.mubr.f32.gmra.mrb[0].mxu0 %v1694
      %v2156 = vpop.f32.mrb[0].mxu0
      %v2157 = vadd.f32 %v1932, %v2156
      %v2158 = vpop.f32.mrb[0].mxu0
      %2159 = vmatprep.mubr.f32.mxu0 0.0
      %2160 = vmatmul.mubr.f32.gmra.mrb[0].mxu0 %v1697
      %v2161 = vpop.f32.mrb[0].mxu0
      %v2162 = vadd.f32 %v1937, %v2161
      %v2163 = vpop.f32.mrb[0].mxu0
      %2164 = vmatprep.mubr.f32.mxu0 0.0
      %2165 = vmatmul.mubr.f32.gmra.mrb[0].mxu0 %v1700
      %v2166 = vpop.f32.mrb[0].mxu0
      %v2167 = vadd.f32 %v1942, %v2166
      %v2168 = vpop.f32.mrb[0].mxu0
      %2169 = vmatprep.mubr.f32.mxu0 0.0
      %2170 = vmatmul.mubr.f32.gmra.mrb[0].mxu0 %v1703
      %v2171 = vpop.f32.mrb[0].mxu0
      %v2172 = vadd.f32 %v1947, %v2171
      %v2173 = vpop.f32.mrb[0].mxu0
      %2174 = vmatprep.mubr.f32.mxu0 0.0
      %2175 = vmatmul.mubr.f32.gmra.mrb[0].mxu0 %v1706
      %v2176 = vpop.f32.mrb[0].mxu0
      %v2177 = vadd.f32 %v1952, %v2176
      %v2178 = vpop.f32.mrb[0].mxu0
      %2179 = vmatprep.mubr.f32.mxu0 0.0
      %2180 = vmatmul.mubr.f32.gmra.mrb[0].mxu0 %v1709
      %v2181 = vpop.f32.mrb[0].mxu0
      %v2182 = vadd.f32 %v1957, %v2181
      %v2183 = vpop.f32.mrb[0].mxu0
      %2184 = vmatprep.mubr.f32.mxu0 0.0
      %2185 = vmatmul.mubr.f32.gmra.mrb[0].mxu0 %v1712
      %v2186 = vpop.f32.mrb[0].mxu0
      %v2187 = vadd.f32 %v1962, %v2186
      %v2188 = vpop.f32.mrb[0].mxu0
      %2189 = vmatprep.mubr.f32.mxu0 0.0
      %2190 = vmatmul.mubr.f32.gmra.mrb[0].mxu0 %v1715
      %v2191 = vpop.f32.mrb[0].mxu0
      %v2192 = vadd.f32 %v1967, %v2191
      %v2193 = vpop.f32.mrb[0].mxu0
      %2194 = vmatprep.mubr.f32.mxu0 0.0
      %2195 = vmatmul.mubr.f32.gmra.mrb[0].mxu0 %v1718
      %v2196 = vpop.f32.mrb[0].mxu0
      %v2197 = vadd.f32 %v1972, %v2196
      %v2198 = vpop.f32.mrb[0].mxu0
      %2199 = vmatprep.mubr.f32.mxu0 0.0
      %2200 = vmatmul.mubr.f32.gmra.mrb[0].mxu0 %v1721
      %v2201 = vpop.f32.mrb[0].mxu0
      %v2202 = vadd.f32 %v1977, %v2201
      %v2203 = vpop.f32.mrb[0].mxu0
      %2204 = vmatprep.mubr.f32.mxu0 0.0
      %2205 = vmatmul.mubr.f32.gmra.mrb[0].mxu0 %v1724
      %v2206 = vpop.f32.mrb[0].mxu0
      %v2207 = vadd.f32 %v1982, %v2206
      %v2208 = vpop.f32.mrb[0].mxu0
      %2209 = vmatprep.mubr.f32.mxu0 0.0
      %2210 = vmatmul.mubr.f32.gmra.mrb[0].mxu0 %v1727
      %v2211 = vpop.f32.mrb[0].mxu0
      %v2212 = vadd.f32 %v1987, %v2211
      %v2213 = vpop.f32.mrb[0].mxu0
      %2214 = vmatprep.mubr.f32.mxu0 0.0
      %2215 = vmatmul.mubr.f32.gmra.mrb[0].mxu0 %v1730
      %v2216 = vpop.f32.mrb[0].mxu0
      %v2217 = vadd.f32 %v1992, %v2216
      %v2218 = vpop.f32.mrb[0].mxu0
      %2219 = vmatprep.mubr.f32.mxu0 0.0
      %2220 = vmatmul.mubr.f32.gmra.mrb[0].mxu0 %v1733
      %v2221 = vpop.f32.mrb[0].mxu0
      %v2222 = vadd.f32 %v1997, %v2221
      %v2223 = vpop.f32.mrb[0].mxu0
      %2224 = vmatprep.mubr.f32.mxu0 0.0
      %2225 = vmatmul.mubr.f32.gmra.mrb[0].mxu0 %v1736
      %v2226 = vpop.f32.mrb[0].mxu0
      %v2227 = vadd.f32 %v2002, %v2226
      %v2228 = vpop.f32.mrb[0].mxu0
      %2229 = vmatprep.mubr.f32.mxu0 0.0
      %2230 = vmatmul.mubr.f32.gmra.mrb[0].mxu0 %v1739
      %v2231 = vpop.f32.mrb[0].mxu0
      %v2232 = vadd.f32 %v2007, %v2231
      %v2233 = vpop.f32.mrb[0].mxu0
      %2234 = vmatprep.mubr.f32.mxu0 0.0
      %2235 = vmatmul.mubr.f32.gmra.mrb[0].mxu0 %v1742
      %v2236 = vpop.f32.mrb[0].mxu0
      %v2237 = vadd.f32 %v2012, %v2236
      %v2238 = vpop.f32.mrb[0].mxu0
      %2239 = vmatprep.mubr.f32.mxu0 0.0
      %2240 = vmatmul.mubr.f32.gmra.mrb[0].mxu0 %v1745
      %v2241 = vpop.f32.mrb[0].mxu0
      %v2242 = vadd.f32 %v2017, %v2241
      %v2243 = vpop.f32.mrb[0].mxu0
      %2244 = vdwg.mxu0
      %v2245 = vld [vmem:[#allocation4] sm:$0xff]
      %v2246 = vld [vmem:[#allocation4 + $0x8] sm:$0xff]
      %v2247 = vld [vmem:[#allocation4 + $0x10] sm:$0xff]
      %v2248 = vld [vmem:[#allocation4 + $0x18] sm:$0xff]
      %v2249 = vld [vmem:[#allocation4 + $0x20] sm:$0xff]
      %v2250 = vld [vmem:[#allocation4 + $0x28] sm:$0xff]
      %v2251 = vld [vmem:[#allocation4 + $0x30] sm:$0xff]
      %v2252 = vld [vmem:[#allocation4 + $0x38] sm:$0xff]
      %v2253 = vld [vmem:[#allocation4 + $0x40] sm:$0xff]
      %v2254 = vld [vmem:[#allocation4 + $0x48] sm:$0xff]
      %v2255 = vld [vmem:[#allocation4 + $0x50] sm:$0xff]
      %v2256 = vld [vmem:[#allocation4 + $0x58] sm:$0xff]
      %v2257 = vld [vmem:[#allocation4 + $0x60] sm:$0xff]
      %v2258 = vld [vmem:[#allocation4 + $0x68] sm:$0xff]
      %v2259 = vld [vmem:[#allocation4 + $0x70] sm:$0xff]
      %v2260 = vld [vmem:[#allocation4 + $0x78] sm:$0xff]
      %v2261 = vld [vmem:[#allocation4 + $0x80] sm:$0xff]
      %v2262 = vld [vmem:[#allocation4 + $0x88] sm:$0xff]
      %v2263 = vld [vmem:[#allocation4 + $0x90] sm:$0xff]
      %v2264 = vld [vmem:[#allocation4 + $0x98] sm:$0xff]
      %v2265 = vld [vmem:[#allocation4 + $0xa0] sm:$0xff]
      %v2266 = vld [vmem:[#allocation4 + $0xa8] sm:$0xff]
      %v2267 = vld [vmem:[#allocation4 + $0xb0] sm:$0xff]
      %v2268 = vld [vmem:[#allocation4 + $0xb8] sm:$0xff]
      %v2269 = vld [vmem:[#allocation4 + $0xc0] sm:$0xff]
      %v2270 = vld [vmem:[#allocation4 + $0xc8] sm:$0xff]
      %v2271 = vld [vmem:[#allocation4 + $0xd0] sm:$0xff]
      %v2272 = vld [vmem:[#allocation4 + $0xd8] sm:$0xff]
      %v2273 = vld [vmem:[#allocation4 + $0xe0] sm:$0xff]
      %v2274 = vld [vmem:[#allocation4 + $0xe8] sm:$0xff]
      %v2275 = vld [vmem:[#allocation4 + $0xf0] sm:$0xff]
      %v2276 = vld [vmem:[#allocation4 + $0xf8] sm:$0xff]
      %v2277 = vadd.f32 %v2245, %v2087
      %v2278 = vadd.f32 %v2246, %v2092
      %v2279 = vadd.f32 %v2247, %v2097
      %v2280 = vadd.f32 %v2248, %v2102
      %v2281 = vadd.f32 %v2249, %v2107
      %v2282 = vadd.f32 %v2250, %v2112
      %v2283 = vadd.f32 %v2251, %v2117
      %v2284 = vadd.f32 %v2252, %v2122
      %v2285 = vadd.f32 %v2253, %v2127
      %v2286 = vadd.f32 %v2254, %v2132
      %v2287 = vadd.f32 %v2255, %v2137
      %v2288 = vadd.f32 %v2256, %v2142
      %v2289 = vadd.f32 %v2257, %v2147
      %v2290 = vadd.f32 %v2258, %v2152
      %v2291 = vadd.f32 %v2259, %v2157
      %v2292 = vadd.f32 %v2260, %v2162
      %v2293 = vadd.f32 %v2261, %v2167
      %v2294 = vadd.f32 %v2262, %v2172
      %v2295 = vadd.f32 %v2263, %v2177
      %v2296 = vadd.f32 %v2264, %v2182
      %v2297 = vadd.f32 %v2265, %v2187
      %v2298 = vadd.f32 %v2266, %v2192
      %v2299 = vadd.f32 %v2267, %v2197
      %v2300 = vadd.f32 %v2268, %v2202
      %v2301 = vadd.f32 %v2269, %v2207
      %v2302 = vadd.f32 %v2270, %v2212
      %v2303 = vadd.f32 %v2271, %v2217
      %v2304 = vadd.f32 %v2272, %v2222
      %v2305 = vadd.f32 %v2273, %v2227
      %v2306 = vadd.f32 %v2274, %v2232
      %v2307 = vadd.f32 %v2275, %v2237
      %v2308 = vadd.f32 %v2276, %v2242
      %2309 = vst [vmem:[#allocation4] sm:$0xff] %v2277
      %2310 = vst [vmem:[#allocation4 + $0x8] sm:$0xff] %v2278
      %2311 = vst [vmem:[#allocation4 + $0x10] sm:$0xff] %v2279
      %2312 = vst [vmem:[#allocation4 + $0x18] sm:$0xff] %v2280
      %2313 = vst [vmem:[#allocation4 + $0x20] sm:$0xff] %v2281
      %2314 = vst [vmem:[#allocation4 + $0x28] sm:$0xff] %v2282
      %2315 = vst [vmem:[#allocation4 + $0x30] sm:$0xff] %v2283
      %2316 = vst [vmem:[#allocation4 + $0x38] sm:$0xff] %v2284
      %2317 = vst [vmem:[#allocation4 + $0x40] sm:$0xff] %v2285
      %2318 = vst [vmem:[#allocation4 + $0x48] sm:$0xff] %v2286
      %2319 = vst [vmem:[#allocation4 + $0x50] sm:$0xff] %v2287
      %2320 = vst [vmem:[#allocation4 + $0x58] sm:$0xff] %v2288
      %2321 = vst [vmem:[#allocation4 + $0x60] sm:$0xff] %v2289
      %2322 = vst [vmem:[#allocation4 + $0x68] sm:$0xff] %v2290
      %2323 = vst [vmem:[#allocation4 + $0x70] sm:$0xff] %v2291
      %2324 = vst [vmem:[#allocation4 + $0x78] sm:$0xff] %v2292
      %2325 = vst [vmem:[#allocation4 + $0x80] sm:$0xff] %v2293
      %2326 = vst [vmem:[#allocation4 + $0x88] sm:$0xff] %v2294
      %2327 = vst [vmem:[#allocation4 + $0x90] sm:$0xff] %v2295
      %2328 = vst [vmem:[#allocation4 + $0x98] sm:$0xff] %v2296
      %2329 = vst [vmem:[#allocation4 + $0xa0] sm:$0xff] %v2297
      %2330 = vst [vmem:[#allocation4 + $0xa8] sm:$0xff] %v2298
      %2331 = vst [vmem:[#allocation4 + $0xb0] sm:$0xff] %v2299
      %2332 = vst [vmem:[#allocation4 + $0xb8] sm:$0xff] %v2300
      %2333 = vst [vmem:[#allocation4 + $0xc0] sm:$0xff] %v2301
      %2334 = vst [vmem:[#allocation4 + $0xc8] sm:$0xff] %v2302
      %2335 = vst [vmem:[#allocation4 + $0xd0] sm:$0xff] %v2303
      %2336 = vst [vmem:[#allocation4 + $0xd8] sm:$0xff] %v2304
      %2337 = vst [vmem:[#allocation4 + $0xe0] sm:$0xff] %v2305
      %2338 = vst [vmem:[#allocation4 + $0xe8] sm:$0xff] %v2306
      %2339 = vst [vmem:[#allocation4 + $0xf0] sm:$0xff] %v2307
      %2340 = vst [vmem:[#allocation4 + $0xf8] sm:$0xff] %v2308
      %2341 = vst [vmem:[#allocation3] sm:$0xff] %v493
      %2342 = vst [vmem:[#allocation3 + $0x18] sm:$0xff] %v494
      %2343 = vst [vmem:[#allocation3 + $0x30] sm:$0xff] %v496
      %2344 = vst [vmem:[#allocation3 + $0x48] sm:$0xff] %v497
      %2345 = vst [vmem:[#allocation3 + $0x60] sm:$0xff] %v499
      %2346 = vst [vmem:[#allocation3 + $0x78] sm:$0xff] %v500
      %2347 = vst [vmem:[#allocation3 + $0x90] sm:$0xff] %v502
      %2348 = vst [vmem:[#allocation3 + $0xa8] sm:$0xff] %v503
      %2349 = vst [vmem:[#allocation3 + $0xc0] sm:$0xff] %v505
      %2350 = vst [vmem:[#allocation3 + $0xd8] sm:$0xff] %v506
      %2351 = vst [vmem:[#allocation3 + $0xf0] sm:$0xff] %v508
      %2352 = vst [vmem:[#allocation3 + $0x108] sm:$0xff] %v509
      %2353 = vst [vmem:[#allocation3 + $0x120] sm:$0xff] %v511
      %2354 = vst [vmem:[#allocation3 + $0x138] sm:$0xff] %v512
      %2355 = vst [vmem:[#allocation3 + $0x150] sm:$0xff] %v514
      %2356 = vst [vmem:[#allocation3 + $0x168] sm:$0xff] %v515
      %2357 = vst [vmem:[#allocation3 + $0x180] sm:$0xff] %v517
      %2358 = vst [vmem:[#allocation3 + $0x198] sm:$0xff] %v518
      %2359 = vst [vmem:[#allocation3 + $0x1b0] sm:$0xff] %v520
      %2360 = vst [vmem:[#allocation3 + $0x1c8] sm:$0xff] %v521
      %2361 = vst [vmem:[#allocation3 + $0x1e0] sm:$0xff] %v523
      %2362 = vst [vmem:[#allocation3 + $0x1f8] sm:$0xff] %v524
      %2363 = vst [vmem:[#allocation3 + $0x210] sm:$0xff] %v526
      %2364 = vst [vmem:[#allocation3 + $0x228] sm:$0xff] %v527
      %2365 = vst [vmem:[#allocation3 + $0x240] sm:$0xff] %v529
      %2366 = vst [vmem:[#allocation3 + $0x258] sm:$0xff] %v530
      %2367 = vst [vmem:[#allocation3 + $0x270] sm:$0xff] %v532
      %2368 = vst [vmem:[#allocation3 + $0x288] sm:$0xff] %v533
      %2369 = vst [vmem:[#allocation3 + $0x2a0] sm:$0xff] %v535
      %2370 = vst [vmem:[#allocation3 + $0x2b8] sm:$0xff] %v536
      %2371 = vst [vmem:[#allocation3 + $0x2d0] sm:$0xff] %v538
      %2372 = vst [vmem:[#allocation3 + $0x2e8] sm:$0xff] %v539
      %v2376 = vrot.slane %v538, 1
      %v2377 = vrot.slane %v539, 1
      %v2378 = vsel %vm621, %v2376, %v2377
      %v2379 = vrot.slane %v540, 1
      %v2380 = vsel %vm621, %v2377, %v2379
      %2383 = vst [vmem:[#allocation3 + $0x8] sm:$0xff] %v634
      %2384 = vst [vmem:[#allocation3 + $0x20] sm:$0xff] %v636
      %2385 = vst [vmem:[#allocation3 + $0x38] sm:$0xff] %v639
      %2386 = vst [vmem:[#allocation3 + $0x50] sm:$0xff] %v641
      %2387 = vst [vmem:[#allocation3 + $0x68] sm:$0xff] %v644
      %2388 = vst [vmem:[#allocation3 + $0x80] sm:$0xff] %v646
      %2389 = vst [vmem:[#allocation3 + $0x98] sm:$0xff] %v649
      %2390 = vst [vmem:[#allocation3 + $0xb0] sm:$0xff] %v651
      %2391 = vst [vmem:[#allocation3 + $0xc8] sm:$0xff] %v654
      %2392 = vst [vmem:[#allocation3 + $0xe0] sm:$0xff] %v656
      %2393 = vst [vmem:[#allocation3 + $0xf8] sm:$0xff] %v659
      %2394 = vst [vmem:[#allocation3 + $0x110] sm:$0xff] %v661
      %2395 = vst [vmem:[#allocation3 + $0x128] sm:$0xff] %v664
      %2396 = vst [vmem:[#allocation3 + $0x140] sm:$0xff] %v666
      %2397 = vst [vmem:[#allocation3 + $0x158] sm:$0xff] %v669
      %2398 = vst [vmem:[#allocation3 + $0x170] sm:$0xff] %v671
      %2399 = vst [vmem:[#allocation3 + $0x188] sm:$0xff] %v674
      %2400 = vst [vmem:[#allocation3 + $0x1a0] sm:$0xff] %v676
      %2401 = vst [vmem:[#allocation3 + $0x1b8] sm:$0xff] %v679
      %2402 = vst [vmem:[#allocation3 + $0x1d0] sm:$0xff] %v681
      %2403 = vst [vmem:[#allocation3 + $0x1e8] sm:$0xff] %v684
      %2404 = vst [vmem:[#allocation3 + $0x200] sm:$0xff] %v686
      %2405 = vst [vmem:[#allocation3 + $0x218] sm:$0xff] %v689
      %2406 = vst [vmem:[#allocation3 + $0x230] sm:$0xff] %v691
      %2407 = vst [vmem:[#allocation3 + $0x248] sm:$0xff] %v694
      %2408 = vst [vmem:[#allocation3 + $0x260] sm:$0xff] %v696
      %2409 = vst [vmem:[#allocation3 + $0x278] sm:$0xff] %v699
      %2410 = vst [vmem:[#allocation3 + $0x290] sm:$0xff] %v701
      %2411 = vst [vmem:[#allocation3 + $0x2a8] sm:$0xff] %v1574
      %2412 = vst [vmem:[#allocation3 + $0x2c0] sm:$0xff] %v1576
      %2413 = vst [vmem:[#allocation3 + $0x2d8] sm:$0xff] %v2378
      %2414 = vst [vmem:[#allocation3 + $0x2f0] sm:$0xff] %v2380
      %v2415 = vrot.slane %v538, 2
      %v2416 = vrot.slane %v539, 2
      %v2417 = vsel %vm766, %v2415, %v2416
      %v2418 = vrot.slane %v540, 2
      %v2419 = vsel %vm766, %v2416, %v2418
      %2422 = vst [vmem:[#allocation3 + $0x10] sm:$0xff] %v779
      %2423 = vst [vmem:[#allocation3 + $0x28] sm:$0xff] %v781
      %2424 = vst [vmem:[#allocation3 + $0x40] sm:$0xff] %v784
      %2425 = vst [vmem:[#allocation3 + $0x58] sm:$0xff] %v786
      %2426 = vst [vmem:[#allocation3 + $0x70] sm:$0xff] %v789
      %2427 = vst [vmem:[#allocation3 + $0x88] sm:$0xff] %v791
      %2428 = vst [vmem:[#allocation3 + $0xa0] sm:$0xff] %v794
      %2429 = vst [vmem:[#allocation3 + $0xb8] sm:$0xff] %v796
      %2430 = vst [vmem:[#allocation3 + $0xd0] sm:$0xff] %v799
      %2431 = vst [vmem:[#allocation3 + $0xe8] sm:$0xff] %v801
      %2432 = vst [vmem:[#allocation3 + $0x100] sm:$0xff] %v804
      %2433 = vst [vmem:[#allocation3 + $0x118] sm:$0xff] %v806
      %2434 = vst [vmem:[#allocation3 + $0x130] sm:$0xff] %v809
      %2435 = vst [vmem:[#allocation3 + $0x148] sm:$0xff] %v811
      %2436 = vst [vmem:[#allocation3 + $0x160] sm:$0xff] %v814
      %2437 = vst [vmem:[#allocation3 + $0x178] sm:$0xff] %v816
      %2438 = vst [vmem:[#allocation3 + $0x190] sm:$0xff] %v819
      %2439 = vst [vmem:[#allocation3 + $0x1a8] sm:$0xff] %v821
      %2440 = vst [vmem:[#allocation3 + $0x1c0] sm:$0xff] %v824
      %2441 = vst [vmem:[#allocation3 + $0x1d8] sm:$0xff] %v826
      %2442 = vst [vmem:[#allocation3 + $0x1f0] sm:$0xff] %v829
      %2443 = vst [vmem:[#allocation3 + $0x208] sm:$0xff] %v831
      %2444 = vst [vmem:[#allocation3 + $0x220] sm:$0xff] %v834
      %2445 = vst [vmem:[#allocation3 + $0x238] sm:$0xff] %v836
      %2446 = vst [vmem:[#allocation3 + $0x250] sm:$0xff] %v839
      %2447 = vst [vmem:[#allocation3 + $0x268] sm:$0xff] %v841
      %2448 = vst [vmem:[#allocation3 + $0x280] sm:$0xff] %v844
      %2449 = vst [vmem:[#allocation3 + $0x298] sm:$0xff] %v846
      %2450 = vst [vmem:[#allocation3 + $0x2b0] sm:$0xff] %v1613
      %2451 = vst [vmem:[#allocation3 + $0x2c8] sm:$0xff] %v1615
      %2452 = vst [vmem:[#allocation3 + $0x2e0] sm:$0xff] %v2417
      %2453 = vst [vmem:[#allocation3 + $0x2f8] sm:$0xff] %v2419
      %v2454 = vld [vmem:[#allocation3] sm:$0xff]
      %v2455 = vld [vmem:[#allocation3 + $0x8] sm:$0xff]
      %v2456 = vld [vmem:[#allocation3 + $0x10] sm:$0xff]
      %v2457 = vld [vmem:[#allocation3 + $0x18] sm:$0xff]
      %v2458 = vld [vmem:[#allocation3 + $0x20] sm:$0xff]
      %v2459 = vld [vmem:[#allocation3 + $0x28] sm:$0xff]
      %v2460 = vld [vmem:[#allocation3 + $0x30] sm:$0xff]
      %v2461 = vld [vmem:[#allocation3 + $0x38] sm:$0xff]
      %v2462 = vld [vmem:[#allocation3 + $0x40] sm:$0xff]
      %v2463 = vld [vmem:[#allocation3 + $0x48] sm:$0xff]
      %v2464 = vld [vmem:[#allocation3 + $0x50] sm:$0xff]
      %v2465 = vld [vmem:[#allocation3 + $0x58] sm:$0xff]
      %v2466 = vld [vmem:[#allocation3 + $0x60] sm:$0xff]
      %v2467 = vld [vmem:[#allocation3 + $0x68] sm:$0xff]
      %v2468 = vld [vmem:[#allocation3 + $0x70] sm:$0xff]
      %v2469 = vld [vmem:[#allocation3 + $0x78] sm:$0xff]
      %v2470 = vld [vmem:[#allocation3 + $0x80] sm:$0xff]
      %v2471 = vld [vmem:[#allocation3 + $0x88] sm:$0xff]
      %v2472 = vld [vmem:[#allocation3 + $0x90] sm:$0xff]
      %v2473 = vld [vmem:[#allocation3 + $0x98] sm:$0xff]
      %v2474 = vld [vmem:[#allocation3 + $0xa0] sm:$0xff]
      %v2475 = vld [vmem:[#allocation3 + $0xa8] sm:$0xff]
      %v2476 = vld [vmem:[#allocation3 + $0xb0] sm:$0xff]
      %v2477 = vld [vmem:[#allocation3 + $0xb8] sm:$0xff]
      %v2478 = vld [vmem:[#allocation3 + $0xc0] sm:$0xff]
      %v2479 = vld [vmem:[#allocation3 + $0xc8] sm:$0xff]
      %v2480 = vld [vmem:[#allocation3 + $0xd0] sm:$0xff]
      %v2481 = vld [vmem:[#allocation3 + $0xd8] sm:$0xff]
      %v2482 = vld [vmem:[#allocation3 + $0xe0] sm:$0xff]
      %v2483 = vld [vmem:[#allocation3 + $0xe8] sm:$0xff]
      %v2484 = vld [vmem:[#allocation3 + $0xf0] sm:$0xff]
      %v2485 = vld [vmem:[#allocation3 + $0xf8] sm:$0xff]
      %v2486 = vld [vmem:[#allocation3 + $0x100] sm:$0xff]
      %v2487 = vld [vmem:[#allocation3 + $0x108] sm:$0xff]
      %v2488 = vld [vmem:[#allocation3 + $0x110] sm:$0xff]
      %v2489 = vld [vmem:[#allocation3 + $0x118] sm:$0xff]
      %v2490 = vld [vmem:[#allocation3 + $0x120] sm:$0xff]
      %v2491 = vld [vmem:[#allocation3 + $0x128] sm:$0xff]
      %v2492 = vld [vmem:[#allocation3 + $0x130] sm:$0xff]
      %v2493 = vld [vmem:[#allocation3 + $0x138] sm:$0xff]
      %v2494 = vld [vmem:[#allocation3 + $0x140] sm:$0xff]
      %v2495 = vld [vmem:[#allocation3 + $0x148] sm:$0xff]
      %v2496 = vld [vmem:[#allocation3 + $0x150] sm:$0xff]
      %v2497 = vld [vmem:[#allocation3 + $0x158] sm:$0xff]
      %v2498 = vld [vmem:[#allocation3 + $0x160] sm:$0xff]
      %v2499 = vld [vmem:[#allocation3 + $0x168] sm:$0xff]
      %v2500 = vld [vmem:[#allocation3 + $0x170] sm:$0xff]
      %v2501 = vld [vmem:[#allocation3 + $0x178] sm:$0xff]
      %v2502 = vld [vmem:[#allocation3 + $0x180] sm:$0xff]
      %v2503 = vld [vmem:[#allocation3 + $0x188] sm:$0xff]
      %v2504 = vld [vmem:[#allocation3 + $0x190] sm:$0xff]
      %v2505 = vld [vmem:[#allocation3 + $0x198] sm:$0xff]
      %v2506 = vld [vmem:[#allocation3 + $0x1a0] sm:$0xff]
      %v2507 = vld [vmem:[#allocation3 + $0x1a8] sm:$0xff]
      %v2508 = vld [vmem:[#allocation3 + $0x1b0] sm:$0xff]
      %v2509 = vld [vmem:[#allocation3 + $0x1b8] sm:$0xff]
      %v2510 = vld [vmem:[#allocation3 + $0x1c0] sm:$0xff]
      %v2511 = vld [vmem:[#allocation3 + $0x1c8] sm:$0xff]
      %v2512 = vld [vmem:[#allocation3 + $0x1d0] sm:$0xff]
      %v2513 = vld [vmem:[#allocation3 + $0x1d8] sm:$0xff]
      %v2514 = vld [vmem:[#allocation3 + $0x1e0] sm:$0xff]
      %v2515 = vld [vmem:[#allocation3 + $0x1e8] sm:$0xff]
      %v2516 = vld [vmem:[#allocation3 + $0x1f0] sm:$0xff]
      %v2517 = vld [vmem:[#allocation3 + $0x1f8] sm:$0xff]
      %v2518 = vld [vmem:[#allocation3 + $0x200] sm:$0xff]
      %v2519 = vld [vmem:[#allocation3 + $0x208] sm:$0xff]
      %v2520 = vld [vmem:[#allocation3 + $0x210] sm:$0xff]
      %v2521 = vld [vmem:[#allocation3 + $0x218] sm:$0xff]
      %v2522 = vld [vmem:[#allocation3 + $0x220] sm:$0xff]
      %v2523 = vld [vmem:[#allocation3 + $0x228] sm:$0xff]
      %v2524 = vld [vmem:[#allocation3 + $0x230] sm:$0xff]
      %v2525 = vld [vmem:[#allocation3 + $0x238] sm:$0xff]
      %v2526 = vld [vmem:[#allocation3 + $0x240] sm:$0xff]
      %v2527 = vld [vmem:[#allocation3 + $0x248] sm:$0xff]
      %v2528 = vld [vmem:[#allocation3 + $0x250] sm:$0xff]
      %v2529 = vld [vmem:[#allocation3 + $0x258] sm:$0xff]
      %v2530 = vld [vmem:[#allocation3 + $0x260] sm:$0xff]
      %v2531 = vld [vmem:[#allocation3 + $0x268] sm:$0xff]
      %v2532 = vld [vmem:[#allocation3 + $0x270] sm:$0xff]
      %v2533 = vld [vmem:[#allocation3 + $0x278] sm:$0xff]
      %v2534 = vld [vmem:[#allocation3 + $0x280] sm:$0xff]
      %v2535 = vld [vmem:[#allocation3 + $0x288] sm:$0xff]
      %v2536 = vld [vmem:[#allocation3 + $0x290] sm:$0xff]
      %v2537 = vld [vmem:[#allocation3 + $0x298] sm:$0xff]
      %v2538 = vld [vmem:[#allocation3 + $0x2a0] sm:$0xff]
      %v2539 = vld [vmem:[#allocation3 + $0x2a8] sm:$0xff]
      %v2540 = vld [vmem:[#allocation3 + $0x2b0] sm:$0xff]
      %v2541 = vld [vmem:[#allocation3 + $0x2b8] sm:$0xff]
      %v2542 = vld [vmem:[#allocation3 + $0x2c0] sm:$0xff]
      %v2543 = vld [vmem:[#allocation3 + $0x2c8] sm:$0xff]
      %v2544 = vld [vmem:[#allocation3 + $0x2d0] sm:$0xff]
      %v2545 = vld [vmem:[#allocation3 + $0x2d8] sm:$0xff]
      %v2546 = vld [vmem:[#allocation3 + $0x2e0] sm:$0xff]
      %v2547 = vld [vmem:[#allocation3 + $0x2e8] sm:$0xff]
      %v2548 = vld [vmem:[#allocation3 + $0x2f0] sm:$0xff]
      %v2549 = vld [vmem:[#allocation3 + $0x2f8] sm:$0xff]
      %s2550 = scalar_lea.vmem %s3, 768
      %v2551 = vld [vmem:[%s2550] sm:$0xff]
      %v2552 = vld [vmem:[%s2550 + $0x8] sm:$0xff]
      %v2553 = vld [vmem:[%s2550 + $0x10] sm:$0xff]
      %v2554 = vld [vmem:[%s2550 + $0x18] sm:$0xff]
      %v2555 = vld [vmem:[%s2550 + $0x20] sm:$0xff]
      %v2556 = vld [vmem:[%s2550 + $0x28] sm:$0xff]
      %v2557 = vld [vmem:[%s2550 + $0x30] sm:$0xff]
      %v2558 = vld [vmem:[%s2550 + $0x38] sm:$0xff]
      %v2559 = vld [vmem:[%s2550 + $0x40] sm:$0xff]
      %v2560 = vld [vmem:[%s2550 + $0x48] sm:$0xff]
      %v2561 = vld [vmem:[%s2550 + $0x50] sm:$0xff]
      %v2562 = vld [vmem:[%s2550 + $0x58] sm:$0xff]
      %v2563 = vld [vmem:[%s2550 + $0x60] sm:$0xff]
      %v2564 = vld [vmem:[%s2550 + $0x68] sm:$0xff]
      %v2565 = vld [vmem:[%s2550 + $0x70] sm:$0xff]
      %v2566 = vld [vmem:[%s2550 + $0x78] sm:$0xff]
      %v2567 = vld [vmem:[%s2550 + $0x80] sm:$0xff]
      %v2568 = vld [vmem:[%s2550 + $0x88] sm:$0xff]
      %v2569 = vld [vmem:[%s2550 + $0x90] sm:$0xff]
      %v2570 = vld [vmem:[%s2550 + $0x98] sm:$0xff]
      %v2571 = vld [vmem:[%s2550 + $0xa0] sm:$0xff]
      %v2572 = vld [vmem:[%s2550 + $0xa8] sm:$0xff]
      %v2573 = vld [vmem:[%s2550 + $0xb0] sm:$0xff]
      %v2574 = vld [vmem:[%s2550 + $0xb8] sm:$0xff]
      %v2575 = vld [vmem:[%s2550 + $0xc0] sm:$0xff]
      %v2576 = vld [vmem:[%s2550 + $0xc8] sm:$0xff]
      %v2577 = vld [vmem:[%s2550 + $0xd0] sm:$0xff]
      %v2578 = vld [vmem:[%s2550 + $0xd8] sm:$0xff]
      %v2579 = vld [vmem:[%s2550 + $0xe0] sm:$0xff]
      %v2580 = vld [vmem:[%s2550 + $0xe8] sm:$0xff]
      %v2581 = vld [vmem:[%s2550 + $0xf0] sm:$0xff]
      %v2582 = vld [vmem:[%s2550 + $0xf8] sm:$0xff]
      %v2583 = vld [vmem:[%s2550 + $0x100] sm:$0xff]
      %v2584 = vld [vmem:[%s2550 + $0x108] sm:$0xff]
      %v2585 = vld [vmem:[%s2550 + $0x110] sm:$0xff]
      %v2586 = vld [vmem:[%s2550 + $0x118] sm:$0xff]
      %v2587 = vld [vmem:[%s2550 + $0x120] sm:$0xff]
      %v2588 = vld [vmem:[%s2550 + $0x128] sm:$0xff]
      %v2589 = vld [vmem:[%s2550 + $0x130] sm:$0xff]
      %v2590 = vld [vmem:[%s2550 + $0x138] sm:$0xff]
      %v2591 = vld [vmem:[%s2550 + $0x140] sm:$0xff]
      %v2592 = vld [vmem:[%s2550 + $0x148] sm:$0xff]
      %v2593 = vld [vmem:[%s2550 + $0x150] sm:$0xff]
      %v2594 = vld [vmem:[%s2550 + $0x158] sm:$0xff]
      %v2595 = vld [vmem:[%s2550 + $0x160] sm:$0xff]
      %v2596 = vld [vmem:[%s2550 + $0x168] sm:$0xff]
      %v2597 = vld [vmem:[%s2550 + $0x170] sm:$0xff]
      %v2598 = vld [vmem:[%s2550 + $0x178] sm:$0xff]
      %2599 = vmatprep.subr.mxu0 0.0
      %2600 = vmatpush1.msra.mxu0 %v2551
      %2601 = vmatprep.subr.mxu0 0.0
      %2602 = vmatpush1.msra.mxu0 %v2552
      %2603 = vmatprep.subr.mxu0 0.0
      %2604 = vmatpush1.msra.mxu0 %v2553
      %2605 = vmatprep.subr.mxu0 0.0
      %2606 = vmatpush1.msra.mxu0 %v2554
      %2607 = vmatprep.subr.mxu0 0.0
      %2608 = vmatpush1.msra.mxu0 %v2555
      %2609 = vmatprep.subr.mxu0 0.0
      %2610 = vmatpush1.msra.mxu0 %v2556
      %2611 = vmatprep.subr.mxu0 0.0
      %2612 = vmatpush1.msra.mxu0 %v2557
      %2613 = vmatprep.subr.mxu0 0.0
      %2614 = vmatpush1.msra.mxu0 %v2558
      %2615 = vmatprep.subr.mxu0 0.0
      %2616 = vmatpush1.msra.mxu0 %v2559
      %2617 = vmatprep.subr.mxu0 0.0
      %2618 = vmatpush1.msra.mxu0 %v2560
      %2619 = vmatprep.subr.mxu0 0.0
      %2620 = vmatpush1.msra.mxu0 %v2561
      %2621 = vmatprep.subr.mxu0 0.0
      %2622 = vmatpush1.msra.mxu0 %v2562
      %2623 = vmatprep.subr.mxu0 0.0
      %2624 = vmatpush1.msra.mxu0 %v2563
      %2625 = vmatprep.subr.mxu0 0.0
      %2626 = vmatpush1.msra.mxu0 %v2564
      %2627 = vmatprep.subr.mxu0 0.0
      %2628 = vmatpush1.msra.mxu0 %v2565
      %2629 = vmatprep.subr.mxu0 0.0
      %2630 = vmatpush1.msra.mxu0 %v2566
      %2631 = vmatprep.subr.mxu0 0.0
      %2632 = vmatpush1.msra.mxu0 %v2567
      %2633 = vmatprep.subr.mxu0 0.0
      %2634 = vmatpush1.msra.mxu0 %v2568
      %2635 = vmatprep.subr.mxu0 0.0
      %2636 = vmatpush1.msra.mxu0 %v2569
      %2637 = vmatprep.subr.mxu0 0.0
      %2638 = vmatpush1.msra.mxu0 %v2570
      %2639 = vmatprep.subr.mxu0 0.0
      %2640 = vmatpush1.msra.mxu0 %v2571
      %2641 = vmatprep.subr.mxu0 0.0
      %2642 = vmatpush1.msra.mxu0 %v2572
      %2643 = vmatprep.subr.mxu0 0.0
      %2644 = vmatpush1.msra.mxu0 %v2573
      %2645 = vmatprep.subr.mxu0 0.0
      %2646 = vmatpush1.msra.mxu0 %v2574
      %2647 = vmatprep.subr.mxu0 0.0
      %2648 = vmatpush1.msra.mxu0 %v2575
      %2649 = vmatprep.subr.mxu0 0.0
      %2650 = vmatpush1.msra.mxu0 %v2576
      %2651 = vmatprep.subr.mxu0 0.0
      %2652 = vmatpush1.msra.mxu0 %v2577
      %2653 = vmatprep.subr.mxu0 0.0
      %2654 = vmatpush1.msra.mxu0 %v2578
      %2655 = vmatprep.subr.mxu0 0.0
      %2656 = vmatpush1.msra.mxu0 %v2579
      %2657 = vmatprep.subr.mxu0 0.0
      %2658 = vmatpush1.msra.mxu0 %v2580
      %2659 = vmatprep.subr.mxu0 0.0
      %2660 = vmatpush1.msra.mxu0 %v2581
      %2661 = vmatprep.subr.mxu0 0.0
      %2662 = vmatpush1.msra.mxu0 %v2582
      %2663 = vmatprep.mubr.f32.mxu0 %v2455
      %2664 = vmatmul.mubr.f32.gmra.mrb[0].mxu0 %v2454
      %v2665 = vpop.f32.mrb[0].mxu0
      %v2666 = vadd.f32 0.0, %v2665
      %v2667 = vpop.f32.mrb[0].mxu0
      %2668 = vmatprep.mubr.f32.mxu0 %v2458
      %2669 = vmatmul.mubr.f32.gmra.mrb[0].mxu0 %v2457
      %v2670 = vpop.f32.mrb[0].mxu0
      %v2671 = vadd.f32 0.0, %v2670
      %v2672 = vpop.f32.mrb[0].mxu0
      %2673 = vmatprep.mubr.f32.mxu0 %v2461
      %2674 = vmatmul.mubr.f32.gmra.mrb[0].mxu0 %v2460
      %v2675 = vpop.f32.mrb[0].mxu0
      %v2676 = vadd.f32 0.0, %v2675
      %v2677 = vpop.f32.mrb[0].mxu0
      %2678 = vmatprep.mubr.f32.mxu0 %v2464
      %2679 = vmatmul.mubr.f32.gmra.mrb[0].mxu0 %v2463
      %v2680 = vpop.f32.mrb[0].mxu0
      %v2681 = vadd.f32 0.0, %v2680
      %v2682 = vpop.f32.mrb[0].mxu0
      %2683 = vmatprep.mubr.f32.mxu0 %v2467
      %2684 = vmatmul.mubr.f32.gmra.mrb[0].mxu0 %v2466
      %v2685 = vpop.f32.mrb[0].mxu0
      %v2686 = vadd.f32 0.0, %v2685
      %v2687 = vpop.f32.mrb[0].mxu0
      %2688 = vmatprep.mubr.f32.mxu0 %v2470
      %2689 = vmatmul.mubr.f32.gmra.mrb[0].mxu0 %v2469
      %v2690 = vpop.f32.mrb[0].mxu0
      %v2691 = vadd.f32 0.0, %v2690
      %v2692 = vpop.f32.mrb[0].mxu0
      %2693 = vmatprep.mubr.f32.mxu0 %v2473
      %2694 = vmatmul.mubr.f32.gmra.mrb[0].mxu0 %v2472
      %v2695 = vpop.f32.mrb[0].mxu0
      %v2696 = vadd.f32 0.0, %v2695
      %v2697 = vpop.f32.mrb[0].mxu0
      %2698 = vmatprep.mubr.f32.mxu0 %v2476
      %2699 = vmatmul.mubr.f32.gmra.mrb[0].mxu0 %v2475
      %v2700 = vpop.f32.mrb[0].mxu0
      %v2701 = vadd.f32 0.0, %v2700
      %v2702 = vpop.f32.mrb[0].mxu0
      %2703 = vmatprep.mubr.f32.mxu0 %v2479
      %2704 = vmatmul.mubr.f32.gmra.mrb[0].mxu0 %v2478
      %v2705 = vpop.f32.mrb[0].mxu0
      %v2706 = vadd.f32 0.0, %v2705
      %v2707 = vpop.f32.mrb[0].mxu0
      %2708 = vmatprep.mubr.f32.mxu0 %v2482
      %2709 = vmatmul.mubr.f32.gmra.mrb[0].mxu0 %v2481
      %v2710 = vpop.f32.mrb[0].mxu0
      %v2711 = vadd.f32 0.0, %v2710
      %v2712 = vpop.f32.mrb[0].mxu0
      %2713 = vmatprep.mubr.f32.mxu0 %v2485
      %2714 = vmatmul.mubr.f32.gmra.mrb[0].mxu0 %v2484
      %v2715 = vpop.f32.mrb[0].mxu0
      %v2716 = vadd.f32 0.0, %v2715
      %v2717 = vpop.f32.mrb[0].mxu0
      %2718 = vmatprep.mubr.f32.mxu0 %v2488
      %2719 = vmatmul.mubr.f32.gmra.mrb[0].mxu0 %v2487
      %v2720 = vpop.f32.mrb[0].mxu0
      %v2721 = vadd.f32 0.0, %v2720
      %v2722 = vpop.f32.mrb[0].mxu0
      %2723 = vmatprep.mubr.f32.mxu0 %v2491
      %2724 = vmatmul.mubr.f32.gmra.mrb[0].mxu0 %v2490
      %v2725 = vpop.f32.mrb[0].mxu0
      %v2726 = vadd.f32 0.0, %v2725
      %v2727 = vpop.f32.mrb[0].mxu0
      %2728 = vmatprep.mubr.f32.mxu0 %v2494
      %2729 = vmatmul.mubr.f32.gmra.mrb[0].mxu0 %v2493
      %v2730 = vpop.f32.mrb[0].mxu0
      %v2731 = vadd.f32 0.0, %v2730
      %v2732 = vpop.f32.mrb[0].mxu0
      %2733 = vmatprep.mubr.f32.mxu0 %v2497
      %2734 = vmatmul.mubr.f32.gmra.mrb[0].mxu0 %v2496
      %v2735 = vpop.f32.mrb[0].mxu0
      %v2736 = vadd.f32 0.0, %v2735
      %v2737 = vpop.f32.mrb[0].mxu0
      %2738 = vmatprep.mubr.f32.mxu0 %v2500
      %2739 = vmatmul.mubr.f32.gmra.mrb[0].mxu0 %v2499
      %v2740 = vpop.f32.mrb[0].mxu0
      %v2741 = vadd.f32 0.0, %v2740
      %v2742 = vpop.f32.mrb[0].mxu0
      %2743 = vmatprep.mubr.f32.mxu0 %v2503
      %2744 = vmatmul.mubr.f32.gmra.mrb[0].mxu0 %v2502
      %v2745 = vpop.f32.mrb[0].mxu0
      %v2746 = vadd.f32 0.0, %v2745
      %v2747 = vpop.f32.mrb[0].mxu0
      %2748 = vmatprep.mubr.f32.mxu0 %v2506
      %2749 = vmatmul.mubr.f32.gmra.mrb[0].mxu0 %v2505
      %v2750 = vpop.f32.mrb[0].mxu0
      %v2751 = vadd.f32 0.0, %v2750
      %v2752 = vpop.f32.mrb[0].mxu0
      %2753 = vmatprep.mubr.f32.mxu0 %v2509
      %2754 = vmatmul.mubr.f32.gmra.mrb[0].mxu0 %v2508
      %v2755 = vpop.f32.mrb[0].mxu0
      %v2756 = vadd.f32 0.0, %v2755
      %v2757 = vpop.f32.mrb[0].mxu0
      %2758 = vmatprep.mubr.f32.mxu0 %v2512
      %2759 = vmatmul.mubr.f32.gmra.mrb[0].mxu0 %v2511
      %v2760 = vpop.f32.mrb[0].mxu0
      %v2761 = vadd.f32 0.0, %v2760
      %v2762 = vpop.f32.mrb[0].mxu0
      %2763 = vmatprep.mubr.f32.mxu0 %v2515
      %2764 = vmatmul.mubr.f32.gmra.mrb[0].mxu0 %v2514
      %v2765 = vpop.f32.mrb[0].mxu0
      %v2766 = vadd.f32 0.0, %v2765
      %v2767 = vpop.f32.mrb[0].mxu0
      %2768 = vmatprep.mubr.f32.mxu0 %v2518
      %2769 = vmatmul.mubr.f32.gmra.mrb[0].mxu0 %v2517
      %v2770 = vpop.f32.mrb[0].mxu0
      %v2771 = vadd.f32 0.0, %v2770
      %v2772 = vpop.f32.mrb[0].mxu0
      %2773 = vmatprep.mubr.f32.mxu0 %v2521
      %2774 = vmatmul.mubr.f32.gmra.mrb[0].mxu0 %v2520
      %v2775 = vpop.f32.mrb[0].mxu0
      %v2776 = vadd.f32 0.0, %v2775
      %v2777 = vpop.f32.mrb[0].mxu0
      %2778 = vmatprep.mubr.f32.mxu0 %v2524
      %2779 = vmatmul.mubr.f32.gmra.mrb[0].mxu0 %v2523
      %v2780 = vpop.f32.mrb[0].mxu0
      %v2781 = vadd.f32 0.0, %v2780
      %v2782 = vpop.f32.mrb[0].mxu0
      %2783 = vmatprep.mubr.f32.mxu0 %v2527
      %2784 = vmatmul.mubr.f32.gmra.mrb[0].mxu0 %v2526
      %v2785 = vpop.f32.mrb[0].mxu0
      %v2786 = vadd.f32 0.0, %v2785
      %v2787 = vpop.f32.mrb[0].mxu0
      %2788 = vmatprep.mubr.f32.mxu0 %v2530
      %2789 = vmatmul.mubr.f32.gmra.mrb[0].mxu0 %v2529
      %v2790 = vpop.f32.mrb[0].mxu0
      %v2791 = vadd.f32 0.0, %v2790
      %v2792 = vpop.f32.mrb[0].mxu0
      %2793 = vmatprep.mubr.f32.mxu0 %v2533
      %2794 = vmatmul.mubr.f32.gmra.mrb[0].mxu0 %v2532
      %v2795 = vpop.f32.mrb[0].mxu0
      %v2796 = vadd.f32 0.0, %v2795
      %v2797 = vpop.f32.mrb[0].mxu0
      %2798 = vmatprep.mubr.f32.mxu0 %v2536
      %2799 = vmatmul.mubr.f32.gmra.mrb[0].mxu0 %v2535
      %v2800 = vpop.f32.mrb[0].mxu0
      %v2801 = vadd.f32 0.0, %v2800
      %v2802 = vpop.f32.mrb[0].mxu0
      %2803 = vmatprep.mubr.f32.mxu0 %v2539
      %2804 = vmatmul.mubr.f32.gmra.mrb[0].mxu0 %v2538
      %v2805 = vpop.f32.mrb[0].mxu0
      %v2806 = vadd.f32 0.0, %v2805
      %v2807 = vpop.f32.mrb[0].mxu0
      %2808 = vmatprep.mubr.f32.mxu0 %v2542
      %2809 = vmatmul.mubr.f32.gmra.mrb[0].mxu0 %v2541
      %v2810 = vpop.f32.mrb[0].mxu0
      %v2811 = vadd.f32 0.0, %v2810
      %v2812 = vpop.f32.mrb[0].mxu0
      %2813 = vmatprep.mubr.f32.mxu0 %v2545
      %2814 = vmatmul.mubr.f32.gmra.mrb[0].mxu0 %v2544
      %v2815 = vpop.f32.mrb[0].mxu0
      %v2816 = vadd.f32 0.0, %v2815
      %v2817 = vpop.f32.mrb[0].mxu0
      %2818 = vmatprep.mubr.f32.mxu0 %v2548
      %2819 = vmatmul.mubr.f32.gmra.mrb[0].mxu0 %v2547
      %v2820 = vpop.f32.mrb[0].mxu0
      %v2821 = vadd.f32 0.0, %v2820
      %v2822 = vpop.f32.mrb[0].mxu0
      %2823 = vdwg.mxu0
      %2824 = vmatprep.subr.mxu0 0.0
      %2825 = vmatpush1.msra.mxu0 %v2583
      %2826 = vmatprep.subr.mxu0 0.0
      %2827 = vmatpush1.msra.mxu0 %v2584
      %2828 = vmatprep.subr.mxu0 0.0
      %2829 = vmatpush1.msra.mxu0 %v2585
      %2830 = vmatprep.subr.mxu0 0.0
      %2831 = vmatpush1.msra.mxu0 %v2586
      %2832 = vmatprep.subr.mxu0 0.0
      %2833 = vmatpush1.msra.mxu0 %v2587
      %2834 = vmatprep.subr.mxu0 0.0
      %2835 = vmatpush1.msra.mxu0 %v2588
      %2836 = vmatprep.subr.mxu0 0.0
      %2837 = vmatpush1.msra.mxu0 %v2589
      %2838 = vmatprep.subr.mxu0 0.0
      %2839 = vmatpush1.msra.mxu0 %v2590
      %2840 = vmatprep.subr.mxu0 0.0
      %2841 = vmatpush1.msra.mxu0 %v2591
      %2842 = vmatprep.subr.mxu0 0.0
      %2843 = vmatpush1.msra.mxu0 %v2592
      %2844 = vmatprep.subr.mxu0 0.0
      %2845 = vmatpush1.msra.mxu0 %v2593
      %2846 = vmatprep.subr.mxu0 0.0
      %2847 = vmatpush1.msra.mxu0 %v2594
      %2848 = vmatprep.subr.mxu0 0.0
      %2849 = vmatpush1.msra.mxu0 %v2595
      %2850 = vmatprep.subr.mxu0 0.0
      %2851 = vmatpush1.msra.mxu0 %v2596
      %2852 = vmatprep.subr.mxu0 0.0
      %2853 = vmatpush1.msra.mxu0 %v2597
      %2854 = vmatprep.subr.mxu0 0.0
      %2855 = vmatpush1.msra.mxu0 %v2598
      %2856 = vmatprep.subr.mxu0 0.0
      %2857 = vmatpush1.msra.mxu0 0.0
      %2858 = vmatprep.subr.mxu0 0.0
      %2859 = vmatpush1.msra.mxu0 0.0
      %2860 = vmatprep.subr.mxu0 0.0
      %2861 = vmatpush1.msra.mxu0 0.0
      %2862 = vmatprep.subr.mxu0 0.0
      %2863 = vmatpush1.msra.mxu0 0.0
      %2864 = vmatprep.subr.mxu0 0.0
      %2865 = vmatpush1.msra.mxu0 0.0
      %2866 = vmatprep.subr.mxu0 0.0
      %2867 = vmatpush1.msra.mxu0 0.0
      %2868 = vmatprep.subr.mxu0 0.0
      %2869 = vmatpush1.msra.mxu0 0.0
      %2870 = vmatprep.subr.mxu0 0.0
      %2871 = vmatpush1.msra.mxu0 0.0
      %2872 = vmatprep.subr.mxu0 0.0
      %2873 = vmatpush1.msra.mxu0 0.0
      %2874 = vmatprep.subr.mxu0 0.0
      %2875 = vmatpush1.msra.mxu0 0.0
      %2876 = vmatprep.subr.mxu0 0.0
      %2877 = vmatpush1.msra.mxu0 0.0
      %2878 = vmatprep.subr.mxu0 0.0
      %2879 = vmatpush1.msra.mxu0 0.0
      %2880 = vmatprep.subr.mxu0 0.0
      %2881 = vmatpush1.msra.mxu0 0.0
      %2882 = vmatprep.subr.mxu0 0.0
      %2883 = vmatpush1.msra.mxu0 0.0
      %2884 = vmatprep.subr.mxu0 0.0
      %2885 = vmatpush1.msra.mxu0 0.0
      %2886 = vmatprep.subr.mxu0 0.0
      %2887 = vmatpush1.msra.mxu0 0.0
      %2888 = vmatprep.mubr.f32.mxu0 0.0
      %2889 = vmatmul.mubr.f32.gmra.mrb[0].mxu0 %v2456
      %v2890 = vpop.f32.mrb[0].mxu0
      %v2891 = vadd.f32 %v2666, %v2890
      %v2892 = vpop.f32.mrb[0].mxu0
      %2893 = vmatprep.mubr.f32.mxu0 0.0
      %2894 = vmatmul.mubr.f32.gmra.mrb[0].mxu0 %v2459
      %v2895 = vpop.f32.mrb[0].mxu0
      %v2896 = vadd.f32 %v2671, %v2895
      %v2897 = vpop.f32.mrb[0].mxu0
      %2898 = vmatprep.mubr.f32.mxu0 0.0
      %2899 = vmatmul.mubr.f32.gmra.mrb[0].mxu0 %v2462
      %v2900 = vpop.f32.mrb[0].mxu0
      %v2901 = vadd.f32 %v2676, %v2900
      %v2902 = vpop.f32.mrb[0].mxu0
      %2903 = vmatprep.mubr.f32.mxu0 0.0
      %2904 = vmatmul.mubr.f32.gmra.mrb[0].mxu0 %v2465
      %v2905 = vpop.f32.mrb[0].mxu0
      %v2906 = vadd.f32 %v2681, %v2905
      %v2907 = vpop.f32.mrb[0].mxu0
      %2908 = vmatprep.mubr.f32.mxu0 0.0
      %2909 = vmatmul.mubr.f32.gmra.mrb[0].mxu0 %v2468
      %v2910 = vpop.f32.mrb[0].mxu0
      %v2911 = vadd.f32 %v2686, %v2910
      %v2912 = vpop.f32.mrb[0].mxu0
      %2913 = vmatprep.mubr.f32.mxu0 0.0
      %2914 = vmatmul.mubr.f32.gmra.mrb[0].mxu0 %v2471
      %v2915 = vpop.f32.mrb[0].mxu0
      %v2916 = vadd.f32 %v2691, %v2915
      %v2917 = vpop.f32.mrb[0].mxu0
      %2918 = vmatprep.mubr.f32.mxu0 0.0
      %2919 = vmatmul.mubr.f32.gmra.mrb[0].mxu0 %v2474
      %v2920 = vpop.f32.mrb[0].mxu0
      %v2921 = vadd.f32 %v2696, %v2920
      %v2922 = vpop.f32.mrb[0].mxu0
      %2923 = vmatprep.mubr.f32.mxu0 0.0
      %2924 = vmatmul.mubr.f32.gmra.mrb[0].mxu0 %v2477
      %v2925 = vpop.f32.mrb[0].mxu0
      %v2926 = vadd.f32 %v2701, %v2925
      %v2927 = vpop.f32.mrb[0].mxu0
      %2928 = vmatprep.mubr.f32.mxu0 0.0
      %2929 = vmatmul.mubr.f32.gmra.mrb[0].mxu0 %v2480
      %v2930 = vpop.f32.mrb[0].mxu0
      %v2931 = vadd.f32 %v2706, %v2930
      %v2932 = vpop.f32.mrb[0].mxu0
      %2933 = vmatprep.mubr.f32.mxu0 0.0
      %2934 = vmatmul.mubr.f32.gmra.mrb[0].mxu0 %v2483
      %v2935 = vpop.f32.mrb[0].mxu0
      %v2936 = vadd.f32 %v2711, %v2935
      %v2937 = vpop.f32.mrb[0].mxu0
      %2938 = vmatprep.mubr.f32.mxu0 0.0
      %2939 = vmatmul.mubr.f32.gmra.mrb[0].mxu0 %v2486
      %v2940 = vpop.f32.mrb[0].mxu0
      %v2941 = vadd.f32 %v2716, %v2940
      %v2942 = vpop.f32.mrb[0].mxu0
      %2943 = vmatprep.mubr.f32.mxu0 0.0
      %2944 = vmatmul.mubr.f32.gmra.mrb[0].mxu0 %v2489
      %v2945 = vpop.f32.mrb[0].mxu0
      %v2946 = vadd.f32 %v2721, %v2945
      %v2947 = vpop.f32.mrb[0].mxu0
      %2948 = vmatprep.mubr.f32.mxu0 0.0
      %2949 = vmatmul.mubr.f32.gmra.mrb[0].mxu0 %v2492
      %v2950 = vpop.f32.mrb[0].mxu0
      %v2951 = vadd.f32 %v2726, %v2950
      %v2952 = vpop.f32.mrb[0].mxu0
      %2953 = vmatprep.mubr.f32.mxu0 0.0
      %2954 = vmatmul.mubr.f32.gmra.mrb[0].mxu0 %v2495
      %v2955 = vpop.f32.mrb[0].mxu0
      %v2956 = vadd.f32 %v2731, %v2955
      %v2957 = vpop.f32.mrb[0].mxu0
      %2958 = vmatprep.mubr.f32.mxu0 0.0
      %2959 = vmatmul.mubr.f32.gmra.mrb[0].mxu0 %v2498
      %v2960 = vpop.f32.mrb[0].mxu0
      %v2961 = vadd.f32 %v2736, %v2960
      %v2962 = vpop.f32.mrb[0].mxu0
      %2963 = vmatprep.mubr.f32.mxu0 0.0
      %2964 = vmatmul.mubr.f32.gmra.mrb[0].mxu0 %v2501
      %v2965 = vpop.f32.mrb[0].mxu0
      %v2966 = vadd.f32 %v2741, %v2965
      %v2967 = vpop.f32.mrb[0].mxu0
      %2968 = vmatprep.mubr.f32.mxu0 0.0
      %2969 = vmatmul.mubr.f32.gmra.mrb[0].mxu0 %v2504
      %v2970 = vpop.f32.mrb[0].mxu0
      %v2971 = vadd.f32 %v2746, %v2970
      %v2972 = vpop.f32.mrb[0].mxu0
      %2973 = vmatprep.mubr.f32.mxu0 0.0
      %2974 = vmatmul.mubr.f32.gmra.mrb[0].mxu0 %v2507
      %v2975 = vpop.f32.mrb[0].mxu0
      %v2976 = vadd.f32 %v2751, %v2975
      %v2977 = vpop.f32.mrb[0].mxu0
      %2978 = vmatprep.mubr.f32.mxu0 0.0
      %2979 = vmatmul.mubr.f32.gmra.mrb[0].mxu0 %v2510
      %v2980 = vpop.f32.mrb[0].mxu0
      %v2981 = vadd.f32 %v2756, %v2980
      %v2982 = vpop.f32.mrb[0].mxu0
      %2983 = vmatprep.mubr.f32.mxu0 0.0
      %2984 = vmatmul.mubr.f32.gmra.mrb[0].mxu0 %v2513
      %v2985 = vpop.f32.mrb[0].mxu0
      %v2986 = vadd.f32 %v2761, %v2985
      %v2987 = vpop.f32.mrb[0].mxu0
      %2988 = vmatprep.mubr.f32.mxu0 0.0
      %2989 = vmatmul.mubr.f32.gmra.mrb[0].mxu0 %v2516
      %v2990 = vpop.f32.mrb[0].mxu0
      %v2991 = vadd.f32 %v2766, %v2990
      %v2992 = vpop.f32.mrb[0].mxu0
      %2993 = vmatprep.mubr.f32.mxu0 0.0
      %2994 = vmatmul.mubr.f32.gmra.mrb[0].mxu0 %v2519
      %v2995 = vpop.f32.mrb[0].mxu0
      %v2996 = vadd.f32 %v2771, %v2995
      %v2997 = vpop.f32.mrb[0].mxu0
      %2998 = vmatprep.mubr.f32.mxu0 0.0
      %2999 = vmatmul.mubr.f32.gmra.mrb[0].mxu0 %v2522
      %v3000 = vpop.f32.mrb[0].mxu0
      %v3001 = vadd.f32 %v2776, %v3000
      %v3002 = vpop.f32.mrb[0].mxu0
      %3003 = vmatprep.mubr.f32.mxu0 0.0
      %3004 = vmatmul.mubr.f32.gmra.mrb[0].mxu0 %v2525
      %v3005 = vpop.f32.mrb[0].mxu0
      %v3006 = vadd.f32 %v2781, %v3005
      %v3007 = vpop.f32.mrb[0].mxu0
      %3008 = vmatprep.mubr.f32.mxu0 0.0
      %3009 = vmatmul.mubr.f32.gmra.mrb[0].mxu0 %v2528
      %v3010 = vpop.f32.mrb[0].mxu0
      %v3011 = vadd.f32 %v2786, %v3010
      %v3012 = vpop.f32.mrb[0].mxu0
      %3013 = vmatprep.mubr.f32.mxu0 0.0
      %3014 = vmatmul.mubr.f32.gmra.mrb[0].mxu0 %v2531
      %v3015 = vpop.f32.mrb[0].mxu0
      %v3016 = vadd.f32 %v2791, %v3015
      %v3017 = vpop.f32.mrb[0].mxu0
      %3018 = vmatprep.mubr.f32.mxu0 0.0
      %3019 = vmatmul.mubr.f32.gmra.mrb[0].mxu0 %v2534
      %v3020 = vpop.f32.mrb[0].mxu0
      %v3021 = vadd.f32 %v2796, %v3020
      %v3022 = vpop.f32.mrb[0].mxu0
      %3023 = vmatprep.mubr.f32.mxu0 0.0
      %3024 = vmatmul.mubr.f32.gmra.mrb[0].mxu0 %v2537
      %v3025 = vpop.f32.mrb[0].mxu0
      %v3026 = vadd.f32 %v2801, %v3025
      %v3027 = vpop.f32.mrb[0].mxu0
      %3028 = vmatprep.mubr.f32.mxu0 0.0
      %3029 = vmatmul.mubr.f32.gmra.mrb[0].mxu0 %v2540
      %v3030 = vpop.f32.mrb[0].mxu0
      %v3031 = vadd.f32 %v2806, %v3030
      %v3032 = vpop.f32.mrb[0].mxu0
      %3033 = vmatprep.mubr.f32.mxu0 0.0
      %3034 = vmatmul.mubr.f32.gmra.mrb[0].mxu0 %v2543
      %v3035 = vpop.f32.mrb[0].mxu0
      %v3036 = vadd.f32 %v2811, %v3035
      %v3037 = vpop.f32.mrb[0].mxu0
      %3038 = vmatprep.mubr.f32.mxu0 0.0
      %3039 = vmatmul.mubr.f32.gmra.mrb[0].mxu0 %v2546
      %v3040 = vpop.f32.mrb[0].mxu0
      %v3041 = vadd.f32 %v2816, %v3040
      %v3042 = vpop.f32.mrb[0].mxu0
      %3043 = vmatprep.mubr.f32.mxu0 0.0
      %3044 = vmatmul.mubr.f32.gmra.mrb[0].mxu0 %v2549
      %v3045 = vpop.f32.mrb[0].mxu0
      %v3046 = vadd.f32 %v2821, %v3045
      %v3047 = vpop.f32.mrb[0].mxu0
      %3048 = vdwg.mxu0
      %v3049 = vld [vmem:[#allocation4] sm:$0xff]
      %v3050 = vld [vmem:[#allocation4 + $0x8] sm:$0xff]
      %v3051 = vld [vmem:[#allocation4 + $0x10] sm:$0xff]
      %v3052 = vld [vmem:[#allocation4 + $0x18] sm:$0xff]
      %v3053 = vld [vmem:[#allocation4 + $0x20] sm:$0xff]
      %v3054 = vld [vmem:[#allocation4 + $0x28] sm:$0xff]
      %v3055 = vld [vmem:[#allocation4 + $0x30] sm:$0xff]
      %v3056 = vld [vmem:[#allocation4 + $0x38] sm:$0xff]
      %v3057 = vld [vmem:[#allocation4 + $0x40] sm:$0xff]
      %v3058 = vld [vmem:[#allocation4 + $0x48] sm:$0xff]
      %v3059 = vld [vmem:[#allocation4 + $0x50] sm:$0xff]
      %v3060 = vld [vmem:[#allocation4 + $0x58] sm:$0xff]
      %v3061 = vld [vmem:[#allocation4 + $0x60] sm:$0xff]
      %v3062 = vld [vmem:[#allocation4 + $0x68] sm:$0xff]
      %v3063 = vld [vmem:[#allocation4 + $0x70] sm:$0xff]
      %v3064 = vld [vmem:[#allocation4 + $0x78] sm:$0xff]
      %v3065 = vld [vmem:[#allocation4 + $0x80] sm:$0xff]
      %v3066 = vld [vmem:[#allocation4 + $0x88] sm:$0xff]
      %v3067 = vld [vmem:[#allocation4 + $0x90] sm:$0xff]
      %v3068 = vld [vmem:[#allocation4 + $0x98] sm:$0xff]
      %v3069 = vld [vmem:[#allocation4 + $0xa0] sm:$0xff]
      %v3070 = vld [vmem:[#allocation4 + $0xa8] sm:$0xff]
      %v3071 = vld [vmem:[#allocation4 + $0xb0] sm:$0xff]
      %v3072 = vld [vmem:[#allocation4 + $0xb8] sm:$0xff]
      %v3073 = vld [vmem:[#allocation4 + $0xc0] sm:$0xff]
      %v3074 = vld [vmem:[#allocation4 + $0xc8] sm:$0xff]
      %v3075 = vld [vmem:[#allocation4 + $0xd0] sm:$0xff]
      %v3076 = vld [vmem:[#allocation4 + $0xd8] sm:$0xff]
      %v3077 = vld [vmem:[#allocation4 + $0xe0] sm:$0xff]
      %v3078 = vld [vmem:[#allocation4 + $0xe8] sm:$0xff]
      %v3079 = vld [vmem:[#allocation4 + $0xf0] sm:$0xff]
      %v3080 = vld [vmem:[#allocation4 + $0xf8] sm:$0xff]
      %v3081 = vadd.f32 %v3049, %v2891
      %v3082 = vadd.f32 %v3050, %v2896
      %v3083 = vadd.f32 %v3051, %v2901
      %v3084 = vadd.f32 %v3052, %v2906
      %v3085 = vadd.f32 %v3053, %v2911
      %v3086 = vadd.f32 %v3054, %v2916
      %v3087 = vadd.f32 %v3055, %v2921
      %v3088 = vadd.f32 %v3056, %v2926
      %v3089 = vadd.f32 %v3057, %v2931
      %v3090 = vadd.f32 %v3058, %v2936
      %v3091 = vadd.f32 %v3059, %v2941
      %v3092 = vadd.f32 %v3060, %v2946
      %v3093 = vadd.f32 %v3061, %v2951
      %v3094 = vadd.f32 %v3062, %v2956
      %v3095 = vadd.f32 %v3063, %v2961
      %v3096 = vadd.f32 %v3064, %v2966
      %v3097 = vadd.f32 %v3065, %v2971
      %v3098 = vadd.f32 %v3066, %v2976
      %v3099 = vadd.f32 %v3067, %v2981
      %v3100 = vadd.f32 %v3068, %v2986
      %v3101 = vadd.f32 %v3069, %v2991
      %v3102 = vadd.f32 %v3070, %v2996
      %v3103 = vadd.f32 %v3071, %v3001
      %v3104 = vadd.f32 %v3072, %v3006
      %v3105 = vadd.f32 %v3073, %v3011
      %v3106 = vadd.f32 %v3074, %v3016
      %v3107 = vadd.f32 %v3075, %v3021
      %v3108 = vadd.f32 %v3076, %v3026
      %v3109 = vadd.f32 %v3077, %v3031
      %v3110 = vadd.f32 %v3078, %v3036
      %v3111 = vadd.f32 %v3079, %v3041
      %v3112 = vadd.f32 %v3080, %v3046
      %3113 = vst [vmem:[#allocation4] sm:$0xff] %v3081
      %3114 = vst [vmem:[#allocation4 + $0x8] sm:$0xff] %v3082
      %3115 = vst [vmem:[#allocation4 + $0x10] sm:$0xff] %v3083
      %3116 = vst [vmem:[#allocation4 + $0x18] sm:$0xff] %v3084
      %3117 = vst [vmem:[#allocation4 + $0x20] sm:$0xff] %v3085
      %3118 = vst [vmem:[#allocation4 + $0x28] sm:$0xff] %v3086
      %3119 = vst [vmem:[#allocation4 + $0x30] sm:$0xff] %v3087
      %3120 = vst [vmem:[#allocation4 + $0x38] sm:$0xff] %v3088
      %3121 = vst [vmem:[#allocation4 + $0x40] sm:$0xff] %v3089
      %3122 = vst [vmem:[#allocation4 + $0x48] sm:$0xff] %v3090
      %3123 = vst [vmem:[#allocation4 + $0x50] sm:$0xff] %v3091
      %3124 = vst [vmem:[#allocation4 + $0x58] sm:$0xff] %v3092
      %3125 = vst [vmem:[#allocation4 + $0x60] sm:$0xff] %v3093
      %3126 = vst [vmem:[#allocation4 + $0x68] sm:$0xff] %v3094
      %3127 = vst [vmem:[#allocation4 + $0x70] sm:$0xff] %v3095
      %3128 = vst [vmem:[#allocation4 + $0x78] sm:$0xff] %v3096
      %3129 = vst [vmem:[#allocation4 + $0x80] sm:$0xff] %v3097
      %3130 = vst [vmem:[#allocation4 + $0x88] sm:$0xff] %v3098
      %3131 = vst [vmem:[#allocation4 + $0x90] sm:$0xff] %v3099
      %3132 = vst [vmem:[#allocation4 + $0x98] sm:$0xff] %v3100
      %3133 = vst [vmem:[#allocation4 + $0xa0] sm:$0xff] %v3101
      %3134 = vst [vmem:[#allocation4 + $0xa8] sm:$0xff] %v3102
      %3135 = vst [vmem:[#allocation4 + $0xb0] sm:$0xff] %v3103
      %3136 = vst [vmem:[#allocation4 + $0xb8] sm:$0xff] %v3104
      %3137 = vst [vmem:[#allocation4 + $0xc0] sm:$0xff] %v3105
      %3138 = vst [vmem:[#allocation4 + $0xc8] sm:$0xff] %v3106
      %3139 = vst [vmem:[#allocation4 + $0xd0] sm:$0xff] %v3107
      %3140 = vst [vmem:[#allocation4 + $0xd8] sm:$0xff] %v3108
      %3141 = vst [vmem:[#allocation4 + $0xe0] sm:$0xff] %v3109
      %3142 = vst [vmem:[#allocation4 + $0xe8] sm:$0xff] %v3110
      %3143 = vst [vmem:[#allocation4 + $0xf0] sm:$0xff] %v3111
      %3144 = vst [vmem:[#allocation4 + $0xf8] sm:$0xff] %v3112
      %v3145 = vld [vmem:[#allocation4] sm:$0xff]
      %v3146 = vld [vmem:[#allocation4 + $0x8] sm:$0xff]
      %v3147 = vld [vmem:[#allocation4 + $0x10] sm:$0xff]
      %v3148 = vld [vmem:[#allocation4 + $0x18] sm:$0xff]
      %v3149 = vld [vmem:[#allocation4 + $0x20] sm:$0xff]
      %v3150 = vld [vmem:[#allocation4 + $0x28] sm:$0xff]
      %v3151 = vld [vmem:[#allocation4 + $0x30] sm:$0xff]
      %v3152 = vld [vmem:[#allocation4 + $0x38] sm:$0xff]
      %v3153 = vld [vmem:[#allocation4 + $0x40] sm:$0xff]
      %v3154 = vld [vmem:[#allocation4 + $0x48] sm:$0xff]
      %v3155 = vld [vmem:[#allocation4 + $0x50] sm:$0xff]
      %v3156 = vld [vmem:[#allocation4 + $0x58] sm:$0xff]
      %v3157 = vld [vmem:[#allocation4 + $0x60] sm:$0xff]
      %v3158 = vld [vmem:[#allocation4 + $0x68] sm:$0xff]
      %v3159 = vld [vmem:[#allocation4 + $0x70] sm:$0xff]
      %v3160 = vld [vmem:[#allocation4 + $0x78] sm:$0xff]
      %v3161 = vld [vmem:[#allocation4 + $0x80] sm:$0xff]
      %v3162 = vld [vmem:[#allocation4 + $0x88] sm:$0xff]
      %v3163 = vld [vmem:[#allocation4 + $0x90] sm:$0xff]
      %v3164 = vld [vmem:[#allocation4 + $0x98] sm:$0xff]
      %v3165 = vld [vmem:[#allocation4 + $0xa0] sm:$0xff]
      %v3166 = vld [vmem:[#allocation4 + $0xa8] sm:$0xff]
      %v3167 = vld [vmem:[#allocation4 + $0xb0] sm:$0xff]
      %v3168 = vld [vmem:[#allocation4 + $0xb8] sm:$0xff]
      %v3169 = vld [vmem:[#allocation4 + $0xc0] sm:$0xff]
      %v3170 = vld [vmem:[#allocation4 + $0xc8] sm:$0xff]
      %v3171 = vld [vmem:[#allocation4 + $0xd0] sm:$0xff]
      %v3172 = vld [vmem:[#allocation4 + $0xd8] sm:$0xff]
      %v3173 = vld [vmem:[#allocation4 + $0xe0] sm:$0xff]
      %v3174 = vld [vmem:[#allocation4 + $0xe8] sm:$0xff]
      %v3175 = vld [vmem:[#allocation4 + $0xf0] sm:$0xff]
      %v3176 = vld [vmem:[#allocation4 + $0xf8] sm:$0xff]
      %3177 = vst [vmem:[%s262] sm:$0xff] %v3145
      %3178 = vst [vmem:[%s262 + $0x8] sm:$0xff] %v3146
      %3179 = vst [vmem:[%s262 + $0x10] sm:$0xff] %v3147
      %3180 = vst [vmem:[%s262 + $0x18] sm:$0xff] %v3148
      %3181 = vst [vmem:[%s262 + $0x20] sm:$0xff] %v3149
      %3182 = vst [vmem:[%s262 + $0x28] sm:$0xff] %v3150
      %3183 = vst [vmem:[%s262 + $0x30] sm:$0xff] %v3151
      %3184 = vst [vmem:[%s262 + $0x38] sm:$0xff] %v3152
      %3185 = vst [vmem:[%s262 + $0x40] sm:$0xff] %v3153
      %3186 = vst [vmem:[%s262 + $0x48] sm:$0xff] %v3154
      %3187 = vst [vmem:[%s262 + $0x50] sm:$0xff] %v3155
      %3188 = vst [vmem:[%s262 + $0x58] sm:$0xff] %v3156
      %3189 = vst [vmem:[%s262 + $0x60] sm:$0xff] %v3157
      %3190 = vst [vmem:[%s262 + $0x68] sm:$0xff] %v3158
      %3191 = vst [vmem:[%s262 + $0x70] sm:$0xff] %v3159
      %3192 = vst [vmem:[%s262 + $0x78] sm:$0xff] %v3160
      %3193 = vst [vmem:[%s262 + $0x80] sm:$0xff] %v3161
      %3194 = vst [vmem:[%s262 + $0x88] sm:$0xff] %v3162
      %3195 = vst [vmem:[%s262 + $0x90] sm:$0xff] %v3163
      %3196 = vst [vmem:[%s262 + $0x98] sm:$0xff] %v3164
      %3197 = vst [vmem:[%s262 + $0xa0] sm:$0xff] %v3165
      %3198 = vst [vmem:[%s262 + $0xa8] sm:$0xff] %v3166
      %3199 = vst [vmem:[%s262 + $0xb0] sm:$0xff] %v3167
      %3200 = vst [vmem:[%s262 + $0xb8] sm:$0xff] %v3168
      %3201 = vst [vmem:[%s262 + $0xc0] sm:$0xff] %v3169
      %3202 = vst [vmem:[%s262 + $0xc8] sm:$0xff] %v3170
      %3203 = vst [vmem:[%s262 + $0xd0] sm:$0xff] %v3171
      %3204 = vst [vmem:[%s262 + $0xd8] sm:$0xff] %v3172
      %3205 = vst [vmem:[%s262 + $0xe0] sm:$0xff] %v3173
      %3206 = vst [vmem:[%s262 + $0xe8] sm:$0xff] %v3174
      %3207 = vst [vmem:[%s262 + $0xf0] sm:$0xff] %v3175
      %3208 = vst [vmem:[%s262 + $0xf8] sm:$0xff] %v3176
      %v3209 = vadd.f32 %v3145, %v3146
      %v3210 = vadd.f32 %v3209, %v3147
      %v3211 = vadd.f32 %v3210, %v3148
      %v3212 = vadd.f32 %v3211, %v3149
      %v3213 = vadd.f32 %v3212, %v3150
      %v3214 = vadd.f32 %v3213, %v3151
      %v3215 = vadd.f32 %v3214, %v3152
      %v3216 = vadd.f32 %v3215, %v3153
      %v3217 = vadd.f32 %v3216, %v3154
      %v3218 = vadd.f32 %v3217, %v3155
      %v3219 = vadd.f32 %v3218, %v3156
      %v3220 = vadd.f32 %v3219, %v3157
      %v3221 = vadd.f32 %v3220, %v3158
      %v3222 = vadd.f32 %v3221, %v3159
      %v3223 = vadd.f32 %v3222, %v3160
      %v3224 = vadd.f32 %v3223, %v3161
      %v3225 = vadd.f32 %v3224, %v3162
      %v3226 = vadd.f32 %v3225, %v3163
      %v3227 = vadd.f32 %v3226, %v3164
      %v3228 = vadd.f32 %v3227, %v3165
      %v3229 = vadd.f32 %v3228, %v3166
      %v3230 = vadd.f32 %v3229, %v3167
      %v3231 = vadd.f32 %v3230, %v3168
      %v3232 = vadd.f32 %v3231, %v3169
      %v3233 = vadd.f32 %v3232, %v3170
      %v3234 = vadd.f32 %v3233, %v3171
      %v3235 = vadd.f32 %v3234, %v3172
      %v3236 = vadd.f32 %v3235, %v3173
      %v3237 = vadd.f32 %v3236, %v3174
      %v3238 = vadd.f32 %v3237, %v3175
      %v3239 = vadd.f32 %v3238, %v3176
      %v3240 = vrot.slane %v3239, 4
      %v3241 = vadd.f32 %v3239, %v3240
      %v3242 = vrot.slane %v3241, 2
      %v3243 = vadd.f32 %v3241, %v3242
      %v3244 = vrot.slane %v3243, 1
      %v3245 = vadd.f32 %v3243, %v3244
      %3246 = vst [vmem:[%s265] sm:$0x1] %v3245
      %v3247 = vmul.f32 %v3145, %v3145
      %v3248 = vmul.f32 %v3146, %v3146
      %v3249 = vmul.f32 %v3147, %v3147
      %v3250 = vmul.f32 %v3148, %v3148
      %v3251 = vmul.f32 %v3149, %v3149
      %v3252 = vmul.f32 %v3150, %v3150
      %v3253 = vmul.f32 %v3151, %v3151
      %v3254 = vmul.f32 %v3152, %v3152
      %v3255 = vmul.f32 %v3153, %v3153
      %v3256 = vmul.f32 %v3154, %v3154
      %v3257 = vmul.f32 %v3155, %v3155
      %v3258 = vmul.f32 %v3156, %v3156
      %v3259 = vmul.f32 %v3157, %v3157
      %v3260 = vmul.f32 %v3158, %v3158
      %v3261 = vmul.f32 %v3159, %v3159
      %v3262 = vmul.f32 %v3160, %v3160
      %v3263 = vmul.f32 %v3161, %v3161
      %v3264 = vmul.f32 %v3162, %v3162
      %v3265 = vmul.f32 %v3163, %v3163
      %v3266 = vmul.f32 %v3164, %v3164
      %v3267 = vmul.f32 %v3165, %v3165
      %v3268 = vmul.f32 %v3166, %v3166
      %v3269 = vmul.f32 %v3167, %v3167
      %v3270 = vmul.f32 %v3168, %v3168
      %v3271 = vmul.f32 %v3169, %v3169
      %v3272 = vmul.f32 %v3170, %v3170
      %v3273 = vmul.f32 %v3171, %v3171
      %v3274 = vmul.f32 %v3172, %v3172
      %v3275 = vmul.f32 %v3173, %v3173
      %v3276 = vmul.f32 %v3174, %v3174
      %v3277 = vmul.f32 %v3175, %v3175
      %v3278 = vmul.f32 %v3176, %v3176
      %v3279 = vadd.f32 %v3247, %v3248
      %v3280 = vadd.f32 %v3279, %v3249
      %v3281 = vadd.f32 %v3280, %v3250
      %v3282 = vadd.f32 %v3281, %v3251
      %v3283 = vadd.f32 %v3282, %v3252
      %v3284 = vadd.f32 %v3283, %v3253
      %v3285 = vadd.f32 %v3284, %v3254
      %v3286 = vadd.f32 %v3285, %v3255
      %v3287 = vadd.f32 %v3286, %v3256
      %v3288 = vadd.f32 %v3287, %v3257
      %v3289 = vadd.f32 %v3288, %v3258
      %v3290 = vadd.f32 %v3289, %v3259
      %v3291 = vadd.f32 %v3290, %v3260
      %v3292 = vadd.f32 %v3291, %v3261
      %v3293 = vadd.f32 %v3292, %v3262
      %v3294 = vadd.f32 %v3293, %v3263
      %v3295 = vadd.f32 %v3294, %v3264
      %v3296 = vadd.f32 %v3295, %v3265
      %v3297 = vadd.f32 %v3296, %v3266
      %v3298 = vadd.f32 %v3297, %v3267
      %v3299 = vadd.f32 %v3298, %v3268
      %v3300 = vadd.f32 %v3299, %v3269
      %v3301 = vadd.f32 %v3300, %v3270
      %v3302 = vadd.f32 %v3301, %v3271
      %v3303 = vadd.f32 %v3302, %v3272
      %v3304 = vadd.f32 %v3303, %v3273
      %v3305 = vadd.f32 %v3304, %v3274
      %v3306 = vadd.f32 %v3305, %v3275
      %v3307 = vadd.f32 %v3306, %v3276
      %v3308 = vadd.f32 %v3307, %v3277
      %v3309 = vadd.f32 %v3308, %v3278
      %v3310 = vrot.slane %v3309, 4
      %v3311 = vadd.f32 %v3309, %v3310
      %v3312 = vrot.slane %v3311, 2
      %v3313 = vadd.f32 %v3311, %v3312
      %v3314 = vrot.slane %v3313, 1
      %v3315 = vadd.f32 %v3313, %v3314
      %3316 = vst [vmem:[%s268] sm:$0x1] %v3315
      %p3317 = scmp.lt.s32.totalorder %s18, 1
      %s3318 = scalar_select %p3317, %s18, 1
      %s3319 = smul.addr %s3318, 32
      %s3320 = smul.addr %s3319, 8
      %s3321 = scalar_lea.vmem %s4, %s3320
      %p3322 = scmp.lt.s32.totalorder %s18, 1
      %s3323 = scalar_select %p3322, %s18, 1
      %s3324 = scalar_lea.vmem %s5, %s3323
      %p3325 = scmp.lt.s32.totalorder %s18, 1
      %s3326 = scalar_select %p3325, %s18, 1
      %s3327 = scalar_lea.vmem %s6, %s3326
      // Predicated region
      $region37: #{bottleneck_forward.5} parent=35 // pred_check
        %p3328 = pneg %p125
      $region38: #{bottleneck_forward.5} parent=35 // pred_check_branch
        %3330 = sbr.rel (%p3328) target = $region40
      $region39: #{bottleneck_forward.5} parent=35 // pred_region
        _
      $region40: #{bottleneck_forward.5} parent=35 // pred_fallthru
        _
      // Predicated region
      $region41: #{bottleneck_forward.5} parent=35 // pred_check
        %p3331 = pneg %p151
      $region42: #{bottleneck_forward.5} parent=35 // pred_check_branch
        %3333 = sbr.rel (%p3331) target = $region44
      $region43: #{bottleneck_forward.5} parent=35 // pred_region
        _
      $region44: #{bottleneck_forward.5} parent=35 // pred_fallthru
        _
      // Predicated region
      $region45: #{bottleneck_forward.5} parent=35 // pred_check
        %p3334 = pneg %p177
      $region46: #{bottleneck_forward.5} parent=35 // pred_check_branch
        %3336 = sbr.rel (%p3334) target = $region48
      $region47: #{bottleneck_forward.5} parent=35 // pred_region
        _
      $region48: #{bottleneck_forward.5} parent=35 // pred_fallthru
        _
    $region36: #{bottleneck_forward.5} parent=5 // pred_fallthru
      _
    %p3337 = scmp.le.s32.totalorder 2, %s13
    // Predicated region
    $region49: #{bottleneck_forward.5} parent=5 // pred_check
      %p3338 = pneg %p3337
    $region50: #{bottleneck_forward.5} parent=5 // pred_check_branch
      %3340 = sbr.rel (%p3338) target = $region52
    $region51: #{bottleneck_forward.5} parent=5 // pred_region
      %s3341 = ssub.s32 %s13, 2
      // Predicated region
      $region53: #{bottleneck_forward.5} parent=51 // pred_check
        %p3342 = pneg %p131
      $region54: #{bottleneck_forward.5} parent=51 // pred_check_branch
        %3344 = sbr.rel (%p3342) target = $region56
      $region55: #{bottleneck_forward.5} parent=51 // pred_region
        %p3345 = scmp.lt.s32.totalorder %s19, 1
        %s3346 = scalar_select %p3345, %s19, 1
        %s3347 = smul.addr %s3346, 32
        %s3348 = smul.addr %s3347, 8
        %s3349 = scalar_lea.vmem %s4, %s3348
      $region56: #{bottleneck_forward.5} parent=51 // pred_fallthru
        _
      // Predicated region
      $region57: #{bottleneck_forward.5} parent=51 // pred_check
        %p3350 = pneg %p157
      $region58: #{bottleneck_forward.5} parent=51 // pred_check_branch
        %3352 = sbr.rel (%p3350) target = $region60
      $region59: #{bottleneck_forward.5} parent=51 // pred_region
        %p3353 = scmp.lt.s32.totalorder %s19, 1
        %s3354 = scalar_select %p3353, %s19, 1
        %s3355 = scalar_lea.vmem %s5, %s3354
      $region60: #{bottleneck_forward.5} parent=51 // pred_fallthru
        _
      // Predicated region
      $region61: #{bottleneck_forward.5} parent=51 // pred_check
        %p3356 = pneg %p183
      $region62: #{bottleneck_forward.5} parent=51 // pred_check_branch
        %3358 = sbr.rel (%p3356) target = $region64
      $region63: #{bottleneck_forward.5} parent=51 // pred_region
        %p3359 = scmp.lt.s32.totalorder %s19, 1
        %s3360 = scalar_select %p3359, %s19, 1
        %s3361 = scalar_lea.vmem %s6, %s3360
      $region64: #{bottleneck_forward.5} parent=51 // pred_fallthru
        _
    $region52: #{bottleneck_forward.5} parent=5 // pred_fallthru
      _
  $region6: #{bottleneck_forward.5} parent=0 // loop_footer
    %s17 = sadd.s32 1, %s13
  $region7: #{bottleneck_forward.5} parent=0 // loop_footer_branch
    %12 = sbr.rel target = $region3
  $region8: #{bottleneck_forward.5} parent=0 // loop_exit
    _

</llo_original>
